<compile_context>
chip_gen: v7x
topology: tpu7x:2x2x1
jax: 0.10.0
libtpu: 0.0.40
codegen_flags: <defaults>
</compile_context>

<pallas_src>
import numpy as np

import jax
import jax.numpy as jnp
from jax.experimental import pallas as pl
from jax.experimental.pallas import tpu as pltpu


# --------------------------------------------------------------------------
# constant operator construction (one-time numpy, direct from the PyTorch
# layer definitions)
# --------------------------------------------------------------------------

def _conv_selection(hi, wi, ho, wo, k, stride, padding):
    """Conv2d: S[t, ih*wi+iw, oh*wo+ow] = 1 iff input (ih,iw) feeds output
    (oh,ow) at tap t=(kh,kw), i.e. ih = oh*s + kh - p (out-of-range => pad)."""
    s = np.zeros((k * k, hi * wi, ho * wo), np.float32)
    for kh in range(k):
        for kw in range(k):
            t = kh * k + kw
            for oh in range(ho):
                ih = oh * stride + kh - padding
                if not 0 <= ih < hi:
                    continue
                for ow in range(wo):
                    iw = ow * stride + kw - padding
                    if not 0 <= iw < wi:
                        continue
                    s[t, ih * wi + iw, oh * wo + ow] = 1.0
    return s


def _deconv_selection(hi, wi, ho, wo, k, stride, padding):
    """ConvTranspose2d: output (oh,ow) = (ih*s - p + kh, iw*s - p + kw)."""
    s = np.zeros((k * k, hi * wi, ho * wo), np.float32)
    for kh in range(k):
        for kw in range(k):
            t = kh * k + kw
            for ih in range(hi):
                oh = ih * stride - padding + kh
                if not 0 <= oh < ho:
                    continue
                for iw in range(wi):
                    ow = iw * stride - padding + kw
                    if not 0 <= ow < wo:
                        continue
                    s[t, ih * wi + iw, oh * wo + ow] = 1.0
    return s


def _pool_selection(hi, wi, ho, wo, stride):
    """MaxPool2d(kernel=2): P[t, in_pixel, out_pixel] gathers phase t."""
    p = np.zeros((4, hi * wi, ho * wo), np.float32)
    for kh in range(2):
        for kw in range(2):
            t = kh * 2 + kw
            for oh in range(ho):
                for ow in range(wo):
                    p[t, (oh * stride + kh) * wi + (ow * stride + kw),
                      oh * wo + ow] = 1.0
    return p


def _dense_conv_4d(w_oc, sel):
    """Dense operator of a (de)conv as a 4-D tensor (Cout, HWout, Cin, HWin).

    w_oc: weights in 'output-major' orientation (Cout, Cin, K, K).
    sel:  (K*K, HWin, HWout) 0/1 tap-selection matrices.
    At most one tap links any (input pixel, output pixel) pair, so the sum is
    exact value placement (no numerical composition error)."""
    cout, cin, k, _ = w_oc.shape
    hwin, hwout = sel.shape[1], sel.shape[2]
    m = np.zeros((cout, hwout, cin, hwin), np.float32)
    for kh in range(k):
        for kw in range(k):
            t = kh * k + kw
            m += np.einsum('oc,iq->oqci', w_oc[:, :, kh, kw], sel[t])
    return m


def _fuse_pool(m4d, pool_sel):
    """Fold a 2x2 max-pool's 4 phase selections into the conv operator:
    returns (4, Cout*HWpool, Cin*HWin)."""
    cout, _, cin, hwin = m4d.shape
    hwp = pool_sel.shape[2]
    fused = np.einsum('tqr,oqci->torci', pool_sel, m4d)
    return fused.reshape(4, cout * hwp, cin * hwin)


def pack_operators(params, matmul_dtype=jnp.float32):
    """One-time repack of PyTorch-layout weights into per-layer dense operators.

    matmul_dtype: dtype of the GEMM operands (jnp.bfloat16 halves the VMEM
    footprint and runs the MXU at native rate; f32 kept as the default for
    PyTorch-faithful numerics).  Biases stay f32 (epilogues stay f32)."""
    w1 = np.asarray(params["w1"], np.float32)    # (8, 1, 3, 3)   Conv2d
    w2 = np.asarray(params["w2"], np.float32)    # (16, 8, 3, 3)  Conv2d
    wt1 = np.asarray(params["wt1"], np.float32)  # (16, 8, 3, 3)  ConvT (Cin,Cout,K,K)
    wt2 = np.asarray(params["wt2"], np.float32)  # (8, 4, 3, 3)   ConvT
    wt3 = np.asarray(params["wt3"], np.float32)  # (4, 1, 2, 2)   ConvT

    def bias_col(b, hw):
        return np.repeat(np.asarray(b, np.float32), hw).reshape(-1, 1)

    # --- encoder ---
    # Conv2d(1->8, k3, s3, p1): 28x28 -> 10x10, then MaxPool2d(2,2) -> 5x5
    m1_4d = _dense_conv_4d(w1, _conv_selection(28, 28, 10, 10, 3, 3, 1))
    m1 = _fuse_pool(m1_4d, _pool_selection(10, 10, 5, 5, stride=2))   # (4, 200, 784)
    b1 = bias_col(params["b1"], 25)                                   # (200, 1)
    # Conv2d(8->16, k3, s2, p1): 5x5 -> 3x3, then MaxPool2d(2,1) -> 2x2
    m2_4d = _dense_conv_4d(w2, _conv_selection(5, 5, 3, 3, 3, 2, 1))
    m2 = _fuse_pool(m2_4d, _pool_selection(3, 3, 2, 2, stride=1))     # (4, 64, 200)
    b2 = bias_col(params["b2"], 4)                                    # (64, 1)

    # --- decoder ---
    # ConvTranspose2d(16->8, k3, s2): 2x2 -> 5x5
    m3 = _dense_conv_4d(np.transpose(wt1, (1, 0, 2, 3)),
                        _deconv_selection(2, 2, 5, 5, 3, 2, 0)
                        ).reshape(8 * 25, 16 * 4)                     # (200, 64)
    b3 = bias_col(params["bt1"], 25)
    # ConvTranspose2d(8->4, k3, s3): 5x5 -> 15x15
    m4 = _dense_conv_4d(np.transpose(wt2, (1, 0, 2, 3)),
                        _deconv_selection(5, 5, 15, 15, 3, 3, 0)
                        ).reshape(4 * 225, 8 * 25)                    # (900, 200)
    b4 = bias_col(params["bt2"], 225)
    # ConvTranspose2d(4->1, k2, s2, p1): 15x15 -> 28x28
    m5 = _dense_conv_4d(np.transpose(wt3, (1, 0, 2, 3)),
                        _deconv_selection(15, 15, 28, 28, 2, 2, 1)
                        ).reshape(1 * 784, 4 * 225)                   # (784, 900)
    b5 = bias_col(params["bt3"], 784)

    mats = dict(m1=m1, m2=m2, m3=m3, m4=m4, m5=m5)
    biases = dict(b1=b1, b2=b2, b3=b3, b4=b4, b5=b5)
    out = {k: jnp.asarray(v, matmul_dtype) for k, v in mats.items()}
    out.update({k: jnp.asarray(v, jnp.float32) for k, v in biases.items()})
    return out


# --------------------------------------------------------------------------
# the single fused Pallas kernel (one grid step == one block of B samples,
# activations laid out (features, B) so batch rides the 128-lane axis)
# --------------------------------------------------------------------------

def _fused_autoencoder_kernel(x_ref, m1_ref, b1_ref, m2_ref, b2_ref,
                              m3_ref, b3_ref, m4_ref, b4_ref,
                              m5_ref, b5_ref, o_ref):
    def dot(m, a):
        # GEMM operands in the operator dtype (f32 or bf16); f32 accumulation.
        return jnp.dot(m, a.astype(m.dtype), preferred_element_type=jnp.float32)

    def conv_pool(m_ref, a, b_ref):
        # pool(relu(conv(a) + b)) == relu(max_t(M_t @ a) + b)
        # (ReLU is monotone; the per-row bias is identical across pool phases.)
        z = dot(m_ref[0], a)
        for t in range(1, m_ref.shape[0]):
            z = jnp.maximum(z, dot(m_ref[t], a))
        return jnp.maximum(z + b_ref[...], 0.0)

    x = x_ref[...]                                                     # (784, B)
    # ---- encoder ----
    h = conv_pool(m1_ref, x, b1_ref)                                   # (200, B)
    h = conv_pool(m2_ref, h, b2_ref)                                   # (64,  B)
    # ---- decoder ----
    h = jnp.maximum(dot(m3_ref[...], h) + b3_ref[...], 0.0)            # (200, B)
    h = jnp.maximum(dot(m4_ref[...], h) + b4_ref[...], 0.0)            # (900, B)
    o_ref[...] = jnp.tanh(dot(m5_ref[...], h) + b5_ref[...]
                          ).astype(o_ref.dtype)                        # (784, B)


def autoencoder_forward(x_nchw, ops, *, block_b=None):
    """x: (N, 1, 28, 28) float32 -> (N, 1, 28, 28) float32."""
    n = x_nchw.shape[0]
    if block_b is None:
        # 128 lanes already saturates lane width (v5e MXU is 128x128); use 256
        # once the batch is big enough (v6e/v7x MXUs are 256x256).
        block_b = 128 if n <= 128 else 256
    n_pad = -(-n // block_b) * block_b
    n_blocks = n_pad // block_b

    # Batch -> lanes: flatten each image to 784 features and put batch last.
    x = x_nchw.astype(jnp.float32).reshape(n, 784)
    x = jnp.pad(x, ((0, n_pad - n), (0, 0))).T                         # (784, n_pad)

    def shared(shape):
        return pl.BlockSpec(tuple(shape), lambda i, _nd=len(shape): (0,) * _nd)

    o = ops
    # Constants (~6.3 MB f32 / ~3.2 MB bf16) + double-buffered I/O blocks stay
    # well under the default scoped-VMEM budget on v5e/v6e/v7x.
    y = pl.pallas_call(
        _fused_autoencoder_kernel,
        out_shape=jax.ShapeDtypeStruct((784, n_pad), jnp.float32),
        grid=(n_blocks,),
        in_specs=[
            pl.BlockSpec((784, block_b), lambda i: (0, i)),
            shared(o["m1"].shape), shared(o["b1"].shape),
            shared(o["m2"].shape), shared(o["b2"].shape),
            shared(o["m3"].shape), shared(o["b3"].shape),
            shared(o["m4"].shape), shared(o["b4"].shape),
            shared(o["m5"].shape), shared(o["b5"].shape),
        ],
        out_specs=pl.BlockSpec((784, block_b), lambda i: (0, i)),
        compiler_params=pltpu.CompilerParams(
            dimension_semantics=("parallel",)),
    )(x, o["m1"], o["b1"], o["m2"], o["b2"], o["m3"], o["b3"],
      o["m4"], o["b4"], o["m5"], o["b5"])

    return y.T[:n].reshape(n, 1, 28, 28)


# --------------------------------------------------------------------------
# plain-JAX reference (im2col formulation) for the in-script correctness check
# --------------------------------------------------------------------------

def _ref_im2col(xp, k, stride):
    n, h, w, c = xp.shape
    oh = (h - k) // stride + 1
    ow = (w - k) // stride + 1
    cols = []
    for kh in range(k):
        for kw in range(k):
            cols.append(xp[:, kh:kh + stride * (oh - 1) + 1:stride,
                           kw:kw + stride * (ow - 1) + 1:stride, :])
    patches = jnp.stack(cols, axis=3)
    return patches.reshape(n * oh * ow, k * k * c), oh, ow


def _ref_gemm(x, w, b, act):
    out = jnp.dot(x, w, precision=jax.lax.Precision.HIGHEST) + b.reshape(1, -1)
    if act == "relu":
        out = jnp.maximum(out, 0.0)
    elif act == "tanh":
        out = jnp.tanh(out)
    return out


def _ref_conv2d(x, w, b, *, stride, padding, act):
    cout, cin, kh, kw = w.shape
    xp = jnp.pad(x, ((0, 0), (padding, padding), (padding, padding), (0, 0)))
    patches, oh, ow = _ref_im2col(xp, kh, stride)
    wmat = jnp.transpose(w, (2, 3, 1, 0)).reshape(kh * kw * cin, cout)
    out = _ref_gemm(patches, wmat, b, act)
    return out.reshape(x.shape[0], oh, ow, cout)


def _ref_dilate(x, s):
    if s == 1:
        return x
    n, h, w, c = x.shape
    out = jnp.zeros((n, (h - 1) * s + 1, (w - 1) * s + 1, c), x.dtype)
    return out.at[:, ::s, ::s, :].set(x)


def _ref_conv_transpose2d(x, w, b, *, stride, padding, act):
    cin, cout, kh, kw = w.shape
    xd = _ref_dilate(x, stride)
    pad = kh - 1 - padding
    xp = jnp.pad(xd, ((0, 0), (pad, pad), (pad, pad), (0, 0)))
    patches, oh, ow = _ref_im2col(xp, kh, 1)
    wmat = jnp.transpose(w[:, :, ::-1, ::-1], (2, 3, 0, 1)).reshape(
        kh * kw * cin, cout)
    out = _ref_gemm(patches, wmat, b, act)
    return out.reshape(x.shape[0], oh, ow, cout)


def _ref_maxpool2(x, *, stride):
    n, h, w, c = x.shape
    oh = (h - 2) // stride + 1
    ow = (w - 2) // stride + 1
    views = [x[:, kh:kh + stride * (oh - 1) + 1:stride,
               kw:kw + stride * (ow - 1) + 1:stride, :]
             for kh in range(2) for kw in range(2)]
    return jnp.maximum(jnp.maximum(views[0], views[1]),
                       jnp.maximum(views[2], views[3]))


def reference_forward(x_nchw, p):
    x = jnp.transpose(x_nchw, (0, 2, 3, 1))                                 # NCHW -> NHWC
    x = _ref_conv2d(x, p["w1"], p["b1"], stride=3, padding=1, act="relu")   # 28->10
    x = _ref_maxpool2(x, stride=2)                                          # 10->5
    x = _ref_conv2d(x, p["w2"], p["b2"], stride=2, padding=1, act="relu")   # 5->3
    x = _ref_maxpool2(x, stride=1)                                          # 3->2
    x = _ref_conv_transpose2d(x, p["wt1"], p["bt1"], stride=2, padding=0, act="relu")  # 2->5
    x = _ref_conv_transpose2d(x, p["wt2"], p["bt2"], stride=3, padding=0, act="relu")  # 5->15
    x = _ref_conv_transpose2d(x, p["wt3"], p["bt3"], stride=2, padding=1, act="tanh")  # 15->28
    return jnp.transpose(x, (0, 3, 1, 2))                                   # NHWC -> NCHW


# --------------------------------------------------------------------------
# params + main
# --------------------------------------------------------------------------

def init_params(key):
    ks = jax.random.split(key, 10)

    def u(k, shape, fan_in):
        bound = 1.0 / float(fan_in) ** 0.5
        return jax.random.uniform(k, shape, jnp.float32, -bound, bound)

    return dict(
        # encoder (Conv2d weight layout: (Cout, Cin, KH, KW))
        w1=u(ks[0], (8, 1, 3, 3), 1 * 9),   b1=u(ks[1], (8,), 1 * 9),
        w2=u(ks[2], (16, 8, 3, 3), 8 * 9),  b2=u(ks[3], (16,), 8 * 9),
        # decoder (ConvTranspose2d weight layout: (Cin, Cout, KH, KW))
        wt1=u(ks[4], (16, 8, 3, 3), 8 * 9), bt1=u(ks[5], (8,), 8 * 9),
        wt2=u(ks[6], (8, 4, 3, 3), 4 * 9),  bt2=u(ks[7], (4,), 4 * 9),
        wt3=u(ks[8], (4, 1, 2, 2), 1 * 4),  bt3=u(ks[9], (1,), 1 * 4),
    )


if __name__ == "__main__":
    key = jax.random.PRNGKey(0)
    kx, kp = jax.random.split(key)
    # MNIST-sized input implied by the module's arithmetic (28x28, 1 channel).
    x = jax.random.normal(kx, (2, 1, 28, 28), jnp.float32)
    params = init_params(kp)
    ops = pack_operators(params)             # one-time dense-operator repack

    fwd = jax.jit(autoencoder_forward)
    y = fwd(x, ops)
    jax.block_until_ready(y)

    assert y.shape == (2, 1, 28, 28), y.shape
    assert y.dtype == jnp.float32

    # Correctness check vs. a plain-JAX im2col reference of the same module.
    # Tolerance absorbs MXU f32-pass differences but is far below the
    # O(0.1..1) errors any structural/index bug would produce.
    y_ref = jax.jit(reference_forward)(x, params)
    err = float(jnp.max(jnp.abs(y - y_ref)))
    assert err < 3e-2, f"mismatch vs reference: max |diff| = {err}"

    print("KERNEL_OK")
</pallas_src>

<mosaic_0001>
module attributes {stable_mosaic.version = 11 : i64} {
  func.func @_fused_autoencoder_kernel(%arg0: i32, %arg1: memref<784x128xf32, #tpu.memory_space<vmem>>, %arg2: memref<4x200x784xf32, #tpu.memory_space<vmem>>, %arg3: memref<200x1xf32, #tpu.memory_space<vmem>>, %arg4: memref<4x64x200xf32, #tpu.memory_space<vmem>>, %arg5: memref<64x1xf32, #tpu.memory_space<vmem>>, %arg6: memref<200x64xf32, #tpu.memory_space<vmem>>, %arg7: memref<200x1xf32, #tpu.memory_space<vmem>>, %arg8: memref<900x200xf32, #tpu.memory_space<vmem>>, %arg9: memref<900x1xf32, #tpu.memory_space<vmem>>, %arg10: memref<784x900xf32, #tpu.memory_space<vmem>>, %arg11: memref<784x1xf32, #tpu.memory_space<vmem>>, %arg12: memref<784x128xf32, #tpu.memory_space<vmem>>) attributes {dimension_semantics = [#tpu.dimension_semantics<parallel>], iteration_bounds = array<i64: 1>, scalar_prefetch = 0 : i64, scratch_operands = 0 : i64, tpu.core_type = #tpu.core_type<tc>, window_params = [{transform_indices = @transform_0, window_bounds = array<i64: 784, 128>}, {pipeline_mode = #tpu.pipeline_mode<synchronous>, transform_indices = @transform_1, window_bounds = array<i64: 4, 200, 784>}, {pipeline_mode = #tpu.pipeline_mode<synchronous>, transform_indices = @transform_2, window_bounds = array<i64: 200, 1>}, {pipeline_mode = #tpu.pipeline_mode<synchronous>, transform_indices = @transform_3, window_bounds = array<i64: 4, 64, 200>}, {pipeline_mode = #tpu.pipeline_mode<synchronous>, transform_indices = @transform_4, window_bounds = array<i64: 64, 1>}, {pipeline_mode = #tpu.pipeline_mode<synchronous>, transform_indices = @transform_5, window_bounds = array<i64: 200, 64>}, {pipeline_mode = #tpu.pipeline_mode<synchronous>, transform_indices = @transform_6, window_bounds = array<i64: 200, 1>}, {pipeline_mode = #tpu.pipeline_mode<synchronous>, transform_indices = @transform_7, window_bounds = array<i64: 900, 200>}, {pipeline_mode = #tpu.pipeline_mode<synchronous>, transform_indices = @transform_8, window_bounds = array<i64: 900, 1>}, {pipeline_mode = #tpu.pipeline_mode<synchronous>, transform_indices = @transform_9, window_bounds = array<i64: 784, 900>}, {pipeline_mode = #tpu.pipeline_mode<synchronous>, transform_indices = @transform_10, window_bounds = array<i64: 784, 1>}, {transform_indices = @transform_11, window_bounds = array<i64: 784, 128>}]} {
    %c0 = arith.constant 0 : index
    %c0_0 = arith.constant 0 : index
    %0 = vector.load %arg1[%c0, %c0_0] : memref<784x128xf32, #tpu.memory_space<vmem>>, vector<784x128xf32>
    %c0_1 = arith.constant 0 : index
    %c0_2 = arith.constant 0 : index
    %c0_3 = arith.constant 0 : index
    %1 = vector.load %arg2[%c0_1, %c0_2, %c0_3] : memref<4x200x784xf32, #tpu.memory_space<vmem>>, vector<1x200x784xf32>
    %2 = vector.shape_cast %1 : vector<1x200x784xf32> to vector<200x784xf32>
    %cst = arith.constant dense<0.000000e+00> : vector<200x128xf32>
    %3 = tpu.matmul %2, %0, %cst {dimension_numbers = #tpu.dot_dimension_numbers<[1], [0], [0], [1], [0, 0, 1, 1], [], []>} : vector<200x784xf32>, vector<784x128xf32>, vector<200x128xf32> -> vector<200x128xf32>
    %c1 = arith.constant 1 : index
    %c0_4 = arith.constant 0 : index
    %c0_5 = arith.constant 0 : index
    %4 = vector.load %arg2[%c1, %c0_4, %c0_5] : memref<4x200x784xf32, #tpu.memory_space<vmem>>, vector<1x200x784xf32>
    %5 = vector.shape_cast %4 : vector<1x200x784xf32> to vector<200x784xf32>
    %cst_6 = arith.constant dense<0.000000e+00> : vector<200x128xf32>
    %6 = tpu.matmul %5, %0, %cst_6 {dimension_numbers = #tpu.dot_dimension_numbers<[1], [0], [0], [1], [0, 0, 1, 1], [], []>} : vector<200x784xf32>, vector<784x128xf32>, vector<200x128xf32> -> vector<200x128xf32>
    %7 = arith.maximumf %3, %6 : vector<200x128xf32>
    %c2 = arith.constant 2 : index
    %c0_7 = arith.constant 0 : index
    %c0_8 = arith.constant 0 : index
    %8 = vector.load %arg2[%c2, %c0_7, %c0_8] : memref<4x200x784xf32, #tpu.memory_space<vmem>>, vector<1x200x784xf32>
    %9 = vector.shape_cast %8 : vector<1x200x784xf32> to vector<200x784xf32>
    %cst_9 = arith.constant dense<0.000000e+00> : vector<200x128xf32>
    %10 = tpu.matmul %9, %0, %cst_9 {dimension_numbers = #tpu.dot_dimension_numbers<[1], [0], [0], [1], [0, 0, 1, 1], [], []>} : vector<200x784xf32>, vector<784x128xf32>, vector<200x128xf32> -> vector<200x128xf32>
    %11 = arith.maximumf %7, %10 : vector<200x128xf32>
    %c3 = arith.constant 3 : index
    %c0_10 = arith.constant 0 : index
    %c0_11 = arith.constant 0 : index
    %12 = vector.load %arg2[%c3, %c0_10, %c0_11] : memref<4x200x784xf32, #tpu.memory_space<vmem>>, vector<1x200x784xf32>
    %13 = vector.shape_cast %12 : vector<1x200x784xf32> to vector<200x784xf32>
    %cst_12 = arith.constant dense<0.000000e+00> : vector<200x128xf32>
    %14 = tpu.matmul %13, %0, %cst_12 {dimension_numbers = #tpu.dot_dimension_numbers<[1], [0], [0], [1], [0, 0, 1, 1], [], []>} : vector<200x784xf32>, vector<784x128xf32>, vector<200x128xf32> -> vector<200x128xf32>
    %15 = arith.maximumf %11, %14 : vector<200x128xf32>
    %c0_13 = arith.constant 0 : index
    %c0_14 = arith.constant 0 : index
    %16 = vector.load %arg3[%c0_13, %c0_14] : memref<200x1xf32, #tpu.memory_space<vmem>>, vector<200x1xf32>
    %17 = vector.broadcast %16 : vector<200x1xf32> to vector<200x128xf32>
    %18 = arith.addf %15, %17 : vector<200x128xf32>
    %cst_15 = arith.constant 0.000000e+00 : f32
    %19 = vector.broadcast %cst_15 : f32 to vector<200x128xf32>
    %20 = arith.maximumf %18, %19 : vector<200x128xf32>
    %c0_16 = arith.constant 0 : index
    %c0_17 = arith.constant 0 : index
    %c0_18 = arith.constant 0 : index
    %21 = vector.load %arg4[%c0_16, %c0_17, %c0_18] : memref<4x64x200xf32, #tpu.memory_space<vmem>>, vector<1x64x200xf32>
    %22 = vector.shape_cast %21 : vector<1x64x200xf32> to vector<64x200xf32>
    %cst_19 = arith.constant dense<0.000000e+00> : vector<64x128xf32>
    %23 = tpu.matmul %22, %20, %cst_19 {dimension_numbers = #tpu.dot_dimension_numbers<[1], [0], [0], [1], [0, 0, 1, 1], [], []>} : vector<64x200xf32>, vector<200x128xf32>, vector<64x128xf32> -> vector<64x128xf32>
    %c1_20 = arith.constant 1 : index
    %c0_21 = arith.constant 0 : index
    %c0_22 = arith.constant 0 : index
    %24 = vector.load %arg4[%c1_20, %c0_21, %c0_22] : memref<4x64x200xf32, #tpu.memory_space<vmem>>, vector<1x64x200xf32>
    %25 = vector.shape_cast %24 : vector<1x64x200xf32> to vector<64x200xf32>
    %cst_23 = arith.constant dense<0.000000e+00> : vector<64x128xf32>
    %26 = tpu.matmul %25, %20, %cst_23 {dimension_numbers = #tpu.dot_dimension_numbers<[1], [0], [0], [1], [0, 0, 1, 1], [], []>} : vector<64x200xf32>, vector<200x128xf32>, vector<64x128xf32> -> vector<64x128xf32>
    %27 = arith.maximumf %23, %26 : vector<64x128xf32>
    %c2_24 = arith.constant 2 : index
    %c0_25 = arith.constant 0 : index
    %c0_26 = arith.constant 0 : index
    %28 = vector.load %arg4[%c2_24, %c0_25, %c0_26] : memref<4x64x200xf32, #tpu.memory_space<vmem>>, vector<1x64x200xf32>
    %29 = vector.shape_cast %28 : vector<1x64x200xf32> to vector<64x200xf32>
    %cst_27 = arith.constant dense<0.000000e+00> : vector<64x128xf32>
    %30 = tpu.matmul %29, %20, %cst_27 {dimension_numbers = #tpu.dot_dimension_numbers<[1], [0], [0], [1], [0, 0, 1, 1], [], []>} : vector<64x200xf32>, vector<200x128xf32>, vector<64x128xf32> -> vector<64x128xf32>
    %31 = arith.maximumf %27, %30 : vector<64x128xf32>
    %c3_28 = arith.constant 3 : index
    %c0_29 = arith.constant 0 : index
    %c0_30 = arith.constant 0 : index
    %32 = vector.load %arg4[%c3_28, %c0_29, %c0_30] : memref<4x64x200xf32, #tpu.memory_space<vmem>>, vector<1x64x200xf32>
    %33 = vector.shape_cast %32 : vector<1x64x200xf32> to vector<64x200xf32>
    %cst_31 = arith.constant dense<0.000000e+00> : vector<64x128xf32>
    %34 = tpu.matmul %33, %20, %cst_31 {dimension_numbers = #tpu.dot_dimension_numbers<[1], [0], [0], [1], [0, 0, 1, 1], [], []>} : vector<64x200xf32>, vector<200x128xf32>, vector<64x128xf32> -> vector<64x128xf32>
    %35 = arith.maximumf %31, %34 : vector<64x128xf32>
    %c0_32 = arith.constant 0 : index
    %c0_33 = arith.constant 0 : index
    %36 = vector.load %arg5[%c0_32, %c0_33] : memref<64x1xf32, #tpu.memory_space<vmem>>, vector<64x1xf32>
    %37 = vector.broadcast %36 : vector<64x1xf32> to vector<64x128xf32>
    %38 = arith.addf %35, %37 : vector<64x128xf32>
    %cst_34 = arith.constant 0.000000e+00 : f32
    %39 = vector.broadcast %cst_34 : f32 to vector<64x128xf32>
    %40 = arith.maximumf %38, %39 : vector<64x128xf32>
    %c0_35 = arith.constant 0 : index
    %c0_36 = arith.constant 0 : index
    %41 = vector.load %arg6[%c0_35, %c0_36] : memref<200x64xf32, #tpu.memory_space<vmem>>, vector<200x64xf32>
    %cst_37 = arith.constant dense<0.000000e+00> : vector<200x128xf32>
    %42 = tpu.matmul %41, %40, %cst_37 {dimension_numbers = #tpu.dot_dimension_numbers<[1], [0], [0], [1], [0, 0, 1, 1], [], []>} : vector<200x64xf32>, vector<64x128xf32>, vector<200x128xf32> -> vector<200x128xf32>
    %c0_38 = arith.constant 0 : index
    %c0_39 = arith.constant 0 : index
    %43 = vector.load %arg7[%c0_38, %c0_39] : memref<200x1xf32, #tpu.memory_space<vmem>>, vector<200x1xf32>
    %44 = vector.broadcast %43 : vector<200x1xf32> to vector<200x128xf32>
    %45 = arith.addf %42, %44 : vector<200x128xf32>
    %cst_40 = arith.constant 0.000000e+00 : f32
    %46 = vector.broadcast %cst_40 : f32 to vector<200x128xf32>
    %47 = arith.maximumf %45, %46 : vector<200x128xf32>
    %c0_41 = arith.constant 0 : index
    %c0_42 = arith.constant 0 : index
    %48 = vector.load %arg8[%c0_41, %c0_42] : memref<900x200xf32, #tpu.memory_space<vmem>>, vector<900x200xf32>
    %cst_43 = arith.constant dense<0.000000e+00> : vector<900x128xf32>
    %49 = tpu.matmul %48, %47, %cst_43 {dimension_numbers = #tpu.dot_dimension_numbers<[1], [0], [0], [1], [0, 0, 1, 1], [], []>} : vector<900x200xf32>, vector<200x128xf32>, vector<900x128xf32> -> vector<900x128xf32>
    %c0_44 = arith.constant 0 : index
    %c0_45 = arith.constant 0 : index
    %50 = vector.load %arg9[%c0_44, %c0_45] : memref<900x1xf32, #tpu.memory_space<vmem>>, vector<900x1xf32>
    %51 = vector.broadcast %50 : vector<900x1xf32> to vector<900x128xf32>
    %52 = arith.addf %49, %51 : vector<900x128xf32>
    %cst_46 = arith.constant 0.000000e+00 : f32
    %53 = vector.broadcast %cst_46 : f32 to vector<900x128xf32>
    %54 = arith.maximumf %52, %53 : vector<900x128xf32>
    %c0_47 = arith.constant 0 : index
    %c0_48 = arith.constant 0 : index
    %55 = vector.load %arg10[%c0_47, %c0_48] : memref<784x900xf32, #tpu.memory_space<vmem>>, vector<784x900xf32>
    %cst_49 = arith.constant dense<0.000000e+00> : vector<784x128xf32>
    %56 = tpu.matmul %55, %54, %cst_49 {dimension_numbers = #tpu.dot_dimension_numbers<[1], [0], [0], [1], [0, 0, 1, 1], [], []>} : vector<784x900xf32>, vector<900x128xf32>, vector<784x128xf32> -> vector<784x128xf32>
    %c0_50 = arith.constant 0 : index
    %c0_51 = arith.constant 0 : index
    %57 = vector.load %arg11[%c0_50, %c0_51] : memref<784x1xf32, #tpu.memory_space<vmem>>, vector<784x1xf32>
    %58 = vector.broadcast %57 : vector<784x1xf32> to vector<784x128xf32>
    %59 = arith.addf %56, %58 : vector<784x128xf32>
    %60 = math.tanh %59 : vector<784x128xf32>
    %c0_52 = arith.constant 0 : index
    %c0_53 = arith.constant 0 : index
    %61 = vector.load %arg12[%c0_52, %c0_53] : memref<784x128xf32, #tpu.memory_space<vmem>>, vector<784x128xf32>
    tpu.vector_store %arg12[%c0_52, %c0_53], %60 {strides = array<i32>} : memref<784x128xf32, #tpu.memory_space<vmem>>, vector<784x128xf32>,
    return
  }
  func.func @transform_0(%arg0: i32) -> (i32, i32) {
    %c0_i32 = arith.constant 0 : i32
    %c0_i32_0 = arith.constant 0 : i32
    return %c0_i32, %arg0 : i32, i32
  }
  func.func @transform_1(%arg0: i32) -> (i32, i32, i32) {
    %c0_i32 = arith.constant 0 : i32
    %c0_i32_0 = arith.constant 0 : i32
    %c0_i32_1 = arith.constant 0 : i32
    %c0_i32_2 = arith.constant 0 : i32
    return %c0_i32, %c0_i32_0, %c0_i32_1 : i32, i32, i32
  }
  func.func @transform_2(%arg0: i32) -> (i32, i32) {
    %c0_i32 = arith.constant 0 : i32
    %c0_i32_0 = arith.constant 0 : i32
    %c0_i32_1 = arith.constant 0 : i32
    return %c0_i32, %c0_i32_0 : i32, i32
  }
  func.func @transform_3(%arg0: i32) -> (i32, i32, i32) {
    %c0_i32 = arith.constant 0 : i32
    %c0_i32_0 = arith.constant 0 : i32
    %c0_i32_1 = arith.constant 0 : i32
    %c0_i32_2 = arith.constant 0 : i32
    return %c0_i32, %c0_i32_0, %c0_i32_1 : i32, i32, i32
  }
  func.func @transform_4(%arg0: i32) -> (i32, i32) {
    %c0_i32 = arith.constant 0 : i32
    %c0_i32_0 = arith.constant 0 : i32
    %c0_i32_1 = arith.constant 0 : i32
    return %c0_i32, %c0_i32_0 : i32, i32
  }
  func.func @transform_5(%arg0: i32) -> (i32, i32) {
    %c0_i32 = arith.constant 0 : i32
    %c0_i32_0 = arith.constant 0 : i32
    %c0_i32_1 = arith.constant 0 : i32
    return %c0_i32, %c0_i32_0 : i32, i32
  }
  func.func @transform_6(%arg0: i32) -> (i32, i32) {
    %c0_i32 = arith.constant 0 : i32
    %c0_i32_0 = arith.constant 0 : i32
    %c0_i32_1 = arith.constant 0 : i32
    return %c0_i32, %c0_i32_0 : i32, i32
  }
  func.func @transform_7(%arg0: i32) -> (i32, i32) {
    %c0_i32 = arith.constant 0 : i32
    %c0_i32_0 = arith.constant 0 : i32
    %c0_i32_1 = arith.constant 0 : i32
    return %c0_i32, %c0_i32_0 : i32, i32
  }
  func.func @transform_8(%arg0: i32) -> (i32, i32) {
    %c0_i32 = arith.constant 0 : i32
    %c0_i32_0 = arith.constant 0 : i32
    %c0_i32_1 = arith.constant 0 : i32
    return %c0_i32, %c0_i32_0 : i32, i32
  }
  func.func @transform_9(%arg0: i32) -> (i32, i32) {
    %c0_i32 = arith.constant 0 : i32
    %c0_i32_0 = arith.constant 0 : i32
    %c0_i32_1 = arith.constant 0 : i32
    return %c0_i32, %c0_i32_0 : i32, i32
  }
  func.func @transform_10(%arg0: i32) -> (i32, i32) {
    %c0_i32 = arith.constant 0 : i32
    %c0_i32_0 = arith.constant 0 : i32
    %c0_i32_1 = arith.constant 0 : i32
    return %c0_i32, %c0_i32_0 : i32, i32
  }
  func.func @transform_11(%arg0: i32) -> (i32, i32) {
    %c0_i32 = arith.constant 0 : i32
    %c0_i32_0 = arith.constant 0 : i32
    return %c0_i32, %arg0 : i32, i32
  }
}

</mosaic_0001>

<llo_original>
// kernel: autoencoder_forward.1
$region0: #{autoencoder_forward.1}
  #allocation0 [shape = 'u32[]', space=smem, size = 0x4, offset = 0x4, fixed_abs, tag = 'smem constant byte address 0x4 - core index']
  #allocation1 [shape = 'u32[144,128]{1,0:T(1,128)}', space=vmem, size = 0x12000, scoped, tag = 'internal scratch']
  %s0 = inlined_call_operand.vmem [shape: f32[784,128], index: 0, kind: input, shape index: {}]
  %s1 = inlined_call_operand.hbm [shape: f32[4,200,784], index: 1, kind: input, shape index: {}]
  %s2 = inlined_call_operand.vmem [shape: f32[200,1], index: 2, kind: input, shape index: {}]
  %s3 = inlined_call_operand.vmem [shape: f32[4,64,200], index: 3, kind: input, shape index: {}]
  %s4 = inlined_call_operand.vmem [shape: f32[64,1], index: 4, kind: input, shape index: {}]
  %s5 = inlined_call_operand.vmem [shape: f32[200,64], index: 5, kind: input, shape index: {}]
  %s6 = inlined_call_operand.vmem [shape: f32[200,1], index: 6, kind: input, shape index: {}]
  %s7 = inlined_call_operand.vmem [shape: f32[900,200], index: 7, kind: input, shape index: {}]
  %s8 = inlined_call_operand.vmem [shape: f32[900,1], index: 8, kind: input, shape index: {}]
  %s9 = inlined_call_operand.vmem [shape: f32[784,900], index: 9, kind: input, shape index: {}]
  %s10 = inlined_call_operand.vmem [shape: f32[784,1], index: 10, kind: input, shape index: {}]
  %s11 = inlined_call_operand.vmem [shape: f32[784,128], index: 11, kind: output, shape index: {}]
  %s12 = sld [smem:[#allocation0]]
  $region58: #{autoencoder_forward.1} parent=0
    _
  %s14 = ssub.s32 1, %s12
  %s15 = scalar_select 0, %s14, %s12
  $region1: #{autoencoder_forward.1} parent=0
    #allocation2 [shape = 'u8[2867200]{0}', space=vmem, size = 0x2bc000, scoped, tag = 'input window, operand 1, single buffered']
    #allocation3 [shape = 's32[1]{0}', space=sflag, size = 0x4, scoped, tag = 'scoped memory for autoencoder_forward.1']
    %16 = vsyncpa [#allocation3], 0
    // Predicated region
    $region2: #{autoencoder_forward.1} parent=1 // pred_check
      _
    $region3: #{autoencoder_forward.1} parent=1 // pred_check_branch
      %18 = sbr.rel (0) target = $region5
    $region4: #{autoencoder_forward.1} parent=1 // pred_region
      _
    $region5: #{autoencoder_forward.1} parent=1 // pred_fallthru
      _
    // Predicated region
    $region6: #{autoencoder_forward.1} parent=1 // pred_check
      _
    $region7: #{autoencoder_forward.1} parent=1 // pred_check_branch
      %20 = sbr.rel (0) target = $region9
    $region8: #{autoencoder_forward.1} parent=1 // pred_region
      %s22 = ssub.s32 89600, 89600
      %23 = vsyncadd [#allocation3], %s22
      %s24 = sshll.u32 [#allocation2], 4
      %s25 = int_to_ptr.vmem [resolvable:$true] %s24
      %30 = dma.hbm_to_vmem [thread:$0]  %s1, 89600, %s25, [#allocation3], 896, 896, 56
    $region9: #{autoencoder_forward.1} parent=1 // pred_fallthru
      _
    // Predicated region
    $region10: #{autoencoder_forward.1} parent=1 // pred_check
      _
    $region11: #{autoencoder_forward.1} parent=1 // pred_check_branch
      %32 = sbr.rel (0) target = $region13
    $region12: #{autoencoder_forward.1} parent=1 // pred_region
      _
    $region13: #{autoencoder_forward.1} parent=1 // pred_fallthru
      _
    // Predicated region
    $region14: #{autoencoder_forward.1} parent=1 // pred_check
      _
    $region15: #{autoencoder_forward.1} parent=1 // pred_check_branch
      %34 = sbr.rel (0) target = $region17
    $region16: #{autoencoder_forward.1} parent=1 // pred_region
      _
    $region17: #{autoencoder_forward.1} parent=1 // pred_fallthru
      _
    // Predicated region
    $region18: #{autoencoder_forward.1} parent=1 // pred_check
      _
    $region19: #{autoencoder_forward.1} parent=1 // pred_check_branch
      %36 = sbr.rel (0) target = $region21
    $region20: #{autoencoder_forward.1} parent=1 // pred_region
      _
    $region21: #{autoencoder_forward.1} parent=1 // pred_fallthru
      _
    // Predicated region
    $region22: #{autoencoder_forward.1} parent=1 // pred_check
      _
    $region23: #{autoencoder_forward.1} parent=1 // pred_check_branch
      %38 = sbr.rel (0) target = $region25
    $region24: #{autoencoder_forward.1} parent=1 // pred_region
      _
    $region25: #{autoencoder_forward.1} parent=1 // pred_fallthru
      _
    // Predicated region
    $region26: #{autoencoder_forward.1} parent=1 // pred_check
      _
    $region27: #{autoencoder_forward.1} parent=1 // pred_check_branch
      %40 = sbr.rel (0) target = $region29
    $region28: #{autoencoder_forward.1} parent=1 // pred_region
      _
    $region29: #{autoencoder_forward.1} parent=1 // pred_fallthru
      _
    // Predicated region
    $region30: #{autoencoder_forward.1} parent=1 // pred_check
      _
    $region31: #{autoencoder_forward.1} parent=1 // pred_check_branch
      %42 = sbr.rel (0) target = $region33
    $region32: #{autoencoder_forward.1} parent=1 // pred_region
      _
    $region33: #{autoencoder_forward.1} parent=1 // pred_fallthru
      _
    // Predicated region
    $region34: #{autoencoder_forward.1} parent=1 // pred_check
      _
    $region35: #{autoencoder_forward.1} parent=1 // pred_check_branch
      %44 = sbr.rel (0) target = $region37
    $region36: #{autoencoder_forward.1} parent=1 // pred_region
      _
    $region37: #{autoencoder_forward.1} parent=1 // pred_fallthru
      _
    // Predicated region
    $region38: #{autoencoder_forward.1} parent=1 // pred_check
      _
    $region39: #{autoencoder_forward.1} parent=1 // pred_check_branch
      %46 = sbr.rel (0) target = $region41
    $region40: #{autoencoder_forward.1} parent=1 // pred_region
      _
    $region41: #{autoencoder_forward.1} parent=1 // pred_fallthru
      _
    // Predicated region
    $region42: #{autoencoder_forward.1} parent=1 // pred_check
      _
    $region43: #{autoencoder_forward.1} parent=1 // pred_check_branch
      %48 = sbr.rel (0) target = $region45
    $region44: #{autoencoder_forward.1} parent=1 // pred_region
      _
    $region45: #{autoencoder_forward.1} parent=1 // pred_fallthru
      _
    // Predicated region
    $region46: #{autoencoder_forward.1} parent=1 // pred_check
      _
    $region47: #{autoencoder_forward.1} parent=1 // pred_check_branch
      %50 = sbr.rel (0) target = $region49
    $region48: #{autoencoder_forward.1} parent=1 // pred_region
      %51 = dma.done [#allocation3], 89600
    $region49: #{autoencoder_forward.1} parent=1 // pred_fallthru
      _
    %v52 = vld [vmem:[%s0] sm:$0xff]
    %v53 = vld [vmem:[%s0 + $0x8] sm:$0xff]
    %v54 = vld [vmem:[%s0 + $0x10] sm:$0xff]
    %v55 = vld [vmem:[%s0 + $0x18] sm:$0xff]
    %v56 = vld [vmem:[%s0 + $0x20] sm:$0xff]
    %v57 = vld [vmem:[%s0 + $0x28] sm:$0xff]
    %v58 = vld [vmem:[%s0 + $0x30] sm:$0xff]
    %v59 = vld [vmem:[%s0 + $0x38] sm:$0xff]
    %v60 = vld [vmem:[%s0 + $0x40] sm:$0xff]
    %v61 = vld [vmem:[%s0 + $0x48] sm:$0xff]
    %v62 = vld [vmem:[%s0 + $0x50] sm:$0xff]
    %v63 = vld [vmem:[%s0 + $0x58] sm:$0xff]
    %v64 = vld [vmem:[%s0 + $0x60] sm:$0xff]
    %v65 = vld [vmem:[%s0 + $0x68] sm:$0xff]
    %v66 = vld [vmem:[%s0 + $0x70] sm:$0xff]
    %v67 = vld [vmem:[%s0 + $0x78] sm:$0xff]
    %v68 = vld [vmem:[%s0 + $0x80] sm:$0xff]
    %v69 = vld [vmem:[%s0 + $0x88] sm:$0xff]
    %v70 = vld [vmem:[%s0 + $0x90] sm:$0xff]
    %v71 = vld [vmem:[%s0 + $0x98] sm:$0xff]
    %v72 = vld [vmem:[%s0 + $0xa0] sm:$0xff]
    %v73 = vld [vmem:[%s0 + $0xa8] sm:$0xff]
    %v74 = vld [vmem:[%s0 + $0xb0] sm:$0xff]
    %v75 = vld [vmem:[%s0 + $0xb8] sm:$0xff]
    %v76 = vld [vmem:[%s0 + $0xc0] sm:$0xff]
    %v77 = vld [vmem:[%s0 + $0xc8] sm:$0xff]
    %v78 = vld [vmem:[%s0 + $0xd0] sm:$0xff]
    %v79 = vld [vmem:[%s0 + $0xd8] sm:$0xff]
    %v80 = vld [vmem:[%s0 + $0xe0] sm:$0xff]
    %v81 = vld [vmem:[%s0 + $0xe8] sm:$0xff]
    %v82 = vld [vmem:[%s0 + $0xf0] sm:$0xff]
    %v83 = vld [vmem:[%s0 + $0xf8] sm:$0xff]
    %v84 = vld [vmem:[%s0 + $0x100] sm:$0xff]
    %v85 = vld [vmem:[%s0 + $0x108] sm:$0xff]
    %v86 = vld [vmem:[%s0 + $0x110] sm:$0xff]
    %v87 = vld [vmem:[%s0 + $0x118] sm:$0xff]
    %v88 = vld [vmem:[%s0 + $0x120] sm:$0xff]
    %v89 = vld [vmem:[%s0 + $0x128] sm:$0xff]
    %v90 = vld [vmem:[%s0 + $0x130] sm:$0xff]
    %v91 = vld [vmem:[%s0 + $0x138] sm:$0xff]
    %v92 = vld [vmem:[%s0 + $0x140] sm:$0xff]
    %v93 = vld [vmem:[%s0 + $0x148] sm:$0xff]
    %v94 = vld [vmem:[%s0 + $0x150] sm:$0xff]
    %v95 = vld [vmem:[%s0 + $0x158] sm:$0xff]
    %v96 = vld [vmem:[%s0 + $0x160] sm:$0xff]
    %v97 = vld [vmem:[%s0 + $0x168] sm:$0xff]
    %v98 = vld [vmem:[%s0 + $0x170] sm:$0xff]
    %v99 = vld [vmem:[%s0 + $0x178] sm:$0xff]
    %v100 = vld [vmem:[%s0 + $0x180] sm:$0xff]
    %v101 = vld [vmem:[%s0 + $0x188] sm:$0xff]
    %v102 = vld [vmem:[%s0 + $0x190] sm:$0xff]
    %v103 = vld [vmem:[%s0 + $0x198] sm:$0xff]
    %v104 = vld [vmem:[%s0 + $0x1a0] sm:$0xff]
    %v105 = vld [vmem:[%s0 + $0x1a8] sm:$0xff]
    %v106 = vld [vmem:[%s0 + $0x1b0] sm:$0xff]
    %v107 = vld [vmem:[%s0 + $0x1b8] sm:$0xff]
    %v108 = vld [vmem:[%s0 + $0x1c0] sm:$0xff]
    %v109 = vld [vmem:[%s0 + $0x1c8] sm:$0xff]
    %v110 = vld [vmem:[%s0 + $0x1d0] sm:$0xff]
    %v111 = vld [vmem:[%s0 + $0x1d8] sm:$0xff]
    %v112 = vld [vmem:[%s0 + $0x1e0] sm:$0xff]
    %v113 = vld [vmem:[%s0 + $0x1e8] sm:$0xff]
    %v114 = vld [vmem:[%s0 + $0x1f0] sm:$0xff]
    %v115 = vld [vmem:[%s0 + $0x1f8] sm:$0xff]
    %v116 = vld [vmem:[%s0 + $0x200] sm:$0xff]
    %v117 = vld [vmem:[%s0 + $0x208] sm:$0xff]
    %v118 = vld [vmem:[%s0 + $0x210] sm:$0xff]
    %v119 = vld [vmem:[%s0 + $0x218] sm:$0xff]
    %v120 = vld [vmem:[%s0 + $0x220] sm:$0xff]
    %v121 = vld [vmem:[%s0 + $0x228] sm:$0xff]
    %v122 = vld [vmem:[%s0 + $0x230] sm:$0xff]
    %v123 = vld [vmem:[%s0 + $0x238] sm:$0xff]
    %v124 = vld [vmem:[%s0 + $0x240] sm:$0xff]
    %v125 = vld [vmem:[%s0 + $0x248] sm:$0xff]
    %v126 = vld [vmem:[%s0 + $0x250] sm:$0xff]
    %v127 = vld [vmem:[%s0 + $0x258] sm:$0xff]
    %v128 = vld [vmem:[%s0 + $0x260] sm:$0xff]
    %v129 = vld [vmem:[%s0 + $0x268] sm:$0xff]
    %v130 = vld [vmem:[%s0 + $0x270] sm:$0xff]
    %v131 = vld [vmem:[%s0 + $0x278] sm:$0xff]
    %v132 = vld [vmem:[%s0 + $0x280] sm:$0xff]
    %v133 = vld [vmem:[%s0 + $0x288] sm:$0xff]
    %v134 = vld [vmem:[%s0 + $0x290] sm:$0xff]
    %v135 = vld [vmem:[%s0 + $0x298] sm:$0xff]
    %v136 = vld [vmem:[%s0 + $0x2a0] sm:$0xff]
    %v137 = vld [vmem:[%s0 + $0x2a8] sm:$0xff]
    %v138 = vld [vmem:[%s0 + $0x2b0] sm:$0xff]
    %v139 = vld [vmem:[%s0 + $0x2b8] sm:$0xff]
    %v140 = vld [vmem:[%s0 + $0x2c0] sm:$0xff]
    %v141 = vld [vmem:[%s0 + $0x2c8] sm:$0xff]
    %v142 = vld [vmem:[%s0 + $0x2d0] sm:$0xff]
    %v143 = vld [vmem:[%s0 + $0x2d8] sm:$0xff]
    %v144 = vld [vmem:[%s0 + $0x2e0] sm:$0xff]
    %v145 = vld [vmem:[%s0 + $0x2e8] sm:$0xff]
    %v146 = vld [vmem:[%s0 + $0x2f0] sm:$0xff]
    %v147 = vld [vmem:[%s0 + $0x2f8] sm:$0xff]
    %v148 = vld [vmem:[%s0 + $0x300] sm:$0xff]
    %v149 = vld [vmem:[%s0 + $0x308] sm:$0xff]
    %v150 = vld [vmem:[#allocation2] sm:$0xff]
    %v151 = vld [vmem:[#allocation2 + $0x8] sm:$0xff]
    %v152 = vld [vmem:[#allocation2 + $0x10] sm:$0xff]
    %v153 = vld [vmem:[#allocation2 + $0x18] sm:$0xff]
    %v154 = vld [vmem:[#allocation2 + $0x20] sm:$0xff]
    %v155 = vld [vmem:[#allocation2 + $0x28] sm:$0xff]
    %v156 = vld [vmem:[#allocation2 + $0x30] sm:$0xff]
    %v157 = vld [vmem:[#allocation2 + $0x38] sm:$0xff]
    %v158 = vld [vmem:[#allocation2 + $0x40] sm:$0xff]
    %v159 = vld [vmem:[#allocation2 + $0x48] sm:$0xff]
    %v160 = vld [vmem:[#allocation2 + $0x50] sm:$0xff]
    %v161 = vld [vmem:[#allocation2 + $0x58] sm:$0xff]
    %v162 = vld [vmem:[#allocation2 + $0x60] sm:$0xff]
    %v163 = vld [vmem:[#allocation2 + $0x68] sm:$0xff]
    %v164 = vld [vmem:[#allocation2 + $0x70] sm:$0xff]
    %v165 = vld [vmem:[#allocation2 + $0x78] sm:$0xff]
    %v166 = vld [vmem:[#allocation2 + $0x80] sm:$0xff]
    %v167 = vld [vmem:[#allocation2 + $0x88] sm:$0xff]
    %v168 = vld [vmem:[#allocation2 + $0x90] sm:$0xff]
    %v169 = vld [vmem:[#allocation2 + $0x98] sm:$0xff]
    %v170 = vld [vmem:[#allocation2 + $0xa0] sm:$0xff]
    %v171 = vld [vmem:[#allocation2 + $0xa8] sm:$0xff]
    %v172 = vld [vmem:[#allocation2 + $0xb0] sm:$0xff]
    %v173 = vld [vmem:[#allocation2 + $0xb8] sm:$0xff]
    %v174 = vld [vmem:[#allocation2 + $0xc0] sm:$0xff]
    %v175 = vld [vmem:[#allocation2 + $0xc8] sm:$0xff]
    %v176 = vld [vmem:[#allocation2 + $0xd0] sm:$0xff]
    %v177 = vld [vmem:[#allocation2 + $0xd8] sm:$0xff]
    %v178 = vld [vmem:[#allocation2 + $0xe0] sm:$0xff]
    %v179 = vld [vmem:[#allocation2 + $0xe8] sm:$0xff]
    %v180 = vld [vmem:[#allocation2 + $0xf0] sm:$0xff]
    %v181 = vld [vmem:[#allocation2 + $0xf8] sm:$0xff]
    %v182 = vld [vmem:[#allocation2 + $0x100] sm:$0xff]
    %v183 = vld [vmem:[#allocation2 + $0x108] sm:$0xff]
    %v184 = vld [vmem:[#allocation2 + $0x110] sm:$0xff]
    %v185 = vld [vmem:[#allocation2 + $0x118] sm:$0xff]
    %v186 = vld [vmem:[#allocation2 + $0x120] sm:$0xff]
    %v187 = vld [vmem:[#allocation2 + $0x128] sm:$0xff]
    %v188 = vld [vmem:[#allocation2 + $0x130] sm:$0xff]
    %v189 = vld [vmem:[#allocation2 + $0x138] sm:$0xff]
    %v190 = vld [vmem:[#allocation2 + $0x140] sm:$0xff]
    %v191 = vld [vmem:[#allocation2 + $0x148] sm:$0xff]
    %v192 = vld [vmem:[#allocation2 + $0x150] sm:$0xff]
    %v193 = vld [vmem:[#allocation2 + $0x158] sm:$0xff]
    %v194 = vld [vmem:[#allocation2 + $0x160] sm:$0xff]
    %v195 = vld [vmem:[#allocation2 + $0x168] sm:$0xff]
    %v196 = vld [vmem:[#allocation2 + $0x170] sm:$0xff]
    %v197 = vld [vmem:[#allocation2 + $0x178] sm:$0xff]
    %v198 = vld [vmem:[#allocation2 + $0x180] sm:$0xff]
    %v199 = vld [vmem:[#allocation2 + $0x188] sm:$0xff]
    %v200 = vld [vmem:[#allocation2 + $0x190] sm:$0xff]
    %v201 = vld [vmem:[#allocation2 + $0x198] sm:$0xff]
    %v202 = vld [vmem:[#allocation2 + $0x1a0] sm:$0xff]
    %v203 = vld [vmem:[#allocation2 + $0x1a8] sm:$0xff]
    %v204 = vld [vmem:[#allocation2 + $0x1b0] sm:$0xff]
    %v205 = vld [vmem:[#allocation2 + $0x1b8] sm:$0xff]
    %v206 = vld [vmem:[#allocation2 + $0x1c0] sm:$0xff]
    %v207 = vld [vmem:[#allocation2 + $0x1c8] sm:$0xff]
    %v208 = vld [vmem:[#allocation2 + $0x1d0] sm:$0xff]
    %v209 = vld [vmem:[#allocation2 + $0x1d8] sm:$0xff]
    %v210 = vld [vmem:[#allocation2 + $0x1e0] sm:$0xff]
    %v211 = vld [vmem:[#allocation2 + $0x1e8] sm:$0xff]
    %v212 = vld [vmem:[#allocation2 + $0x1f0] sm:$0xff]
    %v213 = vld [vmem:[#allocation2 + $0x1f8] sm:$0xff]
    %v214 = vld [vmem:[#allocation2 + $0x200] sm:$0xff]
    %v215 = vld [vmem:[#allocation2 + $0x208] sm:$0xff]
    %v216 = vld [vmem:[#allocation2 + $0x210] sm:$0xff]
    %v217 = vld [vmem:[#allocation2 + $0x218] sm:$0xff]
    %v218 = vld [vmem:[#allocation2 + $0x220] sm:$0xff]
    %v219 = vld [vmem:[#allocation2 + $0x228] sm:$0xff]
    %v220 = vld [vmem:[#allocation2 + $0x230] sm:$0xff]
    %v221 = vld [vmem:[#allocation2 + $0x238] sm:$0xff]
    %v222 = vld [vmem:[#allocation2 + $0x240] sm:$0xff]
    %v223 = vld [vmem:[#allocation2 + $0x248] sm:$0xff]
    %v224 = vld [vmem:[#allocation2 + $0x250] sm:$0xff]
    %v225 = vld [vmem:[#allocation2 + $0x258] sm:$0xff]
    %v226 = vld [vmem:[#allocation2 + $0x260] sm:$0xff]
    %v227 = vld [vmem:[#allocation2 + $0x268] sm:$0xff]
    %v228 = vld [vmem:[#allocation2 + $0x270] sm:$0xff]
    %v229 = vld [vmem:[#allocation2 + $0x278] sm:$0xff]
    %v230 = vld [vmem:[#allocation2 + $0x280] sm:$0xff]
    %v231 = vld [vmem:[#allocation2 + $0x288] sm:$0xff]
    %v232 = vld [vmem:[#allocation2 + $0x290] sm:$0xff]
    %v233 = vld [vmem:[#allocation2 + $0x298] sm:$0xff]
    %v234 = vld [vmem:[#allocation2 + $0x2a0] sm:$0xff]
    %v235 = vld [vmem:[#allocation2 + $0x2a8] sm:$0xff]
    %v236 = vld [vmem:[#allocation2 + $0x2b0] sm:$0xff]
    %v237 = vld [vmem:[#allocation2 + $0x2b8] sm:$0xff]
    %v238 = vld [vmem:[#allocation2 + $0x2c0] sm:$0xff]
    %v239 = vld [vmem:[#allocation2 + $0x2c8] sm:$0xff]
    %v240 = vld [vmem:[#allocation2 + $0x2d0] sm:$0xff]
    %v241 = vld [vmem:[#allocation2 + $0x2d8] sm:$0xff]
    %v242 = vld [vmem:[#allocation2 + $0x2e0] sm:$0xff]
    %v243 = vld [vmem:[#allocation2 + $0x2e8] sm:$0xff]
    %v244 = vld [vmem:[#allocation2 + $0x2f0] sm:$0xff]
    %v245 = vld [vmem:[#allocation2 + $0x2f8] sm:$0xff]
    %v246 = vld [vmem:[#allocation2 + $0x300] sm:$0xff]
    %v247 = vld [vmem:[#allocation2 + $0x308] sm:$0xff]
    %v248 = vld [vmem:[#allocation2 + $0x310] sm:$0xff]
    %v249 = vld [vmem:[#allocation2 + $0x318] sm:$0xff]
    %v250 = vld [vmem:[#allocation2 + $0x320] sm:$0xff]
    %v251 = vld [vmem:[#allocation2 + $0x328] sm:$0xff]
    %v252 = vld [vmem:[#allocation2 + $0x330] sm:$0xff]
    %v253 = vld [vmem:[#allocation2 + $0x338] sm:$0xff]
    %v254 = vld [vmem:[#allocation2 + $0x340] sm:$0xff]
    %v255 = vld [vmem:[#allocation2 + $0x348] sm:$0xff]
    %v256 = vld [vmem:[#allocation2 + $0x350] sm:$0xff]
    %v257 = vld [vmem:[#allocation2 + $0x358] sm:$0xff]
    %v258 = vld [vmem:[#allocation2 + $0x360] sm:$0xff]
    %v259 = vld [vmem:[#allocation2 + $0x368] sm:$0xff]
    %v260 = vld [vmem:[#allocation2 + $0x370] sm:$0xff]
    %v261 = vld [vmem:[#allocation2 + $0x378] sm:$0xff]
    %v262 = vld [vmem:[#allocation2 + $0x380] sm:$0xff]
    %v263 = vld [vmem:[#allocation2 + $0x388] sm:$0xff]
    %v264 = vld [vmem:[#allocation2 + $0x390] sm:$0xff]
    %v265 = vld [vmem:[#allocation2 + $0x398] sm:$0xff]
    %v266 = vld [vmem:[#allocation2 + $0x3a0] sm:$0xff]
    %v267 = vld [vmem:[#allocation2 + $0x3a8] sm:$0xff]
    %v268 = vld [vmem:[#allocation2 + $0x3b0] sm:$0xff]
    %v269 = vld [vmem:[#allocation2 + $0x3b8] sm:$0xff]
    %v270 = vld [vmem:[#allocation2 + $0x3c0] sm:$0xff]
    %v271 = vld [vmem:[#allocation2 + $0x3c8] sm:$0xff]
    %v272 = vld [vmem:[#allocation2 + $0x3d0] sm:$0xff]
    %v273 = vld [vmem:[#allocation2 + $0x3d8] sm:$0xff]
    %v274 = vld [vmem:[#allocation2 + $0x3e0] sm:$0xff]
    %v275 = vld [vmem:[#allocation2 + $0x3e8] sm:$0xff]
    %v276 = vld [vmem:[#allocation2 + $0x3f0] sm:$0xff]
    %v277 = vld [vmem:[#allocation2 + $0x3f8] sm:$0xff]
    %v278 = vld [vmem:[#allocation2 + $0x400] sm:$0xff]
    %v279 = vld [vmem:[#allocation2 + $0x408] sm:$0xff]
    %v280 = vld [vmem:[#allocation2 + $0x410] sm:$0xff]
    %v281 = vld [vmem:[#allocation2 + $0x418] sm:$0xff]
    %v282 = vld [vmem:[#allocation2 + $0x420] sm:$0xff]
    %v283 = vld [vmem:[#allocation2 + $0x428] sm:$0xff]
    %v284 = vld [vmem:[#allocation2 + $0x430] sm:$0xff]
    %v285 = vld [vmem:[#allocation2 + $0x438] sm:$0xff]
    %v286 = vld [vmem:[#allocation2 + $0x440] sm:$0xff]
    %v287 = vld [vmem:[#allocation2 + $0x448] sm:$0xff]
    %v288 = vld [vmem:[#allocation2 + $0x450] sm:$0xff]
    %v289 = vld [vmem:[#allocation2 + $0x458] sm:$0xff]
    %v290 = vld [vmem:[#allocation2 + $0x460] sm:$0xff]
    %v291 = vld [vmem:[#allocation2 + $0x468] sm:$0xff]
    %v292 = vld [vmem:[#allocation2 + $0x470] sm:$0xff]
    %v293 = vld [vmem:[#allocation2 + $0x478] sm:$0xff]
    %v294 = vld [vmem:[#allocation2 + $0x480] sm:$0xff]
    %v295 = vld [vmem:[#allocation2 + $0x488] sm:$0xff]
    %v296 = vld [vmem:[#allocation2 + $0x490] sm:$0xff]
    %v297 = vld [vmem:[#allocation2 + $0x498] sm:$0xff]
    %v298 = vld [vmem:[#allocation2 + $0x4a0] sm:$0xff]
    %v299 = vld [vmem:[#allocation2 + $0x4a8] sm:$0xff]
    %v300 = vld [vmem:[#allocation2 + $0x4b0] sm:$0xff]
    %v301 = vld [vmem:[#allocation2 + $0x4b8] sm:$0xff]
    %v302 = vld [vmem:[#allocation2 + $0x4c0] sm:$0xff]
    %v303 = vld [vmem:[#allocation2 + $0x4c8] sm:$0xff]
    %v304 = vld [vmem:[#allocation2 + $0x4d0] sm:$0xff]
    %v305 = vld [vmem:[#allocation2 + $0x4d8] sm:$0xff]
    %v306 = vld [vmem:[#allocation2 + $0x4e0] sm:$0xff]
    %v307 = vld [vmem:[#allocation2 + $0x4e8] sm:$0xff]
    %v308 = vld [vmem:[#allocation2 + $0x4f0] sm:$0xff]
    %v309 = vld [vmem:[#allocation2 + $0x4f8] sm:$0xff]
    %v310 = vld [vmem:[#allocation2 + $0x500] sm:$0xff]
    %v311 = vld [vmem:[#allocation2 + $0x508] sm:$0xff]
    %v312 = vld [vmem:[#allocation2 + $0x510] sm:$0xff]
    %v313 = vld [vmem:[#allocation2 + $0x518] sm:$0xff]
    %v314 = vld [vmem:[#allocation2 + $0x520] sm:$0xff]
    %v315 = vld [vmem:[#allocation2 + $0x528] sm:$0xff]
    %v316 = vld [vmem:[#allocation2 + $0x530] sm:$0xff]
    %v317 = vld [vmem:[#allocation2 + $0x538] sm:$0xff]
    %v318 = vld [vmem:[#allocation2 + $0x540] sm:$0xff]
    %v319 = vld [vmem:[#allocation2 + $0x548] sm:$0xff]
    %v320 = vld [vmem:[#allocation2 + $0x550] sm:$0xff]
    %v321 = vld [vmem:[#allocation2 + $0x558] sm:$0xff]
    %v322 = vld [vmem:[#allocation2 + $0x560] sm:$0xff]
    %v323 = vld [vmem:[#allocation2 + $0x568] sm:$0xff]
    %v324 = vld [vmem:[#allocation2 + $0x570] sm:$0xff]
    %vm325 = vcmask 130048
    %v327 = vsel %vm325, %v156, 0
    %v330 = vsel %vm325, %v163, 0
    %v333 = vsel %vm325, %v170, 0
    %v336 = vsel %vm325, %v177, 0
    %v339 = vsel %vm325, %v184, 0
    %v342 = vsel %vm325, %v191, 0
    %v345 = vsel %vm325, %v198, 0
    %v348 = vsel %vm325, %v205, 0
    %v351 = vsel %vm325, %v212, 0
    %v354 = vsel %vm325, %v219, 0
    %v357 = vsel %vm325, %v226, 0
    %v360 = vsel %vm325, %v233, 0
    %v363 = vsel %vm325, %v240, 0
    %v366 = vsel %vm325, %v247, 0
    %v369 = vsel %vm325, %v254, 0
    %v372 = vsel %vm325, %v261, 0
    %v375 = vsel %vm325, %v268, 0
    %v378 = vsel %vm325, %v275, 0
    %v381 = vsel %vm325, %v282, 0
    %v384 = vsel %vm325, %v289, 0
    %v387 = vsel %vm325, %v296, 0
    %v390 = vsel %vm325, %v303, 0
    %v393 = vsel %vm325, %v310, 0
    %v396 = vsel %vm325, %v317, 0
    %v399 = vsel %vm325, %v324, 0
    %401 = vmatprep.subr.mxu0 0.0
    %402 = vmatpush1.msra.mxu0 %v52
    %403 = vmatprep.subr.mxu0 0.0
    %404 = vmatpush1.msra.mxu0 %v53
    %405 = vmatprep.subr.mxu0 0.0
    %406 = vmatpush1.msra.mxu0 %v54
    %407 = vmatprep.subr.mxu0 0.0
    %408 = vmatpush1.msra.mxu0 %v55
    %409 = vmatprep.subr.mxu0 0.0
    %410 = vmatpush1.msra.mxu0 %v56
    %411 = vmatprep.subr.mxu0 0.0
    %412 = vmatpush1.msra.mxu0 %v57
    %413 = vmatprep.subr.mxu0 0.0
    %414 = vmatpush1.msra.mxu0 %v58
    %415 = vmatprep.subr.mxu0 0.0
    %416 = vmatpush1.msra.mxu0 %v59
    %417 = vmatprep.subr.mxu0 0.0
    %418 = vmatpush1.msra.mxu0 %v60
    %419 = vmatprep.subr.mxu0 0.0
    %420 = vmatpush1.msra.mxu0 %v61
    %421 = vmatprep.subr.mxu0 0.0
    %422 = vmatpush1.msra.mxu0 %v62
    %423 = vmatprep.subr.mxu0 0.0
    %424 = vmatpush1.msra.mxu0 %v63
    %425 = vmatprep.subr.mxu0 0.0
    %426 = vmatpush1.msra.mxu0 %v64
    %427 = vmatprep.subr.mxu0 0.0
    %428 = vmatpush1.msra.mxu0 %v65
    %429 = vmatprep.subr.mxu0 0.0
    %430 = vmatpush1.msra.mxu0 %v66
    %431 = vmatprep.subr.mxu0 0.0
    %432 = vmatpush1.msra.mxu0 %v67
    %433 = vmatprep.subr.mxu0 0.0
    %434 = vmatpush1.msra.mxu0 %v68
    %435 = vmatprep.subr.mxu0 0.0
    %436 = vmatpush1.msra.mxu0 %v69
    %437 = vmatprep.subr.mxu0 0.0
    %438 = vmatpush1.msra.mxu0 %v70
    %439 = vmatprep.subr.mxu0 0.0
    %440 = vmatpush1.msra.mxu0 %v71
    %441 = vmatprep.subr.mxu0 0.0
    %442 = vmatpush1.msra.mxu0 %v72
    %443 = vmatprep.subr.mxu0 0.0
    %444 = vmatpush1.msra.mxu0 %v73
    %445 = vmatprep.subr.mxu0 0.0
    %446 = vmatpush1.msra.mxu0 %v74
    %447 = vmatprep.subr.mxu0 0.0
    %448 = vmatpush1.msra.mxu0 %v75
    %449 = vmatprep.subr.mxu0 0.0
    %450 = vmatpush1.msra.mxu0 %v76
    %451 = vmatprep.subr.mxu0 0.0
    %452 = vmatpush1.msra.mxu0 %v77
    %453 = vmatprep.subr.mxu0 0.0
    %454 = vmatpush1.msra.mxu0 %v78
    %455 = vmatprep.subr.mxu0 0.0
    %456 = vmatpush1.msra.mxu0 %v79
    %457 = vmatprep.subr.mxu0 0.0
    %458 = vmatpush1.msra.mxu0 %v80
    %459 = vmatprep.subr.mxu0 0.0
    %460 = vmatpush1.msra.mxu0 %v81
    %461 = vmatprep.subr.mxu0 0.0
    %462 = vmatpush1.msra.mxu0 %v82
    %463 = vmatprep.subr.mxu0 0.0
    %464 = vmatpush1.msra.mxu0 %v83
    %465 = vmatprep.mubr.f32.mxu0 %v151
    %466 = vmatmul.mubr.f32.gmra.mrb[0].mxu0 %v150
    %v467 = vpop.f32.mrb[0].mxu0
    %v468 = vadd.f32 0.0, %v467
    %v469 = vpop.f32.mrb[0].mxu0
    %470 = vmatprep.mubr.f32.mxu0 %v158
    %471 = vmatmul.mubr.f32.gmra.mrb[0].mxu0 %v157
    %v472 = vpop.f32.mrb[0].mxu0
    %v473 = vadd.f32 0.0, %v472
    %v474 = vpop.f32.mrb[0].mxu0
    %475 = vmatprep.mubr.f32.mxu0 %v165
    %476 = vmatmul.mubr.f32.gmra.mrb[0].mxu0 %v164
    %v477 = vpop.f32.mrb[0].mxu0
    %v478 = vadd.f32 0.0, %v477
    %v479 = vpop.f32.mrb[0].mxu0
    %480 = vmatprep.mubr.f32.mxu0 %v172
    %481 = vmatmul.mubr.f32.gmra.mrb[0].mxu0 %v171
    %v482 = vpop.f32.mrb[0].mxu0
    %v483 = vadd.f32 0.0, %v482
    %v484 = vpop.f32.mrb[0].mxu0
    %485 = vmatprep.mubr.f32.mxu0 %v179
    %486 = vmatmul.mubr.f32.gmra.mrb[0].mxu0 %v178
    %v487 = vpop.f32.mrb[0].mxu0
    %v488 = vadd.f32 0.0, %v487
    %v489 = vpop.f32.mrb[0].mxu0
    %490 = vmatprep.mubr.f32.mxu0 %v186
    %491 = vmatmul.mubr.f32.gmra.mrb[0].mxu0 %v185
    %v492 = vpop.f32.mrb[0].mxu0
    %v493 = vadd.f32 0.0, %v492
    %v494 = vpop.f32.mrb[0].mxu0
    %495 = vmatprep.mubr.f32.mxu0 %v193
    %496 = vmatmul.mubr.f32.gmra.mrb[0].mxu0 %v192
    %v497 = vpop.f32.mrb[0].mxu0
    %v498 = vadd.f32 0.0, %v497
    %v499 = vpop.f32.mrb[0].mxu0
    %500 = vmatprep.mubr.f32.mxu0 %v200
    %501 = vmatmul.mubr.f32.gmra.mrb[0].mxu0 %v199
    %v502 = vpop.f32.mrb[0].mxu0
    %v503 = vadd.f32 0.0, %v502
    %v504 = vpop.f32.mrb[0].mxu0
    %505 = vmatprep.mubr.f32.mxu0 %v207
    %506 = vmatmul.mubr.f32.gmra.mrb[0].mxu0 %v206
    %v507 = vpop.f32.mrb[0].mxu0
    %v508 = vadd.f32 0.0, %v507
    %v509 = vpop.f32.mrb[0].mxu0
    %510 = vmatprep.mubr.f32.mxu0 %v214
    %511 = vmatmul.mubr.f32.gmra.mrb[0].mxu0 %v213
    %v512 = vpop.f32.mrb[0].mxu0
    %v513 = vadd.f32 0.0, %v512
    %v514 = vpop.f32.mrb[0].mxu0
    %515 = vmatprep.mubr.f32.mxu0 %v221
    %516 = vmatmul.mubr.f32.gmra.mrb[0].mxu0 %v220
    %v517 = vpop.f32.mrb[0].mxu0
    %v518 = vadd.f32 0.0, %v517
    %v519 = vpop.f32.mrb[0].mxu0
    %520 = vmatprep.mubr.f32.mxu0 %v228
    %521 = vmatmul.mubr.f32.gmra.mrb[0].mxu0 %v227
    %v522 = vpop.f32.mrb[0].mxu0
    %v523 = vadd.f32 0.0, %v522
    %v524 = vpop.f32.mrb[0].mxu0
    %525 = vmatprep.mubr.f32.mxu0 %v235
    %526 = vmatmul.mubr.f32.gmra.mrb[0].mxu0 %v234
    %v527 = vpop.f32.mrb[0].mxu0
    %v528 = vadd.f32 0.0, %v527
    %v529 = vpop.f32.mrb[0].mxu0
    %530 = vmatprep.mubr.f32.mxu0 %v242
    %531 = vmatmul.mubr.f32.gmra.mrb[0].mxu0 %v241
    %v532 = vpop.f32.mrb[0].mxu0
    %v533 = vadd.f32 0.0, %v532
    %v534 = vpop.f32.mrb[0].mxu0
    %535 = vmatprep.mubr.f32.mxu0 %v249
    %536 = vmatmul.mubr.f32.gmra.mrb[0].mxu0 %v248
    %v537 = vpop.f32.mrb[0].mxu0
    %v538 = vadd.f32 0.0, %v537
    %v539 = vpop.f32.mrb[0].mxu0
    %540 = vmatprep.mubr.f32.mxu0 %v256
    %541 = vmatmul.mubr.f32.gmra.mrb[0].mxu0 %v255
    %v542 = vpop.f32.mrb[0].mxu0
    %v543 = vadd.f32 0.0, %v542
    %v544 = vpop.f32.mrb[0].mxu0
    %545 = vmatprep.mubr.f32.mxu0 %v263
    %546 = vmatmul.mubr.f32.gmra.mrb[0].mxu0 %v262
    %v547 = vpop.f32.mrb[0].mxu0
    %v548 = vadd.f32 0.0, %v547
    %v549 = vpop.f32.mrb[0].mxu0
    %550 = vmatprep.mubr.f32.mxu0 %v270
    %551 = vmatmul.mubr.f32.gmra.mrb[0].mxu0 %v269
    %v552 = vpop.f32.mrb[0].mxu0
    %v553 = vadd.f32 0.0, %v552
    %v554 = vpop.f32.mrb[0].mxu0
    %555 = vmatprep.mubr.f32.mxu0 %v277
    %556 = vmatmul.mubr.f32.gmra.mrb[0].mxu0 %v276
    %v557 = vpop.f32.mrb[0].mxu0
    %v558 = vadd.f32 0.0, %v557
    %v559 = vpop.f32.mrb[0].mxu0
    %560 = vmatprep.mubr.f32.mxu0 %v284
    %561 = vmatmul.mubr.f32.gmra.mrb[0].mxu0 %v283
    %v562 = vpop.f32.mrb[0].mxu0
    %v563 = vadd.f32 0.0, %v562
    %v564 = vpop.f32.mrb[0].mxu0
    %565 = vmatprep.mubr.f32.mxu0 %v291
    %566 = vmatmul.mubr.f32.gmra.mrb[0].mxu0 %v290
    %v567 = vpop.f32.mrb[0].mxu0
    %v568 = vadd.f32 0.0, %v567
    %v569 = vpop.f32.mrb[0].mxu0
    %570 = vmatprep.mubr.f32.mxu0 %v298
    %571 = vmatmul.mubr.f32.gmra.mrb[0].mxu0 %v297
    %v572 = vpop.f32.mrb[0].mxu0
    %v573 = vadd.f32 0.0, %v572
    %v574 = vpop.f32.mrb[0].mxu0
    %575 = vmatprep.mubr.f32.mxu0 %v305
    %576 = vmatmul.mubr.f32.gmra.mrb[0].mxu0 %v304
    %v577 = vpop.f32.mrb[0].mxu0
    %v578 = vadd.f32 0.0, %v577
    %v579 = vpop.f32.mrb[0].mxu0
    %580 = vmatprep.mubr.f32.mxu0 %v312
    %581 = vmatmul.mubr.f32.gmra.mrb[0].mxu0 %v311
    %v582 = vpop.f32.mrb[0].mxu0
    %v583 = vadd.f32 0.0, %v582
    %v584 = vpop.f32.mrb[0].mxu0
    %585 = vmatprep.mubr.f32.mxu0 %v319
    %586 = vmatmul.mubr.f32.gmra.mrb[0].mxu0 %v318
    %v587 = vpop.f32.mrb[0].mxu0
    %v588 = vadd.f32 0.0, %v587
    %v589 = vpop.f32.mrb[0].mxu0
    %590 = vdwg.mxu0
    %591 = vmatprep.subr.mxu0 0.0
    %592 = vmatpush1.msra.mxu0 %v84
    %593 = vmatprep.subr.mxu0 0.0
    %594 = vmatpush1.msra.mxu0 %v85
    %595 = vmatprep.subr.mxu0 0.0
    %596 = vmatpush1.msra.mxu0 %v86
    %597 = vmatprep.subr.mxu0 0.0
    %598 = vmatpush1.msra.mxu0 %v87
    %599 = vmatprep.subr.mxu0 0.0
    %600 = vmatpush1.msra.mxu0 %v88
    %601 = vmatprep.subr.mxu0 0.0
    %602 = vmatpush1.msra.mxu0 %v89
    %603 = vmatprep.subr.mxu0 0.0
    %604 = vmatpush1.msra.mxu0 %v90
    %605 = vmatprep.subr.mxu0 0.0
    %606 = vmatpush1.msra.mxu0 %v91
    %607 = vmatprep.subr.mxu0 0.0
    %608 = vmatpush1.msra.mxu0 %v92
    %609 = vmatprep.subr.mxu0 0.0
    %610 = vmatpush1.msra.mxu0 %v93
    %611 = vmatprep.subr.mxu0 0.0
    %612 = vmatpush1.msra.mxu0 %v94
    %613 = vmatprep.subr.mxu0 0.0
    %614 = vmatpush1.msra.mxu0 %v95
    %615 = vmatprep.subr.mxu0 0.0
    %616 = vmatpush1.msra.mxu0 %v96
    %617 = vmatprep.subr.mxu0 0.0
    %618 = vmatpush1.msra.mxu0 %v97
    %619 = vmatprep.subr.mxu0 0.0
    %620 = vmatpush1.msra.mxu0 %v98
    %621 = vmatprep.subr.mxu0 0.0
    %622 = vmatpush1.msra.mxu0 %v99
    %623 = vmatprep.subr.mxu0 0.0
    %624 = vmatpush1.msra.mxu0 %v100
    %625 = vmatprep.subr.mxu0 0.0
    %626 = vmatpush1.msra.mxu0 %v101
    %627 = vmatprep.subr.mxu0 0.0
    %628 = vmatpush1.msra.mxu0 %v102
    %629 = vmatprep.subr.mxu0 0.0
    %630 = vmatpush1.msra.mxu0 %v103
    %631 = vmatprep.subr.mxu0 0.0
    %632 = vmatpush1.msra.mxu0 %v104
    %633 = vmatprep.subr.mxu0 0.0
    %634 = vmatpush1.msra.mxu0 %v105
    %635 = vmatprep.subr.mxu0 0.0
    %636 = vmatpush1.msra.mxu0 %v106
    %637 = vmatprep.subr.mxu0 0.0
    %638 = vmatpush1.msra.mxu0 %v107
    %639 = vmatprep.subr.mxu0 0.0
    %640 = vmatpush1.msra.mxu0 %v108
    %641 = vmatprep.subr.mxu0 0.0
    %642 = vmatpush1.msra.mxu0 %v109
    %643 = vmatprep.subr.mxu0 0.0
    %644 = vmatpush1.msra.mxu0 %v110
    %645 = vmatprep.subr.mxu0 0.0
    %646 = vmatpush1.msra.mxu0 %v111
    %647 = vmatprep.subr.mxu0 0.0
    %648 = vmatpush1.msra.mxu0 %v112
    %649 = vmatprep.subr.mxu0 0.0
    %650 = vmatpush1.msra.mxu0 %v113
    %651 = vmatprep.subr.mxu0 0.0
    %652 = vmatpush1.msra.mxu0 %v114
    %653 = vmatprep.subr.mxu0 0.0
    %654 = vmatpush1.msra.mxu0 %v115
    %655 = vmatprep.mubr.f32.mxu0 %v153
    %656 = vmatmul.mubr.f32.gmra.mrb[0].mxu0 %v152
    %v657 = vpop.f32.mrb[0].mxu0
    %v658 = vadd.f32 %v468, %v657
    %v659 = vpop.f32.mrb[0].mxu0
    %660 = vmatprep.mubr.f32.mxu0 %v160
    %661 = vmatmul.mubr.f32.gmra.mrb[0].mxu0 %v159
    %v662 = vpop.f32.mrb[0].mxu0
    %v663 = vadd.f32 %v473, %v662
    %v664 = vpop.f32.mrb[0].mxu0
    %665 = vmatprep.mubr.f32.mxu0 %v167
    %666 = vmatmul.mubr.f32.gmra.mrb[0].mxu0 %v166
    %v667 = vpop.f32.mrb[0].mxu0
    %v668 = vadd.f32 %v478, %v667
    %v669 = vpop.f32.mrb[0].mxu0
    %670 = vmatprep.mubr.f32.mxu0 %v174
    %671 = vmatmul.mubr.f32.gmra.mrb[0].mxu0 %v173
    %v672 = vpop.f32.mrb[0].mxu0
    %v673 = vadd.f32 %v483, %v672
    %v674 = vpop.f32.mrb[0].mxu0
    %675 = vmatprep.mubr.f32.mxu0 %v181
    %676 = vmatmul.mubr.f32.gmra.mrb[0].mxu0 %v180
    %v677 = vpop.f32.mrb[0].mxu0
    %v678 = vadd.f32 %v488, %v677
    %v679 = vpop.f32.mrb[0].mxu0
    %680 = vmatprep.mubr.f32.mxu0 %v188
    %681 = vmatmul.mubr.f32.gmra.mrb[0].mxu0 %v187
    %v682 = vpop.f32.mrb[0].mxu0
    %v683 = vadd.f32 %v493, %v682
    %v684 = vpop.f32.mrb[0].mxu0
    %685 = vmatprep.mubr.f32.mxu0 %v195
    %686 = vmatmul.mubr.f32.gmra.mrb[0].mxu0 %v194
    %v687 = vpop.f32.mrb[0].mxu0
    %v688 = vadd.f32 %v498, %v687
    %v689 = vpop.f32.mrb[0].mxu0
    %690 = vmatprep.mubr.f32.mxu0 %v202
    %691 = vmatmul.mubr.f32.gmra.mrb[0].mxu0 %v201
    %v692 = vpop.f32.mrb[0].mxu0
    %v693 = vadd.f32 %v503, %v692
    %v694 = vpop.f32.mrb[0].mxu0
    %695 = vmatprep.mubr.f32.mxu0 %v209
    %696 = vmatmul.mubr.f32.gmra.mrb[0].mxu0 %v208
    %v697 = vpop.f32.mrb[0].mxu0
    %v698 = vadd.f32 %v508, %v697
    %v699 = vpop.f32.mrb[0].mxu0
    %700 = vmatprep.mubr.f32.mxu0 %v216
    %701 = vmatmul.mubr.f32.gmra.mrb[0].mxu0 %v215
    %v702 = vpop.f32.mrb[0].mxu0
    %v703 = vadd.f32 %v513, %v702
    %v704 = vpop.f32.mrb[0].mxu0
    %705 = vmatprep.mubr.f32.mxu0 %v223
    %706 = vmatmul.mubr.f32.gmra.mrb[0].mxu0 %v222
    %v707 = vpop.f32.mrb[0].mxu0
    %v708 = vadd.f32 %v518, %v707
    %v709 = vpop.f32.mrb[0].mxu0
    %710 = vmatprep.mubr.f32.mxu0 %v230
    %711 = vmatmul.mubr.f32.gmra.mrb[0].mxu0 %v229
    %v712 = vpop.f32.mrb[0].mxu0
    %v713 = vadd.f32 %v523, %v712
    %v714 = vpop.f32.mrb[0].mxu0
    %715 = vmatprep.mubr.f32.mxu0 %v237
    %716 = vmatmul.mubr.f32.gmra.mrb[0].mxu0 %v236
    %v717 = vpop.f32.mrb[0].mxu0
    %v718 = vadd.f32 %v528, %v717
    %v719 = vpop.f32.mrb[0].mxu0
    %720 = vmatprep.mubr.f32.mxu0 %v244
    %721 = vmatmul.mubr.f32.gmra.mrb[0].mxu0 %v243
    %v722 = vpop.f32.mrb[0].mxu0
    %v723 = vadd.f32 %v533, %v722
    %v724 = vpop.f32.mrb[0].mxu0
    %725 = vmatprep.mubr.f32.mxu0 %v251
    %726 = vmatmul.mubr.f32.gmra.mrb[0].mxu0 %v250
    %v727 = vpop.f32.mrb[0].mxu0
    %v728 = vadd.f32 %v538, %v727
    %v729 = vpop.f32.mrb[0].mxu0
    %730 = vmatprep.mubr.f32.mxu0 %v258
    %731 = vmatmul.mubr.f32.gmra.mrb[0].mxu0 %v257
    %v732 = vpop.f32.mrb[0].mxu0
    %v733 = vadd.f32 %v543, %v732
    %v734 = vpop.f32.mrb[0].mxu0
    %735 = vmatprep.mubr.f32.mxu0 %v265
    %736 = vmatmul.mubr.f32.gmra.mrb[0].mxu0 %v264
    %v737 = vpop.f32.mrb[0].mxu0
    %v738 = vadd.f32 %v548, %v737
    %v739 = vpop.f32.mrb[0].mxu0
    %740 = vmatprep.mubr.f32.mxu0 %v272
    %741 = vmatmul.mubr.f32.gmra.mrb[0].mxu0 %v271
    %v742 = vpop.f32.mrb[0].mxu0
    %v743 = vadd.f32 %v553, %v742
    %v744 = vpop.f32.mrb[0].mxu0
    %745 = vmatprep.mubr.f32.mxu0 %v279
    %746 = vmatmul.mubr.f32.gmra.mrb[0].mxu0 %v278
    %v747 = vpop.f32.mrb[0].mxu0
    %v748 = vadd.f32 %v558, %v747
    %v749 = vpop.f32.mrb[0].mxu0
    %750 = vmatprep.mubr.f32.mxu0 %v286
    %751 = vmatmul.mubr.f32.gmra.mrb[0].mxu0 %v285
    %v752 = vpop.f32.mrb[0].mxu0
    %v753 = vadd.f32 %v563, %v752
    %v754 = vpop.f32.mrb[0].mxu0
    %755 = vmatprep.mubr.f32.mxu0 %v293
    %756 = vmatmul.mubr.f32.gmra.mrb[0].mxu0 %v292
    %v757 = vpop.f32.mrb[0].mxu0
    %v758 = vadd.f32 %v568, %v757
    %v759 = vpop.f32.mrb[0].mxu0
    %760 = vmatprep.mubr.f32.mxu0 %v300
    %761 = vmatmul.mubr.f32.gmra.mrb[0].mxu0 %v299
    %v762 = vpop.f32.mrb[0].mxu0
    %v763 = vadd.f32 %v573, %v762
    %v764 = vpop.f32.mrb[0].mxu0
    %765 = vmatprep.mubr.f32.mxu0 %v307
    %766 = vmatmul.mubr.f32.gmra.mrb[0].mxu0 %v306
    %v767 = vpop.f32.mrb[0].mxu0
    %v768 = vadd.f32 %v578, %v767
    %v769 = vpop.f32.mrb[0].mxu0
    %770 = vmatprep.mubr.f32.mxu0 %v314
    %771 = vmatmul.mubr.f32.gmra.mrb[0].mxu0 %v313
    %v772 = vpop.f32.mrb[0].mxu0
    %v773 = vadd.f32 %v583, %v772
    %v774 = vpop.f32.mrb[0].mxu0
    %775 = vmatprep.mubr.f32.mxu0 %v321
    %776 = vmatmul.mubr.f32.gmra.mrb[0].mxu0 %v320
    %v777 = vpop.f32.mrb[0].mxu0
    %v778 = vadd.f32 %v588, %v777
    %v779 = vpop.f32.mrb[0].mxu0
    %780 = vdwg.mxu0
    %781 = vmatprep.subr.mxu0 0.0
    %782 = vmatpush1.msra.mxu0 %v116
    %783 = vmatprep.subr.mxu0 0.0
    %784 = vmatpush1.msra.mxu0 %v117
    %785 = vmatprep.subr.mxu0 0.0
    %786 = vmatpush1.msra.mxu0 %v118
    %787 = vmatprep.subr.mxu0 0.0
    %788 = vmatpush1.msra.mxu0 %v119
    %789 = vmatprep.subr.mxu0 0.0
    %790 = vmatpush1.msra.mxu0 %v120
    %791 = vmatprep.subr.mxu0 0.0
    %792 = vmatpush1.msra.mxu0 %v121
    %793 = vmatprep.subr.mxu0 0.0
    %794 = vmatpush1.msra.mxu0 %v122
    %795 = vmatprep.subr.mxu0 0.0
    %796 = vmatpush1.msra.mxu0 %v123
    %797 = vmatprep.subr.mxu0 0.0
    %798 = vmatpush1.msra.mxu0 %v124
    %799 = vmatprep.subr.mxu0 0.0
    %800 = vmatpush1.msra.mxu0 %v125
    %801 = vmatprep.subr.mxu0 0.0
    %802 = vmatpush1.msra.mxu0 %v126
    %803 = vmatprep.subr.mxu0 0.0
    %804 = vmatpush1.msra.mxu0 %v127
    %805 = vmatprep.subr.mxu0 0.0
    %806 = vmatpush1.msra.mxu0 %v128
    %807 = vmatprep.subr.mxu0 0.0
    %808 = vmatpush1.msra.mxu0 %v129
    %809 = vmatprep.subr.mxu0 0.0
    %810 = vmatpush1.msra.mxu0 %v130
    %811 = vmatprep.subr.mxu0 0.0
    %812 = vmatpush1.msra.mxu0 %v131
    %813 = vmatprep.subr.mxu0 0.0
    %814 = vmatpush1.msra.mxu0 %v132
    %815 = vmatprep.subr.mxu0 0.0
    %816 = vmatpush1.msra.mxu0 %v133
    %817 = vmatprep.subr.mxu0 0.0
    %818 = vmatpush1.msra.mxu0 %v134
    %819 = vmatprep.subr.mxu0 0.0
    %820 = vmatpush1.msra.mxu0 %v135
    %821 = vmatprep.subr.mxu0 0.0
    %822 = vmatpush1.msra.mxu0 %v136
    %823 = vmatprep.subr.mxu0 0.0
    %824 = vmatpush1.msra.mxu0 %v137
    %825 = vmatprep.subr.mxu0 0.0
    %826 = vmatpush1.msra.mxu0 %v138
    %827 = vmatprep.subr.mxu0 0.0
    %828 = vmatpush1.msra.mxu0 %v139
    %829 = vmatprep.subr.mxu0 0.0
    %830 = vmatpush1.msra.mxu0 %v140
    %831 = vmatprep.subr.mxu0 0.0
    %832 = vmatpush1.msra.mxu0 %v141
    %833 = vmatprep.subr.mxu0 0.0
    %834 = vmatpush1.msra.mxu0 %v142
    %835 = vmatprep.subr.mxu0 0.0
    %836 = vmatpush1.msra.mxu0 %v143
    %837 = vmatprep.subr.mxu0 0.0
    %838 = vmatpush1.msra.mxu0 %v144
    %839 = vmatprep.subr.mxu0 0.0
    %840 = vmatpush1.msra.mxu0 %v145
    %841 = vmatprep.subr.mxu0 0.0
    %842 = vmatpush1.msra.mxu0 %v146
    %843 = vmatprep.subr.mxu0 0.0
    %844 = vmatpush1.msra.mxu0 %v147
    %845 = vmatprep.mubr.f32.mxu0 %v155
    %846 = vmatmul.mubr.f32.gmra.mrb[0].mxu0 %v154
    %v847 = vpop.f32.mrb[0].mxu0
    %v848 = vadd.f32 %v658, %v847
    %v849 = vpop.f32.mrb[0].mxu0
    %850 = vmatprep.mubr.f32.mxu0 %v162
    %851 = vmatmul.mubr.f32.gmra.mrb[0].mxu0 %v161
    %v852 = vpop.f32.mrb[0].mxu0
    %v853 = vadd.f32 %v663, %v852
    %v854 = vpop.f32.mrb[0].mxu0
    %855 = vmatprep.mubr.f32.mxu0 %v169
    %856 = vmatmul.mubr.f32.gmra.mrb[0].mxu0 %v168
    %v857 = vpop.f32.mrb[0].mxu0
    %v858 = vadd.f32 %v668, %v857
    %v859 = vpop.f32.mrb[0].mxu0
    %860 = vmatprep.mubr.f32.mxu0 %v176
    %861 = vmatmul.mubr.f32.gmra.mrb[0].mxu0 %v175
    %v862 = vpop.f32.mrb[0].mxu0
    %v863 = vadd.f32 %v673, %v862
    %v864 = vpop.f32.mrb[0].mxu0
    %865 = vmatprep.mubr.f32.mxu0 %v183
    %866 = vmatmul.mubr.f32.gmra.mrb[0].mxu0 %v182
    %v867 = vpop.f32.mrb[0].mxu0
    %v868 = vadd.f32 %v678, %v867
    %v869 = vpop.f32.mrb[0].mxu0
    %870 = vmatprep.mubr.f32.mxu0 %v190
    %871 = vmatmul.mubr.f32.gmra.mrb[0].mxu0 %v189
    %v872 = vpop.f32.mrb[0].mxu0
    %v873 = vadd.f32 %v683, %v872
    %v874 = vpop.f32.mrb[0].mxu0
    %875 = vmatprep.mubr.f32.mxu0 %v197
    %876 = vmatmul.mubr.f32.gmra.mrb[0].mxu0 %v196
    %v877 = vpop.f32.mrb[0].mxu0
    %v878 = vadd.f32 %v688, %v877
    %v879 = vpop.f32.mrb[0].mxu0
    %880 = vmatprep.mubr.f32.mxu0 %v204
    %881 = vmatmul.mubr.f32.gmra.mrb[0].mxu0 %v203
    %v882 = vpop.f32.mrb[0].mxu0
    %v883 = vadd.f32 %v693, %v882
    %v884 = vpop.f32.mrb[0].mxu0
    %885 = vmatprep.mubr.f32.mxu0 %v211
    %886 = vmatmul.mubr.f32.gmra.mrb[0].mxu0 %v210
    %v887 = vpop.f32.mrb[0].mxu0
    %v888 = vadd.f32 %v698, %v887
    %v889 = vpop.f32.mrb[0].mxu0
    %890 = vmatprep.mubr.f32.mxu0 %v218
    %891 = vmatmul.mubr.f32.gmra.mrb[0].mxu0 %v217
    %v892 = vpop.f32.mrb[0].mxu0
    %v893 = vadd.f32 %v703, %v892
    %v894 = vpop.f32.mrb[0].mxu0
    %895 = vmatprep.mubr.f32.mxu0 %v225
    %896 = vmatmul.mubr.f32.gmra.mrb[0].mxu0 %v224
    %v897 = vpop.f32.mrb[0].mxu0
    %v898 = vadd.f32 %v708, %v897
    %v899 = vpop.f32.mrb[0].mxu0
    %900 = vmatprep.mubr.f32.mxu0 %v232
    %901 = vmatmul.mubr.f32.gmra.mrb[0].mxu0 %v231
    %v902 = vpop.f32.mrb[0].mxu0
    %v903 = vadd.f32 %v713, %v902
    %v904 = vpop.f32.mrb[0].mxu0
    %905 = vmatprep.mubr.f32.mxu0 %v239
    %906 = vmatmul.mubr.f32.gmra.mrb[0].mxu0 %v238
    %v907 = vpop.f32.mrb[0].mxu0
    %v908 = vadd.f32 %v718, %v907
    %v909 = vpop.f32.mrb[0].mxu0
    %910 = vmatprep.mubr.f32.mxu0 %v246
    %911 = vmatmul.mubr.f32.gmra.mrb[0].mxu0 %v245
    %v912 = vpop.f32.mrb[0].mxu0
    %v913 = vadd.f32 %v723, %v912
    %v914 = vpop.f32.mrb[0].mxu0
    %915 = vmatprep.mubr.f32.mxu0 %v253
    %916 = vmatmul.mubr.f32.gmra.mrb[0].mxu0 %v252
    %v917 = vpop.f32.mrb[0].mxu0
    %v918 = vadd.f32 %v728, %v917
    %v919 = vpop.f32.mrb[0].mxu0
    %920 = vmatprep.mubr.f32.mxu0 %v260
    %921 = vmatmul.mubr.f32.gmra.mrb[0].mxu0 %v259
    %v922 = vpop.f32.mrb[0].mxu0
    %v923 = vadd.f32 %v733, %v922
    %v924 = vpop.f32.mrb[0].mxu0
    %925 = vmatprep.mubr.f32.mxu0 %v267
    %926 = vmatmul.mubr.f32.gmra.mrb[0].mxu0 %v266
    %v927 = vpop.f32.mrb[0].mxu0
    %v928 = vadd.f32 %v738, %v927
    %v929 = vpop.f32.mrb[0].mxu0
    %930 = vmatprep.mubr.f32.mxu0 %v274
    %931 = vmatmul.mubr.f32.gmra.mrb[0].mxu0 %v273
    %v932 = vpop.f32.mrb[0].mxu0
    %v933 = vadd.f32 %v743, %v932
    %v934 = vpop.f32.mrb[0].mxu0
    %935 = vmatprep.mubr.f32.mxu0 %v281
    %936 = vmatmul.mubr.f32.gmra.mrb[0].mxu0 %v280
    %v937 = vpop.f32.mrb[0].mxu0
    %v938 = vadd.f32 %v748, %v937
    %v939 = vpop.f32.mrb[0].mxu0
    %940 = vmatprep.mubr.f32.mxu0 %v288
    %941 = vmatmul.mubr.f32.gmra.mrb[0].mxu0 %v287
    %v942 = vpop.f32.mrb[0].mxu0
    %v943 = vadd.f32 %v753, %v942
    %v944 = vpop.f32.mrb[0].mxu0
    %945 = vmatprep.mubr.f32.mxu0 %v295
    %946 = vmatmul.mubr.f32.gmra.mrb[0].mxu0 %v294
    %v947 = vpop.f32.mrb[0].mxu0
    %v948 = vadd.f32 %v758, %v947
    %v949 = vpop.f32.mrb[0].mxu0
    %950 = vmatprep.mubr.f32.mxu0 %v302
    %951 = vmatmul.mubr.f32.gmra.mrb[0].mxu0 %v301
    %v952 = vpop.f32.mrb[0].mxu0
    %v953 = vadd.f32 %v763, %v952
    %v954 = vpop.f32.mrb[0].mxu0
    %955 = vmatprep.mubr.f32.mxu0 %v309
    %956 = vmatmul.mubr.f32.gmra.mrb[0].mxu0 %v308
    %v957 = vpop.f32.mrb[0].mxu0
    %v958 = vadd.f32 %v768, %v957
    %v959 = vpop.f32.mrb[0].mxu0
    %960 = vmatprep.mubr.f32.mxu0 %v316
    %961 = vmatmul.mubr.f32.gmra.mrb[0].mxu0 %v315
    %v962 = vpop.f32.mrb[0].mxu0
    %v963 = vadd.f32 %v773, %v962
    %v964 = vpop.f32.mrb[0].mxu0
    %965 = vmatprep.mubr.f32.mxu0 %v323
    %966 = vmatmul.mubr.f32.gmra.mrb[0].mxu0 %v322
    %v967 = vpop.f32.mrb[0].mxu0
    %v968 = vadd.f32 %v778, %v967
    %v969 = vpop.f32.mrb[0].mxu0
    %970 = vdwg.mxu0
    %971 = vmatprep.subr.mxu0 0.0
    %972 = vmatpush1.msra.mxu0 %v148
    %973 = vmatprep.subr.mxu0 0.0
    %974 = vmatpush1.msra.mxu0 %v149
    %975 = vmatprep.subr.mxu0 0.0
    %976 = vmatpush1.msra.mxu0 0.0
    %977 = vmatprep.subr.mxu0 0.0
    %978 = vmatpush1.msra.mxu0 0.0
    %979 = vmatprep.subr.mxu0 0.0
    %980 = vmatpush1.msra.mxu0 0.0
    %981 = vmatprep.subr.mxu0 0.0
    %982 = vmatpush1.msra.mxu0 0.0
    %983 = vmatprep.subr.mxu0 0.0
    %984 = vmatpush1.msra.mxu0 0.0
    %985 = vmatprep.subr.mxu0 0.0
    %986 = vmatpush1.msra.mxu0 0.0
    %987 = vmatprep.subr.mxu0 0.0
    %988 = vmatpush1.msra.mxu0 0.0
    %989 = vmatprep.subr.mxu0 0.0
    %990 = vmatpush1.msra.mxu0 0.0
    %991 = vmatprep.subr.mxu0 0.0
    %992 = vmatpush1.msra.mxu0 0.0
    %993 = vmatprep.subr.mxu0 0.0
    %994 = vmatpush1.msra.mxu0 0.0
    %995 = vmatprep.subr.mxu0 0.0
    %996 = vmatpush1.msra.mxu0 0.0
    %997 = vmatprep.subr.mxu0 0.0
    %998 = vmatpush1.msra.mxu0 0.0
    %999 = vmatprep.subr.mxu0 0.0
    %1000 = vmatpush1.msra.mxu0 0.0
    %1001 = vmatprep.subr.mxu0 0.0
    %1002 = vmatpush1.msra.mxu0 0.0
    %1003 = vmatprep.subr.mxu0 0.0
    %1004 = vmatpush1.msra.mxu0 0.0
    %1005 = vmatprep.subr.mxu0 0.0
    %1006 = vmatpush1.msra.mxu0 0.0
    %1007 = vmatprep.subr.mxu0 0.0
    %1008 = vmatpush1.msra.mxu0 0.0
    %1009 = vmatprep.subr.mxu0 0.0
    %1010 = vmatpush1.msra.mxu0 0.0
    %1011 = vmatprep.subr.mxu0 0.0
    %1012 = vmatpush1.msra.mxu0 0.0
    %1013 = vmatprep.subr.mxu0 0.0
    %1014 = vmatpush1.msra.mxu0 0.0
    %1015 = vmatprep.subr.mxu0 0.0
    %1016 = vmatpush1.msra.mxu0 0.0
    %1017 = vmatprep.subr.mxu0 0.0
    %1018 = vmatpush1.msra.mxu0 0.0
    %1019 = vmatprep.subr.mxu0 0.0
    %1020 = vmatpush1.msra.mxu0 0.0
    %1021 = vmatprep.subr.mxu0 0.0
    %1022 = vmatpush1.msra.mxu0 0.0
    %1023 = vmatprep.subr.mxu0 0.0
    %1024 = vmatpush1.msra.mxu0 0.0
    %1025 = vmatprep.subr.mxu0 0.0
    %1026 = vmatpush1.msra.mxu0 0.0
    %1027 = vmatprep.subr.mxu0 0.0
    %1028 = vmatpush1.msra.mxu0 0.0
    %1029 = vmatprep.subr.mxu0 0.0
    %1030 = vmatpush1.msra.mxu0 0.0
    %1031 = vmatprep.subr.mxu0 0.0
    %1032 = vmatpush1.msra.mxu0 0.0
    %1033 = vmatprep.subr.mxu0 0.0
    %1034 = vmatpush1.msra.mxu0 0.0
    %1035 = vmatprep.mubr.f32.mxu0 0.0
    %1036 = vmatmul.mubr.f32.gmra.mrb[0].mxu0 %v327
    %v1037 = vpop.f32.mrb[0].mxu0
    %v1038 = vadd.f32 %v848, %v1037
    %v1039 = vpop.f32.mrb[0].mxu0
    %1040 = vmatprep.mubr.f32.mxu0 0.0
    %1041 = vmatmul.mubr.f32.gmra.mrb[0].mxu0 %v330
    %v1042 = vpop.f32.mrb[0].mxu0
    %v1043 = vadd.f32 %v853, %v1042
    %v1044 = vpop.f32.mrb[0].mxu0
    %1045 = vmatprep.mubr.f32.mxu0 0.0
    %1046 = vmatmul.mubr.f32.gmra.mrb[0].mxu0 %v333
    %v1047 = vpop.f32.mrb[0].mxu0
    %v1048 = vadd.f32 %v858, %v1047
    %v1049 = vpop.f32.mrb[0].mxu0
    %1050 = vmatprep.mubr.f32.mxu0 0.0
    %1051 = vmatmul.mubr.f32.gmra.mrb[0].mxu0 %v336
    %v1052 = vpop.f32.mrb[0].mxu0
    %v1053 = vadd.f32 %v863, %v1052
    %v1054 = vpop.f32.mrb[0].mxu0
    %1055 = vmatprep.mubr.f32.mxu0 0.0
    %1056 = vmatmul.mubr.f32.gmra.mrb[0].mxu0 %v339
    %v1057 = vpop.f32.mrb[0].mxu0
    %v1058 = vadd.f32 %v868, %v1057
    %v1059 = vpop.f32.mrb[0].mxu0
    %1060 = vmatprep.mubr.f32.mxu0 0.0
    %1061 = vmatmul.mubr.f32.gmra.mrb[0].mxu0 %v342
    %v1062 = vpop.f32.mrb[0].mxu0
    %v1063 = vadd.f32 %v873, %v1062
    %v1064 = vpop.f32.mrb[0].mxu0
    %1065 = vmatprep.mubr.f32.mxu0 0.0
    %1066 = vmatmul.mubr.f32.gmra.mrb[0].mxu0 %v345
    %v1067 = vpop.f32.mrb[0].mxu0
    %v1068 = vadd.f32 %v878, %v1067
    %v1069 = vpop.f32.mrb[0].mxu0
    %1070 = vmatprep.mubr.f32.mxu0 0.0
    %1071 = vmatmul.mubr.f32.gmra.mrb[0].mxu0 %v348
    %v1072 = vpop.f32.mrb[0].mxu0
    %v1073 = vadd.f32 %v883, %v1072
    %v1074 = vpop.f32.mrb[0].mxu0
    %1075 = vmatprep.mubr.f32.mxu0 0.0
    %1076 = vmatmul.mubr.f32.gmra.mrb[0].mxu0 %v351
    %v1077 = vpop.f32.mrb[0].mxu0
    %v1078 = vadd.f32 %v888, %v1077
    %v1079 = vpop.f32.mrb[0].mxu0
    %1080 = vmatprep.mubr.f32.mxu0 0.0
    %1081 = vmatmul.mubr.f32.gmra.mrb[0].mxu0 %v354
    %v1082 = vpop.f32.mrb[0].mxu0
    %v1083 = vadd.f32 %v893, %v1082
    %v1084 = vpop.f32.mrb[0].mxu0
    %1085 = vmatprep.mubr.f32.mxu0 0.0
    %1086 = vmatmul.mubr.f32.gmra.mrb[0].mxu0 %v357
    %v1087 = vpop.f32.mrb[0].mxu0
    %v1088 = vadd.f32 %v898, %v1087
    %v1089 = vpop.f32.mrb[0].mxu0
    %1090 = vmatprep.mubr.f32.mxu0 0.0
    %1091 = vmatmul.mubr.f32.gmra.mrb[0].mxu0 %v360
    %v1092 = vpop.f32.mrb[0].mxu0
    %v1093 = vadd.f32 %v903, %v1092
    %v1094 = vpop.f32.mrb[0].mxu0
    %1095 = vmatprep.mubr.f32.mxu0 0.0
    %1096 = vmatmul.mubr.f32.gmra.mrb[0].mxu0 %v363
    %v1097 = vpop.f32.mrb[0].mxu0
    %v1098 = vadd.f32 %v908, %v1097
    %v1099 = vpop.f32.mrb[0].mxu0
    %1100 = vmatprep.mubr.f32.mxu0 0.0
    %1101 = vmatmul.mubr.f32.gmra.mrb[0].mxu0 %v366
    %v1102 = vpop.f32.mrb[0].mxu0
    %v1103 = vadd.f32 %v913, %v1102
    %v1104 = vpop.f32.mrb[0].mxu0
    %1105 = vmatprep.mubr.f32.mxu0 0.0
    %1106 = vmatmul.mubr.f32.gmra.mrb[0].mxu0 %v369
    %v1107 = vpop.f32.mrb[0].mxu0
    %v1108 = vadd.f32 %v918, %v1107
    %v1109 = vpop.f32.mrb[0].mxu0
    %1110 = vmatprep.mubr.f32.mxu0 0.0
    %1111 = vmatmul.mubr.f32.gmra.mrb[0].mxu0 %v372
    %v1112 = vpop.f32.mrb[0].mxu0
    %v1113 = vadd.f32 %v923, %v1112
    %v1114 = vpop.f32.mrb[0].mxu0
    %1115 = vmatprep.mubr.f32.mxu0 0.0
    %1116 = vmatmul.mubr.f32.gmra.mrb[0].mxu0 %v375
    %v1117 = vpop.f32.mrb[0].mxu0
    %v1118 = vadd.f32 %v928, %v1117
    %v1119 = vpop.f32.mrb[0].mxu0
    %1120 = vmatprep.mubr.f32.mxu0 0.0
    %1121 = vmatmul.mubr.f32.gmra.mrb[0].mxu0 %v378
    %v1122 = vpop.f32.mrb[0].mxu0
    %v1123 = vadd.f32 %v933, %v1122
    %v1124 = vpop.f32.mrb[0].mxu0
    %1125 = vmatprep.mubr.f32.mxu0 0.0
    %1126 = vmatmul.mubr.f32.gmra.mrb[0].mxu0 %v381
    %v1127 = vpop.f32.mrb[0].mxu0
    %v1128 = vadd.f32 %v938, %v1127
    %v1129 = vpop.f32.mrb[0].mxu0
    %1130 = vmatprep.mubr.f32.mxu0 0.0
    %1131 = vmatmul.mubr.f32.gmra.mrb[0].mxu0 %v384
    %v1132 = vpop.f32.mrb[0].mxu0
    %v1133 = vadd.f32 %v943, %v1132
    %v1134 = vpop.f32.mrb[0].mxu0
    %1135 = vmatprep.mubr.f32.mxu0 0.0
    %1136 = vmatmul.mubr.f32.gmra.mrb[0].mxu0 %v387
    %v1137 = vpop.f32.mrb[0].mxu0
    %v1138 = vadd.f32 %v948, %v1137
    %v1139 = vpop.f32.mrb[0].mxu0
    %1140 = vmatprep.mubr.f32.mxu0 0.0
    %1141 = vmatmul.mubr.f32.gmra.mrb[0].mxu0 %v390
    %v1142 = vpop.f32.mrb[0].mxu0
    %v1143 = vadd.f32 %v953, %v1142
    %v1144 = vpop.f32.mrb[0].mxu0
    %1145 = vmatprep.mubr.f32.mxu0 0.0
    %1146 = vmatmul.mubr.f32.gmra.mrb[0].mxu0 %v393
    %v1147 = vpop.f32.mrb[0].mxu0
    %v1148 = vadd.f32 %v958, %v1147
    %v1149 = vpop.f32.mrb[0].mxu0
    %1150 = vmatprep.mubr.f32.mxu0 0.0
    %1151 = vmatmul.mubr.f32.gmra.mrb[0].mxu0 %v396
    %v1152 = vpop.f32.mrb[0].mxu0
    %v1153 = vadd.f32 %v963, %v1152
    %v1154 = vpop.f32.mrb[0].mxu0
    %1155 = vmatprep.mubr.f32.mxu0 0.0
    %1156 = vmatmul.mubr.f32.gmra.mrb[0].mxu0 %v399
    %v1157 = vpop.f32.mrb[0].mxu0
    %v1158 = vadd.f32 %v968, %v1157
    %v1159 = vpop.f32.mrb[0].mxu0
    %1160 = vdwg.mxu0
    %s1161 = scalar_lea.vmem [#allocation2], 1400
    %v1162 = vld [vmem:[%s1161] sm:$0xff]
    %v1163 = vld [vmem:[%s1161 + $0x8] sm:$0xff]
    %v1164 = vld [vmem:[%s1161 + $0x10] sm:$0xff]
    %v1165 = vld [vmem:[%s1161 + $0x18] sm:$0xff]
    %v1166 = vld [vmem:[%s1161 + $0x20] sm:$0xff]
    %v1167 = vld [vmem:[%s1161 + $0x28] sm:$0xff]
    %v1168 = vld [vmem:[%s1161 + $0x30] sm:$0xff]
    %v1169 = vld [vmem:[%s1161 + $0x38] sm:$0xff]
    %v1170 = vld [vmem:[%s1161 + $0x40] sm:$0xff]
    %v1171 = vld [vmem:[%s1161 + $0x48] sm:$0xff]
    %v1172 = vld [vmem:[%s1161 + $0x50] sm:$0xff]
    %v1173 = vld [vmem:[%s1161 + $0x58] sm:$0xff]
    %v1174 = vld [vmem:[%s1161 + $0x60] sm:$0xff]
    %v1175 = vld [vmem:[%s1161 + $0x68] sm:$0xff]
    %v1176 = vld [vmem:[%s1161 + $0x70] sm:$0xff]
    %v1177 = vld [vmem:[%s1161 + $0x78] sm:$0xff]
    %v1178 = vld [vmem:[%s1161 + $0x80] sm:$0xff]
    %v1179 = vld [vmem:[%s1161 + $0x88] sm:$0xff]
    %v1180 = vld [vmem:[%s1161 + $0x90] sm:$0xff]
    %v1181 = vld [vmem:[%s1161 + $0x98] sm:$0xff]
    %v1182 = vld [vmem:[%s1161 + $0xa0] sm:$0xff]
    %v1183 = vld [vmem:[%s1161 + $0xa8] sm:$0xff]
    %v1184 = vld [vmem:[%s1161 + $0xb0] sm:$0xff]
    %v1185 = vld [vmem:[%s1161 + $0xb8] sm:$0xff]
    %v1186 = vld [vmem:[%s1161 + $0xc0] sm:$0xff]
    %v1187 = vld [vmem:[%s1161 + $0xc8] sm:$0xff]
    %v1188 = vld [vmem:[%s1161 + $0xd0] sm:$0xff]
    %v1189 = vld [vmem:[%s1161 + $0xd8] sm:$0xff]
    %v1190 = vld [vmem:[%s1161 + $0xe0] sm:$0xff]
    %v1191 = vld [vmem:[%s1161 + $0xe8] sm:$0xff]
    %v1192 = vld [vmem:[%s1161 + $0xf0] sm:$0xff]
    %v1193 = vld [vmem:[%s1161 + $0xf8] sm:$0xff]
    %v1194 = vld [vmem:[%s1161 + $0x100] sm:$0xff]
    %v1195 = vld [vmem:[%s1161 + $0x108] sm:$0xff]
    %v1196 = vld [vmem:[%s1161 + $0x110] sm:$0xff]
    %v1197 = vld [vmem:[%s1161 + $0x118] sm:$0xff]
    %v1198 = vld [vmem:[%s1161 + $0x120] sm:$0xff]
    %v1199 = vld [vmem:[%s1161 + $0x128] sm:$0xff]
    %v1200 = vld [vmem:[%s1161 + $0x130] sm:$0xff]
    %v1201 = vld [vmem:[%s1161 + $0x138] sm:$0xff]
    %v1202 = vld [vmem:[%s1161 + $0x140] sm:$0xff]
    %v1203 = vld [vmem:[%s1161 + $0x148] sm:$0xff]
    %v1204 = vld [vmem:[%s1161 + $0x150] sm:$0xff]
    %v1205 = vld [vmem:[%s1161 + $0x158] sm:$0xff]
    %v1206 = vld [vmem:[%s1161 + $0x160] sm:$0xff]
    %v1207 = vld [vmem:[%s1161 + $0x168] sm:$0xff]
    %v1208 = vld [vmem:[%s1161 + $0x170] sm:$0xff]
    %v1209 = vld [vmem:[%s1161 + $0x178] sm:$0xff]
    %v1210 = vld [vmem:[%s1161 + $0x180] sm:$0xff]
    %v1211 = vld [vmem:[%s1161 + $0x188] sm:$0xff]
    %v1212 = vld [vmem:[%s1161 + $0x190] sm:$0xff]
    %v1213 = vld [vmem:[%s1161 + $0x198] sm:$0xff]
    %v1214 = vld [vmem:[%s1161 + $0x1a0] sm:$0xff]
    %v1215 = vld [vmem:[%s1161 + $0x1a8] sm:$0xff]
    %v1216 = vld [vmem:[%s1161 + $0x1b0] sm:$0xff]
    %v1217 = vld [vmem:[%s1161 + $0x1b8] sm:$0xff]
    %v1218 = vld [vmem:[%s1161 + $0x1c0] sm:$0xff]
    %v1219 = vld [vmem:[%s1161 + $0x1c8] sm:$0xff]
    %v1220 = vld [vmem:[%s1161 + $0x1d0] sm:$0xff]
    %v1221 = vld [vmem:[%s1161 + $0x1d8] sm:$0xff]
    %v1222 = vld [vmem:[%s1161 + $0x1e0] sm:$0xff]
    %v1223 = vld [vmem:[%s1161 + $0x1e8] sm:$0xff]
    %v1224 = vld [vmem:[%s1161 + $0x1f0] sm:$0xff]
    %v1225 = vld [vmem:[%s1161 + $0x1f8] sm:$0xff]
    %v1226 = vld [vmem:[%s1161 + $0x200] sm:$0xff]
    %v1227 = vld [vmem:[%s1161 + $0x208] sm:$0xff]
    %v1228 = vld [vmem:[%s1161 + $0x210] sm:$0xff]
    %v1229 = vld [vmem:[%s1161 + $0x218] sm:$0xff]
    %v1230 = vld [vmem:[%s1161 + $0x220] sm:$0xff]
    %v1231 = vld [vmem:[%s1161 + $0x228] sm:$0xff]
    %v1232 = vld [vmem:[%s1161 + $0x230] sm:$0xff]
    %v1233 = vld [vmem:[%s1161 + $0x238] sm:$0xff]
    %v1234 = vld [vmem:[%s1161 + $0x240] sm:$0xff]
    %v1235 = vld [vmem:[%s1161 + $0x248] sm:$0xff]
    %v1236 = vld [vmem:[%s1161 + $0x250] sm:$0xff]
    %v1237 = vld [vmem:[%s1161 + $0x258] sm:$0xff]
    %v1238 = vld [vmem:[%s1161 + $0x260] sm:$0xff]
    %v1239 = vld [vmem:[%s1161 + $0x268] sm:$0xff]
    %v1240 = vld [vmem:[%s1161 + $0x270] sm:$0xff]
    %v1241 = vld [vmem:[%s1161 + $0x278] sm:$0xff]
    %v1242 = vld [vmem:[%s1161 + $0x280] sm:$0xff]
    %v1243 = vld [vmem:[%s1161 + $0x288] sm:$0xff]
    %v1244 = vld [vmem:[%s1161 + $0x290] sm:$0xff]
    %v1245 = vld [vmem:[%s1161 + $0x298] sm:$0xff]
    %v1246 = vld [vmem:[%s1161 + $0x2a0] sm:$0xff]
    %v1247 = vld [vmem:[%s1161 + $0x2a8] sm:$0xff]
    %v1248 = vld [vmem:[%s1161 + $0x2b0] sm:$0xff]
    %v1249 = vld [vmem:[%s1161 + $0x2b8] sm:$0xff]
    %v1250 = vld [vmem:[%s1161 + $0x2c0] sm:$0xff]
    %v1251 = vld [vmem:[%s1161 + $0x2c8] sm:$0xff]
    %v1252 = vld [vmem:[%s1161 + $0x2d0] sm:$0xff]
    %v1253 = vld [vmem:[%s1161 + $0x2d8] sm:$0xff]
    %v1254 = vld [vmem:[%s1161 + $0x2e0] sm:$0xff]
    %v1255 = vld [vmem:[%s1161 + $0x2e8] sm:$0xff]
    %v1256 = vld [vmem:[%s1161 + $0x2f0] sm:$0xff]
    %v1257 = vld [vmem:[%s1161 + $0x2f8] sm:$0xff]
    %v1258 = vld [vmem:[%s1161 + $0x300] sm:$0xff]
    %v1259 = vld [vmem:[%s1161 + $0x308] sm:$0xff]
    %v1260 = vld [vmem:[%s1161 + $0x310] sm:$0xff]
    %v1261 = vld [vmem:[%s1161 + $0x318] sm:$0xff]
    %v1262 = vld [vmem:[%s1161 + $0x320] sm:$0xff]
    %v1263 = vld [vmem:[%s1161 + $0x328] sm:$0xff]
    %v1264 = vld [vmem:[%s1161 + $0x330] sm:$0xff]
    %v1265 = vld [vmem:[%s1161 + $0x338] sm:$0xff]
    %v1266 = vld [vmem:[%s1161 + $0x340] sm:$0xff]
    %v1267 = vld [vmem:[%s1161 + $0x348] sm:$0xff]
    %v1268 = vld [vmem:[%s1161 + $0x350] sm:$0xff]
    %v1269 = vld [vmem:[%s1161 + $0x358] sm:$0xff]
    %v1270 = vld [vmem:[%s1161 + $0x360] sm:$0xff]
    %v1271 = vld [vmem:[%s1161 + $0x368] sm:$0xff]
    %v1272 = vld [vmem:[%s1161 + $0x370] sm:$0xff]
    %v1273 = vld [vmem:[%s1161 + $0x378] sm:$0xff]
    %v1274 = vld [vmem:[%s1161 + $0x380] sm:$0xff]
    %v1275 = vld [vmem:[%s1161 + $0x388] sm:$0xff]
    %v1276 = vld [vmem:[%s1161 + $0x390] sm:$0xff]
    %v1277 = vld [vmem:[%s1161 + $0x398] sm:$0xff]
    %v1278 = vld [vmem:[%s1161 + $0x3a0] sm:$0xff]
    %v1279 = vld [vmem:[%s1161 + $0x3a8] sm:$0xff]
    %v1280 = vld [vmem:[%s1161 + $0x3b0] sm:$0xff]
    %v1281 = vld [vmem:[%s1161 + $0x3b8] sm:$0xff]
    %v1282 = vld [vmem:[%s1161 + $0x3c0] sm:$0xff]
    %v1283 = vld [vmem:[%s1161 + $0x3c8] sm:$0xff]
    %v1284 = vld [vmem:[%s1161 + $0x3d0] sm:$0xff]
    %v1285 = vld [vmem:[%s1161 + $0x3d8] sm:$0xff]
    %v1286 = vld [vmem:[%s1161 + $0x3e0] sm:$0xff]
    %v1287 = vld [vmem:[%s1161 + $0x3e8] sm:$0xff]
    %v1288 = vld [vmem:[%s1161 + $0x3f0] sm:$0xff]
    %v1289 = vld [vmem:[%s1161 + $0x3f8] sm:$0xff]
    %v1290 = vld [vmem:[%s1161 + $0x400] sm:$0xff]
    %v1291 = vld [vmem:[%s1161 + $0x408] sm:$0xff]
    %v1292 = vld [vmem:[%s1161 + $0x410] sm:$0xff]
    %v1293 = vld [vmem:[%s1161 + $0x418] sm:$0xff]
    %v1294 = vld [vmem:[%s1161 + $0x420] sm:$0xff]
    %v1295 = vld [vmem:[%s1161 + $0x428] sm:$0xff]
    %v1296 = vld [vmem:[%s1161 + $0x430] sm:$0xff]
    %v1297 = vld [vmem:[%s1161 + $0x438] sm:$0xff]
    %v1298 = vld [vmem:[%s1161 + $0x440] sm:$0xff]
    %v1299 = vld [vmem:[%s1161 + $0x448] sm:$0xff]
    %v1300 = vld [vmem:[%s1161 + $0x450] sm:$0xff]
    %v1301 = vld [vmem:[%s1161 + $0x458] sm:$0xff]
    %v1302 = vld [vmem:[%s1161 + $0x460] sm:$0xff]
    %v1303 = vld [vmem:[%s1161 + $0x468] sm:$0xff]
    %v1304 = vld [vmem:[%s1161 + $0x470] sm:$0xff]
    %v1305 = vld [vmem:[%s1161 + $0x478] sm:$0xff]
    %v1306 = vld [vmem:[%s1161 + $0x480] sm:$0xff]
    %v1307 = vld [vmem:[%s1161 + $0x488] sm:$0xff]
    %v1308 = vld [vmem:[%s1161 + $0x490] sm:$0xff]
    %v1309 = vld [vmem:[%s1161 + $0x498] sm:$0xff]
    %v1310 = vld [vmem:[%s1161 + $0x4a0] sm:$0xff]
    %v1311 = vld [vmem:[%s1161 + $0x4a8] sm:$0xff]
    %v1312 = vld [vmem:[%s1161 + $0x4b0] sm:$0xff]
    %v1313 = vld [vmem:[%s1161 + $0x4b8] sm:$0xff]
    %v1314 = vld [vmem:[%s1161 + $0x4c0] sm:$0xff]
    %v1315 = vld [vmem:[%s1161 + $0x4c8] sm:$0xff]
    %v1316 = vld [vmem:[%s1161 + $0x4d0] sm:$0xff]
    %v1317 = vld [vmem:[%s1161 + $0x4d8] sm:$0xff]
    %v1318 = vld [vmem:[%s1161 + $0x4e0] sm:$0xff]
    %v1319 = vld [vmem:[%s1161 + $0x4e8] sm:$0xff]
    %v1320 = vld [vmem:[%s1161 + $0x4f0] sm:$0xff]
    %v1321 = vld [vmem:[%s1161 + $0x4f8] sm:$0xff]
    %v1322 = vld [vmem:[%s1161 + $0x500] sm:$0xff]
    %v1323 = vld [vmem:[%s1161 + $0x508] sm:$0xff]
    %v1324 = vld [vmem:[%s1161 + $0x510] sm:$0xff]
    %v1325 = vld [vmem:[%s1161 + $0x518] sm:$0xff]
    %v1326 = vld [vmem:[%s1161 + $0x520] sm:$0xff]
    %v1327 = vld [vmem:[%s1161 + $0x528] sm:$0xff]
    %v1328 = vld [vmem:[%s1161 + $0x530] sm:$0xff]
    %v1329 = vld [vmem:[%s1161 + $0x538] sm:$0xff]
    %v1330 = vld [vmem:[%s1161 + $0x540] sm:$0xff]
    %v1331 = vld [vmem:[%s1161 + $0x548] sm:$0xff]
    %v1332 = vld [vmem:[%s1161 + $0x550] sm:$0xff]
    %v1333 = vld [vmem:[%s1161 + $0x558] sm:$0xff]
    %v1334 = vld [vmem:[%s1161 + $0x560] sm:$0xff]
    %v1335 = vld [vmem:[%s1161 + $0x568] sm:$0xff]
    %v1336 = vld [vmem:[%s1161 + $0x570] sm:$0xff]
    %v1338 = vsel %vm325, %v1168, 0
    %v1341 = vsel %vm325, %v1175, 0
    %v1344 = vsel %vm325, %v1182, 0
    %v1347 = vsel %vm325, %v1189, 0
    %v1350 = vsel %vm325, %v1196, 0
    %v1353 = vsel %vm325, %v1203, 0
    %v1356 = vsel %vm325, %v1210, 0
    %v1359 = vsel %vm325, %v1217, 0
    %v1362 = vsel %vm325, %v1224, 0
    %v1365 = vsel %vm325, %v1231, 0
    %v1368 = vsel %vm325, %v1238, 0
    %v1371 = vsel %vm325, %v1245, 0
    %v1374 = vsel %vm325, %v1252, 0
    %v1377 = vsel %vm325, %v1259, 0
    %v1380 = vsel %vm325, %v1266, 0
    %v1383 = vsel %vm325, %v1273, 0
    %v1386 = vsel %vm325, %v1280, 0
    %v1389 = vsel %vm325, %v1287, 0
    %v1392 = vsel %vm325, %v1294, 0
    %v1395 = vsel %vm325, %v1301, 0
    %v1398 = vsel %vm325, %v1308, 0
    %v1401 = vsel %vm325, %v1315, 0
    %v1404 = vsel %vm325, %v1322, 0
    %v1407 = vsel %vm325, %v1329, 0
    %v1410 = vsel %vm325, %v1336, 0
    %1412 = vmatprep.subr.mxu0 0.0
    %1413 = vmatpush1.msra.mxu0 %v52
    %1414 = vmatprep.subr.mxu0 0.0
    %1415 = vmatpush1.msra.mxu0 %v53
    %1416 = vmatprep.subr.mxu0 0.0
    %1417 = vmatpush1.msra.mxu0 %v54
    %1418 = vmatprep.subr.mxu0 0.0
    %1419 = vmatpush1.msra.mxu0 %v55
    %1420 = vmatprep.subr.mxu0 0.0
    %1421 = vmatpush1.msra.mxu0 %v56
    %1422 = vmatprep.subr.mxu0 0.0
    %1423 = vmatpush1.msra.mxu0 %v57
    %1424 = vmatprep.subr.mxu0 0.0
    %1425 = vmatpush1.msra.mxu0 %v58
    %1426 = vmatprep.subr.mxu0 0.0
    %1427 = vmatpush1.msra.mxu0 %v59
    %1428 = vmatprep.subr.mxu0 0.0
    %1429 = vmatpush1.msra.mxu0 %v60
    %1430 = vmatprep.subr.mxu0 0.0
    %1431 = vmatpush1.msra.mxu0 %v61
    %1432 = vmatprep.subr.mxu0 0.0
    %1433 = vmatpush1.msra.mxu0 %v62
    %1434 = vmatprep.subr.mxu0 0.0
    %1435 = vmatpush1.msra.mxu0 %v63
    %1436 = vmatprep.subr.mxu0 0.0
    %1437 = vmatpush1.msra.mxu0 %v64
    %1438 = vmatprep.subr.mxu0 0.0
    %1439 = vmatpush1.msra.mxu0 %v65
    %1440 = vmatprep.subr.mxu0 0.0
    %1441 = vmatpush1.msra.mxu0 %v66
    %1442 = vmatprep.subr.mxu0 0.0
    %1443 = vmatpush1.msra.mxu0 %v67
    %1444 = vmatprep.subr.mxu0 0.0
    %1445 = vmatpush1.msra.mxu0 %v68
    %1446 = vmatprep.subr.mxu0 0.0
    %1447 = vmatpush1.msra.mxu0 %v69
    %1448 = vmatprep.subr.mxu0 0.0
    %1449 = vmatpush1.msra.mxu0 %v70
    %1450 = vmatprep.subr.mxu0 0.0
    %1451 = vmatpush1.msra.mxu0 %v71
    %1452 = vmatprep.subr.mxu0 0.0
    %1453 = vmatpush1.msra.mxu0 %v72
    %1454 = vmatprep.subr.mxu0 0.0
    %1455 = vmatpush1.msra.mxu0 %v73
    %1456 = vmatprep.subr.mxu0 0.0
    %1457 = vmatpush1.msra.mxu0 %v74
    %1458 = vmatprep.subr.mxu0 0.0
    %1459 = vmatpush1.msra.mxu0 %v75
    %1460 = vmatprep.subr.mxu0 0.0
    %1461 = vmatpush1.msra.mxu0 %v76
    %1462 = vmatprep.subr.mxu0 0.0
    %1463 = vmatpush1.msra.mxu0 %v77
    %1464 = vmatprep.subr.mxu0 0.0
    %1465 = vmatpush1.msra.mxu0 %v78
    %1466 = vmatprep.subr.mxu0 0.0
    %1467 = vmatpush1.msra.mxu0 %v79
    %1468 = vmatprep.subr.mxu0 0.0
    %1469 = vmatpush1.msra.mxu0 %v80
    %1470 = vmatprep.subr.mxu0 0.0
    %1471 = vmatpush1.msra.mxu0 %v81
    %1472 = vmatprep.subr.mxu0 0.0
    %1473 = vmatpush1.msra.mxu0 %v82
    %1474 = vmatprep.subr.mxu0 0.0
    %1475 = vmatpush1.msra.mxu0 %v83
    %1476 = vmatprep.mubr.f32.mxu0 %v1163
    %1477 = vmatmul.mubr.f32.gmra.mrb[0].mxu0 %v1162
    %v1478 = vpop.f32.mrb[0].mxu0
    %v1479 = vadd.f32 0.0, %v1478
    %v1480 = vpop.f32.mrb[0].mxu0
    %1481 = vmatprep.mubr.f32.mxu0 %v1170
    %1482 = vmatmul.mubr.f32.gmra.mrb[0].mxu0 %v1169
    %v1483 = vpop.f32.mrb[0].mxu0
    %v1484 = vadd.f32 0.0, %v1483
    %v1485 = vpop.f32.mrb[0].mxu0
    %1486 = vmatprep.mubr.f32.mxu0 %v1177
    %1487 = vmatmul.mubr.f32.gmra.mrb[0].mxu0 %v1176
    %v1488 = vpop.f32.mrb[0].mxu0
    %v1489 = vadd.f32 0.0, %v1488
    %v1490 = vpop.f32.mrb[0].mxu0
    %1491 = vmatprep.mubr.f32.mxu0 %v1184
    %1492 = vmatmul.mubr.f32.gmra.mrb[0].mxu0 %v1183
    %v1493 = vpop.f32.mrb[0].mxu0
    %v1494 = vadd.f32 0.0, %v1493
    %v1495 = vpop.f32.mrb[0].mxu0
    %1496 = vmatprep.mubr.f32.mxu0 %v1191
    %1497 = vmatmul.mubr.f32.gmra.mrb[0].mxu0 %v1190
    %v1498 = vpop.f32.mrb[0].mxu0
    %v1499 = vadd.f32 0.0, %v1498
    %v1500 = vpop.f32.mrb[0].mxu0
    %1501 = vmatprep.mubr.f32.mxu0 %v1198
    %1502 = vmatmul.mubr.f32.gmra.mrb[0].mxu0 %v1197
    %v1503 = vpop.f32.mrb[0].mxu0
    %v1504 = vadd.f32 0.0, %v1503
    %v1505 = vpop.f32.mrb[0].mxu0
    %1506 = vmatprep.mubr.f32.mxu0 %v1205
    %1507 = vmatmul.mubr.f32.gmra.mrb[0].mxu0 %v1204
    %v1508 = vpop.f32.mrb[0].mxu0
    %v1509 = vadd.f32 0.0, %v1508
    %v1510 = vpop.f32.mrb[0].mxu0
    %1511 = vmatprep.mubr.f32.mxu0 %v1212
    %1512 = vmatmul.mubr.f32.gmra.mrb[0].mxu0 %v1211
    %v1513 = vpop.f32.mrb[0].mxu0
    %v1514 = vadd.f32 0.0, %v1513
    %v1515 = vpop.f32.mrb[0].mxu0
    %1516 = vmatprep.mubr.f32.mxu0 %v1219
    %1517 = vmatmul.mubr.f32.gmra.mrb[0].mxu0 %v1218
    %v1518 = vpop.f32.mrb[0].mxu0
    %v1519 = vadd.f32 0.0, %v1518
    %v1520 = vpop.f32.mrb[0].mxu0
    %1521 = vmatprep.mubr.f32.mxu0 %v1226
    %1522 = vmatmul.mubr.f32.gmra.mrb[0].mxu0 %v1225
    %v1523 = vpop.f32.mrb[0].mxu0
    %v1524 = vadd.f32 0.0, %v1523
    %v1525 = vpop.f32.mrb[0].mxu0
    %1526 = vmatprep.mubr.f32.mxu0 %v1233
    %1527 = vmatmul.mubr.f32.gmra.mrb[0].mxu0 %v1232
    %v1528 = vpop.f32.mrb[0].mxu0
    %v1529 = vadd.f32 0.0, %v1528
    %v1530 = vpop.f32.mrb[0].mxu0
    %1531 = vmatprep.mubr.f32.mxu0 %v1240
    %1532 = vmatmul.mubr.f32.gmra.mrb[0].mxu0 %v1239
    %v1533 = vpop.f32.mrb[0].mxu0
    %v1534 = vadd.f32 0.0, %v1533
    %v1535 = vpop.f32.mrb[0].mxu0
    %1536 = vmatprep.mubr.f32.mxu0 %v1247
    %1537 = vmatmul.mubr.f32.gmra.mrb[0].mxu0 %v1246
    %v1538 = vpop.f32.mrb[0].mxu0
    %v1539 = vadd.f32 0.0, %v1538
    %v1540 = vpop.f32.mrb[0].mxu0
    %1541 = vmatprep.mubr.f32.mxu0 %v1254
    %1542 = vmatmul.mubr.f32.gmra.mrb[0].mxu0 %v1253
    %v1543 = vpop.f32.mrb[0].mxu0
    %v1544 = vadd.f32 0.0, %v1543
    %v1545 = vpop.f32.mrb[0].mxu0
    %1546 = vmatprep.mubr.f32.mxu0 %v1261
    %1547 = vmatmul.mubr.f32.gmra.mrb[0].mxu0 %v1260
    %v1548 = vpop.f32.mrb[0].mxu0
    %v1549 = vadd.f32 0.0, %v1548
    %v1550 = vpop.f32.mrb[0].mxu0
    %1551 = vmatprep.mubr.f32.mxu0 %v1268
    %1552 = vmatmul.mubr.f32.gmra.mrb[0].mxu0 %v1267
    %v1553 = vpop.f32.mrb[0].mxu0
    %v1554 = vadd.f32 0.0, %v1553
    %v1555 = vpop.f32.mrb[0].mxu0
    %1556 = vmatprep.mubr.f32.mxu0 %v1275
    %1557 = vmatmul.mubr.f32.gmra.mrb[0].mxu0 %v1274
    %v1558 = vpop.f32.mrb[0].mxu0
    %v1559 = vadd.f32 0.0, %v1558
    %v1560 = vpop.f32.mrb[0].mxu0
    %1561 = vmatprep.mubr.f32.mxu0 %v1282
    %1562 = vmatmul.mubr.f32.gmra.mrb[0].mxu0 %v1281
    %v1563 = vpop.f32.mrb[0].mxu0
    %v1564 = vadd.f32 0.0, %v1563
    %v1565 = vpop.f32.mrb[0].mxu0
    %1566 = vmatprep.mubr.f32.mxu0 %v1289
    %1567 = vmatmul.mubr.f32.gmra.mrb[0].mxu0 %v1288
    %v1568 = vpop.f32.mrb[0].mxu0
    %v1569 = vadd.f32 0.0, %v1568
    %v1570 = vpop.f32.mrb[0].mxu0
    %1571 = vmatprep.mubr.f32.mxu0 %v1296
    %1572 = vmatmul.mubr.f32.gmra.mrb[0].mxu0 %v1295
    %v1573 = vpop.f32.mrb[0].mxu0
    %v1574 = vadd.f32 0.0, %v1573
    %v1575 = vpop.f32.mrb[0].mxu0
    %1576 = vmatprep.mubr.f32.mxu0 %v1303
    %1577 = vmatmul.mubr.f32.gmra.mrb[0].mxu0 %v1302
    %v1578 = vpop.f32.mrb[0].mxu0
    %v1579 = vadd.f32 0.0, %v1578
    %v1580 = vpop.f32.mrb[0].mxu0
    %1581 = vmatprep.mubr.f32.mxu0 %v1310
    %1582 = vmatmul.mubr.f32.gmra.mrb[0].mxu0 %v1309
    %v1583 = vpop.f32.mrb[0].mxu0
    %v1584 = vadd.f32 0.0, %v1583
    %v1585 = vpop.f32.mrb[0].mxu0
    %1586 = vmatprep.mubr.f32.mxu0 %v1317
    %1587 = vmatmul.mubr.f32.gmra.mrb[0].mxu0 %v1316
    %v1588 = vpop.f32.mrb[0].mxu0
    %v1589 = vadd.f32 0.0, %v1588
    %v1590 = vpop.f32.mrb[0].mxu0
    %1591 = vmatprep.mubr.f32.mxu0 %v1324
    %1592 = vmatmul.mubr.f32.gmra.mrb[0].mxu0 %v1323
    %v1593 = vpop.f32.mrb[0].mxu0
    %v1594 = vadd.f32 0.0, %v1593
    %v1595 = vpop.f32.mrb[0].mxu0
    %1596 = vmatprep.mubr.f32.mxu0 %v1331
    %1597 = vmatmul.mubr.f32.gmra.mrb[0].mxu0 %v1330
    %v1598 = vpop.f32.mrb[0].mxu0
    %v1599 = vadd.f32 0.0, %v1598
    %v1600 = vpop.f32.mrb[0].mxu0
    %1601 = vdwg.mxu0
    %1602 = vmatprep.subr.mxu0 0.0
    %1603 = vmatpush1.msra.mxu0 %v84
    %1604 = vmatprep.subr.mxu0 0.0
    %1605 = vmatpush1.msra.mxu0 %v85
    %1606 = vmatprep.subr.mxu0 0.0
    %1607 = vmatpush1.msra.mxu0 %v86
    %1608 = vmatprep.subr.mxu0 0.0
    %1609 = vmatpush1.msra.mxu0 %v87
    %1610 = vmatprep.subr.mxu0 0.0
    %1611 = vmatpush1.msra.mxu0 %v88
    %1612 = vmatprep.subr.mxu0 0.0
    %1613 = vmatpush1.msra.mxu0 %v89
    %1614 = vmatprep.subr.mxu0 0.0
    %1615 = vmatpush1.msra.mxu0 %v90
    %1616 = vmatprep.subr.mxu0 0.0
    %1617 = vmatpush1.msra.mxu0 %v91
    %1618 = vmatprep.subr.mxu0 0.0
    %1619 = vmatpush1.msra.mxu0 %v92
    %1620 = vmatprep.subr.mxu0 0.0
    %1621 = vmatpush1.msra.mxu0 %v93
    %1622 = vmatprep.subr.mxu0 0.0
    %1623 = vmatpush1.msra.mxu0 %v94
    %1624 = vmatprep.subr.mxu0 0.0
    %1625 = vmatpush1.msra.mxu0 %v95
    %1626 = vmatprep.subr.mxu0 0.0
    %1627 = vmatpush1.msra.mxu0 %v96
    %1628 = vmatprep.subr.mxu0 0.0
    %1629 = vmatpush1.msra.mxu0 %v97
    %1630 = vmatprep.subr.mxu0 0.0
    %1631 = vmatpush1.msra.mxu0 %v98
    %1632 = vmatprep.subr.mxu0 0.0
    %1633 = vmatpush1.msra.mxu0 %v99
    %1634 = vmatprep.subr.mxu0 0.0
    %1635 = vmatpush1.msra.mxu0 %v100
    %1636 = vmatprep.subr.mxu0 0.0
    %1637 = vmatpush1.msra.mxu0 %v101
    %1638 = vmatprep.subr.mxu0 0.0
    %1639 = vmatpush1.msra.mxu0 %v102
    %1640 = vmatprep.subr.mxu0 0.0
    %1641 = vmatpush1.msra.mxu0 %v103
    %1642 = vmatprep.subr.mxu0 0.0
    %1643 = vmatpush1.msra.mxu0 %v104
    %1644 = vmatprep.subr.mxu0 0.0
    %1645 = vmatpush1.msra.mxu0 %v105
    %1646 = vmatprep.subr.mxu0 0.0
    %1647 = vmatpush1.msra.mxu0 %v106
    %1648 = vmatprep.subr.mxu0 0.0
    %1649 = vmatpush1.msra.mxu0 %v107
    %1650 = vmatprep.subr.mxu0 0.0
    %1651 = vmatpush1.msra.mxu0 %v108
    %1652 = vmatprep.subr.mxu0 0.0
    %1653 = vmatpush1.msra.mxu0 %v109
    %1654 = vmatprep.subr.mxu0 0.0
    %1655 = vmatpush1.msra.mxu0 %v110
    %1656 = vmatprep.subr.mxu0 0.0
    %1657 = vmatpush1.msra.mxu0 %v111
    %1658 = vmatprep.subr.mxu0 0.0
    %1659 = vmatpush1.msra.mxu0 %v112
    %1660 = vmatprep.subr.mxu0 0.0
    %1661 = vmatpush1.msra.mxu0 %v113
    %1662 = vmatprep.subr.mxu0 0.0
    %1663 = vmatpush1.msra.mxu0 %v114
    %1664 = vmatprep.subr.mxu0 0.0
    %1665 = vmatpush1.msra.mxu0 %v115
    %1666 = vmatprep.mubr.f32.mxu0 %v1165
    %1667 = vmatmul.mubr.f32.gmra.mrb[0].mxu0 %v1164
    %v1668 = vpop.f32.mrb[0].mxu0
    %v1669 = vadd.f32 %v1479, %v1668
    %v1670 = vpop.f32.mrb[0].mxu0
    %1671 = vmatprep.mubr.f32.mxu0 %v1172
    %1672 = vmatmul.mubr.f32.gmra.mrb[0].mxu0 %v1171
    %v1673 = vpop.f32.mrb[0].mxu0
    %v1674 = vadd.f32 %v1484, %v1673
    %v1675 = vpop.f32.mrb[0].mxu0
    %1676 = vmatprep.mubr.f32.mxu0 %v1179
    %1677 = vmatmul.mubr.f32.gmra.mrb[0].mxu0 %v1178
    %v1678 = vpop.f32.mrb[0].mxu0
    %v1679 = vadd.f32 %v1489, %v1678
    %v1680 = vpop.f32.mrb[0].mxu0
    %1681 = vmatprep.mubr.f32.mxu0 %v1186
    %1682 = vmatmul.mubr.f32.gmra.mrb[0].mxu0 %v1185
    %v1683 = vpop.f32.mrb[0].mxu0
    %v1684 = vadd.f32 %v1494, %v1683
    %v1685 = vpop.f32.mrb[0].mxu0
    %1686 = vmatprep.mubr.f32.mxu0 %v1193
    %1687 = vmatmul.mubr.f32.gmra.mrb[0].mxu0 %v1192
    %v1688 = vpop.f32.mrb[0].mxu0
    %v1689 = vadd.f32 %v1499, %v1688
    %v1690 = vpop.f32.mrb[0].mxu0
    %1691 = vmatprep.mubr.f32.mxu0 %v1200
    %1692 = vmatmul.mubr.f32.gmra.mrb[0].mxu0 %v1199
    %v1693 = vpop.f32.mrb[0].mxu0
    %v1694 = vadd.f32 %v1504, %v1693
    %v1695 = vpop.f32.mrb[0].mxu0
    %1696 = vmatprep.mubr.f32.mxu0 %v1207
    %1697 = vmatmul.mubr.f32.gmra.mrb[0].mxu0 %v1206
    %v1698 = vpop.f32.mrb[0].mxu0
    %v1699 = vadd.f32 %v1509, %v1698
    %v1700 = vpop.f32.mrb[0].mxu0
    %1701 = vmatprep.mubr.f32.mxu0 %v1214
    %1702 = vmatmul.mubr.f32.gmra.mrb[0].mxu0 %v1213
    %v1703 = vpop.f32.mrb[0].mxu0
    %v1704 = vadd.f32 %v1514, %v1703
    %v1705 = vpop.f32.mrb[0].mxu0
    %1706 = vmatprep.mubr.f32.mxu0 %v1221
    %1707 = vmatmul.mubr.f32.gmra.mrb[0].mxu0 %v1220
    %v1708 = vpop.f32.mrb[0].mxu0
    %v1709 = vadd.f32 %v1519, %v1708
    %v1710 = vpop.f32.mrb[0].mxu0
    %1711 = vmatprep.mubr.f32.mxu0 %v1228
    %1712 = vmatmul.mubr.f32.gmra.mrb[0].mxu0 %v1227
    %v1713 = vpop.f32.mrb[0].mxu0
    %v1714 = vadd.f32 %v1524, %v1713
    %v1715 = vpop.f32.mrb[0].mxu0
    %1716 = vmatprep.mubr.f32.mxu0 %v1235
    %1717 = vmatmul.mubr.f32.gmra.mrb[0].mxu0 %v1234
    %v1718 = vpop.f32.mrb[0].mxu0
    %v1719 = vadd.f32 %v1529, %v1718
    %v1720 = vpop.f32.mrb[0].mxu0
    %1721 = vmatprep.mubr.f32.mxu0 %v1242
    %1722 = vmatmul.mubr.f32.gmra.mrb[0].mxu0 %v1241
    %v1723 = vpop.f32.mrb[0].mxu0
    %v1724 = vadd.f32 %v1534, %v1723
    %v1725 = vpop.f32.mrb[0].mxu0
    %1726 = vmatprep.mubr.f32.mxu0 %v1249
    %1727 = vmatmul.mubr.f32.gmra.mrb[0].mxu0 %v1248
    %v1728 = vpop.f32.mrb[0].mxu0
    %v1729 = vadd.f32 %v1539, %v1728
    %v1730 = vpop.f32.mrb[0].mxu0
    %1731 = vmatprep.mubr.f32.mxu0 %v1256
    %1732 = vmatmul.mubr.f32.gmra.mrb[0].mxu0 %v1255
    %v1733 = vpop.f32.mrb[0].mxu0
    %v1734 = vadd.f32 %v1544, %v1733
    %v1735 = vpop.f32.mrb[0].mxu0
    %1736 = vmatprep.mubr.f32.mxu0 %v1263
    %1737 = vmatmul.mubr.f32.gmra.mrb[0].mxu0 %v1262
    %v1738 = vpop.f32.mrb[0].mxu0
    %v1739 = vadd.f32 %v1549, %v1738
    %v1740 = vpop.f32.mrb[0].mxu0
    %1741 = vmatprep.mubr.f32.mxu0 %v1270
    %1742 = vmatmul.mubr.f32.gmra.mrb[0].mxu0 %v1269
    %v1743 = vpop.f32.mrb[0].mxu0
    %v1744 = vadd.f32 %v1554, %v1743
    %v1745 = vpop.f32.mrb[0].mxu0
    %1746 = vmatprep.mubr.f32.mxu0 %v1277
    %1747 = vmatmul.mubr.f32.gmra.mrb[0].mxu0 %v1276
    %v1748 = vpop.f32.mrb[0].mxu0
    %v1749 = vadd.f32 %v1559, %v1748
    %v1750 = vpop.f32.mrb[0].mxu0
    %1751 = vmatprep.mubr.f32.mxu0 %v1284
    %1752 = vmatmul.mubr.f32.gmra.mrb[0].mxu0 %v1283
    %v1753 = vpop.f32.mrb[0].mxu0
    %v1754 = vadd.f32 %v1564, %v1753
    %v1755 = vpop.f32.mrb[0].mxu0
    %1756 = vmatprep.mubr.f32.mxu0 %v1291
    %1757 = vmatmul.mubr.f32.gmra.mrb[0].mxu0 %v1290
    %v1758 = vpop.f32.mrb[0].mxu0
    %v1759 = vadd.f32 %v1569, %v1758
    %v1760 = vpop.f32.mrb[0].mxu0
    %1761 = vmatprep.mubr.f32.mxu0 %v1298
    %1762 = vmatmul.mubr.f32.gmra.mrb[0].mxu0 %v1297
    %v1763 = vpop.f32.mrb[0].mxu0
    %v1764 = vadd.f32 %v1574, %v1763
    %v1765 = vpop.f32.mrb[0].mxu0
    %1766 = vmatprep.mubr.f32.mxu0 %v1305
    %1767 = vmatmul.mubr.f32.gmra.mrb[0].mxu0 %v1304
    %v1768 = vpop.f32.mrb[0].mxu0
    %v1769 = vadd.f32 %v1579, %v1768
    %v1770 = vpop.f32.mrb[0].mxu0
    %1771 = vmatprep.mubr.f32.mxu0 %v1312
    %1772 = vmatmul.mubr.f32.gmra.mrb[0].mxu0 %v1311
    %v1773 = vpop.f32.mrb[0].mxu0
    %v1774 = vadd.f32 %v1584, %v1773
    %v1775 = vpop.f32.mrb[0].mxu0
    %1776 = vmatprep.mubr.f32.mxu0 %v1319
    %1777 = vmatmul.mubr.f32.gmra.mrb[0].mxu0 %v1318
    %v1778 = vpop.f32.mrb[0].mxu0
    %v1779 = vadd.f32 %v1589, %v1778
    %v1780 = vpop.f32.mrb[0].mxu0
    %1781 = vmatprep.mubr.f32.mxu0 %v1326
    %1782 = vmatmul.mubr.f32.gmra.mrb[0].mxu0 %v1325
    %v1783 = vpop.f32.mrb[0].mxu0
    %v1784 = vadd.f32 %v1594, %v1783
    %v1785 = vpop.f32.mrb[0].mxu0
    %1786 = vmatprep.mubr.f32.mxu0 %v1333
    %1787 = vmatmul.mubr.f32.gmra.mrb[0].mxu0 %v1332
    %v1788 = vpop.f32.mrb[0].mxu0
    %v1789 = vadd.f32 %v1599, %v1788
    %v1790 = vpop.f32.mrb[0].mxu0
    %1791 = vdwg.mxu0
    %1792 = vmatprep.subr.mxu0 0.0
    %1793 = vmatpush1.msra.mxu0 %v116
    %1794 = vmatprep.subr.mxu0 0.0
    %1795 = vmatpush1.msra.mxu0 %v117
    %1796 = vmatprep.subr.mxu0 0.0
    %1797 = vmatpush1.msra.mxu0 %v118
    %1798 = vmatprep.subr.mxu0 0.0
    %1799 = vmatpush1.msra.mxu0 %v119
    %1800 = vmatprep.subr.mxu0 0.0
    %1801 = vmatpush1.msra.mxu0 %v120
    %1802 = vmatprep.subr.mxu0 0.0
    %1803 = vmatpush1.msra.mxu0 %v121
    %1804 = vmatprep.subr.mxu0 0.0
    %1805 = vmatpush1.msra.mxu0 %v122
    %1806 = vmatprep.subr.mxu0 0.0
    %1807 = vmatpush1.msra.mxu0 %v123
    %1808 = vmatprep.subr.mxu0 0.0
    %1809 = vmatpush1.msra.mxu0 %v124
    %1810 = vmatprep.subr.mxu0 0.0
    %1811 = vmatpush1.msra.mxu0 %v125
    %1812 = vmatprep.subr.mxu0 0.0
    %1813 = vmatpush1.msra.mxu0 %v126
    %1814 = vmatprep.subr.mxu0 0.0
    %1815 = vmatpush1.msra.mxu0 %v127
    %1816 = vmatprep.subr.mxu0 0.0
    %1817 = vmatpush1.msra.mxu0 %v128
    %1818 = vmatprep.subr.mxu0 0.0
    %1819 = vmatpush1.msra.mxu0 %v129
    %1820 = vmatprep.subr.mxu0 0.0
    %1821 = vmatpush1.msra.mxu0 %v130
    %1822 = vmatprep.subr.mxu0 0.0
    %1823 = vmatpush1.msra.mxu0 %v131
    %1824 = vmatprep.subr.mxu0 0.0
    %1825 = vmatpush1.msra.mxu0 %v132
    %1826 = vmatprep.subr.mxu0 0.0
    %1827 = vmatpush1.msra.mxu0 %v133
    %1828 = vmatprep.subr.mxu0 0.0
    %1829 = vmatpush1.msra.mxu0 %v134
    %1830 = vmatprep.subr.mxu0 0.0
    %1831 = vmatpush1.msra.mxu0 %v135
    %1832 = vmatprep.subr.mxu0 0.0
    %1833 = vmatpush1.msra.mxu0 %v136
    %1834 = vmatprep.subr.mxu0 0.0
    %1835 = vmatpush1.msra.mxu0 %v137
    %1836 = vmatprep.subr.mxu0 0.0
    %1837 = vmatpush1.msra.mxu0 %v138
    %1838 = vmatprep.subr.mxu0 0.0
    %1839 = vmatpush1.msra.mxu0 %v139
    %1840 = vmatprep.subr.mxu0 0.0
    %1841 = vmatpush1.msra.mxu0 %v140
    %1842 = vmatprep.subr.mxu0 0.0
    %1843 = vmatpush1.msra.mxu0 %v141
    %1844 = vmatprep.subr.mxu0 0.0
    %1845 = vmatpush1.msra.mxu0 %v142
    %1846 = vmatprep.subr.mxu0 0.0
    %1847 = vmatpush1.msra.mxu0 %v143
    %1848 = vmatprep.subr.mxu0 0.0
    %1849 = vmatpush1.msra.mxu0 %v144
    %1850 = vmatprep.subr.mxu0 0.0
    %1851 = vmatpush1.msra.mxu0 %v145
    %1852 = vmatprep.subr.mxu0 0.0
    %1853 = vmatpush1.msra.mxu0 %v146
    %1854 = vmatprep.subr.mxu0 0.0
    %1855 = vmatpush1.msra.mxu0 %v147
    %1856 = vmatprep.mubr.f32.mxu0 %v1167
    %1857 = vmatmul.mubr.f32.gmra.mrb[0].mxu0 %v1166
    %v1858 = vpop.f32.mrb[0].mxu0
    %v1859 = vadd.f32 %v1669, %v1858
    %v1860 = vpop.f32.mrb[0].mxu0
    %1861 = vmatprep.mubr.f32.mxu0 %v1174
    %1862 = vmatmul.mubr.f32.gmra.mrb[0].mxu0 %v1173
    %v1863 = vpop.f32.mrb[0].mxu0
    %v1864 = vadd.f32 %v1674, %v1863
    %v1865 = vpop.f32.mrb[0].mxu0
    %1866 = vmatprep.mubr.f32.mxu0 %v1181
    %1867 = vmatmul.mubr.f32.gmra.mrb[0].mxu0 %v1180
    %v1868 = vpop.f32.mrb[0].mxu0
    %v1869 = vadd.f32 %v1679, %v1868
    %v1870 = vpop.f32.mrb[0].mxu0
    %1871 = vmatprep.mubr.f32.mxu0 %v1188
    %1872 = vmatmul.mubr.f32.gmra.mrb[0].mxu0 %v1187
    %v1873 = vpop.f32.mrb[0].mxu0
    %v1874 = vadd.f32 %v1684, %v1873
    %v1875 = vpop.f32.mrb[0].mxu0
    %1876 = vmatprep.mubr.f32.mxu0 %v1195
    %1877 = vmatmul.mubr.f32.gmra.mrb[0].mxu0 %v1194
    %v1878 = vpop.f32.mrb[0].mxu0
    %v1879 = vadd.f32 %v1689, %v1878
    %v1880 = vpop.f32.mrb[0].mxu0
    %1881 = vmatprep.mubr.f32.mxu0 %v1202
    %1882 = vmatmul.mubr.f32.gmra.mrb[0].mxu0 %v1201
    %v1883 = vpop.f32.mrb[0].mxu0
    %v1884 = vadd.f32 %v1694, %v1883
    %v1885 = vpop.f32.mrb[0].mxu0
    %1886 = vmatprep.mubr.f32.mxu0 %v1209
    %1887 = vmatmul.mubr.f32.gmra.mrb[0].mxu0 %v1208
    %v1888 = vpop.f32.mrb[0].mxu0
    %v1889 = vadd.f32 %v1699, %v1888
    %v1890 = vpop.f32.mrb[0].mxu0
    %1891 = vmatprep.mubr.f32.mxu0 %v1216
    %1892 = vmatmul.mubr.f32.gmra.mrb[0].mxu0 %v1215
    %v1893 = vpop.f32.mrb[0].mxu0
    %v1894 = vadd.f32 %v1704, %v1893
    %v1895 = vpop.f32.mrb[0].mxu0
    %1896 = vmatprep.mubr.f32.mxu0 %v1223
    %1897 = vmatmul.mubr.f32.gmra.mrb[0].mxu0 %v1222
    %v1898 = vpop.f32.mrb[0].mxu0
    %v1899 = vadd.f32 %v1709, %v1898
    %v1900 = vpop.f32.mrb[0].mxu0
    %1901 = vmatprep.mubr.f32.mxu0 %v1230
    %1902 = vmatmul.mubr.f32.gmra.mrb[0].mxu0 %v1229
    %v1903 = vpop.f32.mrb[0].mxu0
    %v1904 = vadd.f32 %v1714, %v1903
    %v1905 = vpop.f32.mrb[0].mxu0
    %1906 = vmatprep.mubr.f32.mxu0 %v1237
    %1907 = vmatmul.mubr.f32.gmra.mrb[0].mxu0 %v1236
    %v1908 = vpop.f32.mrb[0].mxu0
    %v1909 = vadd.f32 %v1719, %v1908
    %v1910 = vpop.f32.mrb[0].mxu0
    %1911 = vmatprep.mubr.f32.mxu0 %v1244
    %1912 = vmatmul.mubr.f32.gmra.mrb[0].mxu0 %v1243
    %v1913 = vpop.f32.mrb[0].mxu0
    %v1914 = vadd.f32 %v1724, %v1913
    %v1915 = vpop.f32.mrb[0].mxu0
    %1916 = vmatprep.mubr.f32.mxu0 %v1251
    %1917 = vmatmul.mubr.f32.gmra.mrb[0].mxu0 %v1250
    %v1918 = vpop.f32.mrb[0].mxu0
    %v1919 = vadd.f32 %v1729, %v1918
    %v1920 = vpop.f32.mrb[0].mxu0
    %1921 = vmatprep.mubr.f32.mxu0 %v1258
    %1922 = vmatmul.mubr.f32.gmra.mrb[0].mxu0 %v1257
    %v1923 = vpop.f32.mrb[0].mxu0
    %v1924 = vadd.f32 %v1734, %v1923
    %v1925 = vpop.f32.mrb[0].mxu0
    %1926 = vmatprep.mubr.f32.mxu0 %v1265
    %1927 = vmatmul.mubr.f32.gmra.mrb[0].mxu0 %v1264
    %v1928 = vpop.f32.mrb[0].mxu0
    %v1929 = vadd.f32 %v1739, %v1928
    %v1930 = vpop.f32.mrb[0].mxu0
    %1931 = vmatprep.mubr.f32.mxu0 %v1272
    %1932 = vmatmul.mubr.f32.gmra.mrb[0].mxu0 %v1271
    %v1933 = vpop.f32.mrb[0].mxu0
    %v1934 = vadd.f32 %v1744, %v1933
    %v1935 = vpop.f32.mrb[0].mxu0
    %1936 = vmatprep.mubr.f32.mxu0 %v1279
    %1937 = vmatmul.mubr.f32.gmra.mrb[0].mxu0 %v1278
    %v1938 = vpop.f32.mrb[0].mxu0
    %v1939 = vadd.f32 %v1749, %v1938
    %v1940 = vpop.f32.mrb[0].mxu0
    %1941 = vmatprep.mubr.f32.mxu0 %v1286
    %1942 = vmatmul.mubr.f32.gmra.mrb[0].mxu0 %v1285
    %v1943 = vpop.f32.mrb[0].mxu0
    %v1944 = vadd.f32 %v1754, %v1943
    %v1945 = vpop.f32.mrb[0].mxu0
    %1946 = vmatprep.mubr.f32.mxu0 %v1293
    %1947 = vmatmul.mubr.f32.gmra.mrb[0].mxu0 %v1292
    %v1948 = vpop.f32.mrb[0].mxu0
    %v1949 = vadd.f32 %v1759, %v1948
    %v1950 = vpop.f32.mrb[0].mxu0
    %1951 = vmatprep.mubr.f32.mxu0 %v1300
    %1952 = vmatmul.mubr.f32.gmra.mrb[0].mxu0 %v1299
    %v1953 = vpop.f32.mrb[0].mxu0
    %v1954 = vadd.f32 %v1764, %v1953
    %v1955 = vpop.f32.mrb[0].mxu0
    %1956 = vmatprep.mubr.f32.mxu0 %v1307
    %1957 = vmatmul.mubr.f32.gmra.mrb[0].mxu0 %v1306
    %v1958 = vpop.f32.mrb[0].mxu0
    %v1959 = vadd.f32 %v1769, %v1958
    %v1960 = vpop.f32.mrb[0].mxu0
    %1961 = vmatprep.mubr.f32.mxu0 %v1314
    %1962 = vmatmul.mubr.f32.gmra.mrb[0].mxu0 %v1313
    %v1963 = vpop.f32.mrb[0].mxu0
    %v1964 = vadd.f32 %v1774, %v1963
    %v1965 = vpop.f32.mrb[0].mxu0
    %1966 = vmatprep.mubr.f32.mxu0 %v1321
    %1967 = vmatmul.mubr.f32.gmra.mrb[0].mxu0 %v1320
    %v1968 = vpop.f32.mrb[0].mxu0
    %v1969 = vadd.f32 %v1779, %v1968
    %v1970 = vpop.f32.mrb[0].mxu0
    %1971 = vmatprep.mubr.f32.mxu0 %v1328
    %1972 = vmatmul.mubr.f32.gmra.mrb[0].mxu0 %v1327
    %v1973 = vpop.f32.mrb[0].mxu0
    %v1974 = vadd.f32 %v1784, %v1973
    %v1975 = vpop.f32.mrb[0].mxu0
    %1976 = vmatprep.mubr.f32.mxu0 %v1335
    %1977 = vmatmul.mubr.f32.gmra.mrb[0].mxu0 %v1334
    %v1978 = vpop.f32.mrb[0].mxu0
    %v1979 = vadd.f32 %v1789, %v1978
    %v1980 = vpop.f32.mrb[0].mxu0
    %1981 = vdwg.mxu0
    %1982 = vmatprep.subr.mxu0 0.0
    %1983 = vmatpush1.msra.mxu0 %v148
    %1984 = vmatprep.subr.mxu0 0.0
    %1985 = vmatpush1.msra.mxu0 %v149
    %1986 = vmatprep.subr.mxu0 0.0
    %1987 = vmatpush1.msra.mxu0 0.0
    %1988 = vmatprep.subr.mxu0 0.0
    %1989 = vmatpush1.msra.mxu0 0.0
    %1990 = vmatprep.subr.mxu0 0.0
    %1991 = vmatpush1.msra.mxu0 0.0
    %1992 = vmatprep.subr.mxu0 0.0
    %1993 = vmatpush1.msra.mxu0 0.0
    %1994 = vmatprep.subr.mxu0 0.0
    %1995 = vmatpush1.msra.mxu0 0.0
    %1996 = vmatprep.subr.mxu0 0.0
    %1997 = vmatpush1.msra.mxu0 0.0
    %1998 = vmatprep.subr.mxu0 0.0
    %1999 = vmatpush1.msra.mxu0 0.0
    %2000 = vmatprep.subr.mxu0 0.0
    %2001 = vmatpush1.msra.mxu0 0.0
    %2002 = vmatprep.subr.mxu0 0.0
    %2003 = vmatpush1.msra.mxu0 0.0
    %2004 = vmatprep.subr.mxu0 0.0
    %2005 = vmatpush1.msra.mxu0 0.0
    %2006 = vmatprep.subr.mxu0 0.0
    %2007 = vmatpush1.msra.mxu0 0.0
    %2008 = vmatprep.subr.mxu0 0.0
    %2009 = vmatpush1.msra.mxu0 0.0
    %2010 = vmatprep.subr.mxu0 0.0
    %2011 = vmatpush1.msra.mxu0 0.0
    %2012 = vmatprep.subr.mxu0 0.0
    %2013 = vmatpush1.msra.mxu0 0.0
    %2014 = vmatprep.subr.mxu0 0.0
    %2015 = vmatpush1.msra.mxu0 0.0
    %2016 = vmatprep.subr.mxu0 0.0
    %2017 = vmatpush1.msra.mxu0 0.0
    %2018 = vmatprep.subr.mxu0 0.0
    %2019 = vmatpush1.msra.mxu0 0.0
    %2020 = vmatprep.subr.mxu0 0.0
    %2021 = vmatpush1.msra.mxu0 0.0
    %2022 = vmatprep.subr.mxu0 0.0
    %2023 = vmatpush1.msra.mxu0 0.0
    %2024 = vmatprep.subr.mxu0 0.0
    %2025 = vmatpush1.msra.mxu0 0.0
    %2026 = vmatprep.subr.mxu0 0.0
    %2027 = vmatpush1.msra.mxu0 0.0
    %2028 = vmatprep.subr.mxu0 0.0
    %2029 = vmatpush1.msra.mxu0 0.0
    %2030 = vmatprep.subr.mxu0 0.0
    %2031 = vmatpush1.msra.mxu0 0.0
    %2032 = vmatprep.subr.mxu0 0.0
    %2033 = vmatpush1.msra.mxu0 0.0
    %2034 = vmatprep.subr.mxu0 0.0
    %2035 = vmatpush1.msra.mxu0 0.0
    %2036 = vmatprep.subr.mxu0 0.0
    %2037 = vmatpush1.msra.mxu0 0.0
    %2038 = vmatprep.subr.mxu0 0.0
    %2039 = vmatpush1.msra.mxu0 0.0
    %2040 = vmatprep.subr.mxu0 0.0
    %2041 = vmatpush1.msra.mxu0 0.0
    %2042 = vmatprep.subr.mxu0 0.0
    %2043 = vmatpush1.msra.mxu0 0.0
    %2044 = vmatprep.subr.mxu0 0.0
    %2045 = vmatpush1.msra.mxu0 0.0
    %2046 = vmatprep.mubr.f32.mxu0 0.0
    %2047 = vmatmul.mubr.f32.gmra.mrb[0].mxu0 %v1338
    %v2048 = vpop.f32.mrb[0].mxu0
    %v2049 = vadd.f32 %v1859, %v2048
    %v2050 = vpop.f32.mrb[0].mxu0
    %2051 = vmatprep.mubr.f32.mxu0 0.0
    %2052 = vmatmul.mubr.f32.gmra.mrb[0].mxu0 %v1341
    %v2053 = vpop.f32.mrb[0].mxu0
    %v2054 = vadd.f32 %v1864, %v2053
    %v2055 = vpop.f32.mrb[0].mxu0
    %2056 = vmatprep.mubr.f32.mxu0 0.0
    %2057 = vmatmul.mubr.f32.gmra.mrb[0].mxu0 %v1344
    %v2058 = vpop.f32.mrb[0].mxu0
    %v2059 = vadd.f32 %v1869, %v2058
    %v2060 = vpop.f32.mrb[0].mxu0
    %2061 = vmatprep.mubr.f32.mxu0 0.0
    %2062 = vmatmul.mubr.f32.gmra.mrb[0].mxu0 %v1347
    %v2063 = vpop.f32.mrb[0].mxu0
    %v2064 = vadd.f32 %v1874, %v2063
    %v2065 = vpop.f32.mrb[0].mxu0
    %2066 = vmatprep.mubr.f32.mxu0 0.0
    %2067 = vmatmul.mubr.f32.gmra.mrb[0].mxu0 %v1350
    %v2068 = vpop.f32.mrb[0].mxu0
    %v2069 = vadd.f32 %v1879, %v2068
    %v2070 = vpop.f32.mrb[0].mxu0
    %2071 = vmatprep.mubr.f32.mxu0 0.0
    %2072 = vmatmul.mubr.f32.gmra.mrb[0].mxu0 %v1353
    %v2073 = vpop.f32.mrb[0].mxu0
    %v2074 = vadd.f32 %v1884, %v2073
    %v2075 = vpop.f32.mrb[0].mxu0
    %2076 = vmatprep.mubr.f32.mxu0 0.0
    %2077 = vmatmul.mubr.f32.gmra.mrb[0].mxu0 %v1356
    %v2078 = vpop.f32.mrb[0].mxu0
    %v2079 = vadd.f32 %v1889, %v2078
    %v2080 = vpop.f32.mrb[0].mxu0
    %2081 = vmatprep.mubr.f32.mxu0 0.0
    %2082 = vmatmul.mubr.f32.gmra.mrb[0].mxu0 %v1359
    %v2083 = vpop.f32.mrb[0].mxu0
    %v2084 = vadd.f32 %v1894, %v2083
    %v2085 = vpop.f32.mrb[0].mxu0
    %2086 = vmatprep.mubr.f32.mxu0 0.0
    %2087 = vmatmul.mubr.f32.gmra.mrb[0].mxu0 %v1362
    %v2088 = vpop.f32.mrb[0].mxu0
    %v2089 = vadd.f32 %v1899, %v2088
    %v2090 = vpop.f32.mrb[0].mxu0
    %2091 = vmatprep.mubr.f32.mxu0 0.0
    %2092 = vmatmul.mubr.f32.gmra.mrb[0].mxu0 %v1365
    %v2093 = vpop.f32.mrb[0].mxu0
    %v2094 = vadd.f32 %v1904, %v2093
    %v2095 = vpop.f32.mrb[0].mxu0
    %2096 = vmatprep.mubr.f32.mxu0 0.0
    %2097 = vmatmul.mubr.f32.gmra.mrb[0].mxu0 %v1368
    %v2098 = vpop.f32.mrb[0].mxu0
    %v2099 = vadd.f32 %v1909, %v2098
    %v2100 = vpop.f32.mrb[0].mxu0
    %2101 = vmatprep.mubr.f32.mxu0 0.0
    %2102 = vmatmul.mubr.f32.gmra.mrb[0].mxu0 %v1371
    %v2103 = vpop.f32.mrb[0].mxu0
    %v2104 = vadd.f32 %v1914, %v2103
    %v2105 = vpop.f32.mrb[0].mxu0
    %2106 = vmatprep.mubr.f32.mxu0 0.0
    %2107 = vmatmul.mubr.f32.gmra.mrb[0].mxu0 %v1374
    %v2108 = vpop.f32.mrb[0].mxu0
    %v2109 = vadd.f32 %v1919, %v2108
    %v2110 = vpop.f32.mrb[0].mxu0
    %2111 = vmatprep.mubr.f32.mxu0 0.0
    %2112 = vmatmul.mubr.f32.gmra.mrb[0].mxu0 %v1377
    %v2113 = vpop.f32.mrb[0].mxu0
    %v2114 = vadd.f32 %v1924, %v2113
    %v2115 = vpop.f32.mrb[0].mxu0
    %2116 = vmatprep.mubr.f32.mxu0 0.0
    %2117 = vmatmul.mubr.f32.gmra.mrb[0].mxu0 %v1380
    %v2118 = vpop.f32.mrb[0].mxu0
    %v2119 = vadd.f32 %v1929, %v2118
    %v2120 = vpop.f32.mrb[0].mxu0
    %2121 = vmatprep.mubr.f32.mxu0 0.0
    %2122 = vmatmul.mubr.f32.gmra.mrb[0].mxu0 %v1383
    %v2123 = vpop.f32.mrb[0].mxu0
    %v2124 = vadd.f32 %v1934, %v2123
    %v2125 = vpop.f32.mrb[0].mxu0
    %2126 = vmatprep.mubr.f32.mxu0 0.0
    %2127 = vmatmul.mubr.f32.gmra.mrb[0].mxu0 %v1386
    %v2128 = vpop.f32.mrb[0].mxu0
    %v2129 = vadd.f32 %v1939, %v2128
    %v2130 = vpop.f32.mrb[0].mxu0
    %2131 = vmatprep.mubr.f32.mxu0 0.0
    %2132 = vmatmul.mubr.f32.gmra.mrb[0].mxu0 %v1389
    %v2133 = vpop.f32.mrb[0].mxu0
    %v2134 = vadd.f32 %v1944, %v2133
    %v2135 = vpop.f32.mrb[0].mxu0
    %2136 = vmatprep.mubr.f32.mxu0 0.0
    %2137 = vmatmul.mubr.f32.gmra.mrb[0].mxu0 %v1392
    %v2138 = vpop.f32.mrb[0].mxu0
    %v2139 = vadd.f32 %v1949, %v2138
    %v2140 = vpop.f32.mrb[0].mxu0
    %2141 = vmatprep.mubr.f32.mxu0 0.0
    %2142 = vmatmul.mubr.f32.gmra.mrb[0].mxu0 %v1395
    %v2143 = vpop.f32.mrb[0].mxu0
    %v2144 = vadd.f32 %v1954, %v2143
    %v2145 = vpop.f32.mrb[0].mxu0
    %2146 = vmatprep.mubr.f32.mxu0 0.0
    %2147 = vmatmul.mubr.f32.gmra.mrb[0].mxu0 %v1398
    %v2148 = vpop.f32.mrb[0].mxu0
    %v2149 = vadd.f32 %v1959, %v2148
    %v2150 = vpop.f32.mrb[0].mxu0
    %2151 = vmatprep.mubr.f32.mxu0 0.0
    %2152 = vmatmul.mubr.f32.gmra.mrb[0].mxu0 %v1401
    %v2153 = vpop.f32.mrb[0].mxu0
    %v2154 = vadd.f32 %v1964, %v2153
    %v2155 = vpop.f32.mrb[0].mxu0
    %2156 = vmatprep.mubr.f32.mxu0 0.0
    %2157 = vmatmul.mubr.f32.gmra.mrb[0].mxu0 %v1404
    %v2158 = vpop.f32.mrb[0].mxu0
    %v2159 = vadd.f32 %v1969, %v2158
    %v2160 = vpop.f32.mrb[0].mxu0
    %2161 = vmatprep.mubr.f32.mxu0 0.0
    %2162 = vmatmul.mubr.f32.gmra.mrb[0].mxu0 %v1407
    %v2163 = vpop.f32.mrb[0].mxu0
    %v2164 = vadd.f32 %v1974, %v2163
    %v2165 = vpop.f32.mrb[0].mxu0
    %2166 = vmatprep.mubr.f32.mxu0 0.0
    %2167 = vmatmul.mubr.f32.gmra.mrb[0].mxu0 %v1410
    %v2168 = vpop.f32.mrb[0].mxu0
    %v2169 = vadd.f32 %v1979, %v2168
    %v2170 = vpop.f32.mrb[0].mxu0
    %2171 = vdwg.mxu0
    %v2172 = vmax.f32 %v1038, %v2049
    %v2173 = vmax.f32 %v1043, %v2054
    %v2174 = vmax.f32 %v1048, %v2059
    %v2175 = vmax.f32 %v1053, %v2064
    %v2176 = vmax.f32 %v1058, %v2069
    %v2177 = vmax.f32 %v1063, %v2074
    %v2178 = vmax.f32 %v1068, %v2079
    %v2179 = vmax.f32 %v1073, %v2084
    %v2180 = vmax.f32 %v1078, %v2089
    %v2181 = vmax.f32 %v1083, %v2094
    %v2182 = vmax.f32 %v1088, %v2099
    %v2183 = vmax.f32 %v1093, %v2104
    %v2184 = vmax.f32 %v1098, %v2109
    %v2185 = vmax.f32 %v1103, %v2114
    %v2186 = vmax.f32 %v1108, %v2119
    %v2187 = vmax.f32 %v1113, %v2124
    %v2188 = vmax.f32 %v1118, %v2129
    %v2189 = vmax.f32 %v1123, %v2134
    %v2190 = vmax.f32 %v1128, %v2139
    %v2191 = vmax.f32 %v1133, %v2144
    %v2192 = vmax.f32 %v1138, %v2149
    %v2193 = vmax.f32 %v1143, %v2154
    %v2194 = vmax.f32 %v1148, %v2159
    %v2195 = vmax.f32 %v1153, %v2164
    %v2196 = vmax.f32 %v1158, %v2169
    %s2197 = scalar_lea.vmem [#allocation2], 2800
    %v2198 = vld [vmem:[%s2197] sm:$0xff]
    %v2199 = vld [vmem:[%s2197 + $0x8] sm:$0xff]
    %v2200 = vld [vmem:[%s2197 + $0x10] sm:$0xff]
    %v2201 = vld [vmem:[%s2197 + $0x18] sm:$0xff]
    %v2202 = vld [vmem:[%s2197 + $0x20] sm:$0xff]
    %v2203 = vld [vmem:[%s2197 + $0x28] sm:$0xff]
    %v2204 = vld [vmem:[%s2197 + $0x30] sm:$0xff]
    %v2205 = vld [vmem:[%s2197 + $0x38] sm:$0xff]
    %v2206 = vld [vmem:[%s2197 + $0x40] sm:$0xff]
    %v2207 = vld [vmem:[%s2197 + $0x48] sm:$0xff]
    %v2208 = vld [vmem:[%s2197 + $0x50] sm:$0xff]
    %v2209 = vld [vmem:[%s2197 + $0x58] sm:$0xff]
    %v2210 = vld [vmem:[%s2197 + $0x60] sm:$0xff]
    %v2211 = vld [vmem:[%s2197 + $0x68] sm:$0xff]
    %v2212 = vld [vmem:[%s2197 + $0x70] sm:$0xff]
    %v2213 = vld [vmem:[%s2197 + $0x78] sm:$0xff]
    %v2214 = vld [vmem:[%s2197 + $0x80] sm:$0xff]
    %v2215 = vld [vmem:[%s2197 + $0x88] sm:$0xff]
    %v2216 = vld [vmem:[%s2197 + $0x90] sm:$0xff]
    %v2217 = vld [vmem:[%s2197 + $0x98] sm:$0xff]
    %v2218 = vld [vmem:[%s2197 + $0xa0] sm:$0xff]
    %v2219 = vld [vmem:[%s2197 + $0xa8] sm:$0xff]
    %v2220 = vld [vmem:[%s2197 + $0xb0] sm:$0xff]
    %v2221 = vld [vmem:[%s2197 + $0xb8] sm:$0xff]
    %v2222 = vld [vmem:[%s2197 + $0xc0] sm:$0xff]
    %v2223 = vld [vmem:[%s2197 + $0xc8] sm:$0xff]
    %v2224 = vld [vmem:[%s2197 + $0xd0] sm:$0xff]
    %v2225 = vld [vmem:[%s2197 + $0xd8] sm:$0xff]
    %v2226 = vld [vmem:[%s2197 + $0xe0] sm:$0xff]
    %v2227 = vld [vmem:[%s2197 + $0xe8] sm:$0xff]
    %v2228 = vld [vmem:[%s2197 + $0xf0] sm:$0xff]
    %v2229 = vld [vmem:[%s2197 + $0xf8] sm:$0xff]
    %v2230 = vld [vmem:[%s2197 + $0x100] sm:$0xff]
    %v2231 = vld [vmem:[%s2197 + $0x108] sm:$0xff]
    %v2232 = vld [vmem:[%s2197 + $0x110] sm:$0xff]
    %v2233 = vld [vmem:[%s2197 + $0x118] sm:$0xff]
    %v2234 = vld [vmem:[%s2197 + $0x120] sm:$0xff]
    %v2235 = vld [vmem:[%s2197 + $0x128] sm:$0xff]
    %v2236 = vld [vmem:[%s2197 + $0x130] sm:$0xff]
    %v2237 = vld [vmem:[%s2197 + $0x138] sm:$0xff]
    %v2238 = vld [vmem:[%s2197 + $0x140] sm:$0xff]
    %v2239 = vld [vmem:[%s2197 + $0x148] sm:$0xff]
    %v2240 = vld [vmem:[%s2197 + $0x150] sm:$0xff]
    %v2241 = vld [vmem:[%s2197 + $0x158] sm:$0xff]
    %v2242 = vld [vmem:[%s2197 + $0x160] sm:$0xff]
    %v2243 = vld [vmem:[%s2197 + $0x168] sm:$0xff]
    %v2244 = vld [vmem:[%s2197 + $0x170] sm:$0xff]
    %v2245 = vld [vmem:[%s2197 + $0x178] sm:$0xff]
    %v2246 = vld [vmem:[%s2197 + $0x180] sm:$0xff]
    %v2247 = vld [vmem:[%s2197 + $0x188] sm:$0xff]
    %v2248 = vld [vmem:[%s2197 + $0x190] sm:$0xff]
    %v2249 = vld [vmem:[%s2197 + $0x198] sm:$0xff]
    %v2250 = vld [vmem:[%s2197 + $0x1a0] sm:$0xff]
    %v2251 = vld [vmem:[%s2197 + $0x1a8] sm:$0xff]
    %v2252 = vld [vmem:[%s2197 + $0x1b0] sm:$0xff]
    %v2253 = vld [vmem:[%s2197 + $0x1b8] sm:$0xff]
    %v2254 = vld [vmem:[%s2197 + $0x1c0] sm:$0xff]
    %v2255 = vld [vmem:[%s2197 + $0x1c8] sm:$0xff]
    %v2256 = vld [vmem:[%s2197 + $0x1d0] sm:$0xff]
    %v2257 = vld [vmem:[%s2197 + $0x1d8] sm:$0xff]
    %v2258 = vld [vmem:[%s2197 + $0x1e0] sm:$0xff]
    %v2259 = vld [vmem:[%s2197 + $0x1e8] sm:$0xff]
    %v2260 = vld [vmem:[%s2197 + $0x1f0] sm:$0xff]
    %v2261 = vld [vmem:[%s2197 + $0x1f8] sm:$0xff]
    %v2262 = vld [vmem:[%s2197 + $0x200] sm:$0xff]
    %v2263 = vld [vmem:[%s2197 + $0x208] sm:$0xff]
    %v2264 = vld [vmem:[%s2197 + $0x210] sm:$0xff]
    %v2265 = vld [vmem:[%s2197 + $0x218] sm:$0xff]
    %v2266 = vld [vmem:[%s2197 + $0x220] sm:$0xff]
    %v2267 = vld [vmem:[%s2197 + $0x228] sm:$0xff]
    %v2268 = vld [vmem:[%s2197 + $0x230] sm:$0xff]
    %v2269 = vld [vmem:[%s2197 + $0x238] sm:$0xff]
    %v2270 = vld [vmem:[%s2197 + $0x240] sm:$0xff]
    %v2271 = vld [vmem:[%s2197 + $0x248] sm:$0xff]
    %v2272 = vld [vmem:[%s2197 + $0x250] sm:$0xff]
    %v2273 = vld [vmem:[%s2197 + $0x258] sm:$0xff]
    %v2274 = vld [vmem:[%s2197 + $0x260] sm:$0xff]
    %v2275 = vld [vmem:[%s2197 + $0x268] sm:$0xff]
    %v2276 = vld [vmem:[%s2197 + $0x270] sm:$0xff]
    %v2277 = vld [vmem:[%s2197 + $0x278] sm:$0xff]
    %v2278 = vld [vmem:[%s2197 + $0x280] sm:$0xff]
    %v2279 = vld [vmem:[%s2197 + $0x288] sm:$0xff]
    %v2280 = vld [vmem:[%s2197 + $0x290] sm:$0xff]
    %v2281 = vld [vmem:[%s2197 + $0x298] sm:$0xff]
    %v2282 = vld [vmem:[%s2197 + $0x2a0] sm:$0xff]
    %v2283 = vld [vmem:[%s2197 + $0x2a8] sm:$0xff]
    %v2284 = vld [vmem:[%s2197 + $0x2b0] sm:$0xff]
    %v2285 = vld [vmem:[%s2197 + $0x2b8] sm:$0xff]
    %v2286 = vld [vmem:[%s2197 + $0x2c0] sm:$0xff]
    %v2287 = vld [vmem:[%s2197 + $0x2c8] sm:$0xff]
    %v2288 = vld [vmem:[%s2197 + $0x2d0] sm:$0xff]
    %v2289 = vld [vmem:[%s2197 + $0x2d8] sm:$0xff]
    %v2290 = vld [vmem:[%s2197 + $0x2e0] sm:$0xff]
    %v2291 = vld [vmem:[%s2197 + $0x2e8] sm:$0xff]
    %v2292 = vld [vmem:[%s2197 + $0x2f0] sm:$0xff]
    %v2293 = vld [vmem:[%s2197 + $0x2f8] sm:$0xff]
    %v2294 = vld [vmem:[%s2197 + $0x300] sm:$0xff]
    %v2295 = vld [vmem:[%s2197 + $0x308] sm:$0xff]
    %v2296 = vld [vmem:[%s2197 + $0x310] sm:$0xff]
    %v2297 = vld [vmem:[%s2197 + $0x318] sm:$0xff]
    %v2298 = vld [vmem:[%s2197 + $0x320] sm:$0xff]
    %v2299 = vld [vmem:[%s2197 + $0x328] sm:$0xff]
    %v2300 = vld [vmem:[%s2197 + $0x330] sm:$0xff]
    %v2301 = vld [vmem:[%s2197 + $0x338] sm:$0xff]
    %v2302 = vld [vmem:[%s2197 + $0x340] sm:$0xff]
    %v2303 = vld [vmem:[%s2197 + $0x348] sm:$0xff]
    %v2304 = vld [vmem:[%s2197 + $0x350] sm:$0xff]
    %v2305 = vld [vmem:[%s2197 + $0x358] sm:$0xff]
    %v2306 = vld [vmem:[%s2197 + $0x360] sm:$0xff]
    %v2307 = vld [vmem:[%s2197 + $0x368] sm:$0xff]
    %v2308 = vld [vmem:[%s2197 + $0x370] sm:$0xff]
    %v2309 = vld [vmem:[%s2197 + $0x378] sm:$0xff]
    %v2310 = vld [vmem:[%s2197 + $0x380] sm:$0xff]
    %v2311 = vld [vmem:[%s2197 + $0x388] sm:$0xff]
    %v2312 = vld [vmem:[%s2197 + $0x390] sm:$0xff]
    %v2313 = vld [vmem:[%s2197 + $0x398] sm:$0xff]
    %v2314 = vld [vmem:[%s2197 + $0x3a0] sm:$0xff]
    %v2315 = vld [vmem:[%s2197 + $0x3a8] sm:$0xff]
    %v2316 = vld [vmem:[%s2197 + $0x3b0] sm:$0xff]
    %v2317 = vld [vmem:[%s2197 + $0x3b8] sm:$0xff]
    %v2318 = vld [vmem:[%s2197 + $0x3c0] sm:$0xff]
    %v2319 = vld [vmem:[%s2197 + $0x3c8] sm:$0xff]
    %v2320 = vld [vmem:[%s2197 + $0x3d0] sm:$0xff]
    %v2321 = vld [vmem:[%s2197 + $0x3d8] sm:$0xff]
    %v2322 = vld [vmem:[%s2197 + $0x3e0] sm:$0xff]
    %v2323 = vld [vmem:[%s2197 + $0x3e8] sm:$0xff]
    %v2324 = vld [vmem:[%s2197 + $0x3f0] sm:$0xff]
    %v2325 = vld [vmem:[%s2197 + $0x3f8] sm:$0xff]
    %v2326 = vld [vmem:[%s2197 + $0x400] sm:$0xff]
    %v2327 = vld [vmem:[%s2197 + $0x408] sm:$0xff]
    %v2328 = vld [vmem:[%s2197 + $0x410] sm:$0xff]
    %v2329 = vld [vmem:[%s2197 + $0x418] sm:$0xff]
    %v2330 = vld [vmem:[%s2197 + $0x420] sm:$0xff]
    %v2331 = vld [vmem:[%s2197 + $0x428] sm:$0xff]
    %v2332 = vld [vmem:[%s2197 + $0x430] sm:$0xff]
    %v2333 = vld [vmem:[%s2197 + $0x438] sm:$0xff]
    %v2334 = vld [vmem:[%s2197 + $0x440] sm:$0xff]
    %v2335 = vld [vmem:[%s2197 + $0x448] sm:$0xff]
    %v2336 = vld [vmem:[%s2197 + $0x450] sm:$0xff]
    %v2337 = vld [vmem:[%s2197 + $0x458] sm:$0xff]
    %v2338 = vld [vmem:[%s2197 + $0x460] sm:$0xff]
    %v2339 = vld [vmem:[%s2197 + $0x468] sm:$0xff]
    %v2340 = vld [vmem:[%s2197 + $0x470] sm:$0xff]
    %v2341 = vld [vmem:[%s2197 + $0x478] sm:$0xff]
    %v2342 = vld [vmem:[%s2197 + $0x480] sm:$0xff]
    %v2343 = vld [vmem:[%s2197 + $0x488] sm:$0xff]
    %v2344 = vld [vmem:[%s2197 + $0x490] sm:$0xff]
    %v2345 = vld [vmem:[%s2197 + $0x498] sm:$0xff]
    %v2346 = vld [vmem:[%s2197 + $0x4a0] sm:$0xff]
    %v2347 = vld [vmem:[%s2197 + $0x4a8] sm:$0xff]
    %v2348 = vld [vmem:[%s2197 + $0x4b0] sm:$0xff]
    %v2349 = vld [vmem:[%s2197 + $0x4b8] sm:$0xff]
    %v2350 = vld [vmem:[%s2197 + $0x4c0] sm:$0xff]
    %v2351 = vld [vmem:[%s2197 + $0x4c8] sm:$0xff]
    %v2352 = vld [vmem:[%s2197 + $0x4d0] sm:$0xff]
    %v2353 = vld [vmem:[%s2197 + $0x4d8] sm:$0xff]
    %v2354 = vld [vmem:[%s2197 + $0x4e0] sm:$0xff]
    %v2355 = vld [vmem:[%s2197 + $0x4e8] sm:$0xff]
    %v2356 = vld [vmem:[%s2197 + $0x4f0] sm:$0xff]
    %v2357 = vld [vmem:[%s2197 + $0x4f8] sm:$0xff]
    %v2358 = vld [vmem:[%s2197 + $0x500] sm:$0xff]
    %v2359 = vld [vmem:[%s2197 + $0x508] sm:$0xff]
    %v2360 = vld [vmem:[%s2197 + $0x510] sm:$0xff]
    %v2361 = vld [vmem:[%s2197 + $0x518] sm:$0xff]
    %v2362 = vld [vmem:[%s2197 + $0x520] sm:$0xff]
    %v2363 = vld [vmem:[%s2197 + $0x528] sm:$0xff]
    %v2364 = vld [vmem:[%s2197 + $0x530] sm:$0xff]
    %v2365 = vld [vmem:[%s2197 + $0x538] sm:$0xff]
    %v2366 = vld [vmem:[%s2197 + $0x540] sm:$0xff]
    %v2367 = vld [vmem:[%s2197 + $0x548] sm:$0xff]
    %v2368 = vld [vmem:[%s2197 + $0x550] sm:$0xff]
    %v2369 = vld [vmem:[%s2197 + $0x558] sm:$0xff]
    %v2370 = vld [vmem:[%s2197 + $0x560] sm:$0xff]
    %v2371 = vld [vmem:[%s2197 + $0x568] sm:$0xff]
    %v2372 = vld [vmem:[%s2197 + $0x570] sm:$0xff]
    %v2374 = vsel %vm325, %v2204, 0
    %v2377 = vsel %vm325, %v2211, 0
    %v2380 = vsel %vm325, %v2218, 0
    %v2383 = vsel %vm325, %v2225, 0
    %v2386 = vsel %vm325, %v2232, 0
    %v2389 = vsel %vm325, %v2239, 0
    %v2392 = vsel %vm325, %v2246, 0
    %v2395 = vsel %vm325, %v2253, 0
    %v2398 = vsel %vm325, %v2260, 0
    %v2401 = vsel %vm325, %v2267, 0
    %v2404 = vsel %vm325, %v2274, 0
    %v2407 = vsel %vm325, %v2281, 0
    %v2410 = vsel %vm325, %v2288, 0
    %v2413 = vsel %vm325, %v2295, 0
    %v2416 = vsel %vm325, %v2302, 0
    %v2419 = vsel %vm325, %v2309, 0
    %v2422 = vsel %vm325, %v2316, 0
    %v2425 = vsel %vm325, %v2323, 0
    %v2428 = vsel %vm325, %v2330, 0
    %v2431 = vsel %vm325, %v2337, 0
    %v2434 = vsel %vm325, %v2344, 0
    %v2437 = vsel %vm325, %v2351, 0
    %v2440 = vsel %vm325, %v2358, 0
    %v2443 = vsel %vm325, %v2365, 0
    %v2446 = vsel %vm325, %v2372, 0
    %2448 = vmatprep.subr.mxu0 0.0
    %2449 = vmatpush1.msra.mxu0 %v52
    %2450 = vmatprep.subr.mxu0 0.0
    %2451 = vmatpush1.msra.mxu0 %v53
    %2452 = vmatprep.subr.mxu0 0.0
    %2453 = vmatpush1.msra.mxu0 %v54
    %2454 = vmatprep.subr.mxu0 0.0
    %2455 = vmatpush1.msra.mxu0 %v55
    %2456 = vmatprep.subr.mxu0 0.0
    %2457 = vmatpush1.msra.mxu0 %v56
    %2458 = vmatprep.subr.mxu0 0.0
    %2459 = vmatpush1.msra.mxu0 %v57
    %2460 = vmatprep.subr.mxu0 0.0
    %2461 = vmatpush1.msra.mxu0 %v58
    %2462 = vmatprep.subr.mxu0 0.0
    %2463 = vmatpush1.msra.mxu0 %v59
    %2464 = vmatprep.subr.mxu0 0.0
    %2465 = vmatpush1.msra.mxu0 %v60
    %2466 = vmatprep.subr.mxu0 0.0
    %2467 = vmatpush1.msra.mxu0 %v61
    %2468 = vmatprep.subr.mxu0 0.0
    %2469 = vmatpush1.msra.mxu0 %v62
    %2470 = vmatprep.subr.mxu0 0.0
    %2471 = vmatpush1.msra.mxu0 %v63
    %2472 = vmatprep.subr.mxu0 0.0
    %2473 = vmatpush1.msra.mxu0 %v64
    %2474 = vmatprep.subr.mxu0 0.0
    %2475 = vmatpush1.msra.mxu0 %v65
    %2476 = vmatprep.subr.mxu0 0.0
    %2477 = vmatpush1.msra.mxu0 %v66
    %2478 = vmatprep.subr.mxu0 0.0
    %2479 = vmatpush1.msra.mxu0 %v67
    %2480 = vmatprep.subr.mxu0 0.0
    %2481 = vmatpush1.msra.mxu0 %v68
    %2482 = vmatprep.subr.mxu0 0.0
    %2483 = vmatpush1.msra.mxu0 %v69
    %2484 = vmatprep.subr.mxu0 0.0
    %2485 = vmatpush1.msra.mxu0 %v70
    %2486 = vmatprep.subr.mxu0 0.0
    %2487 = vmatpush1.msra.mxu0 %v71
    %2488 = vmatprep.subr.mxu0 0.0
    %2489 = vmatpush1.msra.mxu0 %v72
    %2490 = vmatprep.subr.mxu0 0.0
    %2491 = vmatpush1.msra.mxu0 %v73
    %2492 = vmatprep.subr.mxu0 0.0
    %2493 = vmatpush1.msra.mxu0 %v74
    %2494 = vmatprep.subr.mxu0 0.0
    %2495 = vmatpush1.msra.mxu0 %v75
    %2496 = vmatprep.subr.mxu0 0.0
    %2497 = vmatpush1.msra.mxu0 %v76
    %2498 = vmatprep.subr.mxu0 0.0
    %2499 = vmatpush1.msra.mxu0 %v77
    %2500 = vmatprep.subr.mxu0 0.0
    %2501 = vmatpush1.msra.mxu0 %v78
    %2502 = vmatprep.subr.mxu0 0.0
    %2503 = vmatpush1.msra.mxu0 %v79
    %2504 = vmatprep.subr.mxu0 0.0
    %2505 = vmatpush1.msra.mxu0 %v80
    %2506 = vmatprep.subr.mxu0 0.0
    %2507 = vmatpush1.msra.mxu0 %v81
    %2508 = vmatprep.subr.mxu0 0.0
    %2509 = vmatpush1.msra.mxu0 %v82
    %2510 = vmatprep.subr.mxu0 0.0
    %2511 = vmatpush1.msra.mxu0 %v83
    %2512 = vmatprep.mubr.f32.mxu0 %v2199
    %2513 = vmatmul.mubr.f32.gmra.mrb[0].mxu0 %v2198
    %v2514 = vpop.f32.mrb[0].mxu0
    %v2515 = vadd.f32 0.0, %v2514
    %v2516 = vpop.f32.mrb[0].mxu0
    %2517 = vmatprep.mubr.f32.mxu0 %v2206
    %2518 = vmatmul.mubr.f32.gmra.mrb[0].mxu0 %v2205
    %v2519 = vpop.f32.mrb[0].mxu0
    %v2520 = vadd.f32 0.0, %v2519
    %v2521 = vpop.f32.mrb[0].mxu0
    %2522 = vmatprep.mubr.f32.mxu0 %v2213
    %2523 = vmatmul.mubr.f32.gmra.mrb[0].mxu0 %v2212
    %v2524 = vpop.f32.mrb[0].mxu0
    %v2525 = vadd.f32 0.0, %v2524
    %v2526 = vpop.f32.mrb[0].mxu0
    %2527 = vmatprep.mubr.f32.mxu0 %v2220
    %2528 = vmatmul.mubr.f32.gmra.mrb[0].mxu0 %v2219
    %v2529 = vpop.f32.mrb[0].mxu0
    %v2530 = vadd.f32 0.0, %v2529
    %v2531 = vpop.f32.mrb[0].mxu0
    %2532 = vmatprep.mubr.f32.mxu0 %v2227
    %2533 = vmatmul.mubr.f32.gmra.mrb[0].mxu0 %v2226
    %v2534 = vpop.f32.mrb[0].mxu0
    %v2535 = vadd.f32 0.0, %v2534
    %v2536 = vpop.f32.mrb[0].mxu0
    %2537 = vmatprep.mubr.f32.mxu0 %v2234
    %2538 = vmatmul.mubr.f32.gmra.mrb[0].mxu0 %v2233
    %v2539 = vpop.f32.mrb[0].mxu0
    %v2540 = vadd.f32 0.0, %v2539
    %v2541 = vpop.f32.mrb[0].mxu0
    %2542 = vmatprep.mubr.f32.mxu0 %v2241
    %2543 = vmatmul.mubr.f32.gmra.mrb[0].mxu0 %v2240
    %v2544 = vpop.f32.mrb[0].mxu0
    %v2545 = vadd.f32 0.0, %v2544
    %v2546 = vpop.f32.mrb[0].mxu0
    %2547 = vmatprep.mubr.f32.mxu0 %v2248
    %2548 = vmatmul.mubr.f32.gmra.mrb[0].mxu0 %v2247
    %v2549 = vpop.f32.mrb[0].mxu0
    %v2550 = vadd.f32 0.0, %v2549
    %v2551 = vpop.f32.mrb[0].mxu0
    %2552 = vmatprep.mubr.f32.mxu0 %v2255
    %2553 = vmatmul.mubr.f32.gmra.mrb[0].mxu0 %v2254
    %v2554 = vpop.f32.mrb[0].mxu0
    %v2555 = vadd.f32 0.0, %v2554
    %v2556 = vpop.f32.mrb[0].mxu0
    %2557 = vmatprep.mubr.f32.mxu0 %v2262
    %2558 = vmatmul.mubr.f32.gmra.mrb[0].mxu0 %v2261
    %v2559 = vpop.f32.mrb[0].mxu0
    %v2560 = vadd.f32 0.0, %v2559
    %v2561 = vpop.f32.mrb[0].mxu0
    %2562 = vmatprep.mubr.f32.mxu0 %v2269
    %2563 = vmatmul.mubr.f32.gmra.mrb[0].mxu0 %v2268
    %v2564 = vpop.f32.mrb[0].mxu0
    %v2565 = vadd.f32 0.0, %v2564
    %v2566 = vpop.f32.mrb[0].mxu0
    %2567 = vmatprep.mubr.f32.mxu0 %v2276
    %2568 = vmatmul.mubr.f32.gmra.mrb[0].mxu0 %v2275
    %v2569 = vpop.f32.mrb[0].mxu0
    %v2570 = vadd.f32 0.0, %v2569
    %v2571 = vpop.f32.mrb[0].mxu0
    %2572 = vmatprep.mubr.f32.mxu0 %v2283
    %2573 = vmatmul.mubr.f32.gmra.mrb[0].mxu0 %v2282
    %v2574 = vpop.f32.mrb[0].mxu0
    %v2575 = vadd.f32 0.0, %v2574
    %v2576 = vpop.f32.mrb[0].mxu0
    %2577 = vmatprep.mubr.f32.mxu0 %v2290
    %2578 = vmatmul.mubr.f32.gmra.mrb[0].mxu0 %v2289
    %v2579 = vpop.f32.mrb[0].mxu0
    %v2580 = vadd.f32 0.0, %v2579
    %v2581 = vpop.f32.mrb[0].mxu0
    %2582 = vmatprep.mubr.f32.mxu0 %v2297
    %2583 = vmatmul.mubr.f32.gmra.mrb[0].mxu0 %v2296
    %v2584 = vpop.f32.mrb[0].mxu0
    %v2585 = vadd.f32 0.0, %v2584
    %v2586 = vpop.f32.mrb[0].mxu0
    %2587 = vmatprep.mubr.f32.mxu0 %v2304
    %2588 = vmatmul.mubr.f32.gmra.mrb[0].mxu0 %v2303
    %v2589 = vpop.f32.mrb[0].mxu0
    %v2590 = vadd.f32 0.0, %v2589
    %v2591 = vpop.f32.mrb[0].mxu0
    %2592 = vmatprep.mubr.f32.mxu0 %v2311
    %2593 = vmatmul.mubr.f32.gmra.mrb[0].mxu0 %v2310
    %v2594 = vpop.f32.mrb[0].mxu0
    %v2595 = vadd.f32 0.0, %v2594
    %v2596 = vpop.f32.mrb[0].mxu0
    %2597 = vmatprep.mubr.f32.mxu0 %v2318
    %2598 = vmatmul.mubr.f32.gmra.mrb[0].mxu0 %v2317
    %v2599 = vpop.f32.mrb[0].mxu0
    %v2600 = vadd.f32 0.0, %v2599
    %v2601 = vpop.f32.mrb[0].mxu0
    %2602 = vmatprep.mubr.f32.mxu0 %v2325
    %2603 = vmatmul.mubr.f32.gmra.mrb[0].mxu0 %v2324
    %v2604 = vpop.f32.mrb[0].mxu0
    %v2605 = vadd.f32 0.0, %v2604
    %v2606 = vpop.f32.mrb[0].mxu0
    %2607 = vmatprep.mubr.f32.mxu0 %v2332
    %2608 = vmatmul.mubr.f32.gmra.mrb[0].mxu0 %v2331
    %v2609 = vpop.f32.mrb[0].mxu0
    %v2610 = vadd.f32 0.0, %v2609
    %v2611 = vpop.f32.mrb[0].mxu0
    %2612 = vmatprep.mubr.f32.mxu0 %v2339
    %2613 = vmatmul.mubr.f32.gmra.mrb[0].mxu0 %v2338
    %v2614 = vpop.f32.mrb[0].mxu0
    %v2615 = vadd.f32 0.0, %v2614
    %v2616 = vpop.f32.mrb[0].mxu0
    %2617 = vmatprep.mubr.f32.mxu0 %v2346
    %2618 = vmatmul.mubr.f32.gmra.mrb[0].mxu0 %v2345
    %v2619 = vpop.f32.mrb[0].mxu0
    %v2620 = vadd.f32 0.0, %v2619
    %v2621 = vpop.f32.mrb[0].mxu0
    %2622 = vmatprep.mubr.f32.mxu0 %v2353
    %2623 = vmatmul.mubr.f32.gmra.mrb[0].mxu0 %v2352
    %v2624 = vpop.f32.mrb[0].mxu0
    %v2625 = vadd.f32 0.0, %v2624
    %v2626 = vpop.f32.mrb[0].mxu0
    %2627 = vmatprep.mubr.f32.mxu0 %v2360
    %2628 = vmatmul.mubr.f32.gmra.mrb[0].mxu0 %v2359
    %v2629 = vpop.f32.mrb[0].mxu0
    %v2630 = vadd.f32 0.0, %v2629
    %v2631 = vpop.f32.mrb[0].mxu0
    %2632 = vmatprep.mubr.f32.mxu0 %v2367
    %2633 = vmatmul.mubr.f32.gmra.mrb[0].mxu0 %v2366
    %v2634 = vpop.f32.mrb[0].mxu0
    %v2635 = vadd.f32 0.0, %v2634
    %v2636 = vpop.f32.mrb[0].mxu0
    %2637 = vdwg.mxu0
    %2638 = vmatprep.subr.mxu0 0.0
    %2639 = vmatpush1.msra.mxu0 %v84
    %2640 = vmatprep.subr.mxu0 0.0
    %2641 = vmatpush1.msra.mxu0 %v85
    %2642 = vmatprep.subr.mxu0 0.0
    %2643 = vmatpush1.msra.mxu0 %v86
    %2644 = vmatprep.subr.mxu0 0.0
    %2645 = vmatpush1.msra.mxu0 %v87
    %2646 = vmatprep.subr.mxu0 0.0
    %2647 = vmatpush1.msra.mxu0 %v88
    %2648 = vmatprep.subr.mxu0 0.0
    %2649 = vmatpush1.msra.mxu0 %v89
    %2650 = vmatprep.subr.mxu0 0.0
    %2651 = vmatpush1.msra.mxu0 %v90
    %2652 = vmatprep.subr.mxu0 0.0
    %2653 = vmatpush1.msra.mxu0 %v91
    %2654 = vmatprep.subr.mxu0 0.0
    %2655 = vmatpush1.msra.mxu0 %v92
    %2656 = vmatprep.subr.mxu0 0.0
    %2657 = vmatpush1.msra.mxu0 %v93
    %2658 = vmatprep.subr.mxu0 0.0
    %2659 = vmatpush1.msra.mxu0 %v94
    %2660 = vmatprep.subr.mxu0 0.0
    %2661 = vmatpush1.msra.mxu0 %v95
    %2662 = vmatprep.subr.mxu0 0.0
    %2663 = vmatpush1.msra.mxu0 %v96
    %2664 = vmatprep.subr.mxu0 0.0
    %2665 = vmatpush1.msra.mxu0 %v97
    %2666 = vmatprep.subr.mxu0 0.0
    %2667 = vmatpush1.msra.mxu0 %v98
    %2668 = vmatprep.subr.mxu0 0.0
    %2669 = vmatpush1.msra.mxu0 %v99
    %2670 = vmatprep.subr.mxu0 0.0
    %2671 = vmatpush1.msra.mxu0 %v100
    %2672 = vmatprep.subr.mxu0 0.0
    %2673 = vmatpush1.msra.mxu0 %v101
    %2674 = vmatprep.subr.mxu0 0.0
    %2675 = vmatpush1.msra.mxu0 %v102
    %2676 = vmatprep.subr.mxu0 0.0
    %2677 = vmatpush1.msra.mxu0 %v103
    %2678 = vmatprep.subr.mxu0 0.0
    %2679 = vmatpush1.msra.mxu0 %v104
    %2680 = vmatprep.subr.mxu0 0.0
    %2681 = vmatpush1.msra.mxu0 %v105
    %2682 = vmatprep.subr.mxu0 0.0
    %2683 = vmatpush1.msra.mxu0 %v106
    %2684 = vmatprep.subr.mxu0 0.0
    %2685 = vmatpush1.msra.mxu0 %v107
    %2686 = vmatprep.subr.mxu0 0.0
    %2687 = vmatpush1.msra.mxu0 %v108
    %2688 = vmatprep.subr.mxu0 0.0
    %2689 = vmatpush1.msra.mxu0 %v109
    %2690 = vmatprep.subr.mxu0 0.0
    %2691 = vmatpush1.msra.mxu0 %v110
    %2692 = vmatprep.subr.mxu0 0.0
    %2693 = vmatpush1.msra.mxu0 %v111
    %2694 = vmatprep.subr.mxu0 0.0
    %2695 = vmatpush1.msra.mxu0 %v112
    %2696 = vmatprep.subr.mxu0 0.0
    %2697 = vmatpush1.msra.mxu0 %v113
    %2698 = vmatprep.subr.mxu0 0.0
    %2699 = vmatpush1.msra.mxu0 %v114
    %2700 = vmatprep.subr.mxu0 0.0
    %2701 = vmatpush1.msra.mxu0 %v115
    %2702 = vmatprep.mubr.f32.mxu0 %v2201
    %2703 = vmatmul.mubr.f32.gmra.mrb[0].mxu0 %v2200
    %v2704 = vpop.f32.mrb[0].mxu0
    %v2705 = vadd.f32 %v2515, %v2704
    %v2706 = vpop.f32.mrb[0].mxu0
    %2707 = vmatprep.mubr.f32.mxu0 %v2208
    %2708 = vmatmul.mubr.f32.gmra.mrb[0].mxu0 %v2207
    %v2709 = vpop.f32.mrb[0].mxu0
    %v2710 = vadd.f32 %v2520, %v2709
    %v2711 = vpop.f32.mrb[0].mxu0
    %2712 = vmatprep.mubr.f32.mxu0 %v2215
    %2713 = vmatmul.mubr.f32.gmra.mrb[0].mxu0 %v2214
    %v2714 = vpop.f32.mrb[0].mxu0
    %v2715 = vadd.f32 %v2525, %v2714
    %v2716 = vpop.f32.mrb[0].mxu0
    %2717 = vmatprep.mubr.f32.mxu0 %v2222
    %2718 = vmatmul.mubr.f32.gmra.mrb[0].mxu0 %v2221
    %v2719 = vpop.f32.mrb[0].mxu0
    %v2720 = vadd.f32 %v2530, %v2719
    %v2721 = vpop.f32.mrb[0].mxu0
    %2722 = vmatprep.mubr.f32.mxu0 %v2229
    %2723 = vmatmul.mubr.f32.gmra.mrb[0].mxu0 %v2228
    %v2724 = vpop.f32.mrb[0].mxu0
    %v2725 = vadd.f32 %v2535, %v2724
    %v2726 = vpop.f32.mrb[0].mxu0
    %2727 = vmatprep.mubr.f32.mxu0 %v2236
    %2728 = vmatmul.mubr.f32.gmra.mrb[0].mxu0 %v2235
    %v2729 = vpop.f32.mrb[0].mxu0
    %v2730 = vadd.f32 %v2540, %v2729
    %v2731 = vpop.f32.mrb[0].mxu0
    %2732 = vmatprep.mubr.f32.mxu0 %v2243
    %2733 = vmatmul.mubr.f32.gmra.mrb[0].mxu0 %v2242
    %v2734 = vpop.f32.mrb[0].mxu0
    %v2735 = vadd.f32 %v2545, %v2734
    %v2736 = vpop.f32.mrb[0].mxu0
    %2737 = vmatprep.mubr.f32.mxu0 %v2250
    %2738 = vmatmul.mubr.f32.gmra.mrb[0].mxu0 %v2249
    %v2739 = vpop.f32.mrb[0].mxu0
    %v2740 = vadd.f32 %v2550, %v2739
    %v2741 = vpop.f32.mrb[0].mxu0
    %2742 = vmatprep.mubr.f32.mxu0 %v2257
    %2743 = vmatmul.mubr.f32.gmra.mrb[0].mxu0 %v2256
    %v2744 = vpop.f32.mrb[0].mxu0
    %v2745 = vadd.f32 %v2555, %v2744
    %v2746 = vpop.f32.mrb[0].mxu0
    %2747 = vmatprep.mubr.f32.mxu0 %v2264
    %2748 = vmatmul.mubr.f32.gmra.mrb[0].mxu0 %v2263
    %v2749 = vpop.f32.mrb[0].mxu0
    %v2750 = vadd.f32 %v2560, %v2749
    %v2751 = vpop.f32.mrb[0].mxu0
    %2752 = vmatprep.mubr.f32.mxu0 %v2271
    %2753 = vmatmul.mubr.f32.gmra.mrb[0].mxu0 %v2270
    %v2754 = vpop.f32.mrb[0].mxu0
    %v2755 = vadd.f32 %v2565, %v2754
    %v2756 = vpop.f32.mrb[0].mxu0
    %2757 = vmatprep.mubr.f32.mxu0 %v2278
    %2758 = vmatmul.mubr.f32.gmra.mrb[0].mxu0 %v2277
    %v2759 = vpop.f32.mrb[0].mxu0
    %v2760 = vadd.f32 %v2570, %v2759
    %v2761 = vpop.f32.mrb[0].mxu0
    %2762 = vmatprep.mubr.f32.mxu0 %v2285
    %2763 = vmatmul.mubr.f32.gmra.mrb[0].mxu0 %v2284
    %v2764 = vpop.f32.mrb[0].mxu0
    %v2765 = vadd.f32 %v2575, %v2764
    %v2766 = vpop.f32.mrb[0].mxu0
    %2767 = vmatprep.mubr.f32.mxu0 %v2292
    %2768 = vmatmul.mubr.f32.gmra.mrb[0].mxu0 %v2291
    %v2769 = vpop.f32.mrb[0].mxu0
    %v2770 = vadd.f32 %v2580, %v2769
    %v2771 = vpop.f32.mrb[0].mxu0
    %2772 = vmatprep.mubr.f32.mxu0 %v2299
    %2773 = vmatmul.mubr.f32.gmra.mrb[0].mxu0 %v2298
    %v2774 = vpop.f32.mrb[0].mxu0
    %v2775 = vadd.f32 %v2585, %v2774
    %v2776 = vpop.f32.mrb[0].mxu0
    %2777 = vmatprep.mubr.f32.mxu0 %v2306
    %2778 = vmatmul.mubr.f32.gmra.mrb[0].mxu0 %v2305
    %v2779 = vpop.f32.mrb[0].mxu0
    %v2780 = vadd.f32 %v2590, %v2779
    %v2781 = vpop.f32.mrb[0].mxu0
    %2782 = vmatprep.mubr.f32.mxu0 %v2313
    %2783 = vmatmul.mubr.f32.gmra.mrb[0].mxu0 %v2312
    %v2784 = vpop.f32.mrb[0].mxu0
    %v2785 = vadd.f32 %v2595, %v2784
    %v2786 = vpop.f32.mrb[0].mxu0
    %2787 = vmatprep.mubr.f32.mxu0 %v2320
    %2788 = vmatmul.mubr.f32.gmra.mrb[0].mxu0 %v2319
    %v2789 = vpop.f32.mrb[0].mxu0
    %v2790 = vadd.f32 %v2600, %v2789
    %v2791 = vpop.f32.mrb[0].mxu0
    %2792 = vmatprep.mubr.f32.mxu0 %v2327
    %2793 = vmatmul.mubr.f32.gmra.mrb[0].mxu0 %v2326
    %v2794 = vpop.f32.mrb[0].mxu0
    %v2795 = vadd.f32 %v2605, %v2794
    %v2796 = vpop.f32.mrb[0].mxu0
    %2797 = vmatprep.mubr.f32.mxu0 %v2334
    %2798 = vmatmul.mubr.f32.gmra.mrb[0].mxu0 %v2333
    %v2799 = vpop.f32.mrb[0].mxu0
    %v2800 = vadd.f32 %v2610, %v2799
    %v2801 = vpop.f32.mrb[0].mxu0
    %2802 = vmatprep.mubr.f32.mxu0 %v2341
    %2803 = vmatmul.mubr.f32.gmra.mrb[0].mxu0 %v2340
    %v2804 = vpop.f32.mrb[0].mxu0
    %v2805 = vadd.f32 %v2615, %v2804
    %v2806 = vpop.f32.mrb[0].mxu0
    %2807 = vmatprep.mubr.f32.mxu0 %v2348
    %2808 = vmatmul.mubr.f32.gmra.mrb[0].mxu0 %v2347
    %v2809 = vpop.f32.mrb[0].mxu0
    %v2810 = vadd.f32 %v2620, %v2809
    %v2811 = vpop.f32.mrb[0].mxu0
    %2812 = vmatprep.mubr.f32.mxu0 %v2355
    %2813 = vmatmul.mubr.f32.gmra.mrb[0].mxu0 %v2354
    %v2814 = vpop.f32.mrb[0].mxu0
    %v2815 = vadd.f32 %v2625, %v2814
    %v2816 = vpop.f32.mrb[0].mxu0
    %2817 = vmatprep.mubr.f32.mxu0 %v2362
    %2818 = vmatmul.mubr.f32.gmra.mrb[0].mxu0 %v2361
    %v2819 = vpop.f32.mrb[0].mxu0
    %v2820 = vadd.f32 %v2630, %v2819
    %v2821 = vpop.f32.mrb[0].mxu0
    %2822 = vmatprep.mubr.f32.mxu0 %v2369
    %2823 = vmatmul.mubr.f32.gmra.mrb[0].mxu0 %v2368
    %v2824 = vpop.f32.mrb[0].mxu0
    %v2825 = vadd.f32 %v2635, %v2824
    %v2826 = vpop.f32.mrb[0].mxu0
    %2827 = vdwg.mxu0
    %2828 = vmatprep.subr.mxu0 0.0
    %2829 = vmatpush1.msra.mxu0 %v116
    %2830 = vmatprep.subr.mxu0 0.0
    %2831 = vmatpush1.msra.mxu0 %v117
    %2832 = vmatprep.subr.mxu0 0.0
    %2833 = vmatpush1.msra.mxu0 %v118
    %2834 = vmatprep.subr.mxu0 0.0
    %2835 = vmatpush1.msra.mxu0 %v119
    %2836 = vmatprep.subr.mxu0 0.0
    %2837 = vmatpush1.msra.mxu0 %v120
    %2838 = vmatprep.subr.mxu0 0.0
    %2839 = vmatpush1.msra.mxu0 %v121
    %2840 = vmatprep.subr.mxu0 0.0
    %2841 = vmatpush1.msra.mxu0 %v122
    %2842 = vmatprep.subr.mxu0 0.0
    %2843 = vmatpush1.msra.mxu0 %v123
    %2844 = vmatprep.subr.mxu0 0.0
    %2845 = vmatpush1.msra.mxu0 %v124
    %2846 = vmatprep.subr.mxu0 0.0
    %2847 = vmatpush1.msra.mxu0 %v125
    %2848 = vmatprep.subr.mxu0 0.0
    %2849 = vmatpush1.msra.mxu0 %v126
    %2850 = vmatprep.subr.mxu0 0.0
    %2851 = vmatpush1.msra.mxu0 %v127
    %2852 = vmatprep.subr.mxu0 0.0
    %2853 = vmatpush1.msra.mxu0 %v128
    %2854 = vmatprep.subr.mxu0 0.0
    %2855 = vmatpush1.msra.mxu0 %v129
    %2856 = vmatprep.subr.mxu0 0.0
    %2857 = vmatpush1.msra.mxu0 %v130
    %2858 = vmatprep.subr.mxu0 0.0
    %2859 = vmatpush1.msra.mxu0 %v131
    %2860 = vmatprep.subr.mxu0 0.0
    %2861 = vmatpush1.msra.mxu0 %v132
    %2862 = vmatprep.subr.mxu0 0.0
    %2863 = vmatpush1.msra.mxu0 %v133
    %2864 = vmatprep.subr.mxu0 0.0
    %2865 = vmatpush1.msra.mxu0 %v134
    %2866 = vmatprep.subr.mxu0 0.0
    %2867 = vmatpush1.msra.mxu0 %v135
    %2868 = vmatprep.subr.mxu0 0.0
    %2869 = vmatpush1.msra.mxu0 %v136
    %2870 = vmatprep.subr.mxu0 0.0
    %2871 = vmatpush1.msra.mxu0 %v137
    %2872 = vmatprep.subr.mxu0 0.0
    %2873 = vmatpush1.msra.mxu0 %v138
    %2874 = vmatprep.subr.mxu0 0.0
    %2875 = vmatpush1.msra.mxu0 %v139
    %2876 = vmatprep.subr.mxu0 0.0
    %2877 = vmatpush1.msra.mxu0 %v140
    %2878 = vmatprep.subr.mxu0 0.0
    %2879 = vmatpush1.msra.mxu0 %v141
    %2880 = vmatprep.subr.mxu0 0.0
    %2881 = vmatpush1.msra.mxu0 %v142
    %2882 = vmatprep.subr.mxu0 0.0
    %2883 = vmatpush1.msra.mxu0 %v143
    %2884 = vmatprep.subr.mxu0 0.0
    %2885 = vmatpush1.msra.mxu0 %v144
    %2886 = vmatprep.subr.mxu0 0.0
    %2887 = vmatpush1.msra.mxu0 %v145
    %2888 = vmatprep.subr.mxu0 0.0
    %2889 = vmatpush1.msra.mxu0 %v146
    %2890 = vmatprep.subr.mxu0 0.0
    %2891 = vmatpush1.msra.mxu0 %v147
    %2892 = vmatprep.mubr.f32.mxu0 %v2203
    %2893 = vmatmul.mubr.f32.gmra.mrb[0].mxu0 %v2202
    %v2894 = vpop.f32.mrb[0].mxu0
    %v2895 = vadd.f32 %v2705, %v2894
    %v2896 = vpop.f32.mrb[0].mxu0
    %2897 = vmatprep.mubr.f32.mxu0 %v2210
    %2898 = vmatmul.mubr.f32.gmra.mrb[0].mxu0 %v2209
    %v2899 = vpop.f32.mrb[0].mxu0
    %v2900 = vadd.f32 %v2710, %v2899
    %v2901 = vpop.f32.mrb[0].mxu0
    %2902 = vmatprep.mubr.f32.mxu0 %v2217
    %2903 = vmatmul.mubr.f32.gmra.mrb[0].mxu0 %v2216
    %v2904 = vpop.f32.mrb[0].mxu0
    %v2905 = vadd.f32 %v2715, %v2904
    %v2906 = vpop.f32.mrb[0].mxu0
    %2907 = vmatprep.mubr.f32.mxu0 %v2224
    %2908 = vmatmul.mubr.f32.gmra.mrb[0].mxu0 %v2223
    %v2909 = vpop.f32.mrb[0].mxu0
    %v2910 = vadd.f32 %v2720, %v2909
    %v2911 = vpop.f32.mrb[0].mxu0
    %2912 = vmatprep.mubr.f32.mxu0 %v2231
    %2913 = vmatmul.mubr.f32.gmra.mrb[0].mxu0 %v2230
    %v2914 = vpop.f32.mrb[0].mxu0
    %v2915 = vadd.f32 %v2725, %v2914
    %v2916 = vpop.f32.mrb[0].mxu0
    %2917 = vmatprep.mubr.f32.mxu0 %v2238
    %2918 = vmatmul.mubr.f32.gmra.mrb[0].mxu0 %v2237
    %v2919 = vpop.f32.mrb[0].mxu0
    %v2920 = vadd.f32 %v2730, %v2919
    %v2921 = vpop.f32.mrb[0].mxu0
    %2922 = vmatprep.mubr.f32.mxu0 %v2245
    %2923 = vmatmul.mubr.f32.gmra.mrb[0].mxu0 %v2244
    %v2924 = vpop.f32.mrb[0].mxu0
    %v2925 = vadd.f32 %v2735, %v2924
    %v2926 = vpop.f32.mrb[0].mxu0
    %2927 = vmatprep.mubr.f32.mxu0 %v2252
    %2928 = vmatmul.mubr.f32.gmra.mrb[0].mxu0 %v2251
    %v2929 = vpop.f32.mrb[0].mxu0
    %v2930 = vadd.f32 %v2740, %v2929
    %v2931 = vpop.f32.mrb[0].mxu0
    %2932 = vmatprep.mubr.f32.mxu0 %v2259
    %2933 = vmatmul.mubr.f32.gmra.mrb[0].mxu0 %v2258
    %v2934 = vpop.f32.mrb[0].mxu0
    %v2935 = vadd.f32 %v2745, %v2934
    %v2936 = vpop.f32.mrb[0].mxu0
    %2937 = vmatprep.mubr.f32.mxu0 %v2266
    %2938 = vmatmul.mubr.f32.gmra.mrb[0].mxu0 %v2265
    %v2939 = vpop.f32.mrb[0].mxu0
    %v2940 = vadd.f32 %v2750, %v2939
    %v2941 = vpop.f32.mrb[0].mxu0
    %2942 = vmatprep.mubr.f32.mxu0 %v2273
    %2943 = vmatmul.mubr.f32.gmra.mrb[0].mxu0 %v2272
    %v2944 = vpop.f32.mrb[0].mxu0
    %v2945 = vadd.f32 %v2755, %v2944
    %v2946 = vpop.f32.mrb[0].mxu0
    %2947 = vmatprep.mubr.f32.mxu0 %v2280
    %2948 = vmatmul.mubr.f32.gmra.mrb[0].mxu0 %v2279
    %v2949 = vpop.f32.mrb[0].mxu0
    %v2950 = vadd.f32 %v2760, %v2949
    %v2951 = vpop.f32.mrb[0].mxu0
    %2952 = vmatprep.mubr.f32.mxu0 %v2287
    %2953 = vmatmul.mubr.f32.gmra.mrb[0].mxu0 %v2286
    %v2954 = vpop.f32.mrb[0].mxu0
    %v2955 = vadd.f32 %v2765, %v2954
    %v2956 = vpop.f32.mrb[0].mxu0
    %2957 = vmatprep.mubr.f32.mxu0 %v2294
    %2958 = vmatmul.mubr.f32.gmra.mrb[0].mxu0 %v2293
    %v2959 = vpop.f32.mrb[0].mxu0
    %v2960 = vadd.f32 %v2770, %v2959
    %v2961 = vpop.f32.mrb[0].mxu0
    %2962 = vmatprep.mubr.f32.mxu0 %v2301
    %2963 = vmatmul.mubr.f32.gmra.mrb[0].mxu0 %v2300
    %v2964 = vpop.f32.mrb[0].mxu0
    %v2965 = vadd.f32 %v2775, %v2964
    %v2966 = vpop.f32.mrb[0].mxu0
    %2967 = vmatprep.mubr.f32.mxu0 %v2308
    %2968 = vmatmul.mubr.f32.gmra.mrb[0].mxu0 %v2307
    %v2969 = vpop.f32.mrb[0].mxu0
    %v2970 = vadd.f32 %v2780, %v2969
    %v2971 = vpop.f32.mrb[0].mxu0
    %2972 = vmatprep.mubr.f32.mxu0 %v2315
    %2973 = vmatmul.mubr.f32.gmra.mrb[0].mxu0 %v2314
    %v2974 = vpop.f32.mrb[0].mxu0
    %v2975 = vadd.f32 %v2785, %v2974
    %v2976 = vpop.f32.mrb[0].mxu0
    %2977 = vmatprep.mubr.f32.mxu0 %v2322
    %2978 = vmatmul.mubr.f32.gmra.mrb[0].mxu0 %v2321
    %v2979 = vpop.f32.mrb[0].mxu0
    %v2980 = vadd.f32 %v2790, %v2979
    %v2981 = vpop.f32.mrb[0].mxu0
    %2982 = vmatprep.mubr.f32.mxu0 %v2329
    %2983 = vmatmul.mubr.f32.gmra.mrb[0].mxu0 %v2328
    %v2984 = vpop.f32.mrb[0].mxu0
    %v2985 = vadd.f32 %v2795, %v2984
    %v2986 = vpop.f32.mrb[0].mxu0
    %2987 = vmatprep.mubr.f32.mxu0 %v2336
    %2988 = vmatmul.mubr.f32.gmra.mrb[0].mxu0 %v2335
    %v2989 = vpop.f32.mrb[0].mxu0
    %v2990 = vadd.f32 %v2800, %v2989
    %v2991 = vpop.f32.mrb[0].mxu0
    %2992 = vmatprep.mubr.f32.mxu0 %v2343
    %2993 = vmatmul.mubr.f32.gmra.mrb[0].mxu0 %v2342
    %v2994 = vpop.f32.mrb[0].mxu0
    %v2995 = vadd.f32 %v2805, %v2994
    %v2996 = vpop.f32.mrb[0].mxu0
    %2997 = vmatprep.mubr.f32.mxu0 %v2350
    %2998 = vmatmul.mubr.f32.gmra.mrb[0].mxu0 %v2349
    %v2999 = vpop.f32.mrb[0].mxu0
    %v3000 = vadd.f32 %v2810, %v2999
    %v3001 = vpop.f32.mrb[0].mxu0
    %3002 = vmatprep.mubr.f32.mxu0 %v2357
    %3003 = vmatmul.mubr.f32.gmra.mrb[0].mxu0 %v2356
    %v3004 = vpop.f32.mrb[0].mxu0
    %v3005 = vadd.f32 %v2815, %v3004
    %v3006 = vpop.f32.mrb[0].mxu0
    %3007 = vmatprep.mubr.f32.mxu0 %v2364
    %3008 = vmatmul.mubr.f32.gmra.mrb[0].mxu0 %v2363
    %v3009 = vpop.f32.mrb[0].mxu0
    %v3010 = vadd.f32 %v2820, %v3009
    %v3011 = vpop.f32.mrb[0].mxu0
    %3012 = vmatprep.mubr.f32.mxu0 %v2371
    %3013 = vmatmul.mubr.f32.gmra.mrb[0].mxu0 %v2370
    %v3014 = vpop.f32.mrb[0].mxu0
    %v3015 = vadd.f32 %v2825, %v3014
    %v3016 = vpop.f32.mrb[0].mxu0
    %3017 = vdwg.mxu0
    %3018 = vmatprep.subr.mxu0 0.0
    %3019 = vmatpush1.msra.mxu0 %v148
    %3020 = vmatprep.subr.mxu0 0.0
    %3021 = vmatpush1.msra.mxu0 %v149
    %3022 = vmatprep.subr.mxu0 0.0
    %3023 = vmatpush1.msra.mxu0 0.0
    %3024 = vmatprep.subr.mxu0 0.0
    %3025 = vmatpush1.msra.mxu0 0.0
    %3026 = vmatprep.subr.mxu0 0.0
    %3027 = vmatpush1.msra.mxu0 0.0
    %3028 = vmatprep.subr.mxu0 0.0
    %3029 = vmatpush1.msra.mxu0 0.0
    %3030 = vmatprep.subr.mxu0 0.0
    %3031 = vmatpush1.msra.mxu0 0.0
    %3032 = vmatprep.subr.mxu0 0.0
    %3033 = vmatpush1.msra.mxu0 0.0
    %3034 = vmatprep.subr.mxu0 0.0
    %3035 = vmatpush1.msra.mxu0 0.0
    %3036 = vmatprep.subr.mxu0 0.0
    %3037 = vmatpush1.msra.mxu0 0.0
    %3038 = vmatprep.subr.mxu0 0.0
    %3039 = vmatpush1.msra.mxu0 0.0
    %3040 = vmatprep.subr.mxu0 0.0
    %3041 = vmatpush1.msra.mxu0 0.0
    %3042 = vmatprep.subr.mxu0 0.0
    %3043 = vmatpush1.msra.mxu0 0.0
    %3044 = vmatprep.subr.mxu0 0.0
    %3045 = vmatpush1.msra.mxu0 0.0
    %3046 = vmatprep.subr.mxu0 0.0
    %3047 = vmatpush1.msra.mxu0 0.0
    %3048 = vmatprep.subr.mxu0 0.0
    %3049 = vmatpush1.msra.mxu0 0.0
    %3050 = vmatprep.subr.mxu0 0.0
    %3051 = vmatpush1.msra.mxu0 0.0
    %3052 = vmatprep.subr.mxu0 0.0
    %3053 = vmatpush1.msra.mxu0 0.0
    %3054 = vmatprep.subr.mxu0 0.0
    %3055 = vmatpush1.msra.mxu0 0.0
    %3056 = vmatprep.subr.mxu0 0.0
    %3057 = vmatpush1.msra.mxu0 0.0
    %3058 = vmatprep.subr.mxu0 0.0
    %3059 = vmatpush1.msra.mxu0 0.0
    %3060 = vmatprep.subr.mxu0 0.0
    %3061 = vmatpush1.msra.mxu0 0.0
    %3062 = vmatprep.subr.mxu0 0.0
    %3063 = vmatpush1.msra.mxu0 0.0
    %3064 = vmatprep.subr.mxu0 0.0
    %3065 = vmatpush1.msra.mxu0 0.0
    %3066 = vmatprep.subr.mxu0 0.0
    %3067 = vmatpush1.msra.mxu0 0.0
    %3068 = vmatprep.subr.mxu0 0.0
    %3069 = vmatpush1.msra.mxu0 0.0
    %3070 = vmatprep.subr.mxu0 0.0
    %3071 = vmatpush1.msra.mxu0 0.0
    %3072 = vmatprep.subr.mxu0 0.0
    %3073 = vmatpush1.msra.mxu0 0.0
    %3074 = vmatprep.subr.mxu0 0.0
    %3075 = vmatpush1.msra.mxu0 0.0
    %3076 = vmatprep.subr.mxu0 0.0
    %3077 = vmatpush1.msra.mxu0 0.0
    %3078 = vmatprep.subr.mxu0 0.0
    %3079 = vmatpush1.msra.mxu0 0.0
    %3080 = vmatprep.subr.mxu0 0.0
    %3081 = vmatpush1.msra.mxu0 0.0
    %3082 = vmatprep.mubr.f32.mxu0 0.0
    %3083 = vmatmul.mubr.f32.gmra.mrb[0].mxu0 %v2374
    %v3084 = vpop.f32.mrb[0].mxu0
    %v3085 = vadd.f32 %v2895, %v3084
    %v3086 = vpop.f32.mrb[0].mxu0
    %3087 = vmatprep.mubr.f32.mxu0 0.0
    %3088 = vmatmul.mubr.f32.gmra.mrb[0].mxu0 %v2377
    %v3089 = vpop.f32.mrb[0].mxu0
    %v3090 = vadd.f32 %v2900, %v3089
    %v3091 = vpop.f32.mrb[0].mxu0
    %3092 = vmatprep.mubr.f32.mxu0 0.0
    %3093 = vmatmul.mubr.f32.gmra.mrb[0].mxu0 %v2380
    %v3094 = vpop.f32.mrb[0].mxu0
    %v3095 = vadd.f32 %v2905, %v3094
    %v3096 = vpop.f32.mrb[0].mxu0
    %3097 = vmatprep.mubr.f32.mxu0 0.0
    %3098 = vmatmul.mubr.f32.gmra.mrb[0].mxu0 %v2383
    %v3099 = vpop.f32.mrb[0].mxu0
    %v3100 = vadd.f32 %v2910, %v3099
    %v3101 = vpop.f32.mrb[0].mxu0
    %3102 = vmatprep.mubr.f32.mxu0 0.0
    %3103 = vmatmul.mubr.f32.gmra.mrb[0].mxu0 %v2386
    %v3104 = vpop.f32.mrb[0].mxu0
    %v3105 = vadd.f32 %v2915, %v3104
    %v3106 = vpop.f32.mrb[0].mxu0
    %3107 = vmatprep.mubr.f32.mxu0 0.0
    %3108 = vmatmul.mubr.f32.gmra.mrb[0].mxu0 %v2389
    %v3109 = vpop.f32.mrb[0].mxu0
    %v3110 = vadd.f32 %v2920, %v3109
    %v3111 = vpop.f32.mrb[0].mxu0
    %3112 = vmatprep.mubr.f32.mxu0 0.0
    %3113 = vmatmul.mubr.f32.gmra.mrb[0].mxu0 %v2392
    %v3114 = vpop.f32.mrb[0].mxu0
    %v3115 = vadd.f32 %v2925, %v3114
    %v3116 = vpop.f32.mrb[0].mxu0
    %3117 = vmatprep.mubr.f32.mxu0 0.0
    %3118 = vmatmul.mubr.f32.gmra.mrb[0].mxu0 %v2395
    %v3119 = vpop.f32.mrb[0].mxu0
    %v3120 = vadd.f32 %v2930, %v3119
    %v3121 = vpop.f32.mrb[0].mxu0
    %3122 = vmatprep.mubr.f32.mxu0 0.0
    %3123 = vmatmul.mubr.f32.gmra.mrb[0].mxu0 %v2398
    %v3124 = vpop.f32.mrb[0].mxu0
    %v3125 = vadd.f32 %v2935, %v3124
    %v3126 = vpop.f32.mrb[0].mxu0
    %3127 = vmatprep.mubr.f32.mxu0 0.0
    %3128 = vmatmul.mubr.f32.gmra.mrb[0].mxu0 %v2401
    %v3129 = vpop.f32.mrb[0].mxu0
    %v3130 = vadd.f32 %v2940, %v3129
    %v3131 = vpop.f32.mrb[0].mxu0
    %3132 = vmatprep.mubr.f32.mxu0 0.0
    %3133 = vmatmul.mubr.f32.gmra.mrb[0].mxu0 %v2404
    %v3134 = vpop.f32.mrb[0].mxu0
    %v3135 = vadd.f32 %v2945, %v3134
    %v3136 = vpop.f32.mrb[0].mxu0
    %3137 = vmatprep.mubr.f32.mxu0 0.0
    %3138 = vmatmul.mubr.f32.gmra.mrb[0].mxu0 %v2407
    %v3139 = vpop.f32.mrb[0].mxu0
    %v3140 = vadd.f32 %v2950, %v3139
    %v3141 = vpop.f32.mrb[0].mxu0
    %3142 = vmatprep.mubr.f32.mxu0 0.0
    %3143 = vmatmul.mubr.f32.gmra.mrb[0].mxu0 %v2410
    %v3144 = vpop.f32.mrb[0].mxu0
    %v3145 = vadd.f32 %v2955, %v3144
    %v3146 = vpop.f32.mrb[0].mxu0
    %3147 = vmatprep.mubr.f32.mxu0 0.0
    %3148 = vmatmul.mubr.f32.gmra.mrb[0].mxu0 %v2413
    %v3149 = vpop.f32.mrb[0].mxu0
    %v3150 = vadd.f32 %v2960, %v3149
    %v3151 = vpop.f32.mrb[0].mxu0
    %3152 = vmatprep.mubr.f32.mxu0 0.0
    %3153 = vmatmul.mubr.f32.gmra.mrb[0].mxu0 %v2416
    %v3154 = vpop.f32.mrb[0].mxu0
    %v3155 = vadd.f32 %v2965, %v3154
    %v3156 = vpop.f32.mrb[0].mxu0
    %3157 = vmatprep.mubr.f32.mxu0 0.0
    %3158 = vmatmul.mubr.f32.gmra.mrb[0].mxu0 %v2419
    %v3159 = vpop.f32.mrb[0].mxu0
    %v3160 = vadd.f32 %v2970, %v3159
    %v3161 = vpop.f32.mrb[0].mxu0
    %3162 = vmatprep.mubr.f32.mxu0 0.0
    %3163 = vmatmul.mubr.f32.gmra.mrb[0].mxu0 %v2422
    %v3164 = vpop.f32.mrb[0].mxu0
    %v3165 = vadd.f32 %v2975, %v3164
    %v3166 = vpop.f32.mrb[0].mxu0
    %3167 = vmatprep.mubr.f32.mxu0 0.0
    %3168 = vmatmul.mubr.f32.gmra.mrb[0].mxu0 %v2425
    %v3169 = vpop.f32.mrb[0].mxu0
    %v3170 = vadd.f32 %v2980, %v3169
    %v3171 = vpop.f32.mrb[0].mxu0
    %3172 = vmatprep.mubr.f32.mxu0 0.0
    %3173 = vmatmul.mubr.f32.gmra.mrb[0].mxu0 %v2428
    %v3174 = vpop.f32.mrb[0].mxu0
    %v3175 = vadd.f32 %v2985, %v3174
    %v3176 = vpop.f32.mrb[0].mxu0
    %3177 = vmatprep.mubr.f32.mxu0 0.0
    %3178 = vmatmul.mubr.f32.gmra.mrb[0].mxu0 %v2431
    %v3179 = vpop.f32.mrb[0].mxu0
    %v3180 = vadd.f32 %v2990, %v3179
    %v3181 = vpop.f32.mrb[0].mxu0
    %3182 = vmatprep.mubr.f32.mxu0 0.0
    %3183 = vmatmul.mubr.f32.gmra.mrb[0].mxu0 %v2434
    %v3184 = vpop.f32.mrb[0].mxu0
    %v3185 = vadd.f32 %v2995, %v3184
    %v3186 = vpop.f32.mrb[0].mxu0
    %3187 = vmatprep.mubr.f32.mxu0 0.0
    %3188 = vmatmul.mubr.f32.gmra.mrb[0].mxu0 %v2437
    %v3189 = vpop.f32.mrb[0].mxu0
    %v3190 = vadd.f32 %v3000, %v3189
    %v3191 = vpop.f32.mrb[0].mxu0
    %3192 = vmatprep.mubr.f32.mxu0 0.0
    %3193 = vmatmul.mubr.f32.gmra.mrb[0].mxu0 %v2440
    %v3194 = vpop.f32.mrb[0].mxu0
    %v3195 = vadd.f32 %v3005, %v3194
    %v3196 = vpop.f32.mrb[0].mxu0
    %3197 = vmatprep.mubr.f32.mxu0 0.0
    %3198 = vmatmul.mubr.f32.gmra.mrb[0].mxu0 %v2443
    %v3199 = vpop.f32.mrb[0].mxu0
    %v3200 = vadd.f32 %v3010, %v3199
    %v3201 = vpop.f32.mrb[0].mxu0
    %3202 = vmatprep.mubr.f32.mxu0 0.0
    %3203 = vmatmul.mubr.f32.gmra.mrb[0].mxu0 %v2446
    %v3204 = vpop.f32.mrb[0].mxu0
    %v3205 = vadd.f32 %v3015, %v3204
    %v3206 = vpop.f32.mrb[0].mxu0
    %3207 = vdwg.mxu0
    %v3208 = vmax.f32 %v2172, %v3085
    %v3209 = vmax.f32 %v2173, %v3090
    %v3210 = vmax.f32 %v2174, %v3095
    %v3211 = vmax.f32 %v2175, %v3100
    %v3212 = vmax.f32 %v2176, %v3105
    %v3213 = vmax.f32 %v2177, %v3110
    %v3214 = vmax.f32 %v2178, %v3115
    %v3215 = vmax.f32 %v2179, %v3120
    %v3216 = vmax.f32 %v2180, %v3125
    %v3217 = vmax.f32 %v2181, %v3130
    %v3218 = vmax.f32 %v2182, %v3135
    %v3219 = vmax.f32 %v2183, %v3140
    %v3220 = vmax.f32 %v2184, %v3145
    %v3221 = vmax.f32 %v2185, %v3150
    %v3222 = vmax.f32 %v2186, %v3155
    %v3223 = vmax.f32 %v2187, %v3160
    %v3224 = vmax.f32 %v2188, %v3165
    %v3225 = vmax.f32 %v2189, %v3170
    %v3226 = vmax.f32 %v2190, %v3175
    %v3227 = vmax.f32 %v2191, %v3180
    %v3228 = vmax.f32 %v2192, %v3185
    %v3229 = vmax.f32 %v2193, %v3190
    %v3230 = vmax.f32 %v2194, %v3195
    %v3231 = vmax.f32 %v2195, %v3200
    %v3232 = vmax.f32 %v2196, %v3205
    %s3233 = scalar_lea.vmem [#allocation2], 4200
    %v3234 = vld [vmem:[%s3233] sm:$0xff]
    %v3235 = vld [vmem:[%s3233 + $0x8] sm:$0xff]
    %v3236 = vld [vmem:[%s3233 + $0x10] sm:$0xff]
    %v3237 = vld [vmem:[%s3233 + $0x18] sm:$0xff]
    %v3238 = vld [vmem:[%s3233 + $0x20] sm:$0xff]
    %v3239 = vld [vmem:[%s3233 + $0x28] sm:$0xff]
    %v3240 = vld [vmem:[%s3233 + $0x30] sm:$0xff]
    %v3241 = vld [vmem:[%s3233 + $0x38] sm:$0xff]
    %v3242 = vld [vmem:[%s3233 + $0x40] sm:$0xff]
    %v3243 = vld [vmem:[%s3233 + $0x48] sm:$0xff]
    %v3244 = vld [vmem:[%s3233 + $0x50] sm:$0xff]
    %v3245 = vld [vmem:[%s3233 + $0x58] sm:$0xff]
    %v3246 = vld [vmem:[%s3233 + $0x60] sm:$0xff]
    %v3247 = vld [vmem:[%s3233 + $0x68] sm:$0xff]
    %v3248 = vld [vmem:[%s3233 + $0x70] sm:$0xff]
    %v3249 = vld [vmem:[%s3233 + $0x78] sm:$0xff]
    %v3250 = vld [vmem:[%s3233 + $0x80] sm:$0xff]
    %v3251 = vld [vmem:[%s3233 + $0x88] sm:$0xff]
    %v3252 = vld [vmem:[%s3233 + $0x90] sm:$0xff]
    %v3253 = vld [vmem:[%s3233 + $0x98] sm:$0xff]
    %v3254 = vld [vmem:[%s3233 + $0xa0] sm:$0xff]
    %v3255 = vld [vmem:[%s3233 + $0xa8] sm:$0xff]
    %v3256 = vld [vmem:[%s3233 + $0xb0] sm:$0xff]
    %v3257 = vld [vmem:[%s3233 + $0xb8] sm:$0xff]
    %v3258 = vld [vmem:[%s3233 + $0xc0] sm:$0xff]
    %v3259 = vld [vmem:[%s3233 + $0xc8] sm:$0xff]
    %v3260 = vld [vmem:[%s3233 + $0xd0] sm:$0xff]
    %v3261 = vld [vmem:[%s3233 + $0xd8] sm:$0xff]
    %v3262 = vld [vmem:[%s3233 + $0xe0] sm:$0xff]
    %v3263 = vld [vmem:[%s3233 + $0xe8] sm:$0xff]
    %v3264 = vld [vmem:[%s3233 + $0xf0] sm:$0xff]
    %v3265 = vld [vmem:[%s3233 + $0xf8] sm:$0xff]
    %v3266 = vld [vmem:[%s3233 + $0x100] sm:$0xff]
    %v3267 = vld [vmem:[%s3233 + $0x108] sm:$0xff]
    %v3268 = vld [vmem:[%s3233 + $0x110] sm:$0xff]
    %v3269 = vld [vmem:[%s3233 + $0x118] sm:$0xff]
    %v3270 = vld [vmem:[%s3233 + $0x120] sm:$0xff]
    %v3271 = vld [vmem:[%s3233 + $0x128] sm:$0xff]
    %v3272 = vld [vmem:[%s3233 + $0x130] sm:$0xff]
    %v3273 = vld [vmem:[%s3233 + $0x138] sm:$0xff]
    %v3274 = vld [vmem:[%s3233 + $0x140] sm:$0xff]
    %v3275 = vld [vmem:[%s3233 + $0x148] sm:$0xff]
    %v3276 = vld [vmem:[%s3233 + $0x150] sm:$0xff]
    %v3277 = vld [vmem:[%s3233 + $0x158] sm:$0xff]
    %v3278 = vld [vmem:[%s3233 + $0x160] sm:$0xff]
    %v3279 = vld [vmem:[%s3233 + $0x168] sm:$0xff]
    %v3280 = vld [vmem:[%s3233 + $0x170] sm:$0xff]
    %v3281 = vld [vmem:[%s3233 + $0x178] sm:$0xff]
    %v3282 = vld [vmem:[%s3233 + $0x180] sm:$0xff]
    %v3283 = vld [vmem:[%s3233 + $0x188] sm:$0xff]
    %v3284 = vld [vmem:[%s3233 + $0x190] sm:$0xff]
    %v3285 = vld [vmem:[%s3233 + $0x198] sm:$0xff]
    %v3286 = vld [vmem:[%s3233 + $0x1a0] sm:$0xff]
    %v3287 = vld [vmem:[%s3233 + $0x1a8] sm:$0xff]
    %v3288 = vld [vmem:[%s3233 + $0x1b0] sm:$0xff]
    %v3289 = vld [vmem:[%s3233 + $0x1b8] sm:$0xff]
    %v3290 = vld [vmem:[%s3233 + $0x1c0] sm:$0xff]
    %v3291 = vld [vmem:[%s3233 + $0x1c8] sm:$0xff]
    %v3292 = vld [vmem:[%s3233 + $0x1d0] sm:$0xff]
    %v3293 = vld [vmem:[%s3233 + $0x1d8] sm:$0xff]
    %v3294 = vld [vmem:[%s3233 + $0x1e0] sm:$0xff]
    %v3295 = vld [vmem:[%s3233 + $0x1e8] sm:$0xff]
    %v3296 = vld [vmem:[%s3233 + $0x1f0] sm:$0xff]
    %v3297 = vld [vmem:[%s3233 + $0x1f8] sm:$0xff]
    %v3298 = vld [vmem:[%s3233 + $0x200] sm:$0xff]
    %v3299 = vld [vmem:[%s3233 + $0x208] sm:$0xff]
    %v3300 = vld [vmem:[%s3233 + $0x210] sm:$0xff]
    %v3301 = vld [vmem:[%s3233 + $0x218] sm:$0xff]
    %v3302 = vld [vmem:[%s3233 + $0x220] sm:$0xff]
    %v3303 = vld [vmem:[%s3233 + $0x228] sm:$0xff]
    %v3304 = vld [vmem:[%s3233 + $0x230] sm:$0xff]
    %v3305 = vld [vmem:[%s3233 + $0x238] sm:$0xff]
    %v3306 = vld [vmem:[%s3233 + $0x240] sm:$0xff]
    %v3307 = vld [vmem:[%s3233 + $0x248] sm:$0xff]
    %v3308 = vld [vmem:[%s3233 + $0x250] sm:$0xff]
    %v3309 = vld [vmem:[%s3233 + $0x258] sm:$0xff]
    %v3310 = vld [vmem:[%s3233 + $0x260] sm:$0xff]
    %v3311 = vld [vmem:[%s3233 + $0x268] sm:$0xff]
    %v3312 = vld [vmem:[%s3233 + $0x270] sm:$0xff]
    %v3313 = vld [vmem:[%s3233 + $0x278] sm:$0xff]
    %v3314 = vld [vmem:[%s3233 + $0x280] sm:$0xff]
    %v3315 = vld [vmem:[%s3233 + $0x288] sm:$0xff]
    %v3316 = vld [vmem:[%s3233 + $0x290] sm:$0xff]
    %v3317 = vld [vmem:[%s3233 + $0x298] sm:$0xff]
    %v3318 = vld [vmem:[%s3233 + $0x2a0] sm:$0xff]
    %v3319 = vld [vmem:[%s3233 + $0x2a8] sm:$0xff]
    %v3320 = vld [vmem:[%s3233 + $0x2b0] sm:$0xff]
    %v3321 = vld [vmem:[%s3233 + $0x2b8] sm:$0xff]
    %v3322 = vld [vmem:[%s3233 + $0x2c0] sm:$0xff]
    %v3323 = vld [vmem:[%s3233 + $0x2c8] sm:$0xff]
    %v3324 = vld [vmem:[%s3233 + $0x2d0] sm:$0xff]
    %v3325 = vld [vmem:[%s3233 + $0x2d8] sm:$0xff]
    %v3326 = vld [vmem:[%s3233 + $0x2e0] sm:$0xff]
    %v3327 = vld [vmem:[%s3233 + $0x2e8] sm:$0xff]
    %v3328 = vld [vmem:[%s3233 + $0x2f0] sm:$0xff]
    %v3329 = vld [vmem:[%s3233 + $0x2f8] sm:$0xff]
    %v3330 = vld [vmem:[%s3233 + $0x300] sm:$0xff]
    %v3331 = vld [vmem:[%s3233 + $0x308] sm:$0xff]
    %v3332 = vld [vmem:[%s3233 + $0x310] sm:$0xff]
    %v3333 = vld [vmem:[%s3233 + $0x318] sm:$0xff]
    %v3334 = vld [vmem:[%s3233 + $0x320] sm:$0xff]
    %v3335 = vld [vmem:[%s3233 + $0x328] sm:$0xff]
    %v3336 = vld [vmem:[%s3233 + $0x330] sm:$0xff]
    %v3337 = vld [vmem:[%s3233 + $0x338] sm:$0xff]
    %v3338 = vld [vmem:[%s3233 + $0x340] sm:$0xff]
    %v3339 = vld [vmem:[%s3233 + $0x348] sm:$0xff]
    %v3340 = vld [vmem:[%s3233 + $0x350] sm:$0xff]
    %v3341 = vld [vmem:[%s3233 + $0x358] sm:$0xff]
    %v3342 = vld [vmem:[%s3233 + $0x360] sm:$0xff]
    %v3343 = vld [vmem:[%s3233 + $0x368] sm:$0xff]
    %v3344 = vld [vmem:[%s3233 + $0x370] sm:$0xff]
    %v3345 = vld [vmem:[%s3233 + $0x378] sm:$0xff]
    %v3346 = vld [vmem:[%s3233 + $0x380] sm:$0xff]
    %v3347 = vld [vmem:[%s3233 + $0x388] sm:$0xff]
    %v3348 = vld [vmem:[%s3233 + $0x390] sm:$0xff]
    %v3349 = vld [vmem:[%s3233 + $0x398] sm:$0xff]
    %v3350 = vld [vmem:[%s3233 + $0x3a0] sm:$0xff]
    %v3351 = vld [vmem:[%s3233 + $0x3a8] sm:$0xff]
    %v3352 = vld [vmem:[%s3233 + $0x3b0] sm:$0xff]
    %v3353 = vld [vmem:[%s3233 + $0x3b8] sm:$0xff]
    %v3354 = vld [vmem:[%s3233 + $0x3c0] sm:$0xff]
    %v3355 = vld [vmem:[%s3233 + $0x3c8] sm:$0xff]
    %v3356 = vld [vmem:[%s3233 + $0x3d0] sm:$0xff]
    %v3357 = vld [vmem:[%s3233 + $0x3d8] sm:$0xff]
    %v3358 = vld [vmem:[%s3233 + $0x3e0] sm:$0xff]
    %v3359 = vld [vmem:[%s3233 + $0x3e8] sm:$0xff]
    %v3360 = vld [vmem:[%s3233 + $0x3f0] sm:$0xff]
    %v3361 = vld [vmem:[%s3233 + $0x3f8] sm:$0xff]
    %v3362 = vld [vmem:[%s3233 + $0x400] sm:$0xff]
    %v3363 = vld [vmem:[%s3233 + $0x408] sm:$0xff]
    %v3364 = vld [vmem:[%s3233 + $0x410] sm:$0xff]
    %v3365 = vld [vmem:[%s3233 + $0x418] sm:$0xff]
    %v3366 = vld [vmem:[%s3233 + $0x420] sm:$0xff]
    %v3367 = vld [vmem:[%s3233 + $0x428] sm:$0xff]
    %v3368 = vld [vmem:[%s3233 + $0x430] sm:$0xff]
    %v3369 = vld [vmem:[%s3233 + $0x438] sm:$0xff]
    %v3370 = vld [vmem:[%s3233 + $0x440] sm:$0xff]
    %v3371 = vld [vmem:[%s3233 + $0x448] sm:$0xff]
    %v3372 = vld [vmem:[%s3233 + $0x450] sm:$0xff]
    %v3373 = vld [vmem:[%s3233 + $0x458] sm:$0xff]
    %v3374 = vld [vmem:[%s3233 + $0x460] sm:$0xff]
    %v3375 = vld [vmem:[%s3233 + $0x468] sm:$0xff]
    %v3376 = vld [vmem:[%s3233 + $0x470] sm:$0xff]
    %v3377 = vld [vmem:[%s3233 + $0x478] sm:$0xff]
    %v3378 = vld [vmem:[%s3233 + $0x480] sm:$0xff]
    %v3379 = vld [vmem:[%s3233 + $0x488] sm:$0xff]
    %v3380 = vld [vmem:[%s3233 + $0x490] sm:$0xff]
    %v3381 = vld [vmem:[%s3233 + $0x498] sm:$0xff]
    %v3382 = vld [vmem:[%s3233 + $0x4a0] sm:$0xff]
    %v3383 = vld [vmem:[%s3233 + $0x4a8] sm:$0xff]
    %v3384 = vld [vmem:[%s3233 + $0x4b0] sm:$0xff]
    %v3385 = vld [vmem:[%s3233 + $0x4b8] sm:$0xff]
    %v3386 = vld [vmem:[%s3233 + $0x4c0] sm:$0xff]
    %v3387 = vld [vmem:[%s3233 + $0x4c8] sm:$0xff]
    %v3388 = vld [vmem:[%s3233 + $0x4d0] sm:$0xff]
    %v3389 = vld [vmem:[%s3233 + $0x4d8] sm:$0xff]
    %v3390 = vld [vmem:[%s3233 + $0x4e0] sm:$0xff]
    %v3391 = vld [vmem:[%s3233 + $0x4e8] sm:$0xff]
    %v3392 = vld [vmem:[%s3233 + $0x4f0] sm:$0xff]
    %v3393 = vld [vmem:[%s3233 + $0x4f8] sm:$0xff]
    %v3394 = vld [vmem:[%s3233 + $0x500] sm:$0xff]
    %v3395 = vld [vmem:[%s3233 + $0x508] sm:$0xff]
    %v3396 = vld [vmem:[%s3233 + $0x510] sm:$0xff]
    %v3397 = vld [vmem:[%s3233 + $0x518] sm:$0xff]
    %v3398 = vld [vmem:[%s3233 + $0x520] sm:$0xff]
    %v3399 = vld [vmem:[%s3233 + $0x528] sm:$0xff]
    %v3400 = vld [vmem:[%s3233 + $0x530] sm:$0xff]
    %v3401 = vld [vmem:[%s3233 + $0x538] sm:$0xff]
    %v3402 = vld [vmem:[%s3233 + $0x540] sm:$0xff]
    %v3403 = vld [vmem:[%s3233 + $0x548] sm:$0xff]
    %v3404 = vld [vmem:[%s3233 + $0x550] sm:$0xff]
    %v3405 = vld [vmem:[%s3233 + $0x558] sm:$0xff]
    %v3406 = vld [vmem:[%s3233 + $0x560] sm:$0xff]
    %v3407 = vld [vmem:[%s3233 + $0x568] sm:$0xff]
    %v3408 = vld [vmem:[%s3233 + $0x570] sm:$0xff]
    %v3410 = vsel %vm325, %v3240, 0
    %v3413 = vsel %vm325, %v3247, 0
    %v3416 = vsel %vm325, %v3254, 0
    %v3419 = vsel %vm325, %v3261, 0
    %v3422 = vsel %vm325, %v3268, 0
    %v3425 = vsel %vm325, %v3275, 0
    %v3428 = vsel %vm325, %v3282, 0
    %v3431 = vsel %vm325, %v3289, 0
    %v3434 = vsel %vm325, %v3296, 0
    %v3437 = vsel %vm325, %v3303, 0
    %v3440 = vsel %vm325, %v3310, 0
    %v3443 = vsel %vm325, %v3317, 0
    %v3446 = vsel %vm325, %v3324, 0
    %v3449 = vsel %vm325, %v3331, 0
    %v3452 = vsel %vm325, %v3338, 0
    %v3455 = vsel %vm325, %v3345, 0
    %v3458 = vsel %vm325, %v3352, 0
    %v3461 = vsel %vm325, %v3359, 0
    %v3464 = vsel %vm325, %v3366, 0
    %v3467 = vsel %vm325, %v3373, 0
    %v3470 = vsel %vm325, %v3380, 0
    %v3473 = vsel %vm325, %v3387, 0
    %v3476 = vsel %vm325, %v3394, 0
    %v3479 = vsel %vm325, %v3401, 0
    %v3482 = vsel %vm325, %v3408, 0
    %3484 = vmatprep.subr.mxu0 0.0
    %3485 = vmatpush1.msra.mxu0 %v52
    %3486 = vmatprep.subr.mxu0 0.0
    %3487 = vmatpush1.msra.mxu0 %v53
    %3488 = vmatprep.subr.mxu0 0.0
    %3489 = vmatpush1.msra.mxu0 %v54
    %3490 = vmatprep.subr.mxu0 0.0
    %3491 = vmatpush1.msra.mxu0 %v55
    %3492 = vmatprep.subr.mxu0 0.0
    %3493 = vmatpush1.msra.mxu0 %v56
    %3494 = vmatprep.subr.mxu0 0.0
    %3495 = vmatpush1.msra.mxu0 %v57
    %3496 = vmatprep.subr.mxu0 0.0
    %3497 = vmatpush1.msra.mxu0 %v58
    %3498 = vmatprep.subr.mxu0 0.0
    %3499 = vmatpush1.msra.mxu0 %v59
    %3500 = vmatprep.subr.mxu0 0.0
    %3501 = vmatpush1.msra.mxu0 %v60
    %3502 = vmatprep.subr.mxu0 0.0
    %3503 = vmatpush1.msra.mxu0 %v61
    %3504 = vmatprep.subr.mxu0 0.0
    %3505 = vmatpush1.msra.mxu0 %v62
    %3506 = vmatprep.subr.mxu0 0.0
    %3507 = vmatpush1.msra.mxu0 %v63
    %3508 = vmatprep.subr.mxu0 0.0
    %3509 = vmatpush1.msra.mxu0 %v64
    %3510 = vmatprep.subr.mxu0 0.0
    %3511 = vmatpush1.msra.mxu0 %v65
    %3512 = vmatprep.subr.mxu0 0.0
    %3513 = vmatpush1.msra.mxu0 %v66
    %3514 = vmatprep.subr.mxu0 0.0
    %3515 = vmatpush1.msra.mxu0 %v67
    %3516 = vmatprep.subr.mxu0 0.0
    %3517 = vmatpush1.msra.mxu0 %v68
    %3518 = vmatprep.subr.mxu0 0.0
    %3519 = vmatpush1.msra.mxu0 %v69
    %3520 = vmatprep.subr.mxu0 0.0
    %3521 = vmatpush1.msra.mxu0 %v70
    %3522 = vmatprep.subr.mxu0 0.0
    %3523 = vmatpush1.msra.mxu0 %v71
    %3524 = vmatprep.subr.mxu0 0.0
    %3525 = vmatpush1.msra.mxu0 %v72
    %3526 = vmatprep.subr.mxu0 0.0
    %3527 = vmatpush1.msra.mxu0 %v73
    %3528 = vmatprep.subr.mxu0 0.0
    %3529 = vmatpush1.msra.mxu0 %v74
    %3530 = vmatprep.subr.mxu0 0.0
    %3531 = vmatpush1.msra.mxu0 %v75
    %3532 = vmatprep.subr.mxu0 0.0
    %3533 = vmatpush1.msra.mxu0 %v76
    %3534 = vmatprep.subr.mxu0 0.0
    %3535 = vmatpush1.msra.mxu0 %v77
    %3536 = vmatprep.subr.mxu0 0.0
    %3537 = vmatpush1.msra.mxu0 %v78
    %3538 = vmatprep.subr.mxu0 0.0
    %3539 = vmatpush1.msra.mxu0 %v79
    %3540 = vmatprep.subr.mxu0 0.0
    %3541 = vmatpush1.msra.mxu0 %v80
    %3542 = vmatprep.subr.mxu0 0.0
    %3543 = vmatpush1.msra.mxu0 %v81
    %3544 = vmatprep.subr.mxu0 0.0
    %3545 = vmatpush1.msra.mxu0 %v82
    %3546 = vmatprep.subr.mxu0 0.0
    %3547 = vmatpush1.msra.mxu0 %v83
    %3548 = vmatprep.mubr.f32.mxu0 %v3235
    %3549 = vmatmul.mubr.f32.gmra.mrb[0].mxu0 %v3234
    %v3550 = vpop.f32.mrb[0].mxu0
    %v3551 = vadd.f32 0.0, %v3550
    %v3552 = vpop.f32.mrb[0].mxu0
    %3553 = vmatprep.mubr.f32.mxu0 %v3242
    %3554 = vmatmul.mubr.f32.gmra.mrb[0].mxu0 %v3241
    %v3555 = vpop.f32.mrb[0].mxu0
    %v3556 = vadd.f32 0.0, %v3555
    %v3557 = vpop.f32.mrb[0].mxu0
    %3558 = vmatprep.mubr.f32.mxu0 %v3249
    %3559 = vmatmul.mubr.f32.gmra.mrb[0].mxu0 %v3248
    %v3560 = vpop.f32.mrb[0].mxu0
    %v3561 = vadd.f32 0.0, %v3560
    %v3562 = vpop.f32.mrb[0].mxu0
    %3563 = vmatprep.mubr.f32.mxu0 %v3256
    %3564 = vmatmul.mubr.f32.gmra.mrb[0].mxu0 %v3255
    %v3565 = vpop.f32.mrb[0].mxu0
    %v3566 = vadd.f32 0.0, %v3565
    %v3567 = vpop.f32.mrb[0].mxu0
    %3568 = vmatprep.mubr.f32.mxu0 %v3263
    %3569 = vmatmul.mubr.f32.gmra.mrb[0].mxu0 %v3262
    %v3570 = vpop.f32.mrb[0].mxu0
    %v3571 = vadd.f32 0.0, %v3570
    %v3572 = vpop.f32.mrb[0].mxu0
    %3573 = vmatprep.mubr.f32.mxu0 %v3270
    %3574 = vmatmul.mubr.f32.gmra.mrb[0].mxu0 %v3269
    %v3575 = vpop.f32.mrb[0].mxu0
    %v3576 = vadd.f32 0.0, %v3575
    %v3577 = vpop.f32.mrb[0].mxu0
    %3578 = vmatprep.mubr.f32.mxu0 %v3277
    %3579 = vmatmul.mubr.f32.gmra.mrb[0].mxu0 %v3276
    %v3580 = vpop.f32.mrb[0].mxu0
    %v3581 = vadd.f32 0.0, %v3580
    %v3582 = vpop.f32.mrb[0].mxu0
    %3583 = vmatprep.mubr.f32.mxu0 %v3284
    %3584 = vmatmul.mubr.f32.gmra.mrb[0].mxu0 %v3283
    %v3585 = vpop.f32.mrb[0].mxu0
    %v3586 = vadd.f32 0.0, %v3585
    %v3587 = vpop.f32.mrb[0].mxu0
    %3588 = vmatprep.mubr.f32.mxu0 %v3291
    %3589 = vmatmul.mubr.f32.gmra.mrb[0].mxu0 %v3290
    %v3590 = vpop.f32.mrb[0].mxu0
    %v3591 = vadd.f32 0.0, %v3590
    %v3592 = vpop.f32.mrb[0].mxu0
    %3593 = vmatprep.mubr.f32.mxu0 %v3298
    %3594 = vmatmul.mubr.f32.gmra.mrb[0].mxu0 %v3297
    %v3595 = vpop.f32.mrb[0].mxu0
    %v3596 = vadd.f32 0.0, %v3595
    %v3597 = vpop.f32.mrb[0].mxu0
    %3598 = vmatprep.mubr.f32.mxu0 %v3305
    %3599 = vmatmul.mubr.f32.gmra.mrb[0].mxu0 %v3304
    %v3600 = vpop.f32.mrb[0].mxu0
    %v3601 = vadd.f32 0.0, %v3600
    %v3602 = vpop.f32.mrb[0].mxu0
    %3603 = vmatprep.mubr.f32.mxu0 %v3312
    %3604 = vmatmul.mubr.f32.gmra.mrb[0].mxu0 %v3311
    %v3605 = vpop.f32.mrb[0].mxu0
    %v3606 = vadd.f32 0.0, %v3605
    %v3607 = vpop.f32.mrb[0].mxu0
    %3608 = vmatprep.mubr.f32.mxu0 %v3319
    %3609 = vmatmul.mubr.f32.gmra.mrb[0].mxu0 %v3318
    %v3610 = vpop.f32.mrb[0].mxu0
    %v3611 = vadd.f32 0.0, %v3610
    %v3612 = vpop.f32.mrb[0].mxu0
    %3613 = vmatprep.mubr.f32.mxu0 %v3326
    %3614 = vmatmul.mubr.f32.gmra.mrb[0].mxu0 %v3325
    %v3615 = vpop.f32.mrb[0].mxu0
    %v3616 = vadd.f32 0.0, %v3615
    %v3617 = vpop.f32.mrb[0].mxu0
    %3618 = vmatprep.mubr.f32.mxu0 %v3333
    %3619 = vmatmul.mubr.f32.gmra.mrb[0].mxu0 %v3332
    %v3620 = vpop.f32.mrb[0].mxu0
    %v3621 = vadd.f32 0.0, %v3620
    %v3622 = vpop.f32.mrb[0].mxu0
    %3623 = vmatprep.mubr.f32.mxu0 %v3340
    %3624 = vmatmul.mubr.f32.gmra.mrb[0].mxu0 %v3339
    %v3625 = vpop.f32.mrb[0].mxu0
    %v3626 = vadd.f32 0.0, %v3625
    %v3627 = vpop.f32.mrb[0].mxu0
    %3628 = vmatprep.mubr.f32.mxu0 %v3347
    %3629 = vmatmul.mubr.f32.gmra.mrb[0].mxu0 %v3346
    %v3630 = vpop.f32.mrb[0].mxu0
    %v3631 = vadd.f32 0.0, %v3630
    %v3632 = vpop.f32.mrb[0].mxu0
    %3633 = vmatprep.mubr.f32.mxu0 %v3354
    %3634 = vmatmul.mubr.f32.gmra.mrb[0].mxu0 %v3353
    %v3635 = vpop.f32.mrb[0].mxu0
    %v3636 = vadd.f32 0.0, %v3635
    %v3637 = vpop.f32.mrb[0].mxu0
    %3638 = vmatprep.mubr.f32.mxu0 %v3361
    %3639 = vmatmul.mubr.f32.gmra.mrb[0].mxu0 %v3360
    %v3640 = vpop.f32.mrb[0].mxu0
    %v3641 = vadd.f32 0.0, %v3640
    %v3642 = vpop.f32.mrb[0].mxu0
    %3643 = vmatprep.mubr.f32.mxu0 %v3368
    %3644 = vmatmul.mubr.f32.gmra.mrb[0].mxu0 %v3367
    %v3645 = vpop.f32.mrb[0].mxu0
    %v3646 = vadd.f32 0.0, %v3645
    %v3647 = vpop.f32.mrb[0].mxu0
    %3648 = vmatprep.mubr.f32.mxu0 %v3375
    %3649 = vmatmul.mubr.f32.gmra.mrb[0].mxu0 %v3374
    %v3650 = vpop.f32.mrb[0].mxu0
    %v3651 = vadd.f32 0.0, %v3650
    %v3652 = vpop.f32.mrb[0].mxu0
    %3653 = vmatprep.mubr.f32.mxu0 %v3382
    %3654 = vmatmul.mubr.f32.gmra.mrb[0].mxu0 %v3381
    %v3655 = vpop.f32.mrb[0].mxu0
    %v3656 = vadd.f32 0.0, %v3655
    %v3657 = vpop.f32.mrb[0].mxu0
    %3658 = vmatprep.mubr.f32.mxu0 %v3389
    %3659 = vmatmul.mubr.f32.gmra.mrb[0].mxu0 %v3388
    %v3660 = vpop.f32.mrb[0].mxu0
    %v3661 = vadd.f32 0.0, %v3660
    %v3662 = vpop.f32.mrb[0].mxu0
    %3663 = vmatprep.mubr.f32.mxu0 %v3396
    %3664 = vmatmul.mubr.f32.gmra.mrb[0].mxu0 %v3395
    %v3665 = vpop.f32.mrb[0].mxu0
    %v3666 = vadd.f32 0.0, %v3665
    %v3667 = vpop.f32.mrb[0].mxu0
    %3668 = vmatprep.mubr.f32.mxu0 %v3403
    %3669 = vmatmul.mubr.f32.gmra.mrb[0].mxu0 %v3402
    %v3670 = vpop.f32.mrb[0].mxu0
    %v3671 = vadd.f32 0.0, %v3670
    %v3672 = vpop.f32.mrb[0].mxu0
    %3673 = vdwg.mxu0
    %3674 = vmatprep.subr.mxu0 0.0
    %3675 = vmatpush1.msra.mxu0 %v84
    %3676 = vmatprep.subr.mxu0 0.0
    %3677 = vmatpush1.msra.mxu0 %v85
    %3678 = vmatprep.subr.mxu0 0.0
    %3679 = vmatpush1.msra.mxu0 %v86
    %3680 = vmatprep.subr.mxu0 0.0
    %3681 = vmatpush1.msra.mxu0 %v87
    %3682 = vmatprep.subr.mxu0 0.0
    %3683 = vmatpush1.msra.mxu0 %v88
    %3684 = vmatprep.subr.mxu0 0.0
    %3685 = vmatpush1.msra.mxu0 %v89
    %3686 = vmatprep.subr.mxu0 0.0
    %3687 = vmatpush1.msra.mxu0 %v90
    %3688 = vmatprep.subr.mxu0 0.0
    %3689 = vmatpush1.msra.mxu0 %v91
    %3690 = vmatprep.subr.mxu0 0.0
    %3691 = vmatpush1.msra.mxu0 %v92
    %3692 = vmatprep.subr.mxu0 0.0
    %3693 = vmatpush1.msra.mxu0 %v93
    %3694 = vmatprep.subr.mxu0 0.0
    %3695 = vmatpush1.msra.mxu0 %v94
    %3696 = vmatprep.subr.mxu0 0.0
    %3697 = vmatpush1.msra.mxu0 %v95
    %3698 = vmatprep.subr.mxu0 0.0
    %3699 = vmatpush1.msra.mxu0 %v96
    %3700 = vmatprep.subr.mxu0 0.0
    %3701 = vmatpush1.msra.mxu0 %v97
    %3702 = vmatprep.subr.mxu0 0.0
    %3703 = vmatpush1.msra.mxu0 %v98
    %3704 = vmatprep.subr.mxu0 0.0
    %3705 = vmatpush1.msra.mxu0 %v99
    %3706 = vmatprep.subr.mxu0 0.0
    %3707 = vmatpush1.msra.mxu0 %v100
    %3708 = vmatprep.subr.mxu0 0.0
    %3709 = vmatpush1.msra.mxu0 %v101
    %3710 = vmatprep.subr.mxu0 0.0
    %3711 = vmatpush1.msra.mxu0 %v102
    %3712 = vmatprep.subr.mxu0 0.0
    %3713 = vmatpush1.msra.mxu0 %v103
    %3714 = vmatprep.subr.mxu0 0.0
    %3715 = vmatpush1.msra.mxu0 %v104
    %3716 = vmatprep.subr.mxu0 0.0
    %3717 = vmatpush1.msra.mxu0 %v105
    %3718 = vmatprep.subr.mxu0 0.0
    %3719 = vmatpush1.msra.mxu0 %v106
    %3720 = vmatprep.subr.mxu0 0.0
    %3721 = vmatpush1.msra.mxu0 %v107
    %3722 = vmatprep.subr.mxu0 0.0
    %3723 = vmatpush1.msra.mxu0 %v108
    %3724 = vmatprep.subr.mxu0 0.0
    %3725 = vmatpush1.msra.mxu0 %v109
    %3726 = vmatprep.subr.mxu0 0.0
    %3727 = vmatpush1.msra.mxu0 %v110
    %3728 = vmatprep.subr.mxu0 0.0
    %3729 = vmatpush1.msra.mxu0 %v111
    %3730 = vmatprep.subr.mxu0 0.0
    %3731 = vmatpush1.msra.mxu0 %v112
    %3732 = vmatprep.subr.mxu0 0.0
    %3733 = vmatpush1.msra.mxu0 %v113
    %3734 = vmatprep.subr.mxu0 0.0
    %3735 = vmatpush1.msra.mxu0 %v114
    %3736 = vmatprep.subr.mxu0 0.0
    %3737 = vmatpush1.msra.mxu0 %v115
    %3738 = vmatprep.mubr.f32.mxu0 %v3237
    %3739 = vmatmul.mubr.f32.gmra.mrb[0].mxu0 %v3236
    %v3740 = vpop.f32.mrb[0].mxu0
    %v3741 = vadd.f32 %v3551, %v3740
    %v3742 = vpop.f32.mrb[0].mxu0
    %3743 = vmatprep.mubr.f32.mxu0 %v3244
    %3744 = vmatmul.mubr.f32.gmra.mrb[0].mxu0 %v3243
    %v3745 = vpop.f32.mrb[0].mxu0
    %v3746 = vadd.f32 %v3556, %v3745
    %v3747 = vpop.f32.mrb[0].mxu0
    %3748 = vmatprep.mubr.f32.mxu0 %v3251
    %3749 = vmatmul.mubr.f32.gmra.mrb[0].mxu0 %v3250
    %v3750 = vpop.f32.mrb[0].mxu0
    %v3751 = vadd.f32 %v3561, %v3750
    %v3752 = vpop.f32.mrb[0].mxu0
    %3753 = vmatprep.mubr.f32.mxu0 %v3258
    %3754 = vmatmul.mubr.f32.gmra.mrb[0].mxu0 %v3257
    %v3755 = vpop.f32.mrb[0].mxu0
    %v3756 = vadd.f32 %v3566, %v3755
    %v3757 = vpop.f32.mrb[0].mxu0
    %3758 = vmatprep.mubr.f32.mxu0 %v3265
    %3759 = vmatmul.mubr.f32.gmra.mrb[0].mxu0 %v3264
    %v3760 = vpop.f32.mrb[0].mxu0
    %v3761 = vadd.f32 %v3571, %v3760
    %v3762 = vpop.f32.mrb[0].mxu0
    %3763 = vmatprep.mubr.f32.mxu0 %v3272
    %3764 = vmatmul.mubr.f32.gmra.mrb[0].mxu0 %v3271
    %v3765 = vpop.f32.mrb[0].mxu0
    %v3766 = vadd.f32 %v3576, %v3765
    %v3767 = vpop.f32.mrb[0].mxu0
    %3768 = vmatprep.mubr.f32.mxu0 %v3279
    %3769 = vmatmul.mubr.f32.gmra.mrb[0].mxu0 %v3278
    %v3770 = vpop.f32.mrb[0].mxu0
    %v3771 = vadd.f32 %v3581, %v3770
    %v3772 = vpop.f32.mrb[0].mxu0
    %3773 = vmatprep.mubr.f32.mxu0 %v3286
    %3774 = vmatmul.mubr.f32.gmra.mrb[0].mxu0 %v3285
    %v3775 = vpop.f32.mrb[0].mxu0
    %v3776 = vadd.f32 %v3586, %v3775
    %v3777 = vpop.f32.mrb[0].mxu0
    %3778 = vmatprep.mubr.f32.mxu0 %v3293
    %3779 = vmatmul.mubr.f32.gmra.mrb[0].mxu0 %v3292
    %v3780 = vpop.f32.mrb[0].mxu0
    %v3781 = vadd.f32 %v3591, %v3780
    %v3782 = vpop.f32.mrb[0].mxu0
    %3783 = vmatprep.mubr.f32.mxu0 %v3300
    %3784 = vmatmul.mubr.f32.gmra.mrb[0].mxu0 %v3299
    %v3785 = vpop.f32.mrb[0].mxu0
    %v3786 = vadd.f32 %v3596, %v3785
    %v3787 = vpop.f32.mrb[0].mxu0
    %3788 = vmatprep.mubr.f32.mxu0 %v3307
    %3789 = vmatmul.mubr.f32.gmra.mrb[0].mxu0 %v3306
    %v3790 = vpop.f32.mrb[0].mxu0
    %v3791 = vadd.f32 %v3601, %v3790
    %v3792 = vpop.f32.mrb[0].mxu0
    %3793 = vmatprep.mubr.f32.mxu0 %v3314
    %3794 = vmatmul.mubr.f32.gmra.mrb[0].mxu0 %v3313
    %v3795 = vpop.f32.mrb[0].mxu0
    %v3796 = vadd.f32 %v3606, %v3795
    %v3797 = vpop.f32.mrb[0].mxu0
    %3798 = vmatprep.mubr.f32.mxu0 %v3321
    %3799 = vmatmul.mubr.f32.gmra.mrb[0].mxu0 %v3320
    %v3800 = vpop.f32.mrb[0].mxu0
    %v3801 = vadd.f32 %v3611, %v3800
    %v3802 = vpop.f32.mrb[0].mxu0
    %3803 = vmatprep.mubr.f32.mxu0 %v3328
    %3804 = vmatmul.mubr.f32.gmra.mrb[0].mxu0 %v3327
    %v3805 = vpop.f32.mrb[0].mxu0
    %v3806 = vadd.f32 %v3616, %v3805
    %v3807 = vpop.f32.mrb[0].mxu0
    %3808 = vmatprep.mubr.f32.mxu0 %v3335
    %3809 = vmatmul.mubr.f32.gmra.mrb[0].mxu0 %v3334
    %v3810 = vpop.f32.mrb[0].mxu0
    %v3811 = vadd.f32 %v3621, %v3810
    %v3812 = vpop.f32.mrb[0].mxu0
    %3813 = vmatprep.mubr.f32.mxu0 %v3342
    %3814 = vmatmul.mubr.f32.gmra.mrb[0].mxu0 %v3341
    %v3815 = vpop.f32.mrb[0].mxu0
    %v3816 = vadd.f32 %v3626, %v3815
    %v3817 = vpop.f32.mrb[0].mxu0
    %3818 = vmatprep.mubr.f32.mxu0 %v3349
    %3819 = vmatmul.mubr.f32.gmra.mrb[0].mxu0 %v3348
    %v3820 = vpop.f32.mrb[0].mxu0
    %v3821 = vadd.f32 %v3631, %v3820
    %v3822 = vpop.f32.mrb[0].mxu0
    %3823 = vmatprep.mubr.f32.mxu0 %v3356
    %3824 = vmatmul.mubr.f32.gmra.mrb[0].mxu0 %v3355
    %v3825 = vpop.f32.mrb[0].mxu0
    %v3826 = vadd.f32 %v3636, %v3825
    %v3827 = vpop.f32.mrb[0].mxu0
    %3828 = vmatprep.mubr.f32.mxu0 %v3363
    %3829 = vmatmul.mubr.f32.gmra.mrb[0].mxu0 %v3362
    %v3830 = vpop.f32.mrb[0].mxu0
    %v3831 = vadd.f32 %v3641, %v3830
    %v3832 = vpop.f32.mrb[0].mxu0
    %3833 = vmatprep.mubr.f32.mxu0 %v3370
    %3834 = vmatmul.mubr.f32.gmra.mrb[0].mxu0 %v3369
    %v3835 = vpop.f32.mrb[0].mxu0
    %v3836 = vadd.f32 %v3646, %v3835
    %v3837 = vpop.f32.mrb[0].mxu0
    %3838 = vmatprep.mubr.f32.mxu0 %v3377
    %3839 = vmatmul.mubr.f32.gmra.mrb[0].mxu0 %v3376
    %v3840 = vpop.f32.mrb[0].mxu0
    %v3841 = vadd.f32 %v3651, %v3840
    %v3842 = vpop.f32.mrb[0].mxu0
    %3843 = vmatprep.mubr.f32.mxu0 %v3384
    %3844 = vmatmul.mubr.f32.gmra.mrb[0].mxu0 %v3383
    %v3845 = vpop.f32.mrb[0].mxu0
    %v3846 = vadd.f32 %v3656, %v3845
    %v3847 = vpop.f32.mrb[0].mxu0
    %3848 = vmatprep.mubr.f32.mxu0 %v3391
    %3849 = vmatmul.mubr.f32.gmra.mrb[0].mxu0 %v3390
    %v3850 = vpop.f32.mrb[0].mxu0
    %v3851 = vadd.f32 %v3661, %v3850
    %v3852 = vpop.f32.mrb[0].mxu0
    %3853 = vmatprep.mubr.f32.mxu0 %v3398
    %3854 = vmatmul.mubr.f32.gmra.mrb[0].mxu0 %v3397
    %v3855 = vpop.f32.mrb[0].mxu0
    %v3856 = vadd.f32 %v3666, %v3855
    %v3857 = vpop.f32.mrb[0].mxu0
    %3858 = vmatprep.mubr.f32.mxu0 %v3405
    %3859 = vmatmul.mubr.f32.gmra.mrb[0].mxu0 %v3404
    %v3860 = vpop.f32.mrb[0].mxu0
    %v3861 = vadd.f32 %v3671, %v3860
    %v3862 = vpop.f32.mrb[0].mxu0
    %3863 = vdwg.mxu0
    %3864 = vmatprep.subr.mxu0 0.0
    %3865 = vmatpush1.msra.mxu0 %v116
    %3866 = vmatprep.subr.mxu0 0.0
    %3867 = vmatpush1.msra.mxu0 %v117
    %3868 = vmatprep.subr.mxu0 0.0
    %3869 = vmatpush1.msra.mxu0 %v118
    %3870 = vmatprep.subr.mxu0 0.0
    %3871 = vmatpush1.msra.mxu0 %v119
    %3872 = vmatprep.subr.mxu0 0.0
    %3873 = vmatpush1.msra.mxu0 %v120
    %3874 = vmatprep.subr.mxu0 0.0
    %3875 = vmatpush1.msra.mxu0 %v121
    %3876 = vmatprep.subr.mxu0 0.0
    %3877 = vmatpush1.msra.mxu0 %v122
    %3878 = vmatprep.subr.mxu0 0.0
    %3879 = vmatpush1.msra.mxu0 %v123
    %3880 = vmatprep.subr.mxu0 0.0
    %3881 = vmatpush1.msra.mxu0 %v124
    %3882 = vmatprep.subr.mxu0 0.0
    %3883 = vmatpush1.msra.mxu0 %v125
    %3884 = vmatprep.subr.mxu0 0.0
    %3885 = vmatpush1.msra.mxu0 %v126
    %3886 = vmatprep.subr.mxu0 0.0
    %3887 = vmatpush1.msra.mxu0 %v127
    %3888 = vmatprep.subr.mxu0 0.0
    %3889 = vmatpush1.msra.mxu0 %v128
    %3890 = vmatprep.subr.mxu0 0.0
    %3891 = vmatpush1.msra.mxu0 %v129
    %3892 = vmatprep.subr.mxu0 0.0
    %3893 = vmatpush1.msra.mxu0 %v130
    %3894 = vmatprep.subr.mxu0 0.0
    %3895 = vmatpush1.msra.mxu0 %v131
    %3896 = vmatprep.subr.mxu0 0.0
    %3897 = vmatpush1.msra.mxu0 %v132
    %3898 = vmatprep.subr.mxu0 0.0
    %3899 = vmatpush1.msra.mxu0 %v133
    %3900 = vmatprep.subr.mxu0 0.0
    %3901 = vmatpush1.msra.mxu0 %v134
    %3902 = vmatprep.subr.mxu0 0.0
    %3903 = vmatpush1.msra.mxu0 %v135
    %3904 = vmatprep.subr.mxu0 0.0
    %3905 = vmatpush1.msra.mxu0 %v136
    %3906 = vmatprep.subr.mxu0 0.0
    %3907 = vmatpush1.msra.mxu0 %v137
    %3908 = vmatprep.subr.mxu0 0.0
    %3909 = vmatpush1.msra.mxu0 %v138
    %3910 = vmatprep.subr.mxu0 0.0
    %3911 = vmatpush1.msra.mxu0 %v139
    %3912 = vmatprep.subr.mxu0 0.0
    %3913 = vmatpush1.msra.mxu0 %v140
    %3914 = vmatprep.subr.mxu0 0.0
    %3915 = vmatpush1.msra.mxu0 %v141
    %3916 = vmatprep.subr.mxu0 0.0
    %3917 = vmatpush1.msra.mxu0 %v142
    %3918 = vmatprep.subr.mxu0 0.0
    %3919 = vmatpush1.msra.mxu0 %v143
    %3920 = vmatprep.subr.mxu0 0.0
    %3921 = vmatpush1.msra.mxu0 %v144
    %3922 = vmatprep.subr.mxu0 0.0
    %3923 = vmatpush1.msra.mxu0 %v145
    %3924 = vmatprep.subr.mxu0 0.0
    %3925 = vmatpush1.msra.mxu0 %v146
    %3926 = vmatprep.subr.mxu0 0.0
    %3927 = vmatpush1.msra.mxu0 %v147
    %3928 = vmatprep.mubr.f32.mxu0 %v3239
    %3929 = vmatmul.mubr.f32.gmra.mrb[0].mxu0 %v3238
    %v3930 = vpop.f32.mrb[0].mxu0
    %v3931 = vadd.f32 %v3741, %v3930
    %v3932 = vpop.f32.mrb[0].mxu0
    %3933 = vmatprep.mubr.f32.mxu0 %v3246
    %3934 = vmatmul.mubr.f32.gmra.mrb[0].mxu0 %v3245
    %v3935 = vpop.f32.mrb[0].mxu0
    %v3936 = vadd.f32 %v3746, %v3935
    %v3937 = vpop.f32.mrb[0].mxu0
    %3938 = vmatprep.mubr.f32.mxu0 %v3253
    %3939 = vmatmul.mubr.f32.gmra.mrb[0].mxu0 %v3252
    %v3940 = vpop.f32.mrb[0].mxu0
    %v3941 = vadd.f32 %v3751, %v3940
    %v3942 = vpop.f32.mrb[0].mxu0
    %3943 = vmatprep.mubr.f32.mxu0 %v3260
    %3944 = vmatmul.mubr.f32.gmra.mrb[0].mxu0 %v3259
    %v3945 = vpop.f32.mrb[0].mxu0
    %v3946 = vadd.f32 %v3756, %v3945
    %v3947 = vpop.f32.mrb[0].mxu0
    %3948 = vmatprep.mubr.f32.mxu0 %v3267
    %3949 = vmatmul.mubr.f32.gmra.mrb[0].mxu0 %v3266
    %v3950 = vpop.f32.mrb[0].mxu0
    %v3951 = vadd.f32 %v3761, %v3950
    %v3952 = vpop.f32.mrb[0].mxu0
    %3953 = vmatprep.mubr.f32.mxu0 %v3274
    %3954 = vmatmul.mubr.f32.gmra.mrb[0].mxu0 %v3273
    %v3955 = vpop.f32.mrb[0].mxu0
    %v3956 = vadd.f32 %v3766, %v3955
    %v3957 = vpop.f32.mrb[0].mxu0
    %3958 = vmatprep.mubr.f32.mxu0 %v3281
    %3959 = vmatmul.mubr.f32.gmra.mrb[0].mxu0 %v3280
    %v3960 = vpop.f32.mrb[0].mxu0
    %v3961 = vadd.f32 %v3771, %v3960
    %v3962 = vpop.f32.mrb[0].mxu0
    %3963 = vmatprep.mubr.f32.mxu0 %v3288
    %3964 = vmatmul.mubr.f32.gmra.mrb[0].mxu0 %v3287
    %v3965 = vpop.f32.mrb[0].mxu0
    %v3966 = vadd.f32 %v3776, %v3965
    %v3967 = vpop.f32.mrb[0].mxu0
    %3968 = vmatprep.mubr.f32.mxu0 %v3295
    %3969 = vmatmul.mubr.f32.gmra.mrb[0].mxu0 %v3294
    %v3970 = vpop.f32.mrb[0].mxu0
    %v3971 = vadd.f32 %v3781, %v3970
    %v3972 = vpop.f32.mrb[0].mxu0
    %3973 = vmatprep.mubr.f32.mxu0 %v3302
    %3974 = vmatmul.mubr.f32.gmra.mrb[0].mxu0 %v3301
    %v3975 = vpop.f32.mrb[0].mxu0
    %v3976 = vadd.f32 %v3786, %v3975
    %v3977 = vpop.f32.mrb[0].mxu0
    %3978 = vmatprep.mubr.f32.mxu0 %v3309
    %3979 = vmatmul.mubr.f32.gmra.mrb[0].mxu0 %v3308
    %v3980 = vpop.f32.mrb[0].mxu0
    %v3981 = vadd.f32 %v3791, %v3980
    %v3982 = vpop.f32.mrb[0].mxu0
    %3983 = vmatprep.mubr.f32.mxu0 %v3316
    %3984 = vmatmul.mubr.f32.gmra.mrb[0].mxu0 %v3315
    %v3985 = vpop.f32.mrb[0].mxu0
    %v3986 = vadd.f32 %v3796, %v3985
    %v3987 = vpop.f32.mrb[0].mxu0
    %3988 = vmatprep.mubr.f32.mxu0 %v3323
    %3989 = vmatmul.mubr.f32.gmra.mrb[0].mxu0 %v3322
    %v3990 = vpop.f32.mrb[0].mxu0
    %v3991 = vadd.f32 %v3801, %v3990
    %v3992 = vpop.f32.mrb[0].mxu0
    %3993 = vmatprep.mubr.f32.mxu0 %v3330
    %3994 = vmatmul.mubr.f32.gmra.mrb[0].mxu0 %v3329
    %v3995 = vpop.f32.mrb[0].mxu0
    %v3996 = vadd.f32 %v3806, %v3995
    %v3997 = vpop.f32.mrb[0].mxu0
    %3998 = vmatprep.mubr.f32.mxu0 %v3337
    %3999 = vmatmul.mubr.f32.gmra.mrb[0].mxu0 %v3336
    %v4000 = vpop.f32.mrb[0].mxu0
    %v4001 = vadd.f32 %v3811, %v4000
    %v4002 = vpop.f32.mrb[0].mxu0
    %4003 = vmatprep.mubr.f32.mxu0 %v3344
    %4004 = vmatmul.mubr.f32.gmra.mrb[0].mxu0 %v3343
    %v4005 = vpop.f32.mrb[0].mxu0
    %v4006 = vadd.f32 %v3816, %v4005
    %v4007 = vpop.f32.mrb[0].mxu0
    %4008 = vmatprep.mubr.f32.mxu0 %v3351
    %4009 = vmatmul.mubr.f32.gmra.mrb[0].mxu0 %v3350
    %v4010 = vpop.f32.mrb[0].mxu0
    %v4011 = vadd.f32 %v3821, %v4010
    %v4012 = vpop.f32.mrb[0].mxu0
    %4013 = vmatprep.mubr.f32.mxu0 %v3358
    %4014 = vmatmul.mubr.f32.gmra.mrb[0].mxu0 %v3357
    %v4015 = vpop.f32.mrb[0].mxu0
    %v4016 = vadd.f32 %v3826, %v4015
    %v4017 = vpop.f32.mrb[0].mxu0
    %4018 = vmatprep.mubr.f32.mxu0 %v3365
    %4019 = vmatmul.mubr.f32.gmra.mrb[0].mxu0 %v3364
    %v4020 = vpop.f32.mrb[0].mxu0
    %v4021 = vadd.f32 %v3831, %v4020
    %v4022 = vpop.f32.mrb[0].mxu0
    %4023 = vmatprep.mubr.f32.mxu0 %v3372
    %4024 = vmatmul.mubr.f32.gmra.mrb[0].mxu0 %v3371
    %v4025 = vpop.f32.mrb[0].mxu0
    %v4026 = vadd.f32 %v3836, %v4025
    %v4027 = vpop.f32.mrb[0].mxu0
    %4028 = vmatprep.mubr.f32.mxu0 %v3379
    %4029 = vmatmul.mubr.f32.gmra.mrb[0].mxu0 %v3378
    %v4030 = vpop.f32.mrb[0].mxu0
    %v4031 = vadd.f32 %v3841, %v4030
    %v4032 = vpop.f32.mrb[0].mxu0
    %4033 = vmatprep.mubr.f32.mxu0 %v3386
    %4034 = vmatmul.mubr.f32.gmra.mrb[0].mxu0 %v3385
    %v4035 = vpop.f32.mrb[0].mxu0
    %v4036 = vadd.f32 %v3846, %v4035
    %v4037 = vpop.f32.mrb[0].mxu0
    %4038 = vmatprep.mubr.f32.mxu0 %v3393
    %4039 = vmatmul.mubr.f32.gmra.mrb[0].mxu0 %v3392
    %v4040 = vpop.f32.mrb[0].mxu0
    %v4041 = vadd.f32 %v3851, %v4040
    %v4042 = vpop.f32.mrb[0].mxu0
    %4043 = vmatprep.mubr.f32.mxu0 %v3400
    %4044 = vmatmul.mubr.f32.gmra.mrb[0].mxu0 %v3399
    %v4045 = vpop.f32.mrb[0].mxu0
    %v4046 = vadd.f32 %v3856, %v4045
    %v4047 = vpop.f32.mrb[0].mxu0
    %4048 = vmatprep.mubr.f32.mxu0 %v3407
    %4049 = vmatmul.mubr.f32.gmra.mrb[0].mxu0 %v3406
    %v4050 = vpop.f32.mrb[0].mxu0
    %v4051 = vadd.f32 %v3861, %v4050
    %v4052 = vpop.f32.mrb[0].mxu0
    %4053 = vdwg.mxu0
    %4054 = vmatprep.subr.mxu0 0.0
    %4055 = vmatpush1.msra.mxu0 %v148
    %4056 = vmatprep.subr.mxu0 0.0
    %4057 = vmatpush1.msra.mxu0 %v149
    %4058 = vmatprep.subr.mxu0 0.0
    %4059 = vmatpush1.msra.mxu0 0.0
    %4060 = vmatprep.subr.mxu0 0.0
    %4061 = vmatpush1.msra.mxu0 0.0
    %4062 = vmatprep.subr.mxu0 0.0
    %4063 = vmatpush1.msra.mxu0 0.0
    %4064 = vmatprep.subr.mxu0 0.0
    %4065 = vmatpush1.msra.mxu0 0.0
    %4066 = vmatprep.subr.mxu0 0.0
    %4067 = vmatpush1.msra.mxu0 0.0
    %4068 = vmatprep.subr.mxu0 0.0
    %4069 = vmatpush1.msra.mxu0 0.0
    %4070 = vmatprep.subr.mxu0 0.0
    %4071 = vmatpush1.msra.mxu0 0.0
    %4072 = vmatprep.subr.mxu0 0.0
    %4073 = vmatpush1.msra.mxu0 0.0
    %4074 = vmatprep.subr.mxu0 0.0
    %4075 = vmatpush1.msra.mxu0 0.0
    %4076 = vmatprep.subr.mxu0 0.0
    %4077 = vmatpush1.msra.mxu0 0.0
    %4078 = vmatprep.subr.mxu0 0.0
    %4079 = vmatpush1.msra.mxu0 0.0
    %4080 = vmatprep.subr.mxu0 0.0
    %4081 = vmatpush1.msra.mxu0 0.0
    %4082 = vmatprep.subr.mxu0 0.0
    %4083 = vmatpush1.msra.mxu0 0.0
    %4084 = vmatprep.subr.mxu0 0.0
    %4085 = vmatpush1.msra.mxu0 0.0
    %4086 = vmatprep.subr.mxu0 0.0
    %4087 = vmatpush1.msra.mxu0 0.0
    %4088 = vmatprep.subr.mxu0 0.0
    %4089 = vmatpush1.msra.mxu0 0.0
    %4090 = vmatprep.subr.mxu0 0.0
    %4091 = vmatpush1.msra.mxu0 0.0
    %4092 = vmatprep.subr.mxu0 0.0
    %4093 = vmatpush1.msra.mxu0 0.0
    %4094 = vmatprep.subr.mxu0 0.0
    %4095 = vmatpush1.msra.mxu0 0.0
    %4096 = vmatprep.subr.mxu0 0.0
    %4097 = vmatpush1.msra.mxu0 0.0
    %4098 = vmatprep.subr.mxu0 0.0
    %4099 = vmatpush1.msra.mxu0 0.0
    %4100 = vmatprep.subr.mxu0 0.0
    %4101 = vmatpush1.msra.mxu0 0.0
    %4102 = vmatprep.subr.mxu0 0.0
    %4103 = vmatpush1.msra.mxu0 0.0
    %4104 = vmatprep.subr.mxu0 0.0
    %4105 = vmatpush1.msra.mxu0 0.0
    %4106 = vmatprep.subr.mxu0 0.0
    %4107 = vmatpush1.msra.mxu0 0.0
    %4108 = vmatprep.subr.mxu0 0.0
    %4109 = vmatpush1.msra.mxu0 0.0
    %4110 = vmatprep.subr.mxu0 0.0
    %4111 = vmatpush1.msra.mxu0 0.0
    %4112 = vmatprep.subr.mxu0 0.0
    %4113 = vmatpush1.msra.mxu0 0.0
    %4114 = vmatprep.subr.mxu0 0.0
    %4115 = vmatpush1.msra.mxu0 0.0
    %4116 = vmatprep.subr.mxu0 0.0
    %4117 = vmatpush1.msra.mxu0 0.0
    %4118 = vmatprep.mubr.f32.mxu0 0.0
    %4119 = vmatmul.mubr.f32.gmra.mrb[0].mxu0 %v3410
    %v4120 = vpop.f32.mrb[0].mxu0
    %v4121 = vadd.f32 %v3931, %v4120
    %v4122 = vpop.f32.mrb[0].mxu0
    %4123 = vmatprep.mubr.f32.mxu0 0.0
    %4124 = vmatmul.mubr.f32.gmra.mrb[0].mxu0 %v3413
    %v4125 = vpop.f32.mrb[0].mxu0
    %v4126 = vadd.f32 %v3936, %v4125
    %v4127 = vpop.f32.mrb[0].mxu0
    %4128 = vmatprep.mubr.f32.mxu0 0.0
    %4129 = vmatmul.mubr.f32.gmra.mrb[0].mxu0 %v3416
    %v4130 = vpop.f32.mrb[0].mxu0
    %v4131 = vadd.f32 %v3941, %v4130
    %v4132 = vpop.f32.mrb[0].mxu0
    %4133 = vmatprep.mubr.f32.mxu0 0.0
    %4134 = vmatmul.mubr.f32.gmra.mrb[0].mxu0 %v3419
    %v4135 = vpop.f32.mrb[0].mxu0
    %v4136 = vadd.f32 %v3946, %v4135
    %v4137 = vpop.f32.mrb[0].mxu0
    %4138 = vmatprep.mubr.f32.mxu0 0.0
    %4139 = vmatmul.mubr.f32.gmra.mrb[0].mxu0 %v3422
    %v4140 = vpop.f32.mrb[0].mxu0
    %v4141 = vadd.f32 %v3951, %v4140
    %v4142 = vpop.f32.mrb[0].mxu0
    %4143 = vmatprep.mubr.f32.mxu0 0.0
    %4144 = vmatmul.mubr.f32.gmra.mrb[0].mxu0 %v3425
    %v4145 = vpop.f32.mrb[0].mxu0
    %v4146 = vadd.f32 %v3956, %v4145
    %v4147 = vpop.f32.mrb[0].mxu0
    %4148 = vmatprep.mubr.f32.mxu0 0.0
    %4149 = vmatmul.mubr.f32.gmra.mrb[0].mxu0 %v3428
    %v4150 = vpop.f32.mrb[0].mxu0
    %v4151 = vadd.f32 %v3961, %v4150
    %v4152 = vpop.f32.mrb[0].mxu0
    %4153 = vmatprep.mubr.f32.mxu0 0.0
    %4154 = vmatmul.mubr.f32.gmra.mrb[0].mxu0 %v3431
    %v4155 = vpop.f32.mrb[0].mxu0
    %v4156 = vadd.f32 %v3966, %v4155
    %v4157 = vpop.f32.mrb[0].mxu0
    %4158 = vmatprep.mubr.f32.mxu0 0.0
    %4159 = vmatmul.mubr.f32.gmra.mrb[0].mxu0 %v3434
    %v4160 = vpop.f32.mrb[0].mxu0
    %v4161 = vadd.f32 %v3971, %v4160
    %v4162 = vpop.f32.mrb[0].mxu0
    %4163 = vmatprep.mubr.f32.mxu0 0.0
    %4164 = vmatmul.mubr.f32.gmra.mrb[0].mxu0 %v3437
    %v4165 = vpop.f32.mrb[0].mxu0
    %v4166 = vadd.f32 %v3976, %v4165
    %v4167 = vpop.f32.mrb[0].mxu0
    %4168 = vmatprep.mubr.f32.mxu0 0.0
    %4169 = vmatmul.mubr.f32.gmra.mrb[0].mxu0 %v3440
    %v4170 = vpop.f32.mrb[0].mxu0
    %v4171 = vadd.f32 %v3981, %v4170
    %v4172 = vpop.f32.mrb[0].mxu0
    %4173 = vmatprep.mubr.f32.mxu0 0.0
    %4174 = vmatmul.mubr.f32.gmra.mrb[0].mxu0 %v3443
    %v4175 = vpop.f32.mrb[0].mxu0
    %v4176 = vadd.f32 %v3986, %v4175
    %v4177 = vpop.f32.mrb[0].mxu0
    %4178 = vmatprep.mubr.f32.mxu0 0.0
    %4179 = vmatmul.mubr.f32.gmra.mrb[0].mxu0 %v3446
    %v4180 = vpop.f32.mrb[0].mxu0
    %v4181 = vadd.f32 %v3991, %v4180
    %v4182 = vpop.f32.mrb[0].mxu0
    %4183 = vmatprep.mubr.f32.mxu0 0.0
    %4184 = vmatmul.mubr.f32.gmra.mrb[0].mxu0 %v3449
    %v4185 = vpop.f32.mrb[0].mxu0
    %v4186 = vadd.f32 %v3996, %v4185
    %v4187 = vpop.f32.mrb[0].mxu0
    %4188 = vmatprep.mubr.f32.mxu0 0.0
    %4189 = vmatmul.mubr.f32.gmra.mrb[0].mxu0 %v3452
    %v4190 = vpop.f32.mrb[0].mxu0
    %v4191 = vadd.f32 %v4001, %v4190
    %v4192 = vpop.f32.mrb[0].mxu0
    %4193 = vmatprep.mubr.f32.mxu0 0.0
    %4194 = vmatmul.mubr.f32.gmra.mrb[0].mxu0 %v3455
    %v4195 = vpop.f32.mrb[0].mxu0
    %v4196 = vadd.f32 %v4006, %v4195
    %v4197 = vpop.f32.mrb[0].mxu0
    %4198 = vmatprep.mubr.f32.mxu0 0.0
    %4199 = vmatmul.mubr.f32.gmra.mrb[0].mxu0 %v3458
    %v4200 = vpop.f32.mrb[0].mxu0
    %v4201 = vadd.f32 %v4011, %v4200
    %v4202 = vpop.f32.mrb[0].mxu0
    %4203 = vmatprep.mubr.f32.mxu0 0.0
    %4204 = vmatmul.mubr.f32.gmra.mrb[0].mxu0 %v3461
    %v4205 = vpop.f32.mrb[0].mxu0
    %v4206 = vadd.f32 %v4016, %v4205
    %v4207 = vpop.f32.mrb[0].mxu0
    %4208 = vmatprep.mubr.f32.mxu0 0.0
    %4209 = vmatmul.mubr.f32.gmra.mrb[0].mxu0 %v3464
    %v4210 = vpop.f32.mrb[0].mxu0
    %v4211 = vadd.f32 %v4021, %v4210
    %v4212 = vpop.f32.mrb[0].mxu0
    %4213 = vmatprep.mubr.f32.mxu0 0.0
    %4214 = vmatmul.mubr.f32.gmra.mrb[0].mxu0 %v3467
    %v4215 = vpop.f32.mrb[0].mxu0
    %v4216 = vadd.f32 %v4026, %v4215
    %v4217 = vpop.f32.mrb[0].mxu0
    %4218 = vmatprep.mubr.f32.mxu0 0.0
    %4219 = vmatmul.mubr.f32.gmra.mrb[0].mxu0 %v3470
    %v4220 = vpop.f32.mrb[0].mxu0
    %v4221 = vadd.f32 %v4031, %v4220
    %v4222 = vpop.f32.mrb[0].mxu0
    %4223 = vmatprep.mubr.f32.mxu0 0.0
    %4224 = vmatmul.mubr.f32.gmra.mrb[0].mxu0 %v3473
    %v4225 = vpop.f32.mrb[0].mxu0
    %v4226 = vadd.f32 %v4036, %v4225
    %v4227 = vpop.f32.mrb[0].mxu0
    %4228 = vmatprep.mubr.f32.mxu0 0.0
    %4229 = vmatmul.mubr.f32.gmra.mrb[0].mxu0 %v3476
    %v4230 = vpop.f32.mrb[0].mxu0
    %v4231 = vadd.f32 %v4041, %v4230
    %v4232 = vpop.f32.mrb[0].mxu0
    %4233 = vmatprep.mubr.f32.mxu0 0.0
    %4234 = vmatmul.mubr.f32.gmra.mrb[0].mxu0 %v3479
    %v4235 = vpop.f32.mrb[0].mxu0
    %v4236 = vadd.f32 %v4046, %v4235
    %v4237 = vpop.f32.mrb[0].mxu0
    %4238 = vmatprep.mubr.f32.mxu0 0.0
    %4239 = vmatmul.mubr.f32.gmra.mrb[0].mxu0 %v3482
    %v4240 = vpop.f32.mrb[0].mxu0
    %v4241 = vadd.f32 %v4051, %v4240
    %v4242 = vpop.f32.mrb[0].mxu0
    %4243 = vdwg.mxu0
    %v4244 = vmax.f32 %v3208, %v4121
    %v4245 = vmax.f32 %v3209, %v4126
    %v4246 = vmax.f32 %v3210, %v4131
    %v4247 = vmax.f32 %v3211, %v4136
    %v4248 = vmax.f32 %v3212, %v4141
    %v4249 = vmax.f32 %v3213, %v4146
    %v4250 = vmax.f32 %v3214, %v4151
    %v4251 = vmax.f32 %v3215, %v4156
    %v4252 = vmax.f32 %v3216, %v4161
    %v4253 = vmax.f32 %v3217, %v4166
    %v4254 = vmax.f32 %v3218, %v4171
    %v4255 = vmax.f32 %v3219, %v4176
    %v4256 = vmax.f32 %v3220, %v4181
    %v4257 = vmax.f32 %v3221, %v4186
    %v4258 = vmax.f32 %v3222, %v4191
    %v4259 = vmax.f32 %v3223, %v4196
    %v4260 = vmax.f32 %v3224, %v4201
    %v4261 = vmax.f32 %v3225, %v4206
    %v4262 = vmax.f32 %v3226, %v4211
    %v4263 = vmax.f32 %v3227, %v4216
    %v4264 = vmax.f32 %v3228, %v4221
    %v4265 = vmax.f32 %v3229, %v4226
    %v4266 = vmax.f32 %v3230, %v4231
    %v4267 = vmax.f32 %v3231, %v4236
    %v4268 = vmax.f32 %v3232, %v4241
    %v4269 = vld [vmem:[%s2] sm:$0xff]
    %v4270 = vld [vmem:[%s2 + $0x8] sm:$0xff]
    %v4271 = vld [vmem:[%s2 + $0x10] sm:$0xff]
    %v4272 = vld [vmem:[%s2 + $0x18] sm:$0xff]
    %v4273 = vld [vmem:[%s2 + $0x20] sm:$0xff]
    %v4274 = vld [vmem:[%s2 + $0x28] sm:$0xff]
    %v4275 = vld [vmem:[%s2 + $0x30] sm:$0xff]
    %v4276 = vld [vmem:[%s2 + $0x38] sm:$0xff]
    %v4277 = vld [vmem:[%s2 + $0x40] sm:$0xff]
    %v4278 = vld [vmem:[%s2 + $0x48] sm:$0xff]
    %v4279 = vld [vmem:[%s2 + $0x50] sm:$0xff]
    %v4280 = vld [vmem:[%s2 + $0x58] sm:$0xff]
    %v4281 = vld [vmem:[%s2 + $0x60] sm:$0xff]
    %v4282 = vld [vmem:[%s2 + $0x68] sm:$0xff]
    %v4283 = vld [vmem:[%s2 + $0x70] sm:$0xff]
    %v4284 = vld [vmem:[%s2 + $0x78] sm:$0xff]
    %v4285 = vld [vmem:[%s2 + $0x80] sm:$0xff]
    %v4286 = vld [vmem:[%s2 + $0x88] sm:$0xff]
    %v4287 = vld [vmem:[%s2 + $0x90] sm:$0xff]
    %v4288 = vld [vmem:[%s2 + $0x98] sm:$0xff]
    %v4289 = vld [vmem:[%s2 + $0xa0] sm:$0xff]
    %v4290 = vld [vmem:[%s2 + $0xa8] sm:$0xff]
    %v4291 = vld [vmem:[%s2 + $0xb0] sm:$0xff]
    %v4292 = vld [vmem:[%s2 + $0xb8] sm:$0xff]
    %v4293 = vld [vmem:[%s2 + $0xc0] sm:$0xff]
    %4295 = vset.pattern.permute.xlu0 0
    %4296 = vperm.xlu0 %4295, %v4269
    %v4297 = vpop.permute.xlu0 %4296
    %4300 = vset.pattern.permute.xlu0 0
    %4301 = vperm.xlu0 %4300, %v4270
    %v4302 = vpop.permute.xlu0 %4301
    %4305 = vset.pattern.permute.xlu0 0
    %4306 = vperm.xlu0 %4305, %v4271
    %v4307 = vpop.permute.xlu0 %4306
    %4310 = vset.pattern.permute.xlu0 0
    %4311 = vperm.xlu0 %4310, %v4272
    %v4312 = vpop.permute.xlu0 %4311
    %4315 = vset.pattern.permute.xlu0 0
    %4316 = vperm.xlu0 %4315, %v4273
    %v4317 = vpop.permute.xlu0 %4316
    %4320 = vset.pattern.permute.xlu0 0
    %4321 = vperm.xlu0 %4320, %v4274
    %v4322 = vpop.permute.xlu0 %4321
    %4325 = vset.pattern.permute.xlu0 0
    %4326 = vperm.xlu0 %4325, %v4275
    %v4327 = vpop.permute.xlu0 %4326
    %4330 = vset.pattern.permute.xlu0 0
    %4331 = vperm.xlu0 %4330, %v4276
    %v4332 = vpop.permute.xlu0 %4331
    %4335 = vset.pattern.permute.xlu0 0
    %4336 = vperm.xlu0 %4335, %v4277
    %v4337 = vpop.permute.xlu0 %4336
    %4340 = vset.pattern.permute.xlu0 0
    %4341 = vperm.xlu0 %4340, %v4278
    %v4342 = vpop.permute.xlu0 %4341
    %4345 = vset.pattern.permute.xlu0 0
    %4346 = vperm.xlu0 %4345, %v4279
    %v4347 = vpop.permute.xlu0 %4346
    %4350 = vset.pattern.permute.xlu0 0
    %4351 = vperm.xlu0 %4350, %v4280
    %v4352 = vpop.permute.xlu0 %4351
    %4355 = vset.pattern.permute.xlu0 0
    %4356 = vperm.xlu0 %4355, %v4281
    %v4357 = vpop.permute.xlu0 %4356
    %4360 = vset.pattern.permute.xlu0 0
    %4361 = vperm.xlu0 %4360, %v4282
    %v4362 = vpop.permute.xlu0 %4361
    %4365 = vset.pattern.permute.xlu0 0
    %4366 = vperm.xlu0 %4365, %v4283
    %v4367 = vpop.permute.xlu0 %4366
    %4370 = vset.pattern.permute.xlu0 0
    %4371 = vperm.xlu0 %4370, %v4284
    %v4372 = vpop.permute.xlu0 %4371
    %4375 = vset.pattern.permute.xlu0 0
    %4376 = vperm.xlu0 %4375, %v4285
    %v4377 = vpop.permute.xlu0 %4376
    %4380 = vset.pattern.permute.xlu0 0
    %4381 = vperm.xlu0 %4380, %v4286
    %v4382 = vpop.permute.xlu0 %4381
    %4385 = vset.pattern.permute.xlu0 0
    %4386 = vperm.xlu0 %4385, %v4287
    %v4387 = vpop.permute.xlu0 %4386
    %4390 = vset.pattern.permute.xlu0 0
    %4391 = vperm.xlu0 %4390, %v4288
    %v4392 = vpop.permute.xlu0 %4391
    %4395 = vset.pattern.permute.xlu0 0
    %4396 = vperm.xlu0 %4395, %v4289
    %v4397 = vpop.permute.xlu0 %4396
    %4400 = vset.pattern.permute.xlu0 0
    %4401 = vperm.xlu0 %4400, %v4290
    %v4402 = vpop.permute.xlu0 %4401
    %4405 = vset.pattern.permute.xlu0 0
    %4406 = vperm.xlu0 %4405, %v4291
    %v4407 = vpop.permute.xlu0 %4406
    %4410 = vset.pattern.permute.xlu0 0
    %4411 = vperm.xlu0 %4410, %v4292
    %v4412 = vpop.permute.xlu0 %4411
    %4415 = vset.pattern.permute.xlu0 0
    %4416 = vperm.xlu0 %4415, %v4293
    %v4417 = vpop.permute.xlu0 %4416
    %v4419 = vadd.f32 %v4244, %v4297
    %v4420 = vadd.f32 %v4245, %v4302
    %v4421 = vadd.f32 %v4246, %v4307
    %v4422 = vadd.f32 %v4247, %v4312
    %v4423 = vadd.f32 %v4248, %v4317
    %v4424 = vadd.f32 %v4249, %v4322
    %v4425 = vadd.f32 %v4250, %v4327
    %v4426 = vadd.f32 %v4251, %v4332
    %v4427 = vadd.f32 %v4252, %v4337
    %v4428 = vadd.f32 %v4253, %v4342
    %v4429 = vadd.f32 %v4254, %v4347
    %v4430 = vadd.f32 %v4255, %v4352
    %v4431 = vadd.f32 %v4256, %v4357
    %v4432 = vadd.f32 %v4257, %v4362
    %v4433 = vadd.f32 %v4258, %v4367
    %v4434 = vadd.f32 %v4259, %v4372
    %v4435 = vadd.f32 %v4260, %v4377
    %v4436 = vadd.f32 %v4261, %v4382
    %v4437 = vadd.f32 %v4262, %v4387
    %v4438 = vadd.f32 %v4263, %v4392
    %v4439 = vadd.f32 %v4264, %v4397
    %v4440 = vadd.f32 %v4265, %v4402
    %v4441 = vadd.f32 %v4266, %v4407
    %v4442 = vadd.f32 %v4267, %v4412
    %v4443 = vadd.f32 %v4268, %v4417
    %v4444 = vmax.f32 %v4419, 0.0
    %v4445 = vmax.f32 %v4420, 0.0
    %v4446 = vmax.f32 %v4421, 0.0
    %v4447 = vmax.f32 %v4422, 0.0
    %v4448 = vmax.f32 %v4423, 0.0
    %v4449 = vmax.f32 %v4424, 0.0
    %v4450 = vmax.f32 %v4425, 0.0
    %v4451 = vmax.f32 %v4426, 0.0
    %v4452 = vmax.f32 %v4427, 0.0
    %v4453 = vmax.f32 %v4428, 0.0
    %v4454 = vmax.f32 %v4429, 0.0
    %v4455 = vmax.f32 %v4430, 0.0
    %v4456 = vmax.f32 %v4431, 0.0
    %v4457 = vmax.f32 %v4432, 0.0
    %v4458 = vmax.f32 %v4433, 0.0
    %v4459 = vmax.f32 %v4434, 0.0
    %v4460 = vmax.f32 %v4435, 0.0
    %v4461 = vmax.f32 %v4436, 0.0
    %v4462 = vmax.f32 %v4437, 0.0
    %v4463 = vmax.f32 %v4438, 0.0
    %v4464 = vmax.f32 %v4439, 0.0
    %v4465 = vmax.f32 %v4440, 0.0
    %v4466 = vmax.f32 %v4441, 0.0
    %v4467 = vmax.f32 %v4442, 0.0
    %v4468 = vmax.f32 %v4443, 0.0
    %v4469 = vld [vmem:[%s3] sm:$0xff]
    %v4470 = vld [vmem:[%s3 + $0x8] sm:$0xff]
    %v4471 = vld [vmem:[%s3 + $0x10] sm:$0xff]
    %v4472 = vld [vmem:[%s3 + $0x18] sm:$0xff]
    %v4473 = vld [vmem:[%s3 + $0x20] sm:$0xff]
    %v4474 = vld [vmem:[%s3 + $0x28] sm:$0xff]
    %v4475 = vld [vmem:[%s3 + $0x30] sm:$0xff]
    %v4476 = vld [vmem:[%s3 + $0x38] sm:$0xff]
    %v4477 = vld [vmem:[%s3 + $0x40] sm:$0xff]
    %v4478 = vld [vmem:[%s3 + $0x48] sm:$0xff]
    %v4479 = vld [vmem:[%s3 + $0x50] sm:$0xff]
    %v4480 = vld [vmem:[%s3 + $0x58] sm:$0xff]
    %v4481 = vld [vmem:[%s3 + $0x60] sm:$0xff]
    %v4482 = vld [vmem:[%s3 + $0x68] sm:$0xff]
    %v4483 = vld [vmem:[%s3 + $0x70] sm:$0xff]
    %v4484 = vld [vmem:[%s3 + $0x78] sm:$0xff]
    %vm4485 = vcmask 588800
    %v4487 = vsel %vm4485, %v4470, 0
    %v4490 = vsel %vm4485, %v4472, 0
    %v4493 = vsel %vm4485, %v4474, 0
    %v4496 = vsel %vm4485, %v4476, 0
    %v4499 = vsel %vm4485, %v4478, 0
    %v4502 = vsel %vm4485, %v4480, 0
    %v4505 = vsel %vm4485, %v4482, 0
    %v4508 = vsel %vm4485, %v4484, 0
    %4510 = vmatprep.subr.mxu0 0.0
    %4511 = vmatpush1.msra.mxu0 %v4444
    %4512 = vmatprep.subr.mxu0 0.0
    %4513 = vmatpush1.msra.mxu0 %v4445
    %4514 = vmatprep.subr.mxu0 0.0
    %4515 = vmatpush1.msra.mxu0 %v4446
    %4516 = vmatprep.subr.mxu0 0.0
    %4517 = vmatpush1.msra.mxu0 %v4447
    %4518 = vmatprep.subr.mxu0 0.0
    %4519 = vmatpush1.msra.mxu0 %v4448
    %4520 = vmatprep.subr.mxu0 0.0
    %4521 = vmatpush1.msra.mxu0 %v4449
    %4522 = vmatprep.subr.mxu0 0.0
    %4523 = vmatpush1.msra.mxu0 %v4450
    %4524 = vmatprep.subr.mxu0 0.0
    %4525 = vmatpush1.msra.mxu0 %v4451
    %4526 = vmatprep.subr.mxu0 0.0
    %4527 = vmatpush1.msra.mxu0 %v4452
    %4528 = vmatprep.subr.mxu0 0.0
    %4529 = vmatpush1.msra.mxu0 %v4453
    %4530 = vmatprep.subr.mxu0 0.0
    %4531 = vmatpush1.msra.mxu0 %v4454
    %4532 = vmatprep.subr.mxu0 0.0
    %4533 = vmatpush1.msra.mxu0 %v4455
    %4534 = vmatprep.subr.mxu0 0.0
    %4535 = vmatpush1.msra.mxu0 %v4456
    %4536 = vmatprep.subr.mxu0 0.0
    %4537 = vmatpush1.msra.mxu0 %v4457
    %4538 = vmatprep.subr.mxu0 0.0
    %4539 = vmatpush1.msra.mxu0 %v4458
    %4540 = vmatprep.subr.mxu0 0.0
    %4541 = vmatpush1.msra.mxu0 %v4459
    %4542 = vmatprep.subr.mxu0 0.0
    %4543 = vmatpush1.msra.mxu0 %v4460
    %4544 = vmatprep.subr.mxu0 0.0
    %4545 = vmatpush1.msra.mxu0 %v4461
    %4546 = vmatprep.subr.mxu0 0.0
    %4547 = vmatpush1.msra.mxu0 %v4462
    %4548 = vmatprep.subr.mxu0 0.0
    %4549 = vmatpush1.msra.mxu0 %v4463
    %4550 = vmatprep.subr.mxu0 0.0
    %4551 = vmatpush1.msra.mxu0 %v4464
    %4552 = vmatprep.subr.mxu0 0.0
    %4553 = vmatpush1.msra.mxu0 %v4465
    %4554 = vmatprep.subr.mxu0 0.0
    %4555 = vmatpush1.msra.mxu0 %v4466
    %4556 = vmatprep.subr.mxu0 0.0
    %4557 = vmatpush1.msra.mxu0 %v4467
    %4558 = vmatprep.subr.mxu0 0.0
    %4559 = vmatpush1.msra.mxu0 %v4468
    %4560 = vmatprep.subr.mxu0 0.0
    %4561 = vmatpush1.msra.mxu0 0.0
    %4562 = vmatprep.subr.mxu0 0.0
    %4563 = vmatpush1.msra.mxu0 0.0
    %4564 = vmatprep.subr.mxu0 0.0
    %4565 = vmatpush1.msra.mxu0 0.0
    %4566 = vmatprep.subr.mxu0 0.0
    %4567 = vmatpush1.msra.mxu0 0.0
    %4568 = vmatprep.subr.mxu0 0.0
    %4569 = vmatpush1.msra.mxu0 0.0
    %4570 = vmatprep.subr.mxu0 0.0
    %4571 = vmatpush1.msra.mxu0 0.0
    %4572 = vmatprep.subr.mxu0 0.0
    %4573 = vmatpush1.msra.mxu0 0.0
    %4574 = vmatprep.mubr.f32.mxu0 %v4487
    %4575 = vmatmul.mubr.f32.gmra.mrb[0].mxu0 %v4469
    %v4576 = vpop.f32.mrb[0].mxu0
    %v4577 = vadd.f32 0.0, %v4576
    %v4578 = vpop.f32.mrb[0].mxu0
    %4579 = vmatprep.mubr.f32.mxu0 %v4490
    %4580 = vmatmul.mubr.f32.gmra.mrb[0].mxu0 %v4471
    %v4581 = vpop.f32.mrb[0].mxu0
    %v4582 = vadd.f32 0.0, %v4581
    %v4583 = vpop.f32.mrb[0].mxu0
    %4584 = vmatprep.mubr.f32.mxu0 %v4493
    %4585 = vmatmul.mubr.f32.gmra.mrb[0].mxu0 %v4473
    %v4586 = vpop.f32.mrb[0].mxu0
    %v4587 = vadd.f32 0.0, %v4586
    %v4588 = vpop.f32.mrb[0].mxu0
    %4589 = vmatprep.mubr.f32.mxu0 %v4496
    %4590 = vmatmul.mubr.f32.gmra.mrb[0].mxu0 %v4475
    %v4591 = vpop.f32.mrb[0].mxu0
    %v4592 = vadd.f32 0.0, %v4591
    %v4593 = vpop.f32.mrb[0].mxu0
    %4594 = vmatprep.mubr.f32.mxu0 %v4499
    %4595 = vmatmul.mubr.f32.gmra.mrb[0].mxu0 %v4477
    %v4596 = vpop.f32.mrb[0].mxu0
    %v4597 = vadd.f32 0.0, %v4596
    %v4598 = vpop.f32.mrb[0].mxu0
    %4599 = vmatprep.mubr.f32.mxu0 %v4502
    %4600 = vmatmul.mubr.f32.gmra.mrb[0].mxu0 %v4479
    %v4601 = vpop.f32.mrb[0].mxu0
    %v4602 = vadd.f32 0.0, %v4601
    %v4603 = vpop.f32.mrb[0].mxu0
    %4604 = vmatprep.mubr.f32.mxu0 %v4505
    %4605 = vmatmul.mubr.f32.gmra.mrb[0].mxu0 %v4481
    %v4606 = vpop.f32.mrb[0].mxu0
    %v4607 = vadd.f32 0.0, %v4606
    %v4608 = vpop.f32.mrb[0].mxu0
    %4609 = vmatprep.mubr.f32.mxu0 %v4508
    %4610 = vmatmul.mubr.f32.gmra.mrb[0].mxu0 %v4483
    %v4611 = vpop.f32.mrb[0].mxu0
    %v4612 = vadd.f32 0.0, %v4611
    %v4613 = vpop.f32.mrb[0].mxu0
    %4614 = vdwg.mxu0
    %s4615 = scalar_lea.vmem %s3, 128
    %v4616 = vld [vmem:[%s4615] sm:$0xff]
    %v4617 = vld [vmem:[%s4615 + $0x8] sm:$0xff]
    %v4618 = vld [vmem:[%s4615 + $0x10] sm:$0xff]
    %v4619 = vld [vmem:[%s4615 + $0x18] sm:$0xff]
    %v4620 = vld [vmem:[%s4615 + $0x20] sm:$0xff]
    %v4621 = vld [vmem:[%s4615 + $0x28] sm:$0xff]
    %v4622 = vld [vmem:[%s4615 + $0x30] sm:$0xff]
    %v4623 = vld [vmem:[%s4615 + $0x38] sm:$0xff]
    %v4624 = vld [vmem:[%s4615 + $0x40] sm:$0xff]
    %v4625 = vld [vmem:[%s4615 + $0x48] sm:$0xff]
    %v4626 = vld [vmem:[%s4615 + $0x50] sm:$0xff]
    %v4627 = vld [vmem:[%s4615 + $0x58] sm:$0xff]
    %v4628 = vld [vmem:[%s4615 + $0x60] sm:$0xff]
    %v4629 = vld [vmem:[%s4615 + $0x68] sm:$0xff]
    %v4630 = vld [vmem:[%s4615 + $0x70] sm:$0xff]
    %v4631 = vld [vmem:[%s4615 + $0x78] sm:$0xff]
    %v4633 = vsel %vm4485, %v4617, 0
    %v4636 = vsel %vm4485, %v4619, 0
    %v4639 = vsel %vm4485, %v4621, 0
    %v4642 = vsel %vm4485, %v4623, 0
    %v4645 = vsel %vm4485, %v4625, 0
    %v4648 = vsel %vm4485, %v4627, 0
    %v4651 = vsel %vm4485, %v4629, 0
    %v4654 = vsel %vm4485, %v4631, 0
    %4656 = vmatprep.subr.mxu0 0.0
    %4657 = vmatpush1.msra.mxu0 %v4444
    %4658 = vmatprep.subr.mxu0 0.0
    %4659 = vmatpush1.msra.mxu0 %v4445
    %4660 = vmatprep.subr.mxu0 0.0
    %4661 = vmatpush1.msra.mxu0 %v4446
    %4662 = vmatprep.subr.mxu0 0.0
    %4663 = vmatpush1.msra.mxu0 %v4447
    %4664 = vmatprep.subr.mxu0 0.0
    %4665 = vmatpush1.msra.mxu0 %v4448
    %4666 = vmatprep.subr.mxu0 0.0
    %4667 = vmatpush1.msra.mxu0 %v4449
    %4668 = vmatprep.subr.mxu0 0.0
    %4669 = vmatpush1.msra.mxu0 %v4450
    %4670 = vmatprep.subr.mxu0 0.0
    %4671 = vmatpush1.msra.mxu0 %v4451
    %4672 = vmatprep.subr.mxu0 0.0
    %4673 = vmatpush1.msra.mxu0 %v4452
    %4674 = vmatprep.subr.mxu0 0.0
    %4675 = vmatpush1.msra.mxu0 %v4453
    %4676 = vmatprep.subr.mxu0 0.0
    %4677 = vmatpush1.msra.mxu0 %v4454
    %4678 = vmatprep.subr.mxu0 0.0
    %4679 = vmatpush1.msra.mxu0 %v4455
    %4680 = vmatprep.subr.mxu0 0.0
    %4681 = vmatpush1.msra.mxu0 %v4456
    %4682 = vmatprep.subr.mxu0 0.0
    %4683 = vmatpush1.msra.mxu0 %v4457
    %4684 = vmatprep.subr.mxu0 0.0
    %4685 = vmatpush1.msra.mxu0 %v4458
    %4686 = vmatprep.subr.mxu0 0.0
    %4687 = vmatpush1.msra.mxu0 %v4459
    %4688 = vmatprep.subr.mxu0 0.0
    %4689 = vmatpush1.msra.mxu0 %v4460
    %4690 = vmatprep.subr.mxu0 0.0
    %4691 = vmatpush1.msra.mxu0 %v4461
    %4692 = vmatprep.subr.mxu0 0.0
    %4693 = vmatpush1.msra.mxu0 %v4462
    %4694 = vmatprep.subr.mxu0 0.0
    %4695 = vmatpush1.msra.mxu0 %v4463
    %4696 = vmatprep.subr.mxu0 0.0
    %4697 = vmatpush1.msra.mxu0 %v4464
    %4698 = vmatprep.subr.mxu0 0.0
    %4699 = vmatpush1.msra.mxu0 %v4465
    %4700 = vmatprep.subr.mxu0 0.0
    %4701 = vmatpush1.msra.mxu0 %v4466
    %4702 = vmatprep.subr.mxu0 0.0
    %4703 = vmatpush1.msra.mxu0 %v4467
    %4704 = vmatprep.subr.mxu0 0.0
    %4705 = vmatpush1.msra.mxu0 %v4468
    %4706 = vmatprep.subr.mxu0 0.0
    %4707 = vmatpush1.msra.mxu0 0.0
    %4708 = vmatprep.subr.mxu0 0.0
    %4709 = vmatpush1.msra.mxu0 0.0
    %4710 = vmatprep.subr.mxu0 0.0
    %4711 = vmatpush1.msra.mxu0 0.0
    %4712 = vmatprep.subr.mxu0 0.0
    %4713 = vmatpush1.msra.mxu0 0.0
    %4714 = vmatprep.subr.mxu0 0.0
    %4715 = vmatpush1.msra.mxu0 0.0
    %4716 = vmatprep.subr.mxu0 0.0
    %4717 = vmatpush1.msra.mxu0 0.0
    %4718 = vmatprep.subr.mxu0 0.0
    %4719 = vmatpush1.msra.mxu0 0.0
    %4720 = vmatprep.mubr.f32.mxu0 %v4633
    %4721 = vmatmul.mubr.f32.gmra.mrb[0].mxu0 %v4616
    %v4722 = vpop.f32.mrb[0].mxu0
    %v4723 = vadd.f32 0.0, %v4722
    %v4724 = vpop.f32.mrb[0].mxu0
    %4725 = vmatprep.mubr.f32.mxu0 %v4636
    %4726 = vmatmul.mubr.f32.gmra.mrb[0].mxu0 %v4618
    %v4727 = vpop.f32.mrb[0].mxu0
    %v4728 = vadd.f32 0.0, %v4727
    %v4729 = vpop.f32.mrb[0].mxu0
    %4730 = vmatprep.mubr.f32.mxu0 %v4639
    %4731 = vmatmul.mubr.f32.gmra.mrb[0].mxu0 %v4620
    %v4732 = vpop.f32.mrb[0].mxu0
    %v4733 = vadd.f32 0.0, %v4732
    %v4734 = vpop.f32.mrb[0].mxu0
    %4735 = vmatprep.mubr.f32.mxu0 %v4642
    %4736 = vmatmul.mubr.f32.gmra.mrb[0].mxu0 %v4622
    %v4737 = vpop.f32.mrb[0].mxu0
    %v4738 = vadd.f32 0.0, %v4737
    %v4739 = vpop.f32.mrb[0].mxu0
    %4740 = vmatprep.mubr.f32.mxu0 %v4645
    %4741 = vmatmul.mubr.f32.gmra.mrb[0].mxu0 %v4624
    %v4742 = vpop.f32.mrb[0].mxu0
    %v4743 = vadd.f32 0.0, %v4742
    %v4744 = vpop.f32.mrb[0].mxu0
    %4745 = vmatprep.mubr.f32.mxu0 %v4648
    %4746 = vmatmul.mubr.f32.gmra.mrb[0].mxu0 %v4626
    %v4747 = vpop.f32.mrb[0].mxu0
    %v4748 = vadd.f32 0.0, %v4747
    %v4749 = vpop.f32.mrb[0].mxu0
    %4750 = vmatprep.mubr.f32.mxu0 %v4651
    %4751 = vmatmul.mubr.f32.gmra.mrb[0].mxu0 %v4628
    %v4752 = vpop.f32.mrb[0].mxu0
    %v4753 = vadd.f32 0.0, %v4752
    %v4754 = vpop.f32.mrb[0].mxu0
    %4755 = vmatprep.mubr.f32.mxu0 %v4654
    %4756 = vmatmul.mubr.f32.gmra.mrb[0].mxu0 %v4630
    %v4757 = vpop.f32.mrb[0].mxu0
    %v4758 = vadd.f32 0.0, %v4757
    %v4759 = vpop.f32.mrb[0].mxu0
    %4760 = vdwg.mxu0
    %v4761 = vmax.f32 %v4577, %v4723
    %v4762 = vmax.f32 %v4582, %v4728
    %v4763 = vmax.f32 %v4587, %v4733
    %v4764 = vmax.f32 %v4592, %v4738
    %v4765 = vmax.f32 %v4597, %v4743
    %v4766 = vmax.f32 %v4602, %v4748
    %v4767 = vmax.f32 %v4607, %v4753
    %v4768 = vmax.f32 %v4612, %v4758
    %s4769 = scalar_lea.vmem %s3, 256
    %v4770 = vld [vmem:[%s4769] sm:$0xff]
    %v4771 = vld [vmem:[%s4769 + $0x8] sm:$0xff]
    %v4772 = vld [vmem:[%s4769 + $0x10] sm:$0xff]
    %v4773 = vld [vmem:[%s4769 + $0x18] sm:$0xff]
    %v4774 = vld [vmem:[%s4769 + $0x20] sm:$0xff]
    %v4775 = vld [vmem:[%s4769 + $0x28] sm:$0xff]
    %v4776 = vld [vmem:[%s4769 + $0x30] sm:$0xff]
    %v4777 = vld [vmem:[%s4769 + $0x38] sm:$0xff]
    %v4778 = vld [vmem:[%s4769 + $0x40] sm:$0xff]
    %v4779 = vld [vmem:[%s4769 + $0x48] sm:$0xff]
    %v4780 = vld [vmem:[%s4769 + $0x50] sm:$0xff]
    %v4781 = vld [vmem:[%s4769 + $0x58] sm:$0xff]
    %v4782 = vld [vmem:[%s4769 + $0x60] sm:$0xff]
    %v4783 = vld [vmem:[%s4769 + $0x68] sm:$0xff]
    %v4784 = vld [vmem:[%s4769 + $0x70] sm:$0xff]
    %v4785 = vld [vmem:[%s4769 + $0x78] sm:$0xff]
    %v4787 = vsel %vm4485, %v4771, 0
    %v4790 = vsel %vm4485, %v4773, 0
    %v4793 = vsel %vm4485, %v4775, 0
    %v4796 = vsel %vm4485, %v4777, 0
    %v4799 = vsel %vm4485, %v4779, 0
    %v4802 = vsel %vm4485, %v4781, 0
    %v4805 = vsel %vm4485, %v4783, 0
    %v4808 = vsel %vm4485, %v4785, 0
    %4810 = vmatprep.subr.mxu0 0.0
    %4811 = vmatpush1.msra.mxu0 %v4444
    %4812 = vmatprep.subr.mxu0 0.0
    %4813 = vmatpush1.msra.mxu0 %v4445
    %4814 = vmatprep.subr.mxu0 0.0
    %4815 = vmatpush1.msra.mxu0 %v4446
    %4816 = vmatprep.subr.mxu0 0.0
    %4817 = vmatpush1.msra.mxu0 %v4447
    %4818 = vmatprep.subr.mxu0 0.0
    %4819 = vmatpush1.msra.mxu0 %v4448
    %4820 = vmatprep.subr.mxu0 0.0
    %4821 = vmatpush1.msra.mxu0 %v4449
    %4822 = vmatprep.subr.mxu0 0.0
    %4823 = vmatpush1.msra.mxu0 %v4450
    %4824 = vmatprep.subr.mxu0 0.0
    %4825 = vmatpush1.msra.mxu0 %v4451
    %4826 = vmatprep.subr.mxu0 0.0
    %4827 = vmatpush1.msra.mxu0 %v4452
    %4828 = vmatprep.subr.mxu0 0.0
    %4829 = vmatpush1.msra.mxu0 %v4453
    %4830 = vmatprep.subr.mxu0 0.0
    %4831 = vmatpush1.msra.mxu0 %v4454
    %4832 = vmatprep.subr.mxu0 0.0
    %4833 = vmatpush1.msra.mxu0 %v4455
    %4834 = vmatprep.subr.mxu0 0.0
    %4835 = vmatpush1.msra.mxu0 %v4456
    %4836 = vmatprep.subr.mxu0 0.0
    %4837 = vmatpush1.msra.mxu0 %v4457
    %4838 = vmatprep.subr.mxu0 0.0
    %4839 = vmatpush1.msra.mxu0 %v4458
    %4840 = vmatprep.subr.mxu0 0.0
    %4841 = vmatpush1.msra.mxu0 %v4459
    %4842 = vmatprep.subr.mxu0 0.0
    %4843 = vmatpush1.msra.mxu0 %v4460
    %4844 = vmatprep.subr.mxu0 0.0
    %4845 = vmatpush1.msra.mxu0 %v4461
    %4846 = vmatprep.subr.mxu0 0.0
    %4847 = vmatpush1.msra.mxu0 %v4462
    %4848 = vmatprep.subr.mxu0 0.0
    %4849 = vmatpush1.msra.mxu0 %v4463
    %4850 = vmatprep.subr.mxu0 0.0
    %4851 = vmatpush1.msra.mxu0 %v4464
    %4852 = vmatprep.subr.mxu0 0.0
    %4853 = vmatpush1.msra.mxu0 %v4465
    %4854 = vmatprep.subr.mxu0 0.0
    %4855 = vmatpush1.msra.mxu0 %v4466
    %4856 = vmatprep.subr.mxu0 0.0
    %4857 = vmatpush1.msra.mxu0 %v4467
    %4858 = vmatprep.subr.mxu0 0.0
    %4859 = vmatpush1.msra.mxu0 %v4468
    %4860 = vmatprep.subr.mxu0 0.0
    %4861 = vmatpush1.msra.mxu0 0.0
    %4862 = vmatprep.subr.mxu0 0.0
    %4863 = vmatpush1.msra.mxu0 0.0
    %4864 = vmatprep.subr.mxu0 0.0
    %4865 = vmatpush1.msra.mxu0 0.0
    %4866 = vmatprep.subr.mxu0 0.0
    %4867 = vmatpush1.msra.mxu0 0.0
    %4868 = vmatprep.subr.mxu0 0.0
    %4869 = vmatpush1.msra.mxu0 0.0
    %4870 = vmatprep.subr.mxu0 0.0
    %4871 = vmatpush1.msra.mxu0 0.0
    %4872 = vmatprep.subr.mxu0 0.0
    %4873 = vmatpush1.msra.mxu0 0.0
    %4874 = vmatprep.mubr.f32.mxu0 %v4787
    %4875 = vmatmul.mubr.f32.gmra.mrb[0].mxu0 %v4770
    %v4876 = vpop.f32.mrb[0].mxu0
    %v4877 = vadd.f32 0.0, %v4876
    %v4878 = vpop.f32.mrb[0].mxu0
    %4879 = vmatprep.mubr.f32.mxu0 %v4790
    %4880 = vmatmul.mubr.f32.gmra.mrb[0].mxu0 %v4772
    %v4881 = vpop.f32.mrb[0].mxu0
    %v4882 = vadd.f32 0.0, %v4881
    %v4883 = vpop.f32.mrb[0].mxu0
    %4884 = vmatprep.mubr.f32.mxu0 %v4793
    %4885 = vmatmul.mubr.f32.gmra.mrb[0].mxu0 %v4774
    %v4886 = vpop.f32.mrb[0].mxu0
    %v4887 = vadd.f32 0.0, %v4886
    %v4888 = vpop.f32.mrb[0].mxu0
    %4889 = vmatprep.mubr.f32.mxu0 %v4796
    %4890 = vmatmul.mubr.f32.gmra.mrb[0].mxu0 %v4776
    %v4891 = vpop.f32.mrb[0].mxu0
    %v4892 = vadd.f32 0.0, %v4891
    %v4893 = vpop.f32.mrb[0].mxu0
    %4894 = vmatprep.mubr.f32.mxu0 %v4799
    %4895 = vmatmul.mubr.f32.gmra.mrb[0].mxu0 %v4778
    %v4896 = vpop.f32.mrb[0].mxu0
    %v4897 = vadd.f32 0.0, %v4896
    %v4898 = vpop.f32.mrb[0].mxu0
    %4899 = vmatprep.mubr.f32.mxu0 %v4802
    %4900 = vmatmul.mubr.f32.gmra.mrb[0].mxu0 %v4780
    %v4901 = vpop.f32.mrb[0].mxu0
    %v4902 = vadd.f32 0.0, %v4901
    %v4903 = vpop.f32.mrb[0].mxu0
    %4904 = vmatprep.mubr.f32.mxu0 %v4805
    %4905 = vmatmul.mubr.f32.gmra.mrb[0].mxu0 %v4782
    %v4906 = vpop.f32.mrb[0].mxu0
    %v4907 = vadd.f32 0.0, %v4906
    %v4908 = vpop.f32.mrb[0].mxu0
    %4909 = vmatprep.mubr.f32.mxu0 %v4808
    %4910 = vmatmul.mubr.f32.gmra.mrb[0].mxu0 %v4784
    %v4911 = vpop.f32.mrb[0].mxu0
    %v4912 = vadd.f32 0.0, %v4911
    %v4913 = vpop.f32.mrb[0].mxu0
    %4914 = vdwg.mxu0
    %v4915 = vmax.f32 %v4761, %v4877
    %v4916 = vmax.f32 %v4762, %v4882
    %v4917 = vmax.f32 %v4763, %v4887
    %v4918 = vmax.f32 %v4764, %v4892
    %v4919 = vmax.f32 %v4765, %v4897
    %v4920 = vmax.f32 %v4766, %v4902
    %v4921 = vmax.f32 %v4767, %v4907
    %v4922 = vmax.f32 %v4768, %v4912
    %s4923 = scalar_lea.vmem %s3, 384
    %v4924 = vld [vmem:[%s4923] sm:$0xff]
    %v4925 = vld [vmem:[%s4923 + $0x8] sm:$0xff]
    %v4926 = vld [vmem:[%s4923 + $0x10] sm:$0xff]
    %v4927 = vld [vmem:[%s4923 + $0x18] sm:$0xff]
    %v4928 = vld [vmem:[%s4923 + $0x20] sm:$0xff]
    %v4929 = vld [vmem:[%s4923 + $0x28] sm:$0xff]
    %v4930 = vld [vmem:[%s4923 + $0x30] sm:$0xff]
    %v4931 = vld [vmem:[%s4923 + $0x38] sm:$0xff]
    %v4932 = vld [vmem:[%s4923 + $0x40] sm:$0xff]
    %v4933 = vld [vmem:[%s4923 + $0x48] sm:$0xff]
    %v4934 = vld [vmem:[%s4923 + $0x50] sm:$0xff]
    %v4935 = vld [vmem:[%s4923 + $0x58] sm:$0xff]
    %v4936 = vld [vmem:[%s4923 + $0x60] sm:$0xff]
    %v4937 = vld [vmem:[%s4923 + $0x68] sm:$0xff]
    %v4938 = vld [vmem:[%s4923 + $0x70] sm:$0xff]
    %v4939 = vld [vmem:[%s4923 + $0x78] sm:$0xff]
    %v4941 = vsel %vm4485, %v4925, 0
    %v4944 = vsel %vm4485, %v4927, 0
    %v4947 = vsel %vm4485, %v4929, 0
    %v4950 = vsel %vm4485, %v4931, 0
    %v4953 = vsel %vm4485, %v4933, 0
    %v4956 = vsel %vm4485, %v4935, 0
    %v4959 = vsel %vm4485, %v4937, 0
    %v4962 = vsel %vm4485, %v4939, 0
    %4964 = vmatprep.subr.mxu0 0.0
    %4965 = vmatpush1.msra.mxu0 %v4444
    %4966 = vmatprep.subr.mxu0 0.0
    %4967 = vmatpush1.msra.mxu0 %v4445
    %4968 = vmatprep.subr.mxu0 0.0
    %4969 = vmatpush1.msra.mxu0 %v4446
    %4970 = vmatprep.subr.mxu0 0.0
    %4971 = vmatpush1.msra.mxu0 %v4447
    %4972 = vmatprep.subr.mxu0 0.0
    %4973 = vmatpush1.msra.mxu0 %v4448
    %4974 = vmatprep.subr.mxu0 0.0
    %4975 = vmatpush1.msra.mxu0 %v4449
    %4976 = vmatprep.subr.mxu0 0.0
    %4977 = vmatpush1.msra.mxu0 %v4450
    %4978 = vmatprep.subr.mxu0 0.0
    %4979 = vmatpush1.msra.mxu0 %v4451
    %4980 = vmatprep.subr.mxu0 0.0
    %4981 = vmatpush1.msra.mxu0 %v4452
    %4982 = vmatprep.subr.mxu0 0.0
    %4983 = vmatpush1.msra.mxu0 %v4453
    %4984 = vmatprep.subr.mxu0 0.0
    %4985 = vmatpush1.msra.mxu0 %v4454
    %4986 = vmatprep.subr.mxu0 0.0
    %4987 = vmatpush1.msra.mxu0 %v4455
    %4988 = vmatprep.subr.mxu0 0.0
    %4989 = vmatpush1.msra.mxu0 %v4456
    %4990 = vmatprep.subr.mxu0 0.0
    %4991 = vmatpush1.msra.mxu0 %v4457
    %4992 = vmatprep.subr.mxu0 0.0
    %4993 = vmatpush1.msra.mxu0 %v4458
    %4994 = vmatprep.subr.mxu0 0.0
    %4995 = vmatpush1.msra.mxu0 %v4459
    %4996 = vmatprep.subr.mxu0 0.0
    %4997 = vmatpush1.msra.mxu0 %v4460
    %4998 = vmatprep.subr.mxu0 0.0
    %4999 = vmatpush1.msra.mxu0 %v4461
    %5000 = vmatprep.subr.mxu0 0.0
    %5001 = vmatpush1.msra.mxu0 %v4462
    %5002 = vmatprep.subr.mxu0 0.0
    %5003 = vmatpush1.msra.mxu0 %v4463
    %5004 = vmatprep.subr.mxu0 0.0
    %5005 = vmatpush1.msra.mxu0 %v4464
    %5006 = vmatprep.subr.mxu0 0.0
    %5007 = vmatpush1.msra.mxu0 %v4465
    %5008 = vmatprep.subr.mxu0 0.0
    %5009 = vmatpush1.msra.mxu0 %v4466
    %5010 = vmatprep.subr.mxu0 0.0
    %5011 = vmatpush1.msra.mxu0 %v4467
    %5012 = vmatprep.subr.mxu0 0.0
    %5013 = vmatpush1.msra.mxu0 %v4468
    %5014 = vmatprep.subr.mxu0 0.0
    %5015 = vmatpush1.msra.mxu0 0.0
    %5016 = vmatprep.subr.mxu0 0.0
    %5017 = vmatpush1.msra.mxu0 0.0
    %5018 = vmatprep.subr.mxu0 0.0
    %5019 = vmatpush1.msra.mxu0 0.0
    %5020 = vmatprep.subr.mxu0 0.0
    %5021 = vmatpush1.msra.mxu0 0.0
    %5022 = vmatprep.subr.mxu0 0.0
    %5023 = vmatpush1.msra.mxu0 0.0
    %5024 = vmatprep.subr.mxu0 0.0
    %5025 = vmatpush1.msra.mxu0 0.0
    %5026 = vmatprep.subr.mxu0 0.0
    %5027 = vmatpush1.msra.mxu0 0.0
    %5028 = vmatprep.mubr.f32.mxu0 %v4941
    %5029 = vmatmul.mubr.f32.gmra.mrb[0].mxu0 %v4924
    %v5030 = vpop.f32.mrb[0].mxu0
    %v5031 = vadd.f32 0.0, %v5030
    %v5032 = vpop.f32.mrb[0].mxu0
    %5033 = vmatprep.mubr.f32.mxu0 %v4944
    %5034 = vmatmul.mubr.f32.gmra.mrb[0].mxu0 %v4926
    %v5035 = vpop.f32.mrb[0].mxu0
    %v5036 = vadd.f32 0.0, %v5035
    %v5037 = vpop.f32.mrb[0].mxu0
    %5038 = vmatprep.mubr.f32.mxu0 %v4947
    %5039 = vmatmul.mubr.f32.gmra.mrb[0].mxu0 %v4928
    %v5040 = vpop.f32.mrb[0].mxu0
    %v5041 = vadd.f32 0.0, %v5040
    %v5042 = vpop.f32.mrb[0].mxu0
    %5043 = vmatprep.mubr.f32.mxu0 %v4950
    %5044 = vmatmul.mubr.f32.gmra.mrb[0].mxu0 %v4930
    %v5045 = vpop.f32.mrb[0].mxu0
    %v5046 = vadd.f32 0.0, %v5045
    %v5047 = vpop.f32.mrb[0].mxu0
    %5048 = vmatprep.mubr.f32.mxu0 %v4953
    %5049 = vmatmul.mubr.f32.gmra.mrb[0].mxu0 %v4932
    %v5050 = vpop.f32.mrb[0].mxu0
    %v5051 = vadd.f32 0.0, %v5050
    %v5052 = vpop.f32.mrb[0].mxu0
    %5053 = vmatprep.mubr.f32.mxu0 %v4956
    %5054 = vmatmul.mubr.f32.gmra.mrb[0].mxu0 %v4934
    %v5055 = vpop.f32.mrb[0].mxu0
    %v5056 = vadd.f32 0.0, %v5055
    %v5057 = vpop.f32.mrb[0].mxu0
    %5058 = vmatprep.mubr.f32.mxu0 %v4959
    %5059 = vmatmul.mubr.f32.gmra.mrb[0].mxu0 %v4936
    %v5060 = vpop.f32.mrb[0].mxu0
    %v5061 = vadd.f32 0.0, %v5060
    %v5062 = vpop.f32.mrb[0].mxu0
    %5063 = vmatprep.mubr.f32.mxu0 %v4962
    %5064 = vmatmul.mubr.f32.gmra.mrb[0].mxu0 %v4938
    %v5065 = vpop.f32.mrb[0].mxu0
    %v5066 = vadd.f32 0.0, %v5065
    %v5067 = vpop.f32.mrb[0].mxu0
    %5068 = vdwg.mxu0
    %v5069 = vmax.f32 %v4915, %v5031
    %v5070 = vmax.f32 %v4916, %v5036
    %v5071 = vmax.f32 %v4917, %v5041
    %v5072 = vmax.f32 %v4918, %v5046
    %v5073 = vmax.f32 %v4919, %v5051
    %v5074 = vmax.f32 %v4920, %v5056
    %v5075 = vmax.f32 %v4921, %v5061
    %v5076 = vmax.f32 %v4922, %v5066
    %v5077 = vld [vmem:[%s4] sm:$0xff]
    %v5078 = vld [vmem:[%s4 + $0x8] sm:$0xff]
    %v5079 = vld [vmem:[%s4 + $0x10] sm:$0xff]
    %v5080 = vld [vmem:[%s4 + $0x18] sm:$0xff]
    %v5081 = vld [vmem:[%s4 + $0x20] sm:$0xff]
    %v5082 = vld [vmem:[%s4 + $0x28] sm:$0xff]
    %v5083 = vld [vmem:[%s4 + $0x30] sm:$0xff]
    %v5084 = vld [vmem:[%s4 + $0x38] sm:$0xff]
    %5086 = vset.pattern.permute.xlu0 0
    %5087 = vperm.xlu0 %5086, %v5077
    %v5088 = vpop.permute.xlu0 %5087
    %5091 = vset.pattern.permute.xlu0 0
    %5092 = vperm.xlu0 %5091, %v5078
    %v5093 = vpop.permute.xlu0 %5092
    %5096 = vset.pattern.permute.xlu0 0
    %5097 = vperm.xlu0 %5096, %v5079
    %v5098 = vpop.permute.xlu0 %5097
    %5101 = vset.pattern.permute.xlu0 0
    %5102 = vperm.xlu0 %5101, %v5080
    %v5103 = vpop.permute.xlu0 %5102
    %5106 = vset.pattern.permute.xlu0 0
    %5107 = vperm.xlu0 %5106, %v5081
    %v5108 = vpop.permute.xlu0 %5107
    %5111 = vset.pattern.permute.xlu0 0
    %5112 = vperm.xlu0 %5111, %v5082
    %v5113 = vpop.permute.xlu0 %5112
    %5116 = vset.pattern.permute.xlu0 0
    %5117 = vperm.xlu0 %5116, %v5083
    %v5118 = vpop.permute.xlu0 %5117
    %5121 = vset.pattern.permute.xlu0 0
    %5122 = vperm.xlu0 %5121, %v5084
    %v5123 = vpop.permute.xlu0 %5122
    %v5125 = vadd.f32 %v5069, %v5088
    %v5126 = vadd.f32 %v5070, %v5093
    %v5127 = vadd.f32 %v5071, %v5098
    %v5128 = vadd.f32 %v5072, %v5103
    %v5129 = vadd.f32 %v5073, %v5108
    %v5130 = vadd.f32 %v5074, %v5113
    %v5131 = vadd.f32 %v5075, %v5118
    %v5132 = vadd.f32 %v5076, %v5123
    %v5133 = vmax.f32 %v5125, 0.0
    %v5134 = vmax.f32 %v5126, 0.0
    %v5135 = vmax.f32 %v5127, 0.0
    %v5136 = vmax.f32 %v5128, 0.0
    %v5137 = vmax.f32 %v5129, 0.0
    %v5138 = vmax.f32 %v5130, 0.0
    %v5139 = vmax.f32 %v5131, 0.0
    %v5140 = vmax.f32 %v5132, 0.0
    %v5141 = vld [vmem:[%s5] sm:$0xff]
    %v5142 = vld [vmem:[%s5 + $0x8] sm:$0xff]
    %v5143 = vld [vmem:[%s5 + $0x10] sm:$0xff]
    %v5144 = vld [vmem:[%s5 + $0x18] sm:$0xff]
    %v5145 = vld [vmem:[%s5 + $0x20] sm:$0xff]
    %v5146 = vld [vmem:[%s5 + $0x28] sm:$0xff]
    %v5147 = vld [vmem:[%s5 + $0x30] sm:$0xff]
    %v5148 = vld [vmem:[%s5 + $0x38] sm:$0xff]
    %v5149 = vld [vmem:[%s5 + $0x40] sm:$0xff]
    %v5150 = vld [vmem:[%s5 + $0x48] sm:$0xff]
    %v5151 = vld [vmem:[%s5 + $0x50] sm:$0xff]
    %v5152 = vld [vmem:[%s5 + $0x58] sm:$0xff]
    %v5153 = vld [vmem:[%s5 + $0x60] sm:$0xff]
    %v5154 = vld [vmem:[%s5 + $0x68] sm:$0xff]
    %v5155 = vld [vmem:[%s5 + $0x70] sm:$0xff]
    %v5156 = vld [vmem:[%s5 + $0x78] sm:$0xff]
    %v5157 = vld [vmem:[%s5 + $0x80] sm:$0xff]
    %v5158 = vld [vmem:[%s5 + $0x88] sm:$0xff]
    %v5159 = vld [vmem:[%s5 + $0x90] sm:$0xff]
    %v5160 = vld [vmem:[%s5 + $0x98] sm:$0xff]
    %v5161 = vld [vmem:[%s5 + $0xa0] sm:$0xff]
    %v5162 = vld [vmem:[%s5 + $0xa8] sm:$0xff]
    %v5163 = vld [vmem:[%s5 + $0xb0] sm:$0xff]
    %v5164 = vld [vmem:[%s5 + $0xb8] sm:$0xff]
    %v5165 = vld [vmem:[%s5 + $0xc0] sm:$0xff]
    %v5166 = vld [vmem:[%s6] sm:$0xff]
    %v5167 = vld [vmem:[%s6 + $0x8] sm:$0xff]
    %v5168 = vld [vmem:[%s6 + $0x10] sm:$0xff]
    %v5169 = vld [vmem:[%s6 + $0x18] sm:$0xff]
    %v5170 = vld [vmem:[%s6 + $0x20] sm:$0xff]
    %v5171 = vld [vmem:[%s6 + $0x28] sm:$0xff]
    %v5172 = vld [vmem:[%s6 + $0x30] sm:$0xff]
    %v5173 = vld [vmem:[%s6 + $0x38] sm:$0xff]
    %v5174 = vld [vmem:[%s6 + $0x40] sm:$0xff]
    %v5175 = vld [vmem:[%s6 + $0x48] sm:$0xff]
    %v5176 = vld [vmem:[%s6 + $0x50] sm:$0xff]
    %v5177 = vld [vmem:[%s6 + $0x58] sm:$0xff]
    %v5178 = vld [vmem:[%s6 + $0x60] sm:$0xff]
    %v5179 = vld [vmem:[%s6 + $0x68] sm:$0xff]
    %v5180 = vld [vmem:[%s6 + $0x70] sm:$0xff]
    %v5181 = vld [vmem:[%s6 + $0x78] sm:$0xff]
    %v5182 = vld [vmem:[%s6 + $0x80] sm:$0xff]
    %v5183 = vld [vmem:[%s6 + $0x88] sm:$0xff]
    %v5184 = vld [vmem:[%s6 + $0x90] sm:$0xff]
    %v5185 = vld [vmem:[%s6 + $0x98] sm:$0xff]
    %v5186 = vld [vmem:[%s6 + $0xa0] sm:$0xff]
    %v5187 = vld [vmem:[%s6 + $0xa8] sm:$0xff]
    %v5188 = vld [vmem:[%s6 + $0xb0] sm:$0xff]
    %v5189 = vld [vmem:[%s6 + $0xb8] sm:$0xff]
    %v5190 = vld [vmem:[%s6 + $0xc0] sm:$0xff]
    %5192 = vset.pattern.permute.xlu0 0
    %5193 = vperm.xlu0 %5192, %v5166
    %v5194 = vpop.permute.xlu0 %5193
    %5197 = vset.pattern.permute.xlu0 0
    %5198 = vperm.xlu0 %5197, %v5167
    %v5199 = vpop.permute.xlu0 %5198
    %5202 = vset.pattern.permute.xlu0 0
    %5203 = vperm.xlu0 %5202, %v5168
    %v5204 = vpop.permute.xlu0 %5203
    %5207 = vset.pattern.permute.xlu0 0
    %5208 = vperm.xlu0 %5207, %v5169
    %v5209 = vpop.permute.xlu0 %5208
    %5212 = vset.pattern.permute.xlu0 0
    %5213 = vperm.xlu0 %5212, %v5170
    %v5214 = vpop.permute.xlu0 %5213
    %5217 = vset.pattern.permute.xlu0 0
    %5218 = vperm.xlu0 %5217, %v5171
    %v5219 = vpop.permute.xlu0 %5218
    %5222 = vset.pattern.permute.xlu0 0
    %5223 = vperm.xlu0 %5222, %v5172
    %v5224 = vpop.permute.xlu0 %5223
    %5227 = vset.pattern.permute.xlu0 0
    %5228 = vperm.xlu0 %5227, %v5173
    %v5229 = vpop.permute.xlu0 %5228
    %5232 = vset.pattern.permute.xlu0 0
    %5233 = vperm.xlu0 %5232, %v5174
    %v5234 = vpop.permute.xlu0 %5233
    %5237 = vset.pattern.permute.xlu0 0
    %5238 = vperm.xlu0 %5237, %v5175
    %v5239 = vpop.permute.xlu0 %5238
    %5242 = vset.pattern.permute.xlu0 0
    %5243 = vperm.xlu0 %5242, %v5176
    %v5244 = vpop.permute.xlu0 %5243
    %5247 = vset.pattern.permute.xlu0 0
    %5248 = vperm.xlu0 %5247, %v5177
    %v5249 = vpop.permute.xlu0 %5248
    %5252 = vset.pattern.permute.xlu0 0
    %5253 = vperm.xlu0 %5252, %v5178
    %v5254 = vpop.permute.xlu0 %5253
    %5257 = vset.pattern.permute.xlu0 0
    %5258 = vperm.xlu0 %5257, %v5179
    %v5259 = vpop.permute.xlu0 %5258
    %5262 = vset.pattern.permute.xlu0 0
    %5263 = vperm.xlu0 %5262, %v5180
    %v5264 = vpop.permute.xlu0 %5263
    %5267 = vset.pattern.permute.xlu0 0
    %5268 = vperm.xlu0 %5267, %v5181
    %v5269 = vpop.permute.xlu0 %5268
    %5272 = vset.pattern.permute.xlu0 0
    %5273 = vperm.xlu0 %5272, %v5182
    %v5274 = vpop.permute.xlu0 %5273
    %5277 = vset.pattern.permute.xlu0 0
    %5278 = vperm.xlu0 %5277, %v5183
    %v5279 = vpop.permute.xlu0 %5278
    %5282 = vset.pattern.permute.xlu0 0
    %5283 = vperm.xlu0 %5282, %v5184
    %v5284 = vpop.permute.xlu0 %5283
    %5287 = vset.pattern.permute.xlu0 0
    %5288 = vperm.xlu0 %5287, %v5185
    %v5289 = vpop.permute.xlu0 %5288
    %5292 = vset.pattern.permute.xlu0 0
    %5293 = vperm.xlu0 %5292, %v5186
    %v5294 = vpop.permute.xlu0 %5293
    %5297 = vset.pattern.permute.xlu0 0
    %5298 = vperm.xlu0 %5297, %v5187
    %v5299 = vpop.permute.xlu0 %5298
    %5302 = vset.pattern.permute.xlu0 0
    %5303 = vperm.xlu0 %5302, %v5188
    %v5304 = vpop.permute.xlu0 %5303
    %5307 = vset.pattern.permute.xlu0 0
    %5308 = vperm.xlu0 %5307, %v5189
    %v5309 = vpop.permute.xlu0 %5308
    %5312 = vset.pattern.permute.xlu0 0
    %5313 = vperm.xlu0 %5312, %v5190
    %v5314 = vpop.permute.xlu0 %5313
    %vm5316 = vcmask 523264
    %v5318 = vsel %vm5316, %v5141, 0
    %v5321 = vsel %vm5316, %v5142, 0
    %v5324 = vsel %vm5316, %v5143, 0
    %v5327 = vsel %vm5316, %v5144, 0
    %v5330 = vsel %vm5316, %v5145, 0
    %v5333 = vsel %vm5316, %v5146, 0
    %v5336 = vsel %vm5316, %v5147, 0
    %v5339 = vsel %vm5316, %v5148, 0
    %v5342 = vsel %vm5316, %v5149, 0
    %v5345 = vsel %vm5316, %v5150, 0
    %v5348 = vsel %vm5316, %v5151, 0
    %v5351 = vsel %vm5316, %v5152, 0
    %v5354 = vsel %vm5316, %v5153, 0
    %v5357 = vsel %vm5316, %v5154, 0
    %v5360 = vsel %vm5316, %v5155, 0
    %v5363 = vsel %vm5316, %v5156, 0
    %v5366 = vsel %vm5316, %v5157, 0
    %v5369 = vsel %vm5316, %v5158, 0
    %v5372 = vsel %vm5316, %v5159, 0
    %v5375 = vsel %vm5316, %v5160, 0
    %v5378 = vsel %vm5316, %v5161, 0
    %v5381 = vsel %vm5316, %v5162, 0
    %v5384 = vsel %vm5316, %v5163, 0
    %v5387 = vsel %vm5316, %v5164, 0
    %v5390 = vsel %vm5316, %v5165, 0
    %5392 = vmatprep.subr.mxu0 0.0
    %5393 = vmatpush1.msra.mxu0 %v5133
    %5394 = vmatprep.subr.mxu0 0.0
    %5395 = vmatpush1.msra.mxu0 %v5134
    %5396 = vmatprep.subr.mxu0 0.0
    %5397 = vmatpush1.msra.mxu0 %v5135
    %5398 = vmatprep.subr.mxu0 0.0
    %5399 = vmatpush1.msra.mxu0 %v5136
    %5400 = vmatprep.subr.mxu0 0.0
    %5401 = vmatpush1.msra.mxu0 %v5137
    %5402 = vmatprep.subr.mxu0 0.0
    %5403 = vmatpush1.msra.mxu0 %v5138
    %5404 = vmatprep.subr.mxu0 0.0
    %5405 = vmatpush1.msra.mxu0 %v5139
    %5406 = vmatprep.subr.mxu0 0.0
    %5407 = vmatpush1.msra.mxu0 %v5140
    %5408 = vmatprep.subr.mxu0 0.0
    %5409 = vmatpush1.msra.mxu0 0.0
    %5410 = vmatprep.subr.mxu0 0.0
    %5411 = vmatpush1.msra.mxu0 0.0
    %5412 = vmatprep.subr.mxu0 0.0
    %5413 = vmatpush1.msra.mxu0 0.0
    %5414 = vmatprep.subr.mxu0 0.0
    %5415 = vmatpush1.msra.mxu0 0.0
    %5416 = vmatprep.subr.mxu0 0.0
    %5417 = vmatpush1.msra.mxu0 0.0
    %5418 = vmatprep.subr.mxu0 0.0
    %5419 = vmatpush1.msra.mxu0 0.0
    %5420 = vmatprep.subr.mxu0 0.0
    %5421 = vmatpush1.msra.mxu0 0.0
    %5422 = vmatprep.subr.mxu0 0.0
    %5423 = vmatpush1.msra.mxu0 0.0
    %5424 = vmatprep.subr.mxu0 0.0
    %5425 = vmatpush1.msra.mxu0 0.0
    %5426 = vmatprep.subr.mxu0 0.0
    %5427 = vmatpush1.msra.mxu0 0.0
    %5428 = vmatprep.subr.mxu0 0.0
    %5429 = vmatpush1.msra.mxu0 0.0
    %5430 = vmatprep.subr.mxu0 0.0
    %5431 = vmatpush1.msra.mxu0 0.0
    %5432 = vmatprep.subr.mxu0 0.0
    %5433 = vmatpush1.msra.mxu0 0.0
    %5434 = vmatprep.subr.mxu0 0.0
    %5435 = vmatpush1.msra.mxu0 0.0
    %5436 = vmatprep.subr.mxu0 0.0
    %5437 = vmatpush1.msra.mxu0 0.0
    %5438 = vmatprep.subr.mxu0 0.0
    %5439 = vmatpush1.msra.mxu0 0.0
    %5440 = vmatprep.subr.mxu0 0.0
    %5441 = vmatpush1.msra.mxu0 0.0
    %5442 = vmatprep.subr.mxu0 0.0
    %5443 = vmatpush1.msra.mxu0 0.0
    %5444 = vmatprep.subr.mxu0 0.0
    %5445 = vmatpush1.msra.mxu0 0.0
    %5446 = vmatprep.subr.mxu0 0.0
    %5447 = vmatpush1.msra.mxu0 0.0
    %5448 = vmatprep.subr.mxu0 0.0
    %5449 = vmatpush1.msra.mxu0 0.0
    %5450 = vmatprep.subr.mxu0 0.0
    %5451 = vmatpush1.msra.mxu0 0.0
    %5452 = vmatprep.subr.mxu0 0.0
    %5453 = vmatpush1.msra.mxu0 0.0
    %5454 = vmatprep.subr.mxu0 0.0
    %5455 = vmatpush1.msra.mxu0 0.0
    %5456 = vmatprep.mubr.f32.mxu0 0.0
    %5457 = vmatmul.mubr.f32.gmra.mrb[0].mxu0 %v5318
    %v5458 = vpop.f32.mrb[0].mxu0
    %v5459 = vadd.f32 %v5194, %v5458
    %v5460 = vpop.f32.mrb[0].mxu0
    %5461 = vmatprep.mubr.f32.mxu0 0.0
    %5462 = vmatmul.mubr.f32.gmra.mrb[0].mxu0 %v5321
    %v5463 = vpop.f32.mrb[0].mxu0
    %v5464 = vadd.f32 %v5199, %v5463
    %v5465 = vpop.f32.mrb[0].mxu0
    %5466 = vmatprep.mubr.f32.mxu0 0.0
    %5467 = vmatmul.mubr.f32.gmra.mrb[0].mxu0 %v5324
    %v5468 = vpop.f32.mrb[0].mxu0
    %v5469 = vadd.f32 %v5204, %v5468
    %v5470 = vpop.f32.mrb[0].mxu0
    %5471 = vmatprep.mubr.f32.mxu0 0.0
    %5472 = vmatmul.mubr.f32.gmra.mrb[0].mxu0 %v5327
    %v5473 = vpop.f32.mrb[0].mxu0
    %v5474 = vadd.f32 %v5209, %v5473
    %v5475 = vpop.f32.mrb[0].mxu0
    %5476 = vmatprep.mubr.f32.mxu0 0.0
    %5477 = vmatmul.mubr.f32.gmra.mrb[0].mxu0 %v5330
    %v5478 = vpop.f32.mrb[0].mxu0
    %v5479 = vadd.f32 %v5214, %v5478
    %v5480 = vpop.f32.mrb[0].mxu0
    %5481 = vmatprep.mubr.f32.mxu0 0.0
    %5482 = vmatmul.mubr.f32.gmra.mrb[0].mxu0 %v5333
    %v5483 = vpop.f32.mrb[0].mxu0
    %v5484 = vadd.f32 %v5219, %v5483
    %v5485 = vpop.f32.mrb[0].mxu0
    %5486 = vmatprep.mubr.f32.mxu0 0.0
    %5487 = vmatmul.mubr.f32.gmra.mrb[0].mxu0 %v5336
    %v5488 = vpop.f32.mrb[0].mxu0
    %v5489 = vadd.f32 %v5224, %v5488
    %v5490 = vpop.f32.mrb[0].mxu0
    %5491 = vmatprep.mubr.f32.mxu0 0.0
    %5492 = vmatmul.mubr.f32.gmra.mrb[0].mxu0 %v5339
    %v5493 = vpop.f32.mrb[0].mxu0
    %v5494 = vadd.f32 %v5229, %v5493
    %v5495 = vpop.f32.mrb[0].mxu0
    %5496 = vmatprep.mubr.f32.mxu0 0.0
    %5497 = vmatmul.mubr.f32.gmra.mrb[0].mxu0 %v5342
    %v5498 = vpop.f32.mrb[0].mxu0
    %v5499 = vadd.f32 %v5234, %v5498
    %v5500 = vpop.f32.mrb[0].mxu0
    %5501 = vmatprep.mubr.f32.mxu0 0.0
    %5502 = vmatmul.mubr.f32.gmra.mrb[0].mxu0 %v5345
    %v5503 = vpop.f32.mrb[0].mxu0
    %v5504 = vadd.f32 %v5239, %v5503
    %v5505 = vpop.f32.mrb[0].mxu0
    %5506 = vmatprep.mubr.f32.mxu0 0.0
    %5507 = vmatmul.mubr.f32.gmra.mrb[0].mxu0 %v5348
    %v5508 = vpop.f32.mrb[0].mxu0
    %v5509 = vadd.f32 %v5244, %v5508
    %v5510 = vpop.f32.mrb[0].mxu0
    %5511 = vmatprep.mubr.f32.mxu0 0.0
    %5512 = vmatmul.mubr.f32.gmra.mrb[0].mxu0 %v5351
    %v5513 = vpop.f32.mrb[0].mxu0
    %v5514 = vadd.f32 %v5249, %v5513
    %v5515 = vpop.f32.mrb[0].mxu0
    %5516 = vmatprep.mubr.f32.mxu0 0.0
    %5517 = vmatmul.mubr.f32.gmra.mrb[0].mxu0 %v5354
    %v5518 = vpop.f32.mrb[0].mxu0
    %v5519 = vadd.f32 %v5254, %v5518
    %v5520 = vpop.f32.mrb[0].mxu0
    %5521 = vmatprep.mubr.f32.mxu0 0.0
    %5522 = vmatmul.mubr.f32.gmra.mrb[0].mxu0 %v5357
    %v5523 = vpop.f32.mrb[0].mxu0
    %v5524 = vadd.f32 %v5259, %v5523
    %v5525 = vpop.f32.mrb[0].mxu0
    %5526 = vmatprep.mubr.f32.mxu0 0.0
    %5527 = vmatmul.mubr.f32.gmra.mrb[0].mxu0 %v5360
    %v5528 = vpop.f32.mrb[0].mxu0
    %v5529 = vadd.f32 %v5264, %v5528
    %v5530 = vpop.f32.mrb[0].mxu0
    %5531 = vmatprep.mubr.f32.mxu0 0.0
    %5532 = vmatmul.mubr.f32.gmra.mrb[0].mxu0 %v5363
    %v5533 = vpop.f32.mrb[0].mxu0
    %v5534 = vadd.f32 %v5269, %v5533
    %v5535 = vpop.f32.mrb[0].mxu0
    %5536 = vmatprep.mubr.f32.mxu0 0.0
    %5537 = vmatmul.mubr.f32.gmra.mrb[0].mxu0 %v5366
    %v5538 = vpop.f32.mrb[0].mxu0
    %v5539 = vadd.f32 %v5274, %v5538
    %v5540 = vpop.f32.mrb[0].mxu0
    %5541 = vmatprep.mubr.f32.mxu0 0.0
    %5542 = vmatmul.mubr.f32.gmra.mrb[0].mxu0 %v5369
    %v5543 = vpop.f32.mrb[0].mxu0
    %v5544 = vadd.f32 %v5279, %v5543
    %v5545 = vpop.f32.mrb[0].mxu0
    %5546 = vmatprep.mubr.f32.mxu0 0.0
    %5547 = vmatmul.mubr.f32.gmra.mrb[0].mxu0 %v5372
    %v5548 = vpop.f32.mrb[0].mxu0
    %v5549 = vadd.f32 %v5284, %v5548
    %v5550 = vpop.f32.mrb[0].mxu0
    %5551 = vmatprep.mubr.f32.mxu0 0.0
    %5552 = vmatmul.mubr.f32.gmra.mrb[0].mxu0 %v5375
    %v5553 = vpop.f32.mrb[0].mxu0
    %v5554 = vadd.f32 %v5289, %v5553
    %v5555 = vpop.f32.mrb[0].mxu0
    %5556 = vmatprep.mubr.f32.mxu0 0.0
    %5557 = vmatmul.mubr.f32.gmra.mrb[0].mxu0 %v5378
    %v5558 = vpop.f32.mrb[0].mxu0
    %v5559 = vadd.f32 %v5294, %v5558
    %v5560 = vpop.f32.mrb[0].mxu0
    %5561 = vmatprep.mubr.f32.mxu0 0.0
    %5562 = vmatmul.mubr.f32.gmra.mrb[0].mxu0 %v5381
    %v5563 = vpop.f32.mrb[0].mxu0
    %v5564 = vadd.f32 %v5299, %v5563
    %v5565 = vpop.f32.mrb[0].mxu0
    %5566 = vmatprep.mubr.f32.mxu0 0.0
    %5567 = vmatmul.mubr.f32.gmra.mrb[0].mxu0 %v5384
    %v5568 = vpop.f32.mrb[0].mxu0
    %v5569 = vadd.f32 %v5304, %v5568
    %v5570 = vpop.f32.mrb[0].mxu0
    %5571 = vmatprep.mubr.f32.mxu0 0.0
    %5572 = vmatmul.mubr.f32.gmra.mrb[0].mxu0 %v5387
    %v5573 = vpop.f32.mrb[0].mxu0
    %v5574 = vadd.f32 %v5309, %v5573
    %v5575 = vpop.f32.mrb[0].mxu0
    %5576 = vmatprep.mubr.f32.mxu0 0.0
    %5577 = vmatmul.mubr.f32.gmra.mrb[0].mxu0 %v5390
    %v5578 = vpop.f32.mrb[0].mxu0
    %v5579 = vadd.f32 %v5314, %v5578
    %v5580 = vpop.f32.mrb[0].mxu0
    %5581 = vdwg.mxu0
    %v5582 = vmax.f32 %v5459, 0.0
    %v5583 = vmax.f32 %v5464, 0.0
    %v5584 = vmax.f32 %v5469, 0.0
    %v5585 = vmax.f32 %v5474, 0.0
    %v5586 = vmax.f32 %v5479, 0.0
    %v5587 = vmax.f32 %v5484, 0.0
    %v5588 = vmax.f32 %v5489, 0.0
    %v5589 = vmax.f32 %v5494, 0.0
    %v5590 = vmax.f32 %v5499, 0.0
    %v5591 = vmax.f32 %v5504, 0.0
    %v5592 = vmax.f32 %v5509, 0.0
    %v5593 = vmax.f32 %v5514, 0.0
    %v5594 = vmax.f32 %v5519, 0.0
    %v5595 = vmax.f32 %v5524, 0.0
    %v5596 = vmax.f32 %v5529, 0.0
    %v5597 = vmax.f32 %v5534, 0.0
    %v5598 = vmax.f32 %v5539, 0.0
    %v5599 = vmax.f32 %v5544, 0.0
    %v5600 = vmax.f32 %v5549, 0.0
    %v5601 = vmax.f32 %v5554, 0.0
    %v5602 = vmax.f32 %v5559, 0.0
    %v5603 = vmax.f32 %v5564, 0.0
    %v5604 = vmax.f32 %v5569, 0.0
    %v5605 = vmax.f32 %v5574, 0.0
    %v5606 = vmax.f32 %v5579, 0.0
    %v5607 = vld [vmem:[%s7] sm:$0xff]
    %v5608 = vld [vmem:[%s7 + $0x8] sm:$0xff]
    %v5609 = vld [vmem:[%s7 + $0x10] sm:$0xff]
    %v5610 = vld [vmem:[%s7 + $0x18] sm:$0xff]
    %v5611 = vld [vmem:[%s7 + $0x20] sm:$0xff]
    %v5612 = vld [vmem:[%s7 + $0x28] sm:$0xff]
    %v5613 = vld [vmem:[%s7 + $0x30] sm:$0xff]
    %v5614 = vld [vmem:[%s7 + $0x38] sm:$0xff]
    %v5615 = vld [vmem:[%s7 + $0x40] sm:$0xff]
    %v5616 = vld [vmem:[%s7 + $0x48] sm:$0xff]
    %v5617 = vld [vmem:[%s7 + $0x50] sm:$0xff]
    %v5618 = vld [vmem:[%s7 + $0x58] sm:$0xff]
    %v5619 = vld [vmem:[%s7 + $0x60] sm:$0xff]
    %v5620 = vld [vmem:[%s7 + $0x68] sm:$0xff]
    %v5621 = vld [vmem:[%s7 + $0x70] sm:$0xff]
    %v5622 = vld [vmem:[%s7 + $0x78] sm:$0xff]
    %v5623 = vld [vmem:[%s7 + $0x80] sm:$0xff]
    %v5624 = vld [vmem:[%s7 + $0x88] sm:$0xff]
    %v5625 = vld [vmem:[%s7 + $0x90] sm:$0xff]
    %v5626 = vld [vmem:[%s7 + $0x98] sm:$0xff]
    %v5627 = vld [vmem:[%s7 + $0xa0] sm:$0xff]
    %v5628 = vld [vmem:[%s7 + $0xa8] sm:$0xff]
    %v5629 = vld [vmem:[%s7 + $0xb0] sm:$0xff]
    %v5630 = vld [vmem:[%s7 + $0xb8] sm:$0xff]
    %v5631 = vld [vmem:[%s7 + $0xc0] sm:$0xff]
    %v5632 = vld [vmem:[%s7 + $0xc8] sm:$0xff]
    %v5633 = vld [vmem:[%s7 + $0xd0] sm:$0xff]
    %v5634 = vld [vmem:[%s7 + $0xd8] sm:$0xff]
    %v5635 = vld [vmem:[%s7 + $0xe0] sm:$0xff]
    %v5636 = vld [vmem:[%s7 + $0xe8] sm:$0xff]
    %v5637 = vld [vmem:[%s7 + $0xf0] sm:$0xff]
    %v5638 = vld [vmem:[%s7 + $0xf8] sm:$0xff]
    %v5639 = vld [vmem:[%s7 + $0x100] sm:$0xff]
    %v5640 = vld [vmem:[%s7 + $0x108] sm:$0xff]
    %v5641 = vld [vmem:[%s7 + $0x110] sm:$0xff]
    %v5642 = vld [vmem:[%s7 + $0x118] sm:$0xff]
    %v5643 = vld [vmem:[%s7 + $0x120] sm:$0xff]
    %v5644 = vld [vmem:[%s7 + $0x128] sm:$0xff]
    %v5645 = vld [vmem:[%s7 + $0x130] sm:$0xff]
    %v5646 = vld [vmem:[%s7 + $0x138] sm:$0xff]
    %v5647 = vld [vmem:[%s7 + $0x140] sm:$0xff]
    %v5648 = vld [vmem:[%s7 + $0x148] sm:$0xff]
    %v5649 = vld [vmem:[%s7 + $0x150] sm:$0xff]
    %v5650 = vld [vmem:[%s7 + $0x158] sm:$0xff]
    %v5651 = vld [vmem:[%s7 + $0x160] sm:$0xff]
    %v5652 = vld [vmem:[%s7 + $0x168] sm:$0xff]
    %v5653 = vld [vmem:[%s7 + $0x170] sm:$0xff]
    %v5654 = vld [vmem:[%s7 + $0x178] sm:$0xff]
    %v5655 = vld [vmem:[%s7 + $0x180] sm:$0xff]
    %v5656 = vld [vmem:[%s7 + $0x188] sm:$0xff]
    %v5657 = vld [vmem:[%s7 + $0x190] sm:$0xff]
    %v5658 = vld [vmem:[%s7 + $0x198] sm:$0xff]
    %v5659 = vld [vmem:[%s7 + $0x1a0] sm:$0xff]
    %v5660 = vld [vmem:[%s7 + $0x1a8] sm:$0xff]
    %v5661 = vld [vmem:[%s7 + $0x1b0] sm:$0xff]
    %v5662 = vld [vmem:[%s7 + $0x1b8] sm:$0xff]
    %v5663 = vld [vmem:[%s7 + $0x1c0] sm:$0xff]
    %v5664 = vld [vmem:[%s7 + $0x1c8] sm:$0xff]
    %v5665 = vld [vmem:[%s7 + $0x1d0] sm:$0xff]
    %v5666 = vld [vmem:[%s7 + $0x1d8] sm:$0xff]
    %v5667 = vld [vmem:[%s7 + $0x1e0] sm:$0xff]
    %v5668 = vld [vmem:[%s7 + $0x1e8] sm:$0xff]
    %v5669 = vld [vmem:[%s7 + $0x1f0] sm:$0xff]
    %v5670 = vld [vmem:[%s7 + $0x1f8] sm:$0xff]
    %v5671 = vld [vmem:[%s7 + $0x200] sm:$0xff]
    %v5672 = vld [vmem:[%s7 + $0x208] sm:$0xff]
    %v5673 = vld [vmem:[%s7 + $0x210] sm:$0xff]
    %v5674 = vld [vmem:[%s7 + $0x218] sm:$0xff]
    %v5675 = vld [vmem:[%s7 + $0x220] sm:$0xff]
    %v5676 = vld [vmem:[%s7 + $0x228] sm:$0xff]
    %v5677 = vld [vmem:[%s7 + $0x230] sm:$0xff]
    %v5678 = vld [vmem:[%s7 + $0x238] sm:$0xff]
    %v5679 = vld [vmem:[%s7 + $0x240] sm:$0xff]
    %v5680 = vld [vmem:[%s7 + $0x248] sm:$0xff]
    %v5681 = vld [vmem:[%s7 + $0x250] sm:$0xff]
    %v5682 = vld [vmem:[%s7 + $0x258] sm:$0xff]
    %v5683 = vld [vmem:[%s7 + $0x260] sm:$0xff]
    %v5684 = vld [vmem:[%s7 + $0x268] sm:$0xff]
    %v5685 = vld [vmem:[%s7 + $0x270] sm:$0xff]
    %v5686 = vld [vmem:[%s7 + $0x278] sm:$0xff]
    %v5687 = vld [vmem:[%s7 + $0x280] sm:$0xff]
    %v5688 = vld [vmem:[%s7 + $0x288] sm:$0xff]
    %v5689 = vld [vmem:[%s7 + $0x290] sm:$0xff]
    %v5690 = vld [vmem:[%s7 + $0x298] sm:$0xff]
    %v5691 = vld [vmem:[%s7 + $0x2a0] sm:$0xff]
    %v5692 = vld [vmem:[%s7 + $0x2a8] sm:$0xff]
    %v5693 = vld [vmem:[%s7 + $0x2b0] sm:$0xff]
    %v5694 = vld [vmem:[%s7 + $0x2b8] sm:$0xff]
    %v5695 = vld [vmem:[%s7 + $0x2c0] sm:$0xff]
    %v5696 = vld [vmem:[%s7 + $0x2c8] sm:$0xff]
    %v5697 = vld [vmem:[%s7 + $0x2d0] sm:$0xff]
    %v5698 = vld [vmem:[%s7 + $0x2d8] sm:$0xff]
    %v5699 = vld [vmem:[%s7 + $0x2e0] sm:$0xff]
    %v5700 = vld [vmem:[%s7 + $0x2e8] sm:$0xff]
    %v5701 = vld [vmem:[%s7 + $0x2f0] sm:$0xff]
    %v5702 = vld [vmem:[%s7 + $0x2f8] sm:$0xff]
    %v5703 = vld [vmem:[%s7 + $0x300] sm:$0xff]
    %v5704 = vld [vmem:[%s7 + $0x308] sm:$0xff]
    %v5705 = vld [vmem:[%s7 + $0x310] sm:$0xff]
    %v5706 = vld [vmem:[%s7 + $0x318] sm:$0xff]
    %v5707 = vld [vmem:[%s7 + $0x320] sm:$0xff]
    %v5708 = vld [vmem:[%s7 + $0x328] sm:$0xff]
    %v5709 = vld [vmem:[%s7 + $0x330] sm:$0xff]
    %v5710 = vld [vmem:[%s7 + $0x338] sm:$0xff]
    %v5711 = vld [vmem:[%s7 + $0x340] sm:$0xff]
    %v5712 = vld [vmem:[%s7 + $0x348] sm:$0xff]
    %v5713 = vld [vmem:[%s7 + $0x350] sm:$0xff]
    %v5714 = vld [vmem:[%s7 + $0x358] sm:$0xff]
    %v5715 = vld [vmem:[%s7 + $0x360] sm:$0xff]
    %v5716 = vld [vmem:[%s7 + $0x368] sm:$0xff]
    %v5717 = vld [vmem:[%s7 + $0x370] sm:$0xff]
    %v5718 = vld [vmem:[%s7 + $0x378] sm:$0xff]
    %v5719 = vld [vmem:[%s7 + $0x380] sm:$0xff]
    %v5720 = vld [vmem:[%s7 + $0x388] sm:$0xff]
    %v5721 = vld [vmem:[%s7 + $0x390] sm:$0xff]
    %v5722 = vld [vmem:[%s7 + $0x398] sm:$0xff]
    %v5723 = vld [vmem:[%s7 + $0x3a0] sm:$0xff]
    %v5724 = vld [vmem:[%s7 + $0x3a8] sm:$0xff]
    %v5725 = vld [vmem:[%s7 + $0x3b0] sm:$0xff]
    %v5726 = vld [vmem:[%s7 + $0x3b8] sm:$0xff]
    %v5727 = vld [vmem:[%s7 + $0x3c0] sm:$0xff]
    %v5728 = vld [vmem:[%s7 + $0x3c8] sm:$0xff]
    %v5729 = vld [vmem:[%s7 + $0x3d0] sm:$0xff]
    %v5730 = vld [vmem:[%s7 + $0x3d8] sm:$0xff]
    %v5731 = vld [vmem:[%s7 + $0x3e0] sm:$0xff]
    %v5732 = vld [vmem:[%s7 + $0x3e8] sm:$0xff]
    %v5733 = vld [vmem:[%s7 + $0x3f0] sm:$0xff]
    %v5734 = vld [vmem:[%s7 + $0x3f8] sm:$0xff]
    %v5735 = vld [vmem:[%s7 + $0x400] sm:$0xff]
    %v5736 = vld [vmem:[%s7 + $0x408] sm:$0xff]
    %v5737 = vld [vmem:[%s7 + $0x410] sm:$0xff]
    %v5738 = vld [vmem:[%s7 + $0x418] sm:$0xff]
    %v5739 = vld [vmem:[%s7 + $0x420] sm:$0xff]
    %v5740 = vld [vmem:[%s7 + $0x428] sm:$0xff]
    %v5741 = vld [vmem:[%s7 + $0x430] sm:$0xff]
    %v5742 = vld [vmem:[%s7 + $0x438] sm:$0xff]
    %v5743 = vld [vmem:[%s7 + $0x440] sm:$0xff]
    %v5744 = vld [vmem:[%s7 + $0x448] sm:$0xff]
    %v5745 = vld [vmem:[%s7 + $0x450] sm:$0xff]
    %v5746 = vld [vmem:[%s7 + $0x458] sm:$0xff]
    %v5747 = vld [vmem:[%s7 + $0x460] sm:$0xff]
    %v5748 = vld [vmem:[%s7 + $0x468] sm:$0xff]
    %v5749 = vld [vmem:[%s7 + $0x470] sm:$0xff]
    %v5750 = vld [vmem:[%s7 + $0x478] sm:$0xff]
    %v5751 = vld [vmem:[%s7 + $0x480] sm:$0xff]
    %v5752 = vld [vmem:[%s7 + $0x488] sm:$0xff]
    %v5753 = vld [vmem:[%s7 + $0x490] sm:$0xff]
    %v5754 = vld [vmem:[%s7 + $0x498] sm:$0xff]
    %v5755 = vld [vmem:[%s7 + $0x4a0] sm:$0xff]
    %v5756 = vld [vmem:[%s7 + $0x4a8] sm:$0xff]
    %v5757 = vld [vmem:[%s7 + $0x4b0] sm:$0xff]
    %v5758 = vld [vmem:[%s7 + $0x4b8] sm:$0xff]
    %v5759 = vld [vmem:[%s7 + $0x4c0] sm:$0xff]
    %v5760 = vld [vmem:[%s7 + $0x4c8] sm:$0xff]
    %v5761 = vld [vmem:[%s7 + $0x4d0] sm:$0xff]
    %v5762 = vld [vmem:[%s7 + $0x4d8] sm:$0xff]
    %v5763 = vld [vmem:[%s7 + $0x4e0] sm:$0xff]
    %v5764 = vld [vmem:[%s7 + $0x4e8] sm:$0xff]
    %v5765 = vld [vmem:[%s7 + $0x4f0] sm:$0xff]
    %v5766 = vld [vmem:[%s7 + $0x4f8] sm:$0xff]
    %v5767 = vld [vmem:[%s7 + $0x500] sm:$0xff]
    %v5768 = vld [vmem:[%s7 + $0x508] sm:$0xff]
    %v5769 = vld [vmem:[%s7 + $0x510] sm:$0xff]
    %v5770 = vld [vmem:[%s7 + $0x518] sm:$0xff]
    %v5771 = vld [vmem:[%s7 + $0x520] sm:$0xff]
    %v5772 = vld [vmem:[%s7 + $0x528] sm:$0xff]
    %v5773 = vld [vmem:[%s7 + $0x530] sm:$0xff]
    %v5774 = vld [vmem:[%s7 + $0x538] sm:$0xff]
    %v5775 = vld [vmem:[%s7 + $0x540] sm:$0xff]
    %v5776 = vld [vmem:[%s7 + $0x548] sm:$0xff]
    %v5777 = vld [vmem:[%s7 + $0x550] sm:$0xff]
    %v5778 = vld [vmem:[%s7 + $0x558] sm:$0xff]
    %v5779 = vld [vmem:[%s7 + $0x560] sm:$0xff]
    %v5780 = vld [vmem:[%s7 + $0x568] sm:$0xff]
    %v5781 = vld [vmem:[%s7 + $0x570] sm:$0xff]
    %v5782 = vld [vmem:[%s7 + $0x578] sm:$0xff]
    %v5783 = vld [vmem:[%s7 + $0x580] sm:$0xff]
    %v5784 = vld [vmem:[%s7 + $0x588] sm:$0xff]
    %v5785 = vld [vmem:[%s7 + $0x590] sm:$0xff]
    %v5786 = vld [vmem:[%s7 + $0x598] sm:$0xff]
    %v5787 = vld [vmem:[%s7 + $0x5a0] sm:$0xff]
    %v5788 = vld [vmem:[%s7 + $0x5a8] sm:$0xff]
    %v5789 = vld [vmem:[%s7 + $0x5b0] sm:$0xff]
    %v5790 = vld [vmem:[%s7 + $0x5b8] sm:$0xff]
    %v5791 = vld [vmem:[%s7 + $0x5c0] sm:$0xff]
    %v5792 = vld [vmem:[%s7 + $0x5c8] sm:$0xff]
    %v5793 = vld [vmem:[%s7 + $0x5d0] sm:$0xff]
    %v5794 = vld [vmem:[%s7 + $0x5d8] sm:$0xff]
    %v5795 = vld [vmem:[%s7 + $0x5e0] sm:$0xff]
    %v5796 = vld [vmem:[%s7 + $0x5e8] sm:$0xff]
    %v5797 = vld [vmem:[%s7 + $0x5f0] sm:$0xff]
    %v5798 = vld [vmem:[%s7 + $0x5f8] sm:$0xff]
    %v5799 = vld [vmem:[%s7 + $0x600] sm:$0xff]
    %v5800 = vld [vmem:[%s7 + $0x608] sm:$0xff]
    %v5801 = vld [vmem:[%s7 + $0x610] sm:$0xff]
    %v5802 = vld [vmem:[%s7 + $0x618] sm:$0xff]
    %v5803 = vld [vmem:[%s7 + $0x620] sm:$0xff]
    %v5804 = vld [vmem:[%s7 + $0x628] sm:$0xff]
    %v5805 = vld [vmem:[%s7 + $0x630] sm:$0xff]
    %v5806 = vld [vmem:[%s7 + $0x638] sm:$0xff]
    %v5807 = vld [vmem:[%s7 + $0x640] sm:$0xff]
    %v5808 = vld [vmem:[%s7 + $0x648] sm:$0xff]
    %v5809 = vld [vmem:[%s7 + $0x650] sm:$0xff]
    %v5810 = vld [vmem:[%s7 + $0x658] sm:$0xff]
    %v5811 = vld [vmem:[%s7 + $0x660] sm:$0xff]
    %v5812 = vld [vmem:[%s7 + $0x668] sm:$0xff]
    %v5813 = vld [vmem:[%s7 + $0x670] sm:$0xff]
    %v5814 = vld [vmem:[%s7 + $0x678] sm:$0xff]
    %v5815 = vld [vmem:[%s7 + $0x680] sm:$0xff]
    %v5816 = vld [vmem:[%s7 + $0x688] sm:$0xff]
    %v5817 = vld [vmem:[%s7 + $0x690] sm:$0xff]
    %v5818 = vld [vmem:[%s7 + $0x698] sm:$0xff]
    %v5819 = vld [vmem:[%s7 + $0x6a0] sm:$0xff]
    %v5820 = vld [vmem:[%s7 + $0x6a8] sm:$0xff]
    %v5821 = vld [vmem:[%s7 + $0x6b0] sm:$0xff]
    %v5822 = vld [vmem:[%s7 + $0x6b8] sm:$0xff]
    %v5823 = vld [vmem:[%s7 + $0x6c0] sm:$0xff]
    %v5824 = vld [vmem:[%s7 + $0x6c8] sm:$0xff]
    %v5825 = vld [vmem:[%s7 + $0x6d0] sm:$0xff]
    %v5826 = vld [vmem:[%s7 + $0x6d8] sm:$0xff]
    %v5827 = vld [vmem:[%s7 + $0x6e0] sm:$0xff]
    %v5828 = vld [vmem:[%s7 + $0x6e8] sm:$0xff]
    %v5829 = vld [vmem:[%s7 + $0x6f0] sm:$0xff]
    %v5830 = vld [vmem:[%s7 + $0x6f8] sm:$0xff]
    %v5831 = vld [vmem:[%s7 + $0x700] sm:$0xf]
    %v5832 = vld [vmem:[%s7 + $0x708] sm:$0xf]
    %v5833 = vld [vmem:[%s8] sm:$0xff]
    %v5834 = vld [vmem:[%s8 + $0x8] sm:$0xff]
    %v5835 = vld [vmem:[%s8 + $0x10] sm:$0xff]
    %v5836 = vld [vmem:[%s8 + $0x18] sm:$0xff]
    %v5837 = vld [vmem:[%s8 + $0x20] sm:$0xff]
    %v5838 = vld [vmem:[%s8 + $0x28] sm:$0xff]
    %v5839 = vld [vmem:[%s8 + $0x30] sm:$0xff]
    %v5840 = vld [vmem:[%s8 + $0x38] sm:$0xff]
    %v5841 = vld [vmem:[%s8 + $0x40] sm:$0xff]
    %v5842 = vld [vmem:[%s8 + $0x48] sm:$0xff]
    %v5843 = vld [vmem:[%s8 + $0x50] sm:$0xff]
    %v5844 = vld [vmem:[%s8 + $0x58] sm:$0xff]
    %v5845 = vld [vmem:[%s8 + $0x60] sm:$0xff]
    %v5846 = vld [vmem:[%s8 + $0x68] sm:$0xff]
    %v5847 = vld [vmem:[%s8 + $0x70] sm:$0xff]
    %v5848 = vld [vmem:[%s8 + $0x78] sm:$0xff]
    %v5849 = vld [vmem:[%s8 + $0x80] sm:$0xff]
    %v5850 = vld [vmem:[%s8 + $0x88] sm:$0xff]
    %v5851 = vld [vmem:[%s8 + $0x90] sm:$0xff]
    %v5852 = vld [vmem:[%s8 + $0x98] sm:$0xff]
    %v5853 = vld [vmem:[%s8 + $0xa0] sm:$0xff]
    %v5854 = vld [vmem:[%s8 + $0xa8] sm:$0xff]
    %v5855 = vld [vmem:[%s8 + $0xb0] sm:$0xff]
    %v5856 = vld [vmem:[%s8 + $0xb8] sm:$0xff]
    %v5857 = vld [vmem:[%s8 + $0xc0] sm:$0xff]
    %v5858 = vld [vmem:[%s8 + $0xc8] sm:$0xff]
    %v5859 = vld [vmem:[%s8 + $0xd0] sm:$0xff]
    %v5860 = vld [vmem:[%s8 + $0xd8] sm:$0xff]
    %v5861 = vld [vmem:[%s8 + $0xe0] sm:$0xff]
    %v5862 = vld [vmem:[%s8 + $0xe8] sm:$0xff]
    %v5863 = vld [vmem:[%s8 + $0xf0] sm:$0xff]
    %v5864 = vld [vmem:[%s8 + $0xf8] sm:$0xff]
    %v5865 = vld [vmem:[%s8 + $0x100] sm:$0xff]
    %v5866 = vld [vmem:[%s8 + $0x108] sm:$0xff]
    %v5867 = vld [vmem:[%s8 + $0x110] sm:$0xff]
    %v5868 = vld [vmem:[%s8 + $0x118] sm:$0xff]
    %v5869 = vld [vmem:[%s8 + $0x120] sm:$0xff]
    %v5870 = vld [vmem:[%s8 + $0x128] sm:$0xff]
    %v5871 = vld [vmem:[%s8 + $0x130] sm:$0xff]
    %v5872 = vld [vmem:[%s8 + $0x138] sm:$0xff]
    %v5873 = vld [vmem:[%s8 + $0x140] sm:$0xff]
    %v5874 = vld [vmem:[%s8 + $0x148] sm:$0xff]
    %v5875 = vld [vmem:[%s8 + $0x150] sm:$0xff]
    %v5876 = vld [vmem:[%s8 + $0x158] sm:$0xff]
    %v5877 = vld [vmem:[%s8 + $0x160] sm:$0xff]
    %v5878 = vld [vmem:[%s8 + $0x168] sm:$0xff]
    %v5879 = vld [vmem:[%s8 + $0x170] sm:$0xff]
    %v5880 = vld [vmem:[%s8 + $0x178] sm:$0xff]
    %v5881 = vld [vmem:[%s8 + $0x180] sm:$0xff]
    %v5882 = vld [vmem:[%s8 + $0x188] sm:$0xff]
    %v5883 = vld [vmem:[%s8 + $0x190] sm:$0xff]
    %v5884 = vld [vmem:[%s8 + $0x198] sm:$0xff]
    %v5885 = vld [vmem:[%s8 + $0x1a0] sm:$0xff]
    %v5886 = vld [vmem:[%s8 + $0x1a8] sm:$0xff]
    %v5887 = vld [vmem:[%s8 + $0x1b0] sm:$0xff]
    %v5888 = vld [vmem:[%s8 + $0x1b8] sm:$0xff]
    %v5889 = vld [vmem:[%s8 + $0x1c0] sm:$0xff]
    %v5890 = vld [vmem:[%s8 + $0x1c8] sm:$0xff]
    %v5891 = vld [vmem:[%s8 + $0x1d0] sm:$0xff]
    %v5892 = vld [vmem:[%s8 + $0x1d8] sm:$0xff]
    %v5893 = vld [vmem:[%s8 + $0x1e0] sm:$0xff]
    %v5894 = vld [vmem:[%s8 + $0x1e8] sm:$0xff]
    %v5895 = vld [vmem:[%s8 + $0x1f0] sm:$0xff]
    %v5896 = vld [vmem:[%s8 + $0x1f8] sm:$0xff]
    %v5897 = vld [vmem:[%s8 + $0x200] sm:$0xff]
    %v5898 = vld [vmem:[%s8 + $0x208] sm:$0xff]
    %v5899 = vld [vmem:[%s8 + $0x210] sm:$0xff]
    %v5900 = vld [vmem:[%s8 + $0x218] sm:$0xff]
    %v5901 = vld [vmem:[%s8 + $0x220] sm:$0xff]
    %v5902 = vld [vmem:[%s8 + $0x228] sm:$0xff]
    %v5903 = vld [vmem:[%s8 + $0x230] sm:$0xff]
    %v5904 = vld [vmem:[%s8 + $0x238] sm:$0xff]
    %v5905 = vld [vmem:[%s8 + $0x240] sm:$0xff]
    %v5906 = vld [vmem:[%s8 + $0x248] sm:$0xff]
    %v5907 = vld [vmem:[%s8 + $0x250] sm:$0xff]
    %v5908 = vld [vmem:[%s8 + $0x258] sm:$0xff]
    %v5909 = vld [vmem:[%s8 + $0x260] sm:$0xff]
    %v5910 = vld [vmem:[%s8 + $0x268] sm:$0xff]
    %v5911 = vld [vmem:[%s8 + $0x270] sm:$0xff]
    %v5912 = vld [vmem:[%s8 + $0x278] sm:$0xff]
    %v5913 = vld [vmem:[%s8 + $0x280] sm:$0xff]
    %v5914 = vld [vmem:[%s8 + $0x288] sm:$0xff]
    %v5915 = vld [vmem:[%s8 + $0x290] sm:$0xff]
    %v5916 = vld [vmem:[%s8 + $0x298] sm:$0xff]
    %v5917 = vld [vmem:[%s8 + $0x2a0] sm:$0xff]
    %v5918 = vld [vmem:[%s8 + $0x2a8] sm:$0xff]
    %v5919 = vld [vmem:[%s8 + $0x2b0] sm:$0xff]
    %v5920 = vld [vmem:[%s8 + $0x2b8] sm:$0xff]
    %v5921 = vld [vmem:[%s8 + $0x2c0] sm:$0xff]
    %v5922 = vld [vmem:[%s8 + $0x2c8] sm:$0xff]
    %v5923 = vld [vmem:[%s8 + $0x2d0] sm:$0xff]
    %v5924 = vld [vmem:[%s8 + $0x2d8] sm:$0xff]
    %v5925 = vld [vmem:[%s8 + $0x2e0] sm:$0xff]
    %v5926 = vld [vmem:[%s8 + $0x2e8] sm:$0xff]
    %v5927 = vld [vmem:[%s8 + $0x2f0] sm:$0xff]
    %v5928 = vld [vmem:[%s8 + $0x2f8] sm:$0xff]
    %v5929 = vld [vmem:[%s8 + $0x300] sm:$0xff]
    %v5930 = vld [vmem:[%s8 + $0x308] sm:$0xff]
    %v5931 = vld [vmem:[%s8 + $0x310] sm:$0xff]
    %v5932 = vld [vmem:[%s8 + $0x318] sm:$0xff]
    %v5933 = vld [vmem:[%s8 + $0x320] sm:$0xff]
    %v5934 = vld [vmem:[%s8 + $0x328] sm:$0xff]
    %v5935 = vld [vmem:[%s8 + $0x330] sm:$0xff]
    %v5936 = vld [vmem:[%s8 + $0x338] sm:$0xff]
    %v5937 = vld [vmem:[%s8 + $0x340] sm:$0xff]
    %v5938 = vld [vmem:[%s8 + $0x348] sm:$0xff]
    %v5939 = vld [vmem:[%s8 + $0x350] sm:$0xff]
    %v5940 = vld [vmem:[%s8 + $0x358] sm:$0xff]
    %v5941 = vld [vmem:[%s8 + $0x360] sm:$0xff]
    %v5942 = vld [vmem:[%s8 + $0x368] sm:$0xff]
    %v5943 = vld [vmem:[%s8 + $0x370] sm:$0xff]
    %v5944 = vld [vmem:[%s8 + $0x378] sm:$0xff]
    %v5945 = vld [vmem:[%s8 + $0x380] sm:$0xf]
    %5947 = vset.pattern.permute.xlu0 0
    %5948 = vperm.xlu0 %5947, %v5833
    %v5949 = vpop.permute.xlu0 %5948
    %5952 = vset.pattern.permute.xlu0 0
    %5953 = vperm.xlu0 %5952, %v5834
    %v5954 = vpop.permute.xlu0 %5953
    %5957 = vset.pattern.permute.xlu0 0
    %5958 = vperm.xlu0 %5957, %v5835
    %v5959 = vpop.permute.xlu0 %5958
    %5962 = vset.pattern.permute.xlu0 0
    %5963 = vperm.xlu0 %5962, %v5836
    %v5964 = vpop.permute.xlu0 %5963
    %5967 = vset.pattern.permute.xlu0 0
    %5968 = vperm.xlu0 %5967, %v5837
    %v5969 = vpop.permute.xlu0 %5968
    %5972 = vset.pattern.permute.xlu0 0
    %5973 = vperm.xlu0 %5972, %v5838
    %v5974 = vpop.permute.xlu0 %5973
    %5977 = vset.pattern.permute.xlu0 0
    %5978 = vperm.xlu0 %5977, %v5839
    %v5979 = vpop.permute.xlu0 %5978
    %5982 = vset.pattern.permute.xlu0 0
    %5983 = vperm.xlu0 %5982, %v5840
    %v5984 = vpop.permute.xlu0 %5983
    %5987 = vset.pattern.permute.xlu0 0
    %5988 = vperm.xlu0 %5987, %v5841
    %v5989 = vpop.permute.xlu0 %5988
    %5992 = vset.pattern.permute.xlu0 0
    %5993 = vperm.xlu0 %5992, %v5842
    %v5994 = vpop.permute.xlu0 %5993
    %5997 = vset.pattern.permute.xlu0 0
    %5998 = vperm.xlu0 %5997, %v5843
    %v5999 = vpop.permute.xlu0 %5998
    %6002 = vset.pattern.permute.xlu0 0
    %6003 = vperm.xlu0 %6002, %v5844
    %v6004 = vpop.permute.xlu0 %6003
    %6007 = vset.pattern.permute.xlu0 0
    %6008 = vperm.xlu0 %6007, %v5845
    %v6009 = vpop.permute.xlu0 %6008
    %6012 = vset.pattern.permute.xlu0 0
    %6013 = vperm.xlu0 %6012, %v5846
    %v6014 = vpop.permute.xlu0 %6013
    %6017 = vset.pattern.permute.xlu0 0
    %6018 = vperm.xlu0 %6017, %v5847
    %v6019 = vpop.permute.xlu0 %6018
    %6022 = vset.pattern.permute.xlu0 0
    %6023 = vperm.xlu0 %6022, %v5848
    %v6024 = vpop.permute.xlu0 %6023
    %6027 = vset.pattern.permute.xlu0 0
    %6028 = vperm.xlu0 %6027, %v5849
    %v6029 = vpop.permute.xlu0 %6028
    %6032 = vset.pattern.permute.xlu0 0
    %6033 = vperm.xlu0 %6032, %v5850
    %v6034 = vpop.permute.xlu0 %6033
    %6037 = vset.pattern.permute.xlu0 0
    %6038 = vperm.xlu0 %6037, %v5851
    %v6039 = vpop.permute.xlu0 %6038
    %6042 = vset.pattern.permute.xlu0 0
    %6043 = vperm.xlu0 %6042, %v5852
    %v6044 = vpop.permute.xlu0 %6043
    %6047 = vset.pattern.permute.xlu0 0
    %6048 = vperm.xlu0 %6047, %v5853
    %v6049 = vpop.permute.xlu0 %6048
    %6052 = vset.pattern.permute.xlu0 0
    %6053 = vperm.xlu0 %6052, %v5854
    %v6054 = vpop.permute.xlu0 %6053
    %6057 = vset.pattern.permute.xlu0 0
    %6058 = vperm.xlu0 %6057, %v5855
    %v6059 = vpop.permute.xlu0 %6058
    %6062 = vset.pattern.permute.xlu0 0
    %6063 = vperm.xlu0 %6062, %v5856
    %v6064 = vpop.permute.xlu0 %6063
    %6067 = vset.pattern.permute.xlu0 0
    %6068 = vperm.xlu0 %6067, %v5857
    %v6069 = vpop.permute.xlu0 %6068
    %6072 = vset.pattern.permute.xlu0 0
    %6073 = vperm.xlu0 %6072, %v5858
    %v6074 = vpop.permute.xlu0 %6073
    %6077 = vset.pattern.permute.xlu0 0
    %6078 = vperm.xlu0 %6077, %v5859
    %v6079 = vpop.permute.xlu0 %6078
    %6082 = vset.pattern.permute.xlu0 0
    %6083 = vperm.xlu0 %6082, %v5860
    %v6084 = vpop.permute.xlu0 %6083
    %6087 = vset.pattern.permute.xlu0 0
    %6088 = vperm.xlu0 %6087, %v5861
    %v6089 = vpop.permute.xlu0 %6088
    %6092 = vset.pattern.permute.xlu0 0
    %6093 = vperm.xlu0 %6092, %v5862
    %v6094 = vpop.permute.xlu0 %6093
    %6097 = vset.pattern.permute.xlu0 0
    %6098 = vperm.xlu0 %6097, %v5863
    %v6099 = vpop.permute.xlu0 %6098
    %6102 = vset.pattern.permute.xlu0 0
    %6103 = vperm.xlu0 %6102, %v5864
    %v6104 = vpop.permute.xlu0 %6103
    %6107 = vset.pattern.permute.xlu0 0
    %6108 = vperm.xlu0 %6107, %v5865
    %v6109 = vpop.permute.xlu0 %6108
    %6112 = vset.pattern.permute.xlu0 0
    %6113 = vperm.xlu0 %6112, %v5866
    %v6114 = vpop.permute.xlu0 %6113
    %6117 = vset.pattern.permute.xlu0 0
    %6118 = vperm.xlu0 %6117, %v5867
    %v6119 = vpop.permute.xlu0 %6118
    %6122 = vset.pattern.permute.xlu0 0
    %6123 = vperm.xlu0 %6122, %v5868
    %v6124 = vpop.permute.xlu0 %6123
    %6127 = vset.pattern.permute.xlu0 0
    %6128 = vperm.xlu0 %6127, %v5869
    %v6129 = vpop.permute.xlu0 %6128
    %6132 = vset.pattern.permute.xlu0 0
    %6133 = vperm.xlu0 %6132, %v5870
    %v6134 = vpop.permute.xlu0 %6133
    %6137 = vset.pattern.permute.xlu0 0
    %6138 = vperm.xlu0 %6137, %v5871
    %v6139 = vpop.permute.xlu0 %6138
    %6142 = vset.pattern.permute.xlu0 0
    %6143 = vperm.xlu0 %6142, %v5872
    %v6144 = vpop.permute.xlu0 %6143
    %6147 = vset.pattern.permute.xlu0 0
    %6148 = vperm.xlu0 %6147, %v5873
    %v6149 = vpop.permute.xlu0 %6148
    %6152 = vset.pattern.permute.xlu0 0
    %6153 = vperm.xlu0 %6152, %v5874
    %v6154 = vpop.permute.xlu0 %6153
    %6157 = vset.pattern.permute.xlu0 0
    %6158 = vperm.xlu0 %6157, %v5875
    %v6159 = vpop.permute.xlu0 %6158
    %6162 = vset.pattern.permute.xlu0 0
    %6163 = vperm.xlu0 %6162, %v5876
    %v6164 = vpop.permute.xlu0 %6163
    %6167 = vset.pattern.permute.xlu0 0
    %6168 = vperm.xlu0 %6167, %v5877
    %v6169 = vpop.permute.xlu0 %6168
    %6172 = vset.pattern.permute.xlu0 0
    %6173 = vperm.xlu0 %6172, %v5878
    %v6174 = vpop.permute.xlu0 %6173
    %6177 = vset.pattern.permute.xlu0 0
    %6178 = vperm.xlu0 %6177, %v5879
    %v6179 = vpop.permute.xlu0 %6178
    %6182 = vset.pattern.permute.xlu0 0
    %6183 = vperm.xlu0 %6182, %v5880
    %v6184 = vpop.permute.xlu0 %6183
    %6187 = vset.pattern.permute.xlu0 0
    %6188 = vperm.xlu0 %6187, %v5881
    %v6189 = vpop.permute.xlu0 %6188
    %6192 = vset.pattern.permute.xlu0 0
    %6193 = vperm.xlu0 %6192, %v5882
    %v6194 = vpop.permute.xlu0 %6193
    %6197 = vset.pattern.permute.xlu0 0
    %6198 = vperm.xlu0 %6197, %v5883
    %v6199 = vpop.permute.xlu0 %6198
    %6202 = vset.pattern.permute.xlu0 0
    %6203 = vperm.xlu0 %6202, %v5884
    %v6204 = vpop.permute.xlu0 %6203
    %6207 = vset.pattern.permute.xlu0 0
    %6208 = vperm.xlu0 %6207, %v5885
    %v6209 = vpop.permute.xlu0 %6208
    %6212 = vset.pattern.permute.xlu0 0
    %6213 = vperm.xlu0 %6212, %v5886
    %v6214 = vpop.permute.xlu0 %6213
    %6217 = vset.pattern.permute.xlu0 0
    %6218 = vperm.xlu0 %6217, %v5887
    %v6219 = vpop.permute.xlu0 %6218
    %6222 = vset.pattern.permute.xlu0 0
    %6223 = vperm.xlu0 %6222, %v5888
    %v6224 = vpop.permute.xlu0 %6223
    %6227 = vset.pattern.permute.xlu0 0
    %6228 = vperm.xlu0 %6227, %v5889
    %v6229 = vpop.permute.xlu0 %6228
    %6232 = vset.pattern.permute.xlu0 0
    %6233 = vperm.xlu0 %6232, %v5890
    %v6234 = vpop.permute.xlu0 %6233
    %6237 = vset.pattern.permute.xlu0 0
    %6238 = vperm.xlu0 %6237, %v5891
    %v6239 = vpop.permute.xlu0 %6238
    %6242 = vset.pattern.permute.xlu0 0
    %6243 = vperm.xlu0 %6242, %v5892
    %v6244 = vpop.permute.xlu0 %6243
    %6247 = vset.pattern.permute.xlu0 0
    %6248 = vperm.xlu0 %6247, %v5893
    %v6249 = vpop.permute.xlu0 %6248
    %6252 = vset.pattern.permute.xlu0 0
    %6253 = vperm.xlu0 %6252, %v5894
    %v6254 = vpop.permute.xlu0 %6253
    %6257 = vset.pattern.permute.xlu0 0
    %6258 = vperm.xlu0 %6257, %v5895
    %v6259 = vpop.permute.xlu0 %6258
    %6262 = vset.pattern.permute.xlu0 0
    %6263 = vperm.xlu0 %6262, %v5896
    %v6264 = vpop.permute.xlu0 %6263
    %6267 = vset.pattern.permute.xlu0 0
    %6268 = vperm.xlu0 %6267, %v5897
    %v6269 = vpop.permute.xlu0 %6268
    %6272 = vset.pattern.permute.xlu0 0
    %6273 = vperm.xlu0 %6272, %v5898
    %v6274 = vpop.permute.xlu0 %6273
    %6277 = vset.pattern.permute.xlu0 0
    %6278 = vperm.xlu0 %6277, %v5899
    %v6279 = vpop.permute.xlu0 %6278
    %6282 = vset.pattern.permute.xlu0 0
    %6283 = vperm.xlu0 %6282, %v5900
    %v6284 = vpop.permute.xlu0 %6283
    %6287 = vset.pattern.permute.xlu0 0
    %6288 = vperm.xlu0 %6287, %v5901
    %v6289 = vpop.permute.xlu0 %6288
    %6292 = vset.pattern.permute.xlu0 0
    %6293 = vperm.xlu0 %6292, %v5902
    %v6294 = vpop.permute.xlu0 %6293
    %6297 = vset.pattern.permute.xlu0 0
    %6298 = vperm.xlu0 %6297, %v5903
    %v6299 = vpop.permute.xlu0 %6298
    %6302 = vset.pattern.permute.xlu0 0
    %6303 = vperm.xlu0 %6302, %v5904
    %v6304 = vpop.permute.xlu0 %6303
    %6307 = vset.pattern.permute.xlu0 0
    %6308 = vperm.xlu0 %6307, %v5905
    %v6309 = vpop.permute.xlu0 %6308
    %6312 = vset.pattern.permute.xlu0 0
    %6313 = vperm.xlu0 %6312, %v5906
    %v6314 = vpop.permute.xlu0 %6313
    %6317 = vset.pattern.permute.xlu0 0
    %6318 = vperm.xlu0 %6317, %v5907
    %v6319 = vpop.permute.xlu0 %6318
    %6322 = vset.pattern.permute.xlu0 0
    %6323 = vperm.xlu0 %6322, %v5908
    %v6324 = vpop.permute.xlu0 %6323
    %6327 = vset.pattern.permute.xlu0 0
    %6328 = vperm.xlu0 %6327, %v5909
    %v6329 = vpop.permute.xlu0 %6328
    %6332 = vset.pattern.permute.xlu0 0
    %6333 = vperm.xlu0 %6332, %v5910
    %v6334 = vpop.permute.xlu0 %6333
    %6337 = vset.pattern.permute.xlu0 0
    %6338 = vperm.xlu0 %6337, %v5911
    %v6339 = vpop.permute.xlu0 %6338
    %6342 = vset.pattern.permute.xlu0 0
    %6343 = vperm.xlu0 %6342, %v5912
    %v6344 = vpop.permute.xlu0 %6343
    %6347 = vset.pattern.permute.xlu0 0
    %6348 = vperm.xlu0 %6347, %v5913
    %v6349 = vpop.permute.xlu0 %6348
    %6352 = vset.pattern.permute.xlu0 0
    %6353 = vperm.xlu0 %6352, %v5914
    %v6354 = vpop.permute.xlu0 %6353
    %6357 = vset.pattern.permute.xlu0 0
    %6358 = vperm.xlu0 %6357, %v5915
    %v6359 = vpop.permute.xlu0 %6358
    %6362 = vset.pattern.permute.xlu0 0
    %6363 = vperm.xlu0 %6362, %v5916
    %v6364 = vpop.permute.xlu0 %6363
    %6367 = vset.pattern.permute.xlu0 0
    %6368 = vperm.xlu0 %6367, %v5917
    %v6369 = vpop.permute.xlu0 %6368
    %6372 = vset.pattern.permute.xlu0 0
    %6373 = vperm.xlu0 %6372, %v5918
    %v6374 = vpop.permute.xlu0 %6373
    %6377 = vset.pattern.permute.xlu0 0
    %6378 = vperm.xlu0 %6377, %v5919
    %v6379 = vpop.permute.xlu0 %6378
    %6382 = vset.pattern.permute.xlu0 0
    %6383 = vperm.xlu0 %6382, %v5920
    %v6384 = vpop.permute.xlu0 %6383
    %6387 = vset.pattern.permute.xlu0 0
    %6388 = vperm.xlu0 %6387, %v5921
    %v6389 = vpop.permute.xlu0 %6388
    %6392 = vset.pattern.permute.xlu0 0
    %6393 = vperm.xlu0 %6392, %v5922
    %v6394 = vpop.permute.xlu0 %6393
    %6397 = vset.pattern.permute.xlu0 0
    %6398 = vperm.xlu0 %6397, %v5923
    %v6399 = vpop.permute.xlu0 %6398
    %6402 = vset.pattern.permute.xlu0 0
    %6403 = vperm.xlu0 %6402, %v5924
    %v6404 = vpop.permute.xlu0 %6403
    %6407 = vset.pattern.permute.xlu0 0
    %6408 = vperm.xlu0 %6407, %v5925
    %v6409 = vpop.permute.xlu0 %6408
    %6412 = vset.pattern.permute.xlu0 0
    %6413 = vperm.xlu0 %6412, %v5926
    %v6414 = vpop.permute.xlu0 %6413
    %6417 = vset.pattern.permute.xlu0 0
    %6418 = vperm.xlu0 %6417, %v5927
    %v6419 = vpop.permute.xlu0 %6418
    %6422 = vset.pattern.permute.xlu0 0
    %6423 = vperm.xlu0 %6422, %v5928
    %v6424 = vpop.permute.xlu0 %6423
    %6427 = vset.pattern.permute.xlu0 0
    %6428 = vperm.xlu0 %6427, %v5929
    %v6429 = vpop.permute.xlu0 %6428
    %6432 = vset.pattern.permute.xlu0 0
    %6433 = vperm.xlu0 %6432, %v5930
    %v6434 = vpop.permute.xlu0 %6433
    %6437 = vset.pattern.permute.xlu0 0
    %6438 = vperm.xlu0 %6437, %v5931
    %v6439 = vpop.permute.xlu0 %6438
    %6442 = vset.pattern.permute.xlu0 0
    %6443 = vperm.xlu0 %6442, %v5932
    %v6444 = vpop.permute.xlu0 %6443
    %6447 = vset.pattern.permute.xlu0 0
    %6448 = vperm.xlu0 %6447, %v5933
    %v6449 = vpop.permute.xlu0 %6448
    %6452 = vset.pattern.permute.xlu0 0
    %6453 = vperm.xlu0 %6452, %v5934
    %v6454 = vpop.permute.xlu0 %6453
    %6457 = vset.pattern.permute.xlu0 0
    %6458 = vperm.xlu0 %6457, %v5935
    %v6459 = vpop.permute.xlu0 %6458
    %6462 = vset.pattern.permute.xlu0 0
    %6463 = vperm.xlu0 %6462, %v5936
    %v6464 = vpop.permute.xlu0 %6463
    %6467 = vset.pattern.permute.xlu0 0
    %6468 = vperm.xlu0 %6467, %v5937
    %v6469 = vpop.permute.xlu0 %6468
    %6472 = vset.pattern.permute.xlu0 0
    %6473 = vperm.xlu0 %6472, %v5938
    %v6474 = vpop.permute.xlu0 %6473
    %6477 = vset.pattern.permute.xlu0 0
    %6478 = vperm.xlu0 %6477, %v5939
    %v6479 = vpop.permute.xlu0 %6478
    %6482 = vset.pattern.permute.xlu0 0
    %6483 = vperm.xlu0 %6482, %v5940
    %v6484 = vpop.permute.xlu0 %6483
    %6487 = vset.pattern.permute.xlu0 0
    %6488 = vperm.xlu0 %6487, %v5941
    %v6489 = vpop.permute.xlu0 %6488
    %6492 = vset.pattern.permute.xlu0 0
    %6493 = vperm.xlu0 %6492, %v5942
    %v6494 = vpop.permute.xlu0 %6493
    %6497 = vset.pattern.permute.xlu0 0
    %6498 = vperm.xlu0 %6497, %v5943
    %v6499 = vpop.permute.xlu0 %6498
    %6502 = vset.pattern.permute.xlu0 0
    %6503 = vperm.xlu0 %6502, %v5944
    %v6504 = vpop.permute.xlu0 %6503
    %6507 = vset.pattern.permute.xlu0 0
    %6508 = vperm.xlu0 %6507, %v5945
    %v6509 = vpop.permute.xlu0 %6508
    %v6512 = vsel %vm4485, %v5608, 0
    %v6515 = vsel %vm4485, %v5610, 0
    %v6518 = vsel %vm4485, %v5612, 0
    %v6521 = vsel %vm4485, %v5614, 0
    %v6524 = vsel %vm4485, %v5616, 0
    %v6527 = vsel %vm4485, %v5618, 0
    %v6530 = vsel %vm4485, %v5620, 0
    %v6533 = vsel %vm4485, %v5622, 0
    %v6536 = vsel %vm4485, %v5624, 0
    %v6539 = vsel %vm4485, %v5626, 0
    %v6542 = vsel %vm4485, %v5628, 0
    %v6545 = vsel %vm4485, %v5630, 0
    %v6548 = vsel %vm4485, %v5632, 0
    %v6551 = vsel %vm4485, %v5634, 0
    %v6554 = vsel %vm4485, %v5636, 0
    %v6557 = vsel %vm4485, %v5638, 0
    %v6560 = vsel %vm4485, %v5640, 0
    %v6563 = vsel %vm4485, %v5642, 0
    %v6566 = vsel %vm4485, %v5644, 0
    %v6569 = vsel %vm4485, %v5646, 0
    %v6572 = vsel %vm4485, %v5648, 0
    %v6575 = vsel %vm4485, %v5650, 0
    %v6578 = vsel %vm4485, %v5652, 0
    %v6581 = vsel %vm4485, %v5654, 0
    %v6584 = vsel %vm4485, %v5656, 0
    %v6587 = vsel %vm4485, %v5658, 0
    %v6590 = vsel %vm4485, %v5660, 0
    %v6593 = vsel %vm4485, %v5662, 0
    %v6596 = vsel %vm4485, %v5664, 0
    %v6599 = vsel %vm4485, %v5666, 0
    %v6602 = vsel %vm4485, %v5668, 0
    %v6605 = vsel %vm4485, %v5670, 0
    %v6608 = vsel %vm4485, %v5672, 0
    %v6611 = vsel %vm4485, %v5674, 0
    %v6614 = vsel %vm4485, %v5676, 0
    %v6617 = vsel %vm4485, %v5678, 0
    %v6620 = vsel %vm4485, %v5680, 0
    %v6623 = vsel %vm4485, %v5682, 0
    %v6626 = vsel %vm4485, %v5684, 0
    %v6629 = vsel %vm4485, %v5686, 0
    %v6632 = vsel %vm4485, %v5688, 0
    %v6635 = vsel %vm4485, %v5690, 0
    %v6638 = vsel %vm4485, %v5692, 0
    %v6641 = vsel %vm4485, %v5694, 0
    %v6644 = vsel %vm4485, %v5696, 0
    %v6647 = vsel %vm4485, %v5698, 0
    %v6650 = vsel %vm4485, %v5700, 0
    %v6653 = vsel %vm4485, %v5702, 0
    %v6656 = vsel %vm4485, %v5704, 0
    %v6659 = vsel %vm4485, %v5706, 0
    %v6662 = vsel %vm4485, %v5708, 0
    %v6665 = vsel %vm4485, %v5710, 0
    %v6668 = vsel %vm4485, %v5712, 0
    %v6671 = vsel %vm4485, %v5714, 0
    %v6674 = vsel %vm4485, %v5716, 0
    %v6677 = vsel %vm4485, %v5718, 0
    %v6680 = vsel %vm4485, %v5720, 0
    %v6683 = vsel %vm4485, %v5722, 0
    %v6686 = vsel %vm4485, %v5724, 0
    %v6689 = vsel %vm4485, %v5726, 0
    %v6692 = vsel %vm4485, %v5728, 0
    %v6695 = vsel %vm4485, %v5730, 0
    %v6698 = vsel %vm4485, %v5732, 0
    %v6701 = vsel %vm4485, %v5734, 0
    %v6704 = vsel %vm4485, %v5736, 0
    %v6707 = vsel %vm4485, %v5738, 0
    %v6710 = vsel %vm4485, %v5740, 0
    %v6713 = vsel %vm4485, %v5742, 0
    %v6716 = vsel %vm4485, %v5744, 0
    %v6719 = vsel %vm4485, %v5746, 0
    %v6722 = vsel %vm4485, %v5748, 0
    %v6725 = vsel %vm4485, %v5750, 0
    %v6728 = vsel %vm4485, %v5752, 0
    %v6731 = vsel %vm4485, %v5754, 0
    %v6734 = vsel %vm4485, %v5756, 0
    %v6737 = vsel %vm4485, %v5758, 0
    %v6740 = vsel %vm4485, %v5760, 0
    %v6743 = vsel %vm4485, %v5762, 0
    %v6746 = vsel %vm4485, %v5764, 0
    %v6749 = vsel %vm4485, %v5766, 0
    %v6752 = vsel %vm4485, %v5768, 0
    %v6755 = vsel %vm4485, %v5770, 0
    %v6758 = vsel %vm4485, %v5772, 0
    %v6761 = vsel %vm4485, %v5774, 0
    %v6764 = vsel %vm4485, %v5776, 0
    %v6767 = vsel %vm4485, %v5778, 0
    %v6770 = vsel %vm4485, %v5780, 0
    %v6773 = vsel %vm4485, %v5782, 0
    %v6776 = vsel %vm4485, %v5784, 0
    %v6779 = vsel %vm4485, %v5786, 0
    %v6782 = vsel %vm4485, %v5788, 0
    %v6785 = vsel %vm4485, %v5790, 0
    %v6788 = vsel %vm4485, %v5792, 0
    %v6791 = vsel %vm4485, %v5794, 0
    %v6794 = vsel %vm4485, %v5796, 0
    %v6797 = vsel %vm4485, %v5798, 0
    %v6800 = vsel %vm4485, %v5800, 0
    %v6803 = vsel %vm4485, %v5802, 0
    %v6806 = vsel %vm4485, %v5804, 0
    %v6809 = vsel %vm4485, %v5806, 0
    %v6812 = vsel %vm4485, %v5808, 0
    %v6815 = vsel %vm4485, %v5810, 0
    %v6818 = vsel %vm4485, %v5812, 0
    %v6821 = vsel %vm4485, %v5814, 0
    %v6824 = vsel %vm4485, %v5816, 0
    %v6827 = vsel %vm4485, %v5818, 0
    %v6830 = vsel %vm4485, %v5820, 0
    %v6833 = vsel %vm4485, %v5822, 0
    %v6836 = vsel %vm4485, %v5824, 0
    %v6839 = vsel %vm4485, %v5826, 0
    %v6842 = vsel %vm4485, %v5828, 0
    %v6845 = vsel %vm4485, %v5830, 0
    %v6848 = vsel %vm4485, %v5832, 0
    %6850 = vmatprep.subr.mxu0 0.0
    %6851 = vmatpush1.msra.mxu0 %v5582
    %6852 = vmatprep.subr.mxu0 0.0
    %6853 = vmatpush1.msra.mxu0 %v5583
    %6854 = vmatprep.subr.mxu0 0.0
    %6855 = vmatpush1.msra.mxu0 %v5584
    %6856 = vmatprep.subr.mxu0 0.0
    %6857 = vmatpush1.msra.mxu0 %v5585
    %6858 = vmatprep.subr.mxu0 0.0
    %6859 = vmatpush1.msra.mxu0 %v5586
    %6860 = vmatprep.subr.mxu0 0.0
    %6861 = vmatpush1.msra.mxu0 %v5587
    %6862 = vmatprep.subr.mxu0 0.0
    %6863 = vmatpush1.msra.mxu0 %v5588
    %6864 = vmatprep.subr.mxu0 0.0
    %6865 = vmatpush1.msra.mxu0 %v5589
    %6866 = vmatprep.subr.mxu0 0.0
    %6867 = vmatpush1.msra.mxu0 %v5590
    %6868 = vmatprep.subr.mxu0 0.0
    %6869 = vmatpush1.msra.mxu0 %v5591
    %6870 = vmatprep.subr.mxu0 0.0
    %6871 = vmatpush1.msra.mxu0 %v5592
    %6872 = vmatprep.subr.mxu0 0.0
    %6873 = vmatpush1.msra.mxu0 %v5593
    %6874 = vmatprep.subr.mxu0 0.0
    %6875 = vmatpush1.msra.mxu0 %v5594
    %6876 = vmatprep.subr.mxu0 0.0
    %6877 = vmatpush1.msra.mxu0 %v5595
    %6878 = vmatprep.subr.mxu0 0.0
    %6879 = vmatpush1.msra.mxu0 %v5596
    %6880 = vmatprep.subr.mxu0 0.0
    %6881 = vmatpush1.msra.mxu0 %v5597
    %6882 = vmatprep.subr.mxu0 0.0
    %6883 = vmatpush1.msra.mxu0 %v5598
    %6884 = vmatprep.subr.mxu0 0.0
    %6885 = vmatpush1.msra.mxu0 %v5599
    %6886 = vmatprep.subr.mxu0 0.0
    %6887 = vmatpush1.msra.mxu0 %v5600
    %6888 = vmatprep.subr.mxu0 0.0
    %6889 = vmatpush1.msra.mxu0 %v5601
    %6890 = vmatprep.subr.mxu0 0.0
    %6891 = vmatpush1.msra.mxu0 %v5602
    %6892 = vmatprep.subr.mxu0 0.0
    %6893 = vmatpush1.msra.mxu0 %v5603
    %6894 = vmatprep.subr.mxu0 0.0
    %6895 = vmatpush1.msra.mxu0 %v5604
    %6896 = vmatprep.subr.mxu0 0.0
    %6897 = vmatpush1.msra.mxu0 %v5605
    %6898 = vmatprep.subr.mxu0 0.0
    %6899 = vmatpush1.msra.mxu0 %v5606
    %6900 = vmatprep.subr.mxu0 0.0
    %6901 = vmatpush1.msra.mxu0 0.0
    %6902 = vmatprep.subr.mxu0 0.0
    %6903 = vmatpush1.msra.mxu0 0.0
    %6904 = vmatprep.subr.mxu0 0.0
    %6905 = vmatpush1.msra.mxu0 0.0
    %6906 = vmatprep.subr.mxu0 0.0
    %6907 = vmatpush1.msra.mxu0 0.0
    %6908 = vmatprep.subr.mxu0 0.0
    %6909 = vmatpush1.msra.mxu0 0.0
    %6910 = vmatprep.subr.mxu0 0.0
    %6911 = vmatpush1.msra.mxu0 0.0
    %6912 = vmatprep.subr.mxu0 0.0
    %6913 = vmatpush1.msra.mxu0 0.0
    %6914 = vmatprep.mubr.f32.mxu0 %v6512
    %6915 = vmatmul.mubr.f32.gmra.mrb[0].mxu0 %v5607
    %v6916 = vpop.f32.mrb[0].mxu0
    %v6917 = vadd.f32 %v5949, %v6916
    %v6918 = vpop.f32.mrb[0].mxu0
    %6919 = vmatprep.mubr.f32.mxu0 %v6515
    %6920 = vmatmul.mubr.f32.gmra.mrb[0].mxu0 %v5609
    %v6921 = vpop.f32.mrb[0].mxu0
    %v6922 = vadd.f32 %v5954, %v6921
    %v6923 = vpop.f32.mrb[0].mxu0
    %6924 = vmatprep.mubr.f32.mxu0 %v6518
    %6925 = vmatmul.mubr.f32.gmra.mrb[0].mxu0 %v5611
    %v6926 = vpop.f32.mrb[0].mxu0
    %v6927 = vadd.f32 %v5959, %v6926
    %v6928 = vpop.f32.mrb[0].mxu0
    %6929 = vmatprep.mubr.f32.mxu0 %v6521
    %6930 = vmatmul.mubr.f32.gmra.mrb[0].mxu0 %v5613
    %v6931 = vpop.f32.mrb[0].mxu0
    %v6932 = vadd.f32 %v5964, %v6931
    %v6933 = vpop.f32.mrb[0].mxu0
    %6934 = vmatprep.mubr.f32.mxu0 %v6524
    %6935 = vmatmul.mubr.f32.gmra.mrb[0].mxu0 %v5615
    %v6936 = vpop.f32.mrb[0].mxu0
    %v6937 = vadd.f32 %v5969, %v6936
    %v6938 = vpop.f32.mrb[0].mxu0
    %6939 = vmatprep.mubr.f32.mxu0 %v6527
    %6940 = vmatmul.mubr.f32.gmra.mrb[0].mxu0 %v5617
    %v6941 = vpop.f32.mrb[0].mxu0
    %v6942 = vadd.f32 %v5974, %v6941
    %v6943 = vpop.f32.mrb[0].mxu0
    %6944 = vmatprep.mubr.f32.mxu0 %v6530
    %6945 = vmatmul.mubr.f32.gmra.mrb[0].mxu0 %v5619
    %v6946 = vpop.f32.mrb[0].mxu0
    %v6947 = vadd.f32 %v5979, %v6946
    %v6948 = vpop.f32.mrb[0].mxu0
    %6949 = vmatprep.mubr.f32.mxu0 %v6533
    %6950 = vmatmul.mubr.f32.gmra.mrb[0].mxu0 %v5621
    %v6951 = vpop.f32.mrb[0].mxu0
    %v6952 = vadd.f32 %v5984, %v6951
    %v6953 = vpop.f32.mrb[0].mxu0
    %6954 = vmatprep.mubr.f32.mxu0 %v6536
    %6955 = vmatmul.mubr.f32.gmra.mrb[0].mxu0 %v5623
    %v6956 = vpop.f32.mrb[0].mxu0
    %v6957 = vadd.f32 %v5989, %v6956
    %v6958 = vpop.f32.mrb[0].mxu0
    %6959 = vmatprep.mubr.f32.mxu0 %v6539
    %6960 = vmatmul.mubr.f32.gmra.mrb[0].mxu0 %v5625
    %v6961 = vpop.f32.mrb[0].mxu0
    %v6962 = vadd.f32 %v5994, %v6961
    %v6963 = vpop.f32.mrb[0].mxu0
    %6964 = vmatprep.mubr.f32.mxu0 %v6542
    %6965 = vmatmul.mubr.f32.gmra.mrb[0].mxu0 %v5627
    %v6966 = vpop.f32.mrb[0].mxu0
    %v6967 = vadd.f32 %v5999, %v6966
    %v6968 = vpop.f32.mrb[0].mxu0
    %6969 = vmatprep.mubr.f32.mxu0 %v6545
    %6970 = vmatmul.mubr.f32.gmra.mrb[0].mxu0 %v5629
    %v6971 = vpop.f32.mrb[0].mxu0
    %v6972 = vadd.f32 %v6004, %v6971
    %v6973 = vpop.f32.mrb[0].mxu0
    %6974 = vmatprep.mubr.f32.mxu0 %v6548
    %6975 = vmatmul.mubr.f32.gmra.mrb[0].mxu0 %v5631
    %v6976 = vpop.f32.mrb[0].mxu0
    %v6977 = vadd.f32 %v6009, %v6976
    %v6978 = vpop.f32.mrb[0].mxu0
    %6979 = vmatprep.mubr.f32.mxu0 %v6551
    %6980 = vmatmul.mubr.f32.gmra.mrb[0].mxu0 %v5633
    %v6981 = vpop.f32.mrb[0].mxu0
    %v6982 = vadd.f32 %v6014, %v6981
    %v6983 = vpop.f32.mrb[0].mxu0
    %6984 = vmatprep.mubr.f32.mxu0 %v6554
    %6985 = vmatmul.mubr.f32.gmra.mrb[0].mxu0 %v5635
    %v6986 = vpop.f32.mrb[0].mxu0
    %v6987 = vadd.f32 %v6019, %v6986
    %v6988 = vpop.f32.mrb[0].mxu0
    %6989 = vmatprep.mubr.f32.mxu0 %v6557
    %6990 = vmatmul.mubr.f32.gmra.mrb[0].mxu0 %v5637
    %v6991 = vpop.f32.mrb[0].mxu0
    %v6992 = vadd.f32 %v6024, %v6991
    %v6993 = vpop.f32.mrb[0].mxu0
    %6994 = vmatprep.mubr.f32.mxu0 %v6560
    %6995 = vmatmul.mubr.f32.gmra.mrb[0].mxu0 %v5639
    %v6996 = vpop.f32.mrb[0].mxu0
    %v6997 = vadd.f32 %v6029, %v6996
    %v6998 = vpop.f32.mrb[0].mxu0
    %6999 = vmatprep.mubr.f32.mxu0 %v6563
    %7000 = vmatmul.mubr.f32.gmra.mrb[0].mxu0 %v5641
    %v7001 = vpop.f32.mrb[0].mxu0
    %v7002 = vadd.f32 %v6034, %v7001
    %v7003 = vpop.f32.mrb[0].mxu0
    %7004 = vmatprep.mubr.f32.mxu0 %v6566
    %7005 = vmatmul.mubr.f32.gmra.mrb[0].mxu0 %v5643
    %v7006 = vpop.f32.mrb[0].mxu0
    %v7007 = vadd.f32 %v6039, %v7006
    %v7008 = vpop.f32.mrb[0].mxu0
    %7009 = vmatprep.mubr.f32.mxu0 %v6569
    %7010 = vmatmul.mubr.f32.gmra.mrb[0].mxu0 %v5645
    %v7011 = vpop.f32.mrb[0].mxu0
    %v7012 = vadd.f32 %v6044, %v7011
    %v7013 = vpop.f32.mrb[0].mxu0
    %7014 = vmatprep.mubr.f32.mxu0 %v6572
    %7015 = vmatmul.mubr.f32.gmra.mrb[0].mxu0 %v5647
    %v7016 = vpop.f32.mrb[0].mxu0
    %v7017 = vadd.f32 %v6049, %v7016
    %v7018 = vpop.f32.mrb[0].mxu0
    %7019 = vmatprep.mubr.f32.mxu0 %v6575
    %7020 = vmatmul.mubr.f32.gmra.mrb[0].mxu0 %v5649
    %v7021 = vpop.f32.mrb[0].mxu0
    %v7022 = vadd.f32 %v6054, %v7021
    %v7023 = vpop.f32.mrb[0].mxu0
    %7024 = vmatprep.mubr.f32.mxu0 %v6578
    %7025 = vmatmul.mubr.f32.gmra.mrb[0].mxu0 %v5651
    %v7026 = vpop.f32.mrb[0].mxu0
    %v7027 = vadd.f32 %v6059, %v7026
    %v7028 = vpop.f32.mrb[0].mxu0
    %7029 = vmatprep.mubr.f32.mxu0 %v6581
    %7030 = vmatmul.mubr.f32.gmra.mrb[0].mxu0 %v5653
    %v7031 = vpop.f32.mrb[0].mxu0
    %v7032 = vadd.f32 %v6064, %v7031
    %v7033 = vpop.f32.mrb[0].mxu0
    %7034 = vmatprep.mubr.f32.mxu0 %v6584
    %7035 = vmatmul.mubr.f32.gmra.mrb[0].mxu0 %v5655
    %v7036 = vpop.f32.mrb[0].mxu0
    %v7037 = vadd.f32 %v6069, %v7036
    %v7038 = vpop.f32.mrb[0].mxu0
    %7039 = vmatprep.mubr.f32.mxu0 %v6587
    %7040 = vmatmul.mubr.f32.gmra.mrb[0].mxu0 %v5657
    %v7041 = vpop.f32.mrb[0].mxu0
    %v7042 = vadd.f32 %v6074, %v7041
    %v7043 = vpop.f32.mrb[0].mxu0
    %7044 = vmatprep.mubr.f32.mxu0 %v6590
    %7045 = vmatmul.mubr.f32.gmra.mrb[0].mxu0 %v5659
    %v7046 = vpop.f32.mrb[0].mxu0
    %v7047 = vadd.f32 %v6079, %v7046
    %v7048 = vpop.f32.mrb[0].mxu0
    %7049 = vmatprep.mubr.f32.mxu0 %v6593
    %7050 = vmatmul.mubr.f32.gmra.mrb[0].mxu0 %v5661
    %v7051 = vpop.f32.mrb[0].mxu0
    %v7052 = vadd.f32 %v6084, %v7051
    %v7053 = vpop.f32.mrb[0].mxu0
    %7054 = vmatprep.mubr.f32.mxu0 %v6596
    %7055 = vmatmul.mubr.f32.gmra.mrb[0].mxu0 %v5663
    %v7056 = vpop.f32.mrb[0].mxu0
    %v7057 = vadd.f32 %v6089, %v7056
    %v7058 = vpop.f32.mrb[0].mxu0
    %7059 = vmatprep.mubr.f32.mxu0 %v6599
    %7060 = vmatmul.mubr.f32.gmra.mrb[0].mxu0 %v5665
    %v7061 = vpop.f32.mrb[0].mxu0
    %v7062 = vadd.f32 %v6094, %v7061
    %v7063 = vpop.f32.mrb[0].mxu0
    %7064 = vmatprep.mubr.f32.mxu0 %v6602
    %7065 = vmatmul.mubr.f32.gmra.mrb[0].mxu0 %v5667
    %v7066 = vpop.f32.mrb[0].mxu0
    %v7067 = vadd.f32 %v6099, %v7066
    %v7068 = vpop.f32.mrb[0].mxu0
    %7069 = vmatprep.mubr.f32.mxu0 %v6605
    %7070 = vmatmul.mubr.f32.gmra.mrb[0].mxu0 %v5669
    %v7071 = vpop.f32.mrb[0].mxu0
    %v7072 = vadd.f32 %v6104, %v7071
    %v7073 = vpop.f32.mrb[0].mxu0
    %7074 = vmatprep.mubr.f32.mxu0 %v6608
    %7075 = vmatmul.mubr.f32.gmra.mrb[0].mxu0 %v5671
    %v7076 = vpop.f32.mrb[0].mxu0
    %v7077 = vadd.f32 %v6109, %v7076
    %v7078 = vpop.f32.mrb[0].mxu0
    %7079 = vmatprep.mubr.f32.mxu0 %v6611
    %7080 = vmatmul.mubr.f32.gmra.mrb[0].mxu0 %v5673
    %v7081 = vpop.f32.mrb[0].mxu0
    %v7082 = vadd.f32 %v6114, %v7081
    %v7083 = vpop.f32.mrb[0].mxu0
    %7084 = vmatprep.mubr.f32.mxu0 %v6614
    %7085 = vmatmul.mubr.f32.gmra.mrb[0].mxu0 %v5675
    %v7086 = vpop.f32.mrb[0].mxu0
    %v7087 = vadd.f32 %v6119, %v7086
    %v7088 = vpop.f32.mrb[0].mxu0
    %7089 = vmatprep.mubr.f32.mxu0 %v6617
    %7090 = vmatmul.mubr.f32.gmra.mrb[0].mxu0 %v5677
    %v7091 = vpop.f32.mrb[0].mxu0
    %v7092 = vadd.f32 %v6124, %v7091
    %v7093 = vpop.f32.mrb[0].mxu0
    %7094 = vmatprep.mubr.f32.mxu0 %v6620
    %7095 = vmatmul.mubr.f32.gmra.mrb[0].mxu0 %v5679
    %v7096 = vpop.f32.mrb[0].mxu0
    %v7097 = vadd.f32 %v6129, %v7096
    %v7098 = vpop.f32.mrb[0].mxu0
    %7099 = vmatprep.mubr.f32.mxu0 %v6623
    %7100 = vmatmul.mubr.f32.gmra.mrb[0].mxu0 %v5681
    %v7101 = vpop.f32.mrb[0].mxu0
    %v7102 = vadd.f32 %v6134, %v7101
    %v7103 = vpop.f32.mrb[0].mxu0
    %7104 = vmatprep.mubr.f32.mxu0 %v6626
    %7105 = vmatmul.mubr.f32.gmra.mrb[0].mxu0 %v5683
    %v7106 = vpop.f32.mrb[0].mxu0
    %v7107 = vadd.f32 %v6139, %v7106
    %v7108 = vpop.f32.mrb[0].mxu0
    %7109 = vmatprep.mubr.f32.mxu0 %v6629
    %7110 = vmatmul.mubr.f32.gmra.mrb[0].mxu0 %v5685
    %v7111 = vpop.f32.mrb[0].mxu0
    %v7112 = vadd.f32 %v6144, %v7111
    %v7113 = vpop.f32.mrb[0].mxu0
    %7114 = vmatprep.mubr.f32.mxu0 %v6632
    %7115 = vmatmul.mubr.f32.gmra.mrb[0].mxu0 %v5687
    %v7116 = vpop.f32.mrb[0].mxu0
    %v7117 = vadd.f32 %v6149, %v7116
    %v7118 = vpop.f32.mrb[0].mxu0
    %7119 = vmatprep.mubr.f32.mxu0 %v6635
    %7120 = vmatmul.mubr.f32.gmra.mrb[0].mxu0 %v5689
    %v7121 = vpop.f32.mrb[0].mxu0
    %v7122 = vadd.f32 %v6154, %v7121
    %v7123 = vpop.f32.mrb[0].mxu0
    %7124 = vmatprep.mubr.f32.mxu0 %v6638
    %7125 = vmatmul.mubr.f32.gmra.mrb[0].mxu0 %v5691
    %v7126 = vpop.f32.mrb[0].mxu0
    %v7127 = vadd.f32 %v6159, %v7126
    %v7128 = vpop.f32.mrb[0].mxu0
    %7129 = vmatprep.mubr.f32.mxu0 %v6641
    %7130 = vmatmul.mubr.f32.gmra.mrb[0].mxu0 %v5693
    %v7131 = vpop.f32.mrb[0].mxu0
    %v7132 = vadd.f32 %v6164, %v7131
    %v7133 = vpop.f32.mrb[0].mxu0
    %7134 = vmatprep.mubr.f32.mxu0 %v6644
    %7135 = vmatmul.mubr.f32.gmra.mrb[0].mxu0 %v5695
    %v7136 = vpop.f32.mrb[0].mxu0
    %v7137 = vadd.f32 %v6169, %v7136
    %v7138 = vpop.f32.mrb[0].mxu0
    %7139 = vmatprep.mubr.f32.mxu0 %v6647
    %7140 = vmatmul.mubr.f32.gmra.mrb[0].mxu0 %v5697
    %v7141 = vpop.f32.mrb[0].mxu0
    %v7142 = vadd.f32 %v6174, %v7141
    %v7143 = vpop.f32.mrb[0].mxu0
    %7144 = vmatprep.mubr.f32.mxu0 %v6650
    %7145 = vmatmul.mubr.f32.gmra.mrb[0].mxu0 %v5699
    %v7146 = vpop.f32.mrb[0].mxu0
    %v7147 = vadd.f32 %v6179, %v7146
    %v7148 = vpop.f32.mrb[0].mxu0
    %7149 = vmatprep.mubr.f32.mxu0 %v6653
    %7150 = vmatmul.mubr.f32.gmra.mrb[0].mxu0 %v5701
    %v7151 = vpop.f32.mrb[0].mxu0
    %v7152 = vadd.f32 %v6184, %v7151
    %v7153 = vpop.f32.mrb[0].mxu0
    %7154 = vmatprep.mubr.f32.mxu0 %v6656
    %7155 = vmatmul.mubr.f32.gmra.mrb[0].mxu0 %v5703
    %v7156 = vpop.f32.mrb[0].mxu0
    %v7157 = vadd.f32 %v6189, %v7156
    %v7158 = vpop.f32.mrb[0].mxu0
    %7159 = vmatprep.mubr.f32.mxu0 %v6659
    %7160 = vmatmul.mubr.f32.gmra.mrb[0].mxu0 %v5705
    %v7161 = vpop.f32.mrb[0].mxu0
    %v7162 = vadd.f32 %v6194, %v7161
    %v7163 = vpop.f32.mrb[0].mxu0
    %7164 = vmatprep.mubr.f32.mxu0 %v6662
    %7165 = vmatmul.mubr.f32.gmra.mrb[0].mxu0 %v5707
    %v7166 = vpop.f32.mrb[0].mxu0
    %v7167 = vadd.f32 %v6199, %v7166
    %v7168 = vpop.f32.mrb[0].mxu0
    %7169 = vmatprep.mubr.f32.mxu0 %v6665
    %7170 = vmatmul.mubr.f32.gmra.mrb[0].mxu0 %v5709
    %v7171 = vpop.f32.mrb[0].mxu0
    %v7172 = vadd.f32 %v6204, %v7171
    %v7173 = vpop.f32.mrb[0].mxu0
    %7174 = vmatprep.mubr.f32.mxu0 %v6668
    %7175 = vmatmul.mubr.f32.gmra.mrb[0].mxu0 %v5711
    %v7176 = vpop.f32.mrb[0].mxu0
    %v7177 = vadd.f32 %v6209, %v7176
    %v7178 = vpop.f32.mrb[0].mxu0
    %7179 = vmatprep.mubr.f32.mxu0 %v6671
    %7180 = vmatmul.mubr.f32.gmra.mrb[0].mxu0 %v5713
    %v7181 = vpop.f32.mrb[0].mxu0
    %v7182 = vadd.f32 %v6214, %v7181
    %v7183 = vpop.f32.mrb[0].mxu0
    %7184 = vmatprep.mubr.f32.mxu0 %v6674
    %7185 = vmatmul.mubr.f32.gmra.mrb[0].mxu0 %v5715
    %v7186 = vpop.f32.mrb[0].mxu0
    %v7187 = vadd.f32 %v6219, %v7186
    %v7188 = vpop.f32.mrb[0].mxu0
    %7189 = vmatprep.mubr.f32.mxu0 %v6677
    %7190 = vmatmul.mubr.f32.gmra.mrb[0].mxu0 %v5717
    %v7191 = vpop.f32.mrb[0].mxu0
    %v7192 = vadd.f32 %v6224, %v7191
    %v7193 = vpop.f32.mrb[0].mxu0
    %7194 = vmatprep.mubr.f32.mxu0 %v6680
    %7195 = vmatmul.mubr.f32.gmra.mrb[0].mxu0 %v5719
    %v7196 = vpop.f32.mrb[0].mxu0
    %v7197 = vadd.f32 %v6229, %v7196
    %v7198 = vpop.f32.mrb[0].mxu0
    %7199 = vmatprep.mubr.f32.mxu0 %v6683
    %7200 = vmatmul.mubr.f32.gmra.mrb[0].mxu0 %v5721
    %v7201 = vpop.f32.mrb[0].mxu0
    %v7202 = vadd.f32 %v6234, %v7201
    %v7203 = vpop.f32.mrb[0].mxu0
    %7204 = vmatprep.mubr.f32.mxu0 %v6686
    %7205 = vmatmul.mubr.f32.gmra.mrb[0].mxu0 %v5723
    %v7206 = vpop.f32.mrb[0].mxu0
    %v7207 = vadd.f32 %v6239, %v7206
    %v7208 = vpop.f32.mrb[0].mxu0
    %7209 = vmatprep.mubr.f32.mxu0 %v6689
    %7210 = vmatmul.mubr.f32.gmra.mrb[0].mxu0 %v5725
    %v7211 = vpop.f32.mrb[0].mxu0
    %v7212 = vadd.f32 %v6244, %v7211
    %v7213 = vpop.f32.mrb[0].mxu0
    %7214 = vmatprep.mubr.f32.mxu0 %v6692
    %7215 = vmatmul.mubr.f32.gmra.mrb[0].mxu0 %v5727
    %v7216 = vpop.f32.mrb[0].mxu0
    %v7217 = vadd.f32 %v6249, %v7216
    %v7218 = vpop.f32.mrb[0].mxu0
    %7219 = vmatprep.mubr.f32.mxu0 %v6695
    %7220 = vmatmul.mubr.f32.gmra.mrb[0].mxu0 %v5729
    %v7221 = vpop.f32.mrb[0].mxu0
    %v7222 = vadd.f32 %v6254, %v7221
    %v7223 = vpop.f32.mrb[0].mxu0
    %7224 = vmatprep.mubr.f32.mxu0 %v6698
    %7225 = vmatmul.mubr.f32.gmra.mrb[0].mxu0 %v5731
    %v7226 = vpop.f32.mrb[0].mxu0
    %v7227 = vadd.f32 %v6259, %v7226
    %v7228 = vpop.f32.mrb[0].mxu0
    %7229 = vmatprep.mubr.f32.mxu0 %v6701
    %7230 = vmatmul.mubr.f32.gmra.mrb[0].mxu0 %v5733
    %v7231 = vpop.f32.mrb[0].mxu0
    %v7232 = vadd.f32 %v6264, %v7231
    %v7233 = vpop.f32.mrb[0].mxu0
    %7234 = vmatprep.mubr.f32.mxu0 %v6704
    %7235 = vmatmul.mubr.f32.gmra.mrb[0].mxu0 %v5735
    %v7236 = vpop.f32.mrb[0].mxu0
    %v7237 = vadd.f32 %v6269, %v7236
    %v7238 = vpop.f32.mrb[0].mxu0
    %7239 = vmatprep.mubr.f32.mxu0 %v6707
    %7240 = vmatmul.mubr.f32.gmra.mrb[0].mxu0 %v5737
    %v7241 = vpop.f32.mrb[0].mxu0
    %v7242 = vadd.f32 %v6274, %v7241
    %v7243 = vpop.f32.mrb[0].mxu0
    %7244 = vmatprep.mubr.f32.mxu0 %v6710
    %7245 = vmatmul.mubr.f32.gmra.mrb[0].mxu0 %v5739
    %v7246 = vpop.f32.mrb[0].mxu0
    %v7247 = vadd.f32 %v6279, %v7246
    %v7248 = vpop.f32.mrb[0].mxu0
    %7249 = vmatprep.mubr.f32.mxu0 %v6713
    %7250 = vmatmul.mubr.f32.gmra.mrb[0].mxu0 %v5741
    %v7251 = vpop.f32.mrb[0].mxu0
    %v7252 = vadd.f32 %v6284, %v7251
    %v7253 = vpop.f32.mrb[0].mxu0
    %7254 = vmatprep.mubr.f32.mxu0 %v6716
    %7255 = vmatmul.mubr.f32.gmra.mrb[0].mxu0 %v5743
    %v7256 = vpop.f32.mrb[0].mxu0
    %v7257 = vadd.f32 %v6289, %v7256
    %v7258 = vpop.f32.mrb[0].mxu0
    %7259 = vmatprep.mubr.f32.mxu0 %v6719
    %7260 = vmatmul.mubr.f32.gmra.mrb[0].mxu0 %v5745
    %v7261 = vpop.f32.mrb[0].mxu0
    %v7262 = vadd.f32 %v6294, %v7261
    %v7263 = vpop.f32.mrb[0].mxu0
    %7264 = vmatprep.mubr.f32.mxu0 %v6722
    %7265 = vmatmul.mubr.f32.gmra.mrb[0].mxu0 %v5747
    %v7266 = vpop.f32.mrb[0].mxu0
    %v7267 = vadd.f32 %v6299, %v7266
    %v7268 = vpop.f32.mrb[0].mxu0
    %7269 = vmatprep.mubr.f32.mxu0 %v6725
    %7270 = vmatmul.mubr.f32.gmra.mrb[0].mxu0 %v5749
    %v7271 = vpop.f32.mrb[0].mxu0
    %v7272 = vadd.f32 %v6304, %v7271
    %v7273 = vpop.f32.mrb[0].mxu0
    %7274 = vmatprep.mubr.f32.mxu0 %v6728
    %7275 = vmatmul.mubr.f32.gmra.mrb[0].mxu0 %v5751
    %v7276 = vpop.f32.mrb[0].mxu0
    %v7277 = vadd.f32 %v6309, %v7276
    %v7278 = vpop.f32.mrb[0].mxu0
    %7279 = vmatprep.mubr.f32.mxu0 %v6731
    %7280 = vmatmul.mubr.f32.gmra.mrb[0].mxu0 %v5753
    %v7281 = vpop.f32.mrb[0].mxu0
    %v7282 = vadd.f32 %v6314, %v7281
    %v7283 = vpop.f32.mrb[0].mxu0
    %7284 = vmatprep.mubr.f32.mxu0 %v6734
    %7285 = vmatmul.mubr.f32.gmra.mrb[0].mxu0 %v5755
    %v7286 = vpop.f32.mrb[0].mxu0
    %v7287 = vadd.f32 %v6319, %v7286
    %v7288 = vpop.f32.mrb[0].mxu0
    %7289 = vmatprep.mubr.f32.mxu0 %v6737
    %7290 = vmatmul.mubr.f32.gmra.mrb[0].mxu0 %v5757
    %v7291 = vpop.f32.mrb[0].mxu0
    %v7292 = vadd.f32 %v6324, %v7291
    %v7293 = vpop.f32.mrb[0].mxu0
    %7294 = vmatprep.mubr.f32.mxu0 %v6740
    %7295 = vmatmul.mubr.f32.gmra.mrb[0].mxu0 %v5759
    %v7296 = vpop.f32.mrb[0].mxu0
    %v7297 = vadd.f32 %v6329, %v7296
    %v7298 = vpop.f32.mrb[0].mxu0
    %7299 = vmatprep.mubr.f32.mxu0 %v6743
    %7300 = vmatmul.mubr.f32.gmra.mrb[0].mxu0 %v5761
    %v7301 = vpop.f32.mrb[0].mxu0
    %v7302 = vadd.f32 %v6334, %v7301
    %v7303 = vpop.f32.mrb[0].mxu0
    %7304 = vmatprep.mubr.f32.mxu0 %v6746
    %7305 = vmatmul.mubr.f32.gmra.mrb[0].mxu0 %v5763
    %v7306 = vpop.f32.mrb[0].mxu0
    %v7307 = vadd.f32 %v6339, %v7306
    %v7308 = vpop.f32.mrb[0].mxu0
    %7309 = vmatprep.mubr.f32.mxu0 %v6749
    %7310 = vmatmul.mubr.f32.gmra.mrb[0].mxu0 %v5765
    %v7311 = vpop.f32.mrb[0].mxu0
    %v7312 = vadd.f32 %v6344, %v7311
    %v7313 = vpop.f32.mrb[0].mxu0
    %7314 = vmatprep.mubr.f32.mxu0 %v6752
    %7315 = vmatmul.mubr.f32.gmra.mrb[0].mxu0 %v5767
    %v7316 = vpop.f32.mrb[0].mxu0
    %v7317 = vadd.f32 %v6349, %v7316
    %v7318 = vpop.f32.mrb[0].mxu0
    %7319 = vmatprep.mubr.f32.mxu0 %v6755
    %7320 = vmatmul.mubr.f32.gmra.mrb[0].mxu0 %v5769
    %v7321 = vpop.f32.mrb[0].mxu0
    %v7322 = vadd.f32 %v6354, %v7321
    %v7323 = vpop.f32.mrb[0].mxu0
    %7324 = vmatprep.mubr.f32.mxu0 %v6758
    %7325 = vmatmul.mubr.f32.gmra.mrb[0].mxu0 %v5771
    %v7326 = vpop.f32.mrb[0].mxu0
    %v7327 = vadd.f32 %v6359, %v7326
    %v7328 = vpop.f32.mrb[0].mxu0
    %7329 = vmatprep.mubr.f32.mxu0 %v6761
    %7330 = vmatmul.mubr.f32.gmra.mrb[0].mxu0 %v5773
    %v7331 = vpop.f32.mrb[0].mxu0
    %v7332 = vadd.f32 %v6364, %v7331
    %v7333 = vpop.f32.mrb[0].mxu0
    %7334 = vmatprep.mubr.f32.mxu0 %v6764
    %7335 = vmatmul.mubr.f32.gmra.mrb[0].mxu0 %v5775
    %v7336 = vpop.f32.mrb[0].mxu0
    %v7337 = vadd.f32 %v6369, %v7336
    %v7338 = vpop.f32.mrb[0].mxu0
    %7339 = vmatprep.mubr.f32.mxu0 %v6767
    %7340 = vmatmul.mubr.f32.gmra.mrb[0].mxu0 %v5777
    %v7341 = vpop.f32.mrb[0].mxu0
    %v7342 = vadd.f32 %v6374, %v7341
    %v7343 = vpop.f32.mrb[0].mxu0
    %7344 = vmatprep.mubr.f32.mxu0 %v6770
    %7345 = vmatmul.mubr.f32.gmra.mrb[0].mxu0 %v5779
    %v7346 = vpop.f32.mrb[0].mxu0
    %v7347 = vadd.f32 %v6379, %v7346
    %v7348 = vpop.f32.mrb[0].mxu0
    %7349 = vmatprep.mubr.f32.mxu0 %v6773
    %7350 = vmatmul.mubr.f32.gmra.mrb[0].mxu0 %v5781
    %v7351 = vpop.f32.mrb[0].mxu0
    %v7352 = vadd.f32 %v6384, %v7351
    %v7353 = vpop.f32.mrb[0].mxu0
    %7354 = vmatprep.mubr.f32.mxu0 %v6776
    %7355 = vmatmul.mubr.f32.gmra.mrb[0].mxu0 %v5783
    %v7356 = vpop.f32.mrb[0].mxu0
    %v7357 = vadd.f32 %v6389, %v7356
    %v7358 = vpop.f32.mrb[0].mxu0
    %7359 = vmatprep.mubr.f32.mxu0 %v6779
    %7360 = vmatmul.mubr.f32.gmra.mrb[0].mxu0 %v5785
    %v7361 = vpop.f32.mrb[0].mxu0
    %v7362 = vadd.f32 %v6394, %v7361
    %v7363 = vpop.f32.mrb[0].mxu0
    %7364 = vmatprep.mubr.f32.mxu0 %v6782
    %7365 = vmatmul.mubr.f32.gmra.mrb[0].mxu0 %v5787
    %v7366 = vpop.f32.mrb[0].mxu0
    %v7367 = vadd.f32 %v6399, %v7366
    %v7368 = vpop.f32.mrb[0].mxu0
    %7369 = vmatprep.mubr.f32.mxu0 %v6785
    %7370 = vmatmul.mubr.f32.gmra.mrb[0].mxu0 %v5789
    %v7371 = vpop.f32.mrb[0].mxu0
    %v7372 = vadd.f32 %v6404, %v7371
    %v7373 = vpop.f32.mrb[0].mxu0
    %7374 = vmatprep.mubr.f32.mxu0 %v6788
    %7375 = vmatmul.mubr.f32.gmra.mrb[0].mxu0 %v5791
    %v7376 = vpop.f32.mrb[0].mxu0
    %v7377 = vadd.f32 %v6409, %v7376
    %v7378 = vpop.f32.mrb[0].mxu0
    %7379 = vmatprep.mubr.f32.mxu0 %v6791
    %7380 = vmatmul.mubr.f32.gmra.mrb[0].mxu0 %v5793
    %v7381 = vpop.f32.mrb[0].mxu0
    %v7382 = vadd.f32 %v6414, %v7381
    %v7383 = vpop.f32.mrb[0].mxu0
    %7384 = vmatprep.mubr.f32.mxu0 %v6794
    %7385 = vmatmul.mubr.f32.gmra.mrb[0].mxu0 %v5795
    %v7386 = vpop.f32.mrb[0].mxu0
    %v7387 = vadd.f32 %v6419, %v7386
    %v7388 = vpop.f32.mrb[0].mxu0
    %7389 = vmatprep.mubr.f32.mxu0 %v6797
    %7390 = vmatmul.mubr.f32.gmra.mrb[0].mxu0 %v5797
    %v7391 = vpop.f32.mrb[0].mxu0
    %v7392 = vadd.f32 %v6424, %v7391
    %v7393 = vpop.f32.mrb[0].mxu0
    %7394 = vmatprep.mubr.f32.mxu0 %v6800
    %7395 = vmatmul.mubr.f32.gmra.mrb[0].mxu0 %v5799
    %v7396 = vpop.f32.mrb[0].mxu0
    %v7397 = vadd.f32 %v6429, %v7396
    %v7398 = vpop.f32.mrb[0].mxu0
    %7399 = vmatprep.mubr.f32.mxu0 %v6803
    %7400 = vmatmul.mubr.f32.gmra.mrb[0].mxu0 %v5801
    %v7401 = vpop.f32.mrb[0].mxu0
    %v7402 = vadd.f32 %v6434, %v7401
    %v7403 = vpop.f32.mrb[0].mxu0
    %7404 = vmatprep.mubr.f32.mxu0 %v6806
    %7405 = vmatmul.mubr.f32.gmra.mrb[0].mxu0 %v5803
    %v7406 = vpop.f32.mrb[0].mxu0
    %v7407 = vadd.f32 %v6439, %v7406
    %v7408 = vpop.f32.mrb[0].mxu0
    %7409 = vmatprep.mubr.f32.mxu0 %v6809
    %7410 = vmatmul.mubr.f32.gmra.mrb[0].mxu0 %v5805
    %v7411 = vpop.f32.mrb[0].mxu0
    %v7412 = vadd.f32 %v6444, %v7411
    %v7413 = vpop.f32.mrb[0].mxu0
    %7414 = vmatprep.mubr.f32.mxu0 %v6812
    %7415 = vmatmul.mubr.f32.gmra.mrb[0].mxu0 %v5807
    %v7416 = vpop.f32.mrb[0].mxu0
    %v7417 = vadd.f32 %v6449, %v7416
    %v7418 = vpop.f32.mrb[0].mxu0
    %7419 = vmatprep.mubr.f32.mxu0 %v6815
    %7420 = vmatmul.mubr.f32.gmra.mrb[0].mxu0 %v5809
    %v7421 = vpop.f32.mrb[0].mxu0
    %v7422 = vadd.f32 %v6454, %v7421
    %v7423 = vpop.f32.mrb[0].mxu0
    %7424 = vmatprep.mubr.f32.mxu0 %v6818
    %7425 = vmatmul.mubr.f32.gmra.mrb[0].mxu0 %v5811
    %v7426 = vpop.f32.mrb[0].mxu0
    %v7427 = vadd.f32 %v6459, %v7426
    %v7428 = vpop.f32.mrb[0].mxu0
    %7429 = vmatprep.mubr.f32.mxu0 %v6821
    %7430 = vmatmul.mubr.f32.gmra.mrb[0].mxu0 %v5813
    %v7431 = vpop.f32.mrb[0].mxu0
    %v7432 = vadd.f32 %v6464, %v7431
    %v7433 = vpop.f32.mrb[0].mxu0
    %7434 = vmatprep.mubr.f32.mxu0 %v6824
    %7435 = vmatmul.mubr.f32.gmra.mrb[0].mxu0 %v5815
    %v7436 = vpop.f32.mrb[0].mxu0
    %v7437 = vadd.f32 %v6469, %v7436
    %v7438 = vpop.f32.mrb[0].mxu0
    %7439 = vmatprep.mubr.f32.mxu0 %v6827
    %7440 = vmatmul.mubr.f32.gmra.mrb[0].mxu0 %v5817
    %v7441 = vpop.f32.mrb[0].mxu0
    %v7442 = vadd.f32 %v6474, %v7441
    %v7443 = vpop.f32.mrb[0].mxu0
    %7444 = vmatprep.mubr.f32.mxu0 %v6830
    %7445 = vmatmul.mubr.f32.gmra.mrb[0].mxu0 %v5819
    %v7446 = vpop.f32.mrb[0].mxu0
    %v7447 = vadd.f32 %v6479, %v7446
    %v7448 = vpop.f32.mrb[0].mxu0
    %7449 = vmatprep.mubr.f32.mxu0 %v6833
    %7450 = vmatmul.mubr.f32.gmra.mrb[0].mxu0 %v5821
    %v7451 = vpop.f32.mrb[0].mxu0
    %v7452 = vadd.f32 %v6484, %v7451
    %v7453 = vpop.f32.mrb[0].mxu0
    %7454 = vmatprep.mubr.f32.mxu0 %v6836
    %7455 = vmatmul.mubr.f32.gmra.mrb[0].mxu0 %v5823
    %v7456 = vpop.f32.mrb[0].mxu0
    %v7457 = vadd.f32 %v6489, %v7456
    %v7458 = vpop.f32.mrb[0].mxu0
    %7459 = vmatprep.mubr.f32.mxu0 %v6839
    %7460 = vmatmul.mubr.f32.gmra.mrb[0].mxu0 %v5825
    %v7461 = vpop.f32.mrb[0].mxu0
    %v7462 = vadd.f32 %v6494, %v7461
    %v7463 = vpop.f32.mrb[0].mxu0
    %7464 = vmatprep.mubr.f32.mxu0 %v6842
    %7465 = vmatmul.mubr.f32.gmra.mrb[0].mxu0 %v5827
    %v7466 = vpop.f32.mrb[0].mxu0
    %v7467 = vadd.f32 %v6499, %v7466
    %v7468 = vpop.f32.mrb[0].mxu0
    %7469 = vmatprep.mubr.f32.mxu0 %v6845
    %7470 = vmatmul.mubr.f32.gmra.mrb[0].mxu0 %v5829
    %v7471 = vpop.f32.mrb[0].mxu0
    %v7472 = vadd.f32 %v6504, %v7471
    %v7473 = vpop.f32.mrb[0].mxu0
    %7474 = vmatprep.mubr.f32.mxu0 %v6848
    %7475 = vmatmul.mubr.f32.gmra.mrb[0].mxu0 %v5831
    %v7476 = vpop.f32.mrb[0].mxu0
    %v7477 = vadd.f32 %v6509, %v7476
    %v7478 = vpop.f32.mrb[0].mxu0
    %7479 = vdwg.mxu0
    %v7480 = vmax.f32 %v6917, 0.0
    %v7481 = vmax.f32 %v6922, 0.0
    %v7482 = vmax.f32 %v6927, 0.0
    %v7483 = vmax.f32 %v6932, 0.0
    %v7484 = vmax.f32 %v6937, 0.0
    %v7485 = vmax.f32 %v6942, 0.0
    %v7486 = vmax.f32 %v6947, 0.0
    %v7487 = vmax.f32 %v6952, 0.0
    %v7488 = vmax.f32 %v6957, 0.0
    %v7489 = vmax.f32 %v6962, 0.0
    %v7490 = vmax.f32 %v6967, 0.0
    %v7491 = vmax.f32 %v6972, 0.0
    %v7492 = vmax.f32 %v6977, 0.0
    %v7493 = vmax.f32 %v6982, 0.0
    %v7494 = vmax.f32 %v6987, 0.0
    %v7495 = vmax.f32 %v6992, 0.0
    %v7496 = vmax.f32 %v6997, 0.0
    %v7497 = vmax.f32 %v7002, 0.0
    %v7498 = vmax.f32 %v7007, 0.0
    %v7499 = vmax.f32 %v7012, 0.0
    %v7500 = vmax.f32 %v7017, 0.0
    %v7501 = vmax.f32 %v7022, 0.0
    %v7502 = vmax.f32 %v7027, 0.0
    %v7503 = vmax.f32 %v7032, 0.0
    %v7504 = vmax.f32 %v7037, 0.0
    %v7505 = vmax.f32 %v7042, 0.0
    %v7506 = vmax.f32 %v7047, 0.0
    %v7507 = vmax.f32 %v7052, 0.0
    %v7508 = vmax.f32 %v7057, 0.0
    %v7509 = vmax.f32 %v7062, 0.0
    %v7510 = vmax.f32 %v7067, 0.0
    %v7511 = vmax.f32 %v7072, 0.0
    %v7512 = vmax.f32 %v7077, 0.0
    %v7513 = vmax.f32 %v7082, 0.0
    %v7514 = vmax.f32 %v7087, 0.0
    %v7515 = vmax.f32 %v7092, 0.0
    %v7516 = vmax.f32 %v7097, 0.0
    %v7517 = vmax.f32 %v7102, 0.0
    %v7518 = vmax.f32 %v7107, 0.0
    %v7519 = vmax.f32 %v7112, 0.0
    %v7520 = vmax.f32 %v7117, 0.0
    %v7521 = vmax.f32 %v7122, 0.0
    %v7522 = vmax.f32 %v7127, 0.0
    %v7523 = vmax.f32 %v7132, 0.0
    %v7524 = vmax.f32 %v7137, 0.0
    %v7525 = vmax.f32 %v7142, 0.0
    %v7526 = vmax.f32 %v7147, 0.0
    %v7527 = vmax.f32 %v7152, 0.0
    %v7528 = vmax.f32 %v7157, 0.0
    %v7529 = vmax.f32 %v7162, 0.0
    %v7530 = vmax.f32 %v7167, 0.0
    %v7531 = vmax.f32 %v7172, 0.0
    %v7532 = vmax.f32 %v7177, 0.0
    %v7533 = vmax.f32 %v7182, 0.0
    %v7534 = vmax.f32 %v7187, 0.0
    %v7535 = vmax.f32 %v7192, 0.0
    %v7536 = vmax.f32 %v7197, 0.0
    %v7537 = vmax.f32 %v7202, 0.0
    %v7538 = vmax.f32 %v7207, 0.0
    %v7539 = vmax.f32 %v7212, 0.0
    %v7540 = vmax.f32 %v7217, 0.0
    %v7541 = vmax.f32 %v7222, 0.0
    %v7542 = vmax.f32 %v7227, 0.0
    %v7543 = vmax.f32 %v7232, 0.0
    %v7544 = vmax.f32 %v7237, 0.0
    %v7545 = vmax.f32 %v7242, 0.0
    %v7546 = vmax.f32 %v7247, 0.0
    %v7547 = vmax.f32 %v7252, 0.0
    %v7548 = vmax.f32 %v7257, 0.0
    %v7549 = vmax.f32 %v7262, 0.0
    %v7550 = vmax.f32 %v7267, 0.0
    %v7551 = vmax.f32 %v7272, 0.0
    %v7552 = vmax.f32 %v7277, 0.0
    %v7553 = vmax.f32 %v7282, 0.0
    %v7554 = vmax.f32 %v7287, 0.0
    %v7555 = vmax.f32 %v7292, 0.0
    %v7556 = vmax.f32 %v7297, 0.0
    %v7557 = vmax.f32 %v7302, 0.0
    %v7558 = vmax.f32 %v7307, 0.0
    %v7559 = vmax.f32 %v7312, 0.0
    %v7560 = vmax.f32 %v7317, 0.0
    %v7561 = vmax.f32 %v7322, 0.0
    %v7562 = vmax.f32 %v7327, 0.0
    %v7563 = vmax.f32 %v7332, 0.0
    %v7564 = vmax.f32 %v7337, 0.0
    %v7565 = vmax.f32 %v7342, 0.0
    %v7566 = vmax.f32 %v7347, 0.0
    %v7567 = vmax.f32 %v7352, 0.0
    %v7568 = vmax.f32 %v7357, 0.0
    %v7569 = vmax.f32 %v7362, 0.0
    %v7570 = vmax.f32 %v7367, 0.0
    %v7571 = vmax.f32 %v7372, 0.0
    %v7572 = vmax.f32 %v7377, 0.0
    %v7573 = vmax.f32 %v7382, 0.0
    %v7574 = vmax.f32 %v7387, 0.0
    %v7575 = vmax.f32 %v7392, 0.0
    %v7576 = vmax.f32 %v7397, 0.0
    %v7577 = vmax.f32 %v7402, 0.0
    %v7578 = vmax.f32 %v7407, 0.0
    %v7579 = vmax.f32 %v7412, 0.0
    %v7580 = vmax.f32 %v7417, 0.0
    %v7581 = vmax.f32 %v7422, 0.0
    %v7582 = vmax.f32 %v7427, 0.0
    %v7583 = vmax.f32 %v7432, 0.0
    %v7584 = vmax.f32 %v7437, 0.0
    %v7585 = vmax.f32 %v7442, 0.0
    %v7586 = vmax.f32 %v7447, 0.0
    %v7587 = vmax.f32 %v7452, 0.0
    %v7588 = vmax.f32 %v7457, 0.0
    %v7589 = vmax.f32 %v7462, 0.0
    %v7590 = vmax.f32 %v7467, 0.0
    %v7591 = vmax.f32 %v7472, 0.0
    %v7592 = vmax.f32 %v7477, 0.0
    %v7593 = vld [vmem:[%s9] sm:$0xff]
    %v7594 = vld [vmem:[%s9 + $0x8] sm:$0xff]
    %v7595 = vld [vmem:[%s9 + $0x10] sm:$0xff]
    %v7596 = vld [vmem:[%s9 + $0x18] sm:$0xff]
    %v7597 = vld [vmem:[%s9 + $0x20] sm:$0xff]
    %v7598 = vld [vmem:[%s9 + $0x28] sm:$0xff]
    %v7599 = vld [vmem:[%s9 + $0x30] sm:$0xff]
    %v7600 = vld [vmem:[%s9 + $0x38] sm:$0xff]
    %v7601 = vld [vmem:[%s9 + $0x40] sm:$0xff]
    %v7602 = vld [vmem:[%s9 + $0x48] sm:$0xff]
    %v7603 = vld [vmem:[%s9 + $0x50] sm:$0xff]
    %v7604 = vld [vmem:[%s9 + $0x58] sm:$0xff]
    %v7605 = vld [vmem:[%s9 + $0x60] sm:$0xff]
    %v7606 = vld [vmem:[%s9 + $0x68] sm:$0xff]
    %v7607 = vld [vmem:[%s9 + $0x70] sm:$0xff]
    %v7608 = vld [vmem:[%s9 + $0x78] sm:$0xff]
    %v7609 = vld [vmem:[%s9 + $0x80] sm:$0xff]
    %v7610 = vld [vmem:[%s9 + $0x88] sm:$0xff]
    %v7611 = vld [vmem:[%s9 + $0x90] sm:$0xff]
    %v7612 = vld [vmem:[%s9 + $0x98] sm:$0xff]
    %v7613 = vld [vmem:[%s9 + $0xa0] sm:$0xff]
    %v7614 = vld [vmem:[%s9 + $0xa8] sm:$0xff]
    %v7615 = vld [vmem:[%s9 + $0xb0] sm:$0xff]
    %v7616 = vld [vmem:[%s9 + $0xb8] sm:$0xff]
    %v7617 = vld [vmem:[%s9 + $0xc0] sm:$0xff]
    %v7618 = vld [vmem:[%s9 + $0xc8] sm:$0xff]
    %v7619 = vld [vmem:[%s9 + $0xd0] sm:$0xff]
    %v7620 = vld [vmem:[%s9 + $0xd8] sm:$0xff]
    %v7621 = vld [vmem:[%s9 + $0xe0] sm:$0xff]
    %v7622 = vld [vmem:[%s9 + $0xe8] sm:$0xff]
    %v7623 = vld [vmem:[%s9 + $0xf0] sm:$0xff]
    %v7624 = vld [vmem:[%s9 + $0xf8] sm:$0xff]
    %v7625 = vld [vmem:[%s9 + $0x100] sm:$0xff]
    %v7626 = vld [vmem:[%s9 + $0x108] sm:$0xff]
    %v7627 = vld [vmem:[%s9 + $0x110] sm:$0xff]
    %v7628 = vld [vmem:[%s9 + $0x118] sm:$0xff]
    %v7629 = vld [vmem:[%s9 + $0x120] sm:$0xff]
    %v7630 = vld [vmem:[%s9 + $0x128] sm:$0xff]
    %v7631 = vld [vmem:[%s9 + $0x130] sm:$0xff]
    %v7632 = vld [vmem:[%s9 + $0x138] sm:$0xff]
    %v7633 = vld [vmem:[%s9 + $0x140] sm:$0xff]
    %v7634 = vld [vmem:[%s9 + $0x148] sm:$0xff]
    %v7635 = vld [vmem:[%s9 + $0x150] sm:$0xff]
    %v7636 = vld [vmem:[%s9 + $0x158] sm:$0xff]
    %v7637 = vld [vmem:[%s9 + $0x160] sm:$0xff]
    %v7638 = vld [vmem:[%s9 + $0x168] sm:$0xff]
    %v7639 = vld [vmem:[%s9 + $0x170] sm:$0xff]
    %v7640 = vld [vmem:[%s9 + $0x178] sm:$0xff]
    %v7641 = vld [vmem:[%s9 + $0x180] sm:$0xff]
    %v7642 = vld [vmem:[%s9 + $0x188] sm:$0xff]
    %v7643 = vld [vmem:[%s9 + $0x190] sm:$0xff]
    %v7644 = vld [vmem:[%s9 + $0x198] sm:$0xff]
    %v7645 = vld [vmem:[%s9 + $0x1a0] sm:$0xff]
    %v7646 = vld [vmem:[%s9 + $0x1a8] sm:$0xff]
    %v7647 = vld [vmem:[%s9 + $0x1b0] sm:$0xff]
    %v7648 = vld [vmem:[%s9 + $0x1b8] sm:$0xff]
    %v7649 = vld [vmem:[%s9 + $0x1c0] sm:$0xff]
    %v7650 = vld [vmem:[%s9 + $0x1c8] sm:$0xff]
    %v7651 = vld [vmem:[%s9 + $0x1d0] sm:$0xff]
    %v7652 = vld [vmem:[%s9 + $0x1d8] sm:$0xff]
    %v7653 = vld [vmem:[%s9 + $0x1e0] sm:$0xff]
    %v7654 = vld [vmem:[%s9 + $0x1e8] sm:$0xff]
    %v7655 = vld [vmem:[%s9 + $0x1f0] sm:$0xff]
    %v7656 = vld [vmem:[%s9 + $0x1f8] sm:$0xff]
    %v7657 = vld [vmem:[%s9 + $0x200] sm:$0xff]
    %v7658 = vld [vmem:[%s9 + $0x208] sm:$0xff]
    %v7659 = vld [vmem:[%s9 + $0x210] sm:$0xff]
    %v7660 = vld [vmem:[%s9 + $0x218] sm:$0xff]
    %v7661 = vld [vmem:[%s9 + $0x220] sm:$0xff]
    %v7662 = vld [vmem:[%s9 + $0x228] sm:$0xff]
    %v7663 = vld [vmem:[%s9 + $0x230] sm:$0xff]
    %v7664 = vld [vmem:[%s9 + $0x238] sm:$0xff]
    %v7665 = vld [vmem:[%s9 + $0x240] sm:$0xff]
    %v7666 = vld [vmem:[%s9 + $0x248] sm:$0xff]
    %v7667 = vld [vmem:[%s9 + $0x250] sm:$0xff]
    %v7668 = vld [vmem:[%s9 + $0x258] sm:$0xff]
    %v7669 = vld [vmem:[%s9 + $0x260] sm:$0xff]
    %v7670 = vld [vmem:[%s9 + $0x268] sm:$0xff]
    %v7671 = vld [vmem:[%s9 + $0x270] sm:$0xff]
    %v7672 = vld [vmem:[%s9 + $0x278] sm:$0xff]
    %v7673 = vld [vmem:[%s9 + $0x280] sm:$0xff]
    %v7674 = vld [vmem:[%s9 + $0x288] sm:$0xff]
    %v7675 = vld [vmem:[%s9 + $0x290] sm:$0xff]
    %v7676 = vld [vmem:[%s9 + $0x298] sm:$0xff]
    %v7677 = vld [vmem:[%s9 + $0x2a0] sm:$0xff]
    %v7678 = vld [vmem:[%s9 + $0x2a8] sm:$0xff]
    %v7679 = vld [vmem:[%s9 + $0x2b0] sm:$0xff]
    %v7680 = vld [vmem:[%s9 + $0x2b8] sm:$0xff]
    %v7681 = vld [vmem:[%s9 + $0x2c0] sm:$0xff]
    %v7682 = vld [vmem:[%s9 + $0x2c8] sm:$0xff]
    %v7683 = vld [vmem:[%s9 + $0x2d0] sm:$0xff]
    %v7684 = vld [vmem:[%s9 + $0x2d8] sm:$0xff]
    %v7685 = vld [vmem:[%s9 + $0x2e0] sm:$0xff]
    %v7686 = vld [vmem:[%s9 + $0x2e8] sm:$0xff]
    %v7687 = vld [vmem:[%s9 + $0x2f0] sm:$0xff]
    %v7688 = vld [vmem:[%s9 + $0x2f8] sm:$0xff]
    %v7689 = vld [vmem:[%s9 + $0x300] sm:$0xff]
    %v7690 = vld [vmem:[%s9 + $0x308] sm:$0xff]
    %v7691 = vld [vmem:[%s9 + $0x310] sm:$0xff]
    %v7692 = vld [vmem:[%s9 + $0x318] sm:$0xff]
    %v7693 = vld [vmem:[%s9 + $0x320] sm:$0xff]
    %v7694 = vld [vmem:[%s9 + $0x328] sm:$0xff]
    %v7695 = vld [vmem:[%s9 + $0x330] sm:$0xff]
    %v7696 = vld [vmem:[%s9 + $0x338] sm:$0xff]
    %v7697 = vld [vmem:[%s9 + $0x340] sm:$0xff]
    %v7698 = vld [vmem:[%s9 + $0x348] sm:$0xff]
    %v7699 = vld [vmem:[%s9 + $0x350] sm:$0xff]
    %v7700 = vld [vmem:[%s9 + $0x358] sm:$0xff]
    %v7701 = vld [vmem:[%s9 + $0x360] sm:$0xff]
    %v7702 = vld [vmem:[%s9 + $0x368] sm:$0xff]
    %v7703 = vld [vmem:[%s9 + $0x370] sm:$0xff]
    %v7704 = vld [vmem:[%s9 + $0x378] sm:$0xff]
    %v7705 = vld [vmem:[%s9 + $0x380] sm:$0xff]
    %v7706 = vld [vmem:[%s9 + $0x388] sm:$0xff]
    %v7707 = vld [vmem:[%s9 + $0x390] sm:$0xff]
    %v7708 = vld [vmem:[%s9 + $0x398] sm:$0xff]
    %v7709 = vld [vmem:[%s9 + $0x3a0] sm:$0xff]
    %v7710 = vld [vmem:[%s9 + $0x3a8] sm:$0xff]
    %v7711 = vld [vmem:[%s9 + $0x3b0] sm:$0xff]
    %v7712 = vld [vmem:[%s9 + $0x3b8] sm:$0xff]
    %v7713 = vld [vmem:[%s9 + $0x3c0] sm:$0xff]
    %v7714 = vld [vmem:[%s9 + $0x3c8] sm:$0xff]
    %v7715 = vld [vmem:[%s9 + $0x3d0] sm:$0xff]
    %v7716 = vld [vmem:[%s9 + $0x3d8] sm:$0xff]
    %v7717 = vld [vmem:[%s9 + $0x3e0] sm:$0xff]
    %v7718 = vld [vmem:[%s9 + $0x3e8] sm:$0xff]
    %v7719 = vld [vmem:[%s9 + $0x3f0] sm:$0xff]
    %v7720 = vld [vmem:[%s9 + $0x3f8] sm:$0xff]
    %v7721 = vld [vmem:[%s9 + $0x400] sm:$0xff]
    %v7722 = vld [vmem:[%s9 + $0x408] sm:$0xff]
    %v7723 = vld [vmem:[%s9 + $0x410] sm:$0xff]
    %v7724 = vld [vmem:[%s9 + $0x418] sm:$0xff]
    %v7725 = vld [vmem:[%s9 + $0x420] sm:$0xff]
    %v7726 = vld [vmem:[%s9 + $0x428] sm:$0xff]
    %v7727 = vld [vmem:[%s9 + $0x430] sm:$0xff]
    %v7728 = vld [vmem:[%s9 + $0x438] sm:$0xff]
    %v7729 = vld [vmem:[%s9 + $0x440] sm:$0xff]
    %v7730 = vld [vmem:[%s9 + $0x448] sm:$0xff]
    %v7731 = vld [vmem:[%s9 + $0x450] sm:$0xff]
    %v7732 = vld [vmem:[%s9 + $0x458] sm:$0xff]
    %v7733 = vld [vmem:[%s9 + $0x460] sm:$0xff]
    %v7734 = vld [vmem:[%s9 + $0x468] sm:$0xff]
    %v7735 = vld [vmem:[%s9 + $0x470] sm:$0xff]
    %v7736 = vld [vmem:[%s9 + $0x478] sm:$0xff]
    %v7737 = vld [vmem:[%s9 + $0x480] sm:$0xff]
    %v7738 = vld [vmem:[%s9 + $0x488] sm:$0xff]
    %v7739 = vld [vmem:[%s9 + $0x490] sm:$0xff]
    %v7740 = vld [vmem:[%s9 + $0x498] sm:$0xff]
    %v7741 = vld [vmem:[%s9 + $0x4a0] sm:$0xff]
    %v7742 = vld [vmem:[%s9 + $0x4a8] sm:$0xff]
    %v7743 = vld [vmem:[%s9 + $0x4b0] sm:$0xff]
    %v7744 = vld [vmem:[%s9 + $0x4b8] sm:$0xff]
    %v7745 = vld [vmem:[%s9 + $0x4c0] sm:$0xff]
    %v7746 = vld [vmem:[%s9 + $0x4c8] sm:$0xff]
    %v7747 = vld [vmem:[%s9 + $0x4d0] sm:$0xff]
    %v7748 = vld [vmem:[%s9 + $0x4d8] sm:$0xff]
    %v7749 = vld [vmem:[%s9 + $0x4e0] sm:$0xff]
    %v7750 = vld [vmem:[%s9 + $0x4e8] sm:$0xff]
    %v7751 = vld [vmem:[%s9 + $0x4f0] sm:$0xff]
    %v7752 = vld [vmem:[%s9 + $0x4f8] sm:$0xff]
    %v7753 = vld [vmem:[%s9 + $0x500] sm:$0xff]
    %v7754 = vld [vmem:[%s9 + $0x508] sm:$0xff]
    %v7755 = vld [vmem:[%s9 + $0x510] sm:$0xff]
    %v7756 = vld [vmem:[%s9 + $0x518] sm:$0xff]
    %v7757 = vld [vmem:[%s9 + $0x520] sm:$0xff]
    %v7758 = vld [vmem:[%s9 + $0x528] sm:$0xff]
    %v7759 = vld [vmem:[%s9 + $0x530] sm:$0xff]
    %v7760 = vld [vmem:[%s9 + $0x538] sm:$0xff]
    %v7761 = vld [vmem:[%s9 + $0x540] sm:$0xff]
    %v7762 = vld [vmem:[%s9 + $0x548] sm:$0xff]
    %v7763 = vld [vmem:[%s9 + $0x550] sm:$0xff]
    %v7764 = vld [vmem:[%s9 + $0x558] sm:$0xff]
    %v7765 = vld [vmem:[%s9 + $0x560] sm:$0xff]
    %v7766 = vld [vmem:[%s9 + $0x568] sm:$0xff]
    %v7767 = vld [vmem:[%s9 + $0x570] sm:$0xff]
    %v7768 = vld [vmem:[%s9 + $0x578] sm:$0xff]
    %v7769 = vld [vmem:[%s9 + $0x580] sm:$0xff]
    %v7770 = vld [vmem:[%s9 + $0x588] sm:$0xff]
    %v7771 = vld [vmem:[%s9 + $0x590] sm:$0xff]
    %v7772 = vld [vmem:[%s9 + $0x598] sm:$0xff]
    %v7773 = vld [vmem:[%s9 + $0x5a0] sm:$0xff]
    %v7774 = vld [vmem:[%s9 + $0x5a8] sm:$0xff]
    %v7775 = vld [vmem:[%s9 + $0x5b0] sm:$0xff]
    %v7776 = vld [vmem:[%s9 + $0x5b8] sm:$0xff]
    %v7777 = vld [vmem:[%s9 + $0x5c0] sm:$0xff]
    %v7778 = vld [vmem:[%s9 + $0x5c8] sm:$0xff]
    %v7779 = vld [vmem:[%s9 + $0x5d0] sm:$0xff]
    %v7780 = vld [vmem:[%s9 + $0x5d8] sm:$0xff]
    %v7781 = vld [vmem:[%s9 + $0x5e0] sm:$0xff]
    %v7782 = vld [vmem:[%s9 + $0x5e8] sm:$0xff]
    %v7783 = vld [vmem:[%s9 + $0x5f0] sm:$0xff]
    %v7784 = vld [vmem:[%s9 + $0x5f8] sm:$0xff]
    %v7785 = vld [vmem:[%s9 + $0x600] sm:$0xff]
    %v7786 = vld [vmem:[%s9 + $0x608] sm:$0xff]
    %v7787 = vld [vmem:[%s9 + $0x610] sm:$0xff]
    %v7788 = vld [vmem:[%s9 + $0x618] sm:$0xff]
    %v7789 = vld [vmem:[%s9 + $0x620] sm:$0xff]
    %v7790 = vld [vmem:[%s9 + $0x628] sm:$0xff]
    %v7791 = vld [vmem:[%s9 + $0x630] sm:$0xff]
    %v7792 = vld [vmem:[%s9 + $0x638] sm:$0xff]
    %v7793 = vld [vmem:[%s9 + $0x640] sm:$0xff]
    %v7794 = vld [vmem:[%s9 + $0x648] sm:$0xff]
    %v7795 = vld [vmem:[%s9 + $0x650] sm:$0xff]
    %v7796 = vld [vmem:[%s9 + $0x658] sm:$0xff]
    %v7797 = vld [vmem:[%s9 + $0x660] sm:$0xff]
    %v7798 = vld [vmem:[%s9 + $0x668] sm:$0xff]
    %v7799 = vld [vmem:[%s9 + $0x670] sm:$0xff]
    %v7800 = vld [vmem:[%s9 + $0x678] sm:$0xff]
    %v7801 = vld [vmem:[%s9 + $0x680] sm:$0xff]
    %v7802 = vld [vmem:[%s9 + $0x688] sm:$0xff]
    %v7803 = vld [vmem:[%s9 + $0x690] sm:$0xff]
    %v7804 = vld [vmem:[%s9 + $0x698] sm:$0xff]
    %v7805 = vld [vmem:[%s9 + $0x6a0] sm:$0xff]
    %v7806 = vld [vmem:[%s9 + $0x6a8] sm:$0xff]
    %v7807 = vld [vmem:[%s9 + $0x6b0] sm:$0xff]
    %v7808 = vld [vmem:[%s9 + $0x6b8] sm:$0xff]
    %v7809 = vld [vmem:[%s9 + $0x6c0] sm:$0xff]
    %v7810 = vld [vmem:[%s9 + $0x6c8] sm:$0xff]
    %v7811 = vld [vmem:[%s9 + $0x6d0] sm:$0xff]
    %v7812 = vld [vmem:[%s9 + $0x6d8] sm:$0xff]
    %v7813 = vld [vmem:[%s9 + $0x6e0] sm:$0xff]
    %v7814 = vld [vmem:[%s9 + $0x6e8] sm:$0xff]
    %v7815 = vld [vmem:[%s9 + $0x6f0] sm:$0xff]
    %v7816 = vld [vmem:[%s9 + $0x6f8] sm:$0xff]
    %v7817 = vld [vmem:[%s9 + $0x700] sm:$0xff]
    %v7818 = vld [vmem:[%s9 + $0x708] sm:$0xff]
    %v7819 = vld [vmem:[%s9 + $0x710] sm:$0xff]
    %v7820 = vld [vmem:[%s9 + $0x718] sm:$0xff]
    %v7821 = vld [vmem:[%s9 + $0x720] sm:$0xff]
    %v7822 = vld [vmem:[%s9 + $0x728] sm:$0xff]
    %v7823 = vld [vmem:[%s9 + $0x730] sm:$0xff]
    %v7824 = vld [vmem:[%s9 + $0x738] sm:$0xff]
    %v7825 = vld [vmem:[%s9 + $0x740] sm:$0xff]
    %v7826 = vld [vmem:[%s9 + $0x748] sm:$0xff]
    %v7827 = vld [vmem:[%s9 + $0x750] sm:$0xff]
    %v7828 = vld [vmem:[%s9 + $0x758] sm:$0xff]
    %v7829 = vld [vmem:[%s9 + $0x760] sm:$0xff]
    %v7830 = vld [vmem:[%s9 + $0x768] sm:$0xff]
    %v7831 = vld [vmem:[%s9 + $0x770] sm:$0xff]
    %v7832 = vld [vmem:[%s9 + $0x778] sm:$0xff]
    %v7833 = vld [vmem:[%s9 + $0x780] sm:$0xff]
    %v7834 = vld [vmem:[%s9 + $0x788] sm:$0xff]
    %v7835 = vld [vmem:[%s9 + $0x790] sm:$0xff]
    %v7836 = vld [vmem:[%s9 + $0x798] sm:$0xff]
    %v7837 = vld [vmem:[%s9 + $0x7a0] sm:$0xff]
    %v7838 = vld [vmem:[%s9 + $0x7a8] sm:$0xff]
    %v7839 = vld [vmem:[%s9 + $0x7b0] sm:$0xff]
    %v7840 = vld [vmem:[%s9 + $0x7b8] sm:$0xff]
    %v7841 = vld [vmem:[%s9 + $0x7c0] sm:$0xff]
    %v7842 = vld [vmem:[%s9 + $0x7c8] sm:$0xff]
    %v7843 = vld [vmem:[%s9 + $0x7d0] sm:$0xff]
    %v7844 = vld [vmem:[%s9 + $0x7d8] sm:$0xff]
    %v7845 = vld [vmem:[%s9 + $0x7e0] sm:$0xff]
    %v7846 = vld [vmem:[%s9 + $0x7e8] sm:$0xff]
    %v7847 = vld [vmem:[%s9 + $0x7f0] sm:$0xff]
    %v7848 = vld [vmem:[%s9 + $0x7f8] sm:$0xff]
    %v7849 = vld [vmem:[%s9 + $0x800] sm:$0xff]
    %v7850 = vld [vmem:[%s9 + $0x808] sm:$0xff]
    %v7851 = vld [vmem:[%s9 + $0x810] sm:$0xff]
    %v7852 = vld [vmem:[%s9 + $0x818] sm:$0xff]
    %v7853 = vld [vmem:[%s9 + $0x820] sm:$0xff]
    %v7854 = vld [vmem:[%s9 + $0x828] sm:$0xff]
    %v7855 = vld [vmem:[%s9 + $0x830] sm:$0xff]
    %v7856 = vld [vmem:[%s9 + $0x838] sm:$0xff]
    %v7857 = vld [vmem:[%s9 + $0x840] sm:$0xff]
    %v7858 = vld [vmem:[%s9 + $0x848] sm:$0xff]
    %v7859 = vld [vmem:[%s9 + $0x850] sm:$0xff]
    %v7860 = vld [vmem:[%s9 + $0x858] sm:$0xff]
    %v7861 = vld [vmem:[%s9 + $0x860] sm:$0xff]
    %v7862 = vld [vmem:[%s9 + $0x868] sm:$0xff]
    %v7863 = vld [vmem:[%s9 + $0x870] sm:$0xff]
    %v7864 = vld [vmem:[%s9 + $0x878] sm:$0xff]
    %v7865 = vld [vmem:[%s9 + $0x880] sm:$0xff]
    %v7866 = vld [vmem:[%s9 + $0x888] sm:$0xff]
    %v7867 = vld [vmem:[%s9 + $0x890] sm:$0xff]
    %v7868 = vld [vmem:[%s9 + $0x898] sm:$0xff]
    %v7869 = vld [vmem:[%s9 + $0x8a0] sm:$0xff]
    %v7870 = vld [vmem:[%s9 + $0x8a8] sm:$0xff]
    %v7871 = vld [vmem:[%s9 + $0x8b0] sm:$0xff]
    %v7872 = vld [vmem:[%s9 + $0x8b8] sm:$0xff]
    %v7873 = vld [vmem:[%s9 + $0x8c0] sm:$0xff]
    %v7874 = vld [vmem:[%s9 + $0x8c8] sm:$0xff]
    %v7875 = vld [vmem:[%s9 + $0x8d0] sm:$0xff]
    %v7876 = vld [vmem:[%s9 + $0x8d8] sm:$0xff]
    %v7877 = vld [vmem:[%s9 + $0x8e0] sm:$0xff]
    %v7878 = vld [vmem:[%s9 + $0x8e8] sm:$0xff]
    %v7879 = vld [vmem:[%s9 + $0x8f0] sm:$0xff]
    %v7880 = vld [vmem:[%s9 + $0x8f8] sm:$0xff]
    %v7881 = vld [vmem:[%s9 + $0x900] sm:$0xff]
    %v7882 = vld [vmem:[%s9 + $0x908] sm:$0xff]
    %v7883 = vld [vmem:[%s9 + $0x910] sm:$0xff]
    %v7884 = vld [vmem:[%s9 + $0x918] sm:$0xff]
    %v7885 = vld [vmem:[%s9 + $0x920] sm:$0xff]
    %v7886 = vld [vmem:[%s9 + $0x928] sm:$0xff]
    %v7887 = vld [vmem:[%s9 + $0x930] sm:$0xff]
    %v7888 = vld [vmem:[%s9 + $0x938] sm:$0xff]
    %v7889 = vld [vmem:[%s9 + $0x940] sm:$0xff]
    %v7890 = vld [vmem:[%s9 + $0x948] sm:$0xff]
    %v7891 = vld [vmem:[%s9 + $0x950] sm:$0xff]
    %v7892 = vld [vmem:[%s9 + $0x958] sm:$0xff]
    %v7893 = vld [vmem:[%s9 + $0x960] sm:$0xff]
    %v7894 = vld [vmem:[%s9 + $0x968] sm:$0xff]
    %v7895 = vld [vmem:[%s9 + $0x970] sm:$0xff]
    %v7896 = vld [vmem:[%s9 + $0x978] sm:$0xff]
    %v7897 = vld [vmem:[%s9 + $0x980] sm:$0xff]
    %v7898 = vld [vmem:[%s9 + $0x988] sm:$0xff]
    %v7899 = vld [vmem:[%s9 + $0x990] sm:$0xff]
    %v7900 = vld [vmem:[%s9 + $0x998] sm:$0xff]
    %v7901 = vld [vmem:[%s9 + $0x9a0] sm:$0xff]
    %v7902 = vld [vmem:[%s9 + $0x9a8] sm:$0xff]
    %v7903 = vld [vmem:[%s9 + $0x9b0] sm:$0xff]
    %v7904 = vld [vmem:[%s9 + $0x9b8] sm:$0xff]
    %v7905 = vld [vmem:[%s9 + $0x9c0] sm:$0xff]
    %v7906 = vld [vmem:[%s9 + $0x9c8] sm:$0xff]
    %v7907 = vld [vmem:[%s9 + $0x9d0] sm:$0xff]
    %v7908 = vld [vmem:[%s9 + $0x9d8] sm:$0xff]
    %v7909 = vld [vmem:[%s9 + $0x9e0] sm:$0xff]
    %v7910 = vld [vmem:[%s9 + $0x9e8] sm:$0xff]
    %v7911 = vld [vmem:[%s9 + $0x9f0] sm:$0xff]
    %v7912 = vld [vmem:[%s9 + $0x9f8] sm:$0xff]
    %v7913 = vld [vmem:[%s9 + $0xa00] sm:$0xff]
    %v7914 = vld [vmem:[%s9 + $0xa08] sm:$0xff]
    %v7915 = vld [vmem:[%s9 + $0xa10] sm:$0xff]
    %v7916 = vld [vmem:[%s9 + $0xa18] sm:$0xff]
    %v7917 = vld [vmem:[%s9 + $0xa20] sm:$0xff]
    %v7918 = vld [vmem:[%s9 + $0xa28] sm:$0xff]
    %v7919 = vld [vmem:[%s9 + $0xa30] sm:$0xff]
    %v7920 = vld [vmem:[%s9 + $0xa38] sm:$0xff]
    %v7921 = vld [vmem:[%s9 + $0xa40] sm:$0xff]
    %v7922 = vld [vmem:[%s9 + $0xa48] sm:$0xff]
    %v7923 = vld [vmem:[%s9 + $0xa50] sm:$0xff]
    %v7924 = vld [vmem:[%s9 + $0xa58] sm:$0xff]
    %v7925 = vld [vmem:[%s9 + $0xa60] sm:$0xff]
    %v7926 = vld [vmem:[%s9 + $0xa68] sm:$0xff]
    %v7927 = vld [vmem:[%s9 + $0xa70] sm:$0xff]
    %v7928 = vld [vmem:[%s9 + $0xa78] sm:$0xff]
    %v7929 = vld [vmem:[%s9 + $0xa80] sm:$0xff]
    %v7930 = vld [vmem:[%s9 + $0xa88] sm:$0xff]
    %v7931 = vld [vmem:[%s9 + $0xa90] sm:$0xff]
    %v7932 = vld [vmem:[%s9 + $0xa98] sm:$0xff]
    %v7933 = vld [vmem:[%s9 + $0xaa0] sm:$0xff]
    %v7934 = vld [vmem:[%s9 + $0xaa8] sm:$0xff]
    %v7935 = vld [vmem:[%s9 + $0xab0] sm:$0xff]
    %v7936 = vld [vmem:[%s9 + $0xab8] sm:$0xff]
    %v7937 = vld [vmem:[%s9 + $0xac0] sm:$0xff]
    %v7938 = vld [vmem:[%s9 + $0xac8] sm:$0xff]
    %v7939 = vld [vmem:[%s9 + $0xad0] sm:$0xff]
    %v7940 = vld [vmem:[%s9 + $0xad8] sm:$0xff]
    %v7941 = vld [vmem:[%s9 + $0xae0] sm:$0xff]
    %v7942 = vld [vmem:[%s9 + $0xae8] sm:$0xff]
    %v7943 = vld [vmem:[%s9 + $0xaf0] sm:$0xff]
    %v7944 = vld [vmem:[%s9 + $0xaf8] sm:$0xff]
    %v7945 = vld [vmem:[%s9 + $0xb00] sm:$0xff]
    %v7946 = vld [vmem:[%s9 + $0xb08] sm:$0xff]
    %v7947 = vld [vmem:[%s9 + $0xb10] sm:$0xff]
    %v7948 = vld [vmem:[%s9 + $0xb18] sm:$0xff]
    %v7949 = vld [vmem:[%s9 + $0xb20] sm:$0xff]
    %v7950 = vld [vmem:[%s9 + $0xb28] sm:$0xff]
    %v7951 = vld [vmem:[%s9 + $0xb30] sm:$0xff]
    %v7952 = vld [vmem:[%s9 + $0xb38] sm:$0xff]
    %v7953 = vld [vmem:[%s9 + $0xb40] sm:$0xff]
    %v7954 = vld [vmem:[%s9 + $0xb48] sm:$0xff]
    %v7955 = vld [vmem:[%s9 + $0xb50] sm:$0xff]
    %v7956 = vld [vmem:[%s9 + $0xb58] sm:$0xff]
    %v7957 = vld [vmem:[%s9 + $0xb60] sm:$0xff]
    %v7958 = vld [vmem:[%s9 + $0xb68] sm:$0xff]
    %v7959 = vld [vmem:[%s9 + $0xb70] sm:$0xff]
    %v7960 = vld [vmem:[%s9 + $0xb78] sm:$0xff]
    %v7961 = vld [vmem:[%s9 + $0xb80] sm:$0xff]
    %v7962 = vld [vmem:[%s9 + $0xb88] sm:$0xff]
    %v7963 = vld [vmem:[%s9 + $0xb90] sm:$0xff]
    %v7964 = vld [vmem:[%s9 + $0xb98] sm:$0xff]
    %v7965 = vld [vmem:[%s9 + $0xba0] sm:$0xff]
    %v7966 = vld [vmem:[%s9 + $0xba8] sm:$0xff]
    %v7967 = vld [vmem:[%s9 + $0xbb0] sm:$0xff]
    %v7968 = vld [vmem:[%s9 + $0xbb8] sm:$0xff]
    %v7969 = vld [vmem:[%s9 + $0xbc0] sm:$0xff]
    %v7970 = vld [vmem:[%s9 + $0xbc8] sm:$0xff]
    %v7971 = vld [vmem:[%s9 + $0xbd0] sm:$0xff]
    %v7972 = vld [vmem:[%s9 + $0xbd8] sm:$0xff]
    %v7973 = vld [vmem:[%s9 + $0xbe0] sm:$0xff]
    %v7974 = vld [vmem:[%s9 + $0xbe8] sm:$0xff]
    %v7975 = vld [vmem:[%s9 + $0xbf0] sm:$0xff]
    %v7976 = vld [vmem:[%s9 + $0xbf8] sm:$0xff]
    %v7977 = vld [vmem:[%s9 + $0xc00] sm:$0xff]
    %v7978 = vld [vmem:[%s9 + $0xc08] sm:$0xff]
    %v7979 = vld [vmem:[%s9 + $0xc10] sm:$0xff]
    %v7980 = vld [vmem:[%s9 + $0xc18] sm:$0xff]
    %v7981 = vld [vmem:[%s9 + $0xc20] sm:$0xff]
    %v7982 = vld [vmem:[%s9 + $0xc28] sm:$0xff]
    %v7983 = vld [vmem:[%s9 + $0xc30] sm:$0xff]
    %v7984 = vld [vmem:[%s9 + $0xc38] sm:$0xff]
    %v7985 = vld [vmem:[%s9 + $0xc40] sm:$0xff]
    %v7986 = vld [vmem:[%s9 + $0xc48] sm:$0xff]
    %v7987 = vld [vmem:[%s9 + $0xc50] sm:$0xff]
    %v7988 = vld [vmem:[%s9 + $0xc58] sm:$0xff]
    %v7989 = vld [vmem:[%s9 + $0xc60] sm:$0xff]
    %v7990 = vld [vmem:[%s9 + $0xc68] sm:$0xff]
    %v7991 = vld [vmem:[%s9 + $0xc70] sm:$0xff]
    %v7992 = vld [vmem:[%s9 + $0xc78] sm:$0xff]
    %v7993 = vld [vmem:[%s9 + $0xc80] sm:$0xff]
    %v7994 = vld [vmem:[%s9 + $0xc88] sm:$0xff]
    %v7995 = vld [vmem:[%s9 + $0xc90] sm:$0xff]
    %v7996 = vld [vmem:[%s9 + $0xc98] sm:$0xff]
    %v7997 = vld [vmem:[%s9 + $0xca0] sm:$0xff]
    %v7998 = vld [vmem:[%s9 + $0xca8] sm:$0xff]
    %v7999 = vld [vmem:[%s9 + $0xcb0] sm:$0xff]
    %v8000 = vld [vmem:[%s9 + $0xcb8] sm:$0xff]
    %v8001 = vld [vmem:[%s9 + $0xcc0] sm:$0xff]
    %v8002 = vld [vmem:[%s9 + $0xcc8] sm:$0xff]
    %v8003 = vld [vmem:[%s9 + $0xcd0] sm:$0xff]
    %v8004 = vld [vmem:[%s9 + $0xcd8] sm:$0xff]
    %v8005 = vld [vmem:[%s9 + $0xce0] sm:$0xff]
    %v8006 = vld [vmem:[%s9 + $0xce8] sm:$0xff]
    %v8007 = vld [vmem:[%s9 + $0xcf0] sm:$0xff]
    %v8008 = vld [vmem:[%s9 + $0xcf8] sm:$0xff]
    %v8009 = vld [vmem:[%s9 + $0xd00] sm:$0xff]
    %v8010 = vld [vmem:[%s9 + $0xd08] sm:$0xff]
    %v8011 = vld [vmem:[%s9 + $0xd10] sm:$0xff]
    %v8012 = vld [vmem:[%s9 + $0xd18] sm:$0xff]
    %v8013 = vld [vmem:[%s9 + $0xd20] sm:$0xff]
    %v8014 = vld [vmem:[%s9 + $0xd28] sm:$0xff]
    %v8015 = vld [vmem:[%s9 + $0xd30] sm:$0xff]
    %v8016 = vld [vmem:[%s9 + $0xd38] sm:$0xff]
    %v8017 = vld [vmem:[%s9 + $0xd40] sm:$0xff]
    %v8018 = vld [vmem:[%s9 + $0xd48] sm:$0xff]
    %v8019 = vld [vmem:[%s9 + $0xd50] sm:$0xff]
    %v8020 = vld [vmem:[%s9 + $0xd58] sm:$0xff]
    %v8021 = vld [vmem:[%s9 + $0xd60] sm:$0xff]
    %v8022 = vld [vmem:[%s9 + $0xd68] sm:$0xff]
    %v8023 = vld [vmem:[%s9 + $0xd70] sm:$0xff]
    %v8024 = vld [vmem:[%s9 + $0xd78] sm:$0xff]
    %v8025 = vld [vmem:[%s9 + $0xd80] sm:$0xff]
    %v8026 = vld [vmem:[%s9 + $0xd88] sm:$0xff]
    %v8027 = vld [vmem:[%s9 + $0xd90] sm:$0xff]
    %v8028 = vld [vmem:[%s9 + $0xd98] sm:$0xff]
    %v8029 = vld [vmem:[%s9 + $0xda0] sm:$0xff]
    %v8030 = vld [vmem:[%s9 + $0xda8] sm:$0xff]
    %v8031 = vld [vmem:[%s9 + $0xdb0] sm:$0xff]
    %v8032 = vld [vmem:[%s9 + $0xdb8] sm:$0xff]
    %v8033 = vld [vmem:[%s9 + $0xdc0] sm:$0xff]
    %v8034 = vld [vmem:[%s9 + $0xdc8] sm:$0xff]
    %v8035 = vld [vmem:[%s9 + $0xdd0] sm:$0xff]
    %v8036 = vld [vmem:[%s9 + $0xdd8] sm:$0xff]
    %v8037 = vld [vmem:[%s9 + $0xde0] sm:$0xff]
    %v8038 = vld [vmem:[%s9 + $0xde8] sm:$0xff]
    %v8039 = vld [vmem:[%s9 + $0xdf0] sm:$0xff]
    %v8040 = vld [vmem:[%s9 + $0xdf8] sm:$0xff]
    %v8041 = vld [vmem:[%s9 + $0xe00] sm:$0xff]
    %v8042 = vld [vmem:[%s9 + $0xe08] sm:$0xff]
    %v8043 = vld [vmem:[%s9 + $0xe10] sm:$0xff]
    %v8044 = vld [vmem:[%s9 + $0xe18] sm:$0xff]
    %v8045 = vld [vmem:[%s9 + $0xe20] sm:$0xff]
    %v8046 = vld [vmem:[%s9 + $0xe28] sm:$0xff]
    %v8047 = vld [vmem:[%s9 + $0xe30] sm:$0xff]
    %v8048 = vld [vmem:[%s9 + $0xe38] sm:$0xff]
    %v8049 = vld [vmem:[%s9 + $0xe40] sm:$0xff]
    %v8050 = vld [vmem:[%s9 + $0xe48] sm:$0xff]
    %v8051 = vld [vmem:[%s9 + $0xe50] sm:$0xff]
    %v8052 = vld [vmem:[%s9 + $0xe58] sm:$0xff]
    %v8053 = vld [vmem:[%s9 + $0xe60] sm:$0xff]
    %v8054 = vld [vmem:[%s9 + $0xe68] sm:$0xff]
    %v8055 = vld [vmem:[%s9 + $0xe70] sm:$0xff]
    %v8056 = vld [vmem:[%s9 + $0xe78] sm:$0xff]
    %v8057 = vld [vmem:[%s9 + $0xe80] sm:$0xff]
    %v8058 = vld [vmem:[%s9 + $0xe88] sm:$0xff]
    %v8059 = vld [vmem:[%s9 + $0xe90] sm:$0xff]
    %v8060 = vld [vmem:[%s9 + $0xe98] sm:$0xff]
    %v8061 = vld [vmem:[%s9 + $0xea0] sm:$0xff]
    %v8062 = vld [vmem:[%s9 + $0xea8] sm:$0xff]
    %v8063 = vld [vmem:[%s9 + $0xeb0] sm:$0xff]
    %v8064 = vld [vmem:[%s9 + $0xeb8] sm:$0xff]
    %v8065 = vld [vmem:[%s9 + $0xec0] sm:$0xff]
    %v8066 = vld [vmem:[%s9 + $0xec8] sm:$0xff]
    %v8067 = vld [vmem:[%s9 + $0xed0] sm:$0xff]
    %v8068 = vld [vmem:[%s9 + $0xed8] sm:$0xff]
    %v8069 = vld [vmem:[%s9 + $0xee0] sm:$0xff]
    %v8070 = vld [vmem:[%s9 + $0xee8] sm:$0xff]
    %v8071 = vld [vmem:[%s9 + $0xef0] sm:$0xff]
    %v8072 = vld [vmem:[%s9 + $0xef8] sm:$0xff]
    %v8073 = vld [vmem:[%s9 + $0xf00] sm:$0xff]
    %v8074 = vld [vmem:[%s9 + $0xf08] sm:$0xff]
    %v8075 = vld [vmem:[%s9 + $0xf10] sm:$0xff]
    %v8076 = vld [vmem:[%s9 + $0xf18] sm:$0xff]
    %v8077 = vld [vmem:[%s9 + $0xf20] sm:$0xff]
    %v8078 = vld [vmem:[%s9 + $0xf28] sm:$0xff]
    %v8079 = vld [vmem:[%s9 + $0xf30] sm:$0xff]
    %v8080 = vld [vmem:[%s9 + $0xf38] sm:$0xff]
    %v8081 = vld [vmem:[%s9 + $0xf40] sm:$0xff]
    %v8082 = vld [vmem:[%s9 + $0xf48] sm:$0xff]
    %v8083 = vld [vmem:[%s9 + $0xf50] sm:$0xff]
    %v8084 = vld [vmem:[%s9 + $0xf58] sm:$0xff]
    %v8085 = vld [vmem:[%s9 + $0xf60] sm:$0xff]
    %v8086 = vld [vmem:[%s9 + $0xf68] sm:$0xff]
    %v8087 = vld [vmem:[%s9 + $0xf70] sm:$0xff]
    %v8088 = vld [vmem:[%s9 + $0xf78] sm:$0xff]
    %v8089 = vld [vmem:[%s9 + $0xf80] sm:$0xff]
    %v8090 = vld [vmem:[%s9 + $0xf88] sm:$0xff]
    %v8091 = vld [vmem:[%s9 + $0xf90] sm:$0xff]
    %v8092 = vld [vmem:[%s9 + $0xf98] sm:$0xff]
    %v8093 = vld [vmem:[%s9 + $0xfa0] sm:$0xff]
    %v8094 = vld [vmem:[%s9 + $0xfa8] sm:$0xff]
    %v8095 = vld [vmem:[%s9 + $0xfb0] sm:$0xff]
    %v8096 = vld [vmem:[%s9 + $0xfb8] sm:$0xff]
    %v8097 = vld [vmem:[%s9 + $0xfc0] sm:$0xff]
    %v8098 = vld [vmem:[%s9 + $0xfc8] sm:$0xff]
    %v8099 = vld [vmem:[%s9 + $0xfd0] sm:$0xff]
    %v8100 = vld [vmem:[%s9 + $0xfd8] sm:$0xff]
    %v8101 = vld [vmem:[%s9 + $0xfe0] sm:$0xff]
    %v8102 = vld [vmem:[%s9 + $0xfe8] sm:$0xff]
    %v8103 = vld [vmem:[%s9 + $0xff0] sm:$0xff]
    %v8104 = vld [vmem:[%s9 + $0xff8] sm:$0xff]
    %v8105 = vld [vmem:[%s9 + $0x1000] sm:$0xff]
    %v8106 = vld [vmem:[%s9 + $0x1008] sm:$0xff]
    %v8107 = vld [vmem:[%s9 + $0x1010] sm:$0xff]
    %v8108 = vld [vmem:[%s9 + $0x1018] sm:$0xff]
    %v8109 = vld [vmem:[%s9 + $0x1020] sm:$0xff]
    %v8110 = vld [vmem:[%s9 + $0x1028] sm:$0xff]
    %v8111 = vld [vmem:[%s9 + $0x1030] sm:$0xff]
    %v8112 = vld [vmem:[%s9 + $0x1038] sm:$0xff]
    %v8113 = vld [vmem:[%s9 + $0x1040] sm:$0xff]
    %v8114 = vld [vmem:[%s9 + $0x1048] sm:$0xff]
    %v8115 = vld [vmem:[%s9 + $0x1050] sm:$0xff]
    %v8116 = vld [vmem:[%s9 + $0x1058] sm:$0xff]
    %v8117 = vld [vmem:[%s9 + $0x1060] sm:$0xff]
    %v8118 = vld [vmem:[%s9 + $0x1068] sm:$0xff]
    %v8119 = vld [vmem:[%s9 + $0x1070] sm:$0xff]
    %v8120 = vld [vmem:[%s9 + $0x1078] sm:$0xff]
    %v8121 = vld [vmem:[%s9 + $0x1080] sm:$0xff]
    %v8122 = vld [vmem:[%s9 + $0x1088] sm:$0xff]
    %v8123 = vld [vmem:[%s9 + $0x1090] sm:$0xff]
    %v8124 = vld [vmem:[%s9 + $0x1098] sm:$0xff]
    %v8125 = vld [vmem:[%s9 + $0x10a0] sm:$0xff]
    %v8126 = vld [vmem:[%s9 + $0x10a8] sm:$0xff]
    %v8127 = vld [vmem:[%s9 + $0x10b0] sm:$0xff]
    %v8128 = vld [vmem:[%s9 + $0x10b8] sm:$0xff]
    %v8129 = vld [vmem:[%s9 + $0x10c0] sm:$0xff]
    %v8130 = vld [vmem:[%s9 + $0x10c8] sm:$0xff]
    %v8131 = vld [vmem:[%s9 + $0x10d0] sm:$0xff]
    %v8132 = vld [vmem:[%s9 + $0x10d8] sm:$0xff]
    %v8133 = vld [vmem:[%s9 + $0x10e0] sm:$0xff]
    %v8134 = vld [vmem:[%s9 + $0x10e8] sm:$0xff]
    %v8135 = vld [vmem:[%s9 + $0x10f0] sm:$0xff]
    %v8136 = vld [vmem:[%s9 + $0x10f8] sm:$0xff]
    %v8137 = vld [vmem:[%s9 + $0x1100] sm:$0xff]
    %v8138 = vld [vmem:[%s9 + $0x1108] sm:$0xff]
    %v8139 = vld [vmem:[%s9 + $0x1110] sm:$0xff]
    %v8140 = vld [vmem:[%s9 + $0x1118] sm:$0xff]
    %v8141 = vld [vmem:[%s9 + $0x1120] sm:$0xff]
    %v8142 = vld [vmem:[%s9 + $0x1128] sm:$0xff]
    %v8143 = vld [vmem:[%s9 + $0x1130] sm:$0xff]
    %v8144 = vld [vmem:[%s9 + $0x1138] sm:$0xff]
    %v8145 = vld [vmem:[%s9 + $0x1140] sm:$0xff]
    %v8146 = vld [vmem:[%s9 + $0x1148] sm:$0xff]
    %v8147 = vld [vmem:[%s9 + $0x1150] sm:$0xff]
    %v8148 = vld [vmem:[%s9 + $0x1158] sm:$0xff]
    %v8149 = vld [vmem:[%s9 + $0x1160] sm:$0xff]
    %v8150 = vld [vmem:[%s9 + $0x1168] sm:$0xff]
    %v8151 = vld [vmem:[%s9 + $0x1170] sm:$0xff]
    %v8152 = vld [vmem:[%s9 + $0x1178] sm:$0xff]
    %v8153 = vld [vmem:[%s9 + $0x1180] sm:$0xff]
    %v8154 = vld [vmem:[%s9 + $0x1188] sm:$0xff]
    %v8155 = vld [vmem:[%s9 + $0x1190] sm:$0xff]
    %v8156 = vld [vmem:[%s9 + $0x1198] sm:$0xff]
    %v8157 = vld [vmem:[%s9 + $0x11a0] sm:$0xff]
    %v8158 = vld [vmem:[%s9 + $0x11a8] sm:$0xff]
    %v8159 = vld [vmem:[%s9 + $0x11b0] sm:$0xff]
    %v8160 = vld [vmem:[%s9 + $0x11b8] sm:$0xff]
    %v8161 = vld [vmem:[%s9 + $0x11c0] sm:$0xff]
    %v8162 = vld [vmem:[%s9 + $0x11c8] sm:$0xff]
    %v8163 = vld [vmem:[%s9 + $0x11d0] sm:$0xff]
    %v8164 = vld [vmem:[%s9 + $0x11d8] sm:$0xff]
    %v8165 = vld [vmem:[%s9 + $0x11e0] sm:$0xff]
    %v8166 = vld [vmem:[%s9 + $0x11e8] sm:$0xff]
    %v8167 = vld [vmem:[%s9 + $0x11f0] sm:$0xff]
    %v8168 = vld [vmem:[%s9 + $0x11f8] sm:$0xff]
    %v8169 = vld [vmem:[%s9 + $0x1200] sm:$0xff]
    %v8170 = vld [vmem:[%s9 + $0x1208] sm:$0xff]
    %v8171 = vld [vmem:[%s9 + $0x1210] sm:$0xff]
    %v8172 = vld [vmem:[%s9 + $0x1218] sm:$0xff]
    %v8173 = vld [vmem:[%s9 + $0x1220] sm:$0xff]
    %v8174 = vld [vmem:[%s9 + $0x1228] sm:$0xff]
    %v8175 = vld [vmem:[%s9 + $0x1230] sm:$0xff]
    %v8176 = vld [vmem:[%s9 + $0x1238] sm:$0xff]
    %v8177 = vld [vmem:[%s9 + $0x1240] sm:$0xff]
    %v8178 = vld [vmem:[%s9 + $0x1248] sm:$0xff]
    %v8179 = vld [vmem:[%s9 + $0x1250] sm:$0xff]
    %v8180 = vld [vmem:[%s9 + $0x1258] sm:$0xff]
    %v8181 = vld [vmem:[%s9 + $0x1260] sm:$0xff]
    %v8182 = vld [vmem:[%s9 + $0x1268] sm:$0xff]
    %v8183 = vld [vmem:[%s9 + $0x1270] sm:$0xff]
    %v8184 = vld [vmem:[%s9 + $0x1278] sm:$0xff]
    %v8185 = vld [vmem:[%s9 + $0x1280] sm:$0xff]
    %v8186 = vld [vmem:[%s9 + $0x1288] sm:$0xff]
    %v8187 = vld [vmem:[%s9 + $0x1290] sm:$0xff]
    %v8188 = vld [vmem:[%s9 + $0x1298] sm:$0xff]
    %v8189 = vld [vmem:[%s9 + $0x12a0] sm:$0xff]
    %v8190 = vld [vmem:[%s9 + $0x12a8] sm:$0xff]
    %v8191 = vld [vmem:[%s9 + $0x12b0] sm:$0xff]
    %v8192 = vld [vmem:[%s9 + $0x12b8] sm:$0xff]
    %v8193 = vld [vmem:[%s9 + $0x12c0] sm:$0xff]
    %v8194 = vld [vmem:[%s9 + $0x12c8] sm:$0xff]
    %v8195 = vld [vmem:[%s9 + $0x12d0] sm:$0xff]
    %v8196 = vld [vmem:[%s9 + $0x12d8] sm:$0xff]
    %v8197 = vld [vmem:[%s9 + $0x12e0] sm:$0xff]
    %v8198 = vld [vmem:[%s9 + $0x12e8] sm:$0xff]
    %v8199 = vld [vmem:[%s9 + $0x12f0] sm:$0xff]
    %v8200 = vld [vmem:[%s9 + $0x12f8] sm:$0xff]
    %v8201 = vld [vmem:[%s9 + $0x1300] sm:$0xff]
    %v8202 = vld [vmem:[%s9 + $0x1308] sm:$0xff]
    %v8203 = vld [vmem:[%s9 + $0x1310] sm:$0xff]
    %v8204 = vld [vmem:[%s9 + $0x1318] sm:$0xff]
    %v8205 = vld [vmem:[%s9 + $0x1320] sm:$0xff]
    %v8206 = vld [vmem:[%s9 + $0x1328] sm:$0xff]
    %v8207 = vld [vmem:[%s9 + $0x1330] sm:$0xff]
    %v8208 = vld [vmem:[%s9 + $0x1338] sm:$0xff]
    %v8209 = vld [vmem:[%s9 + $0x1340] sm:$0xff]
    %v8210 = vld [vmem:[%s9 + $0x1348] sm:$0xff]
    %v8211 = vld [vmem:[%s9 + $0x1350] sm:$0xff]
    %v8212 = vld [vmem:[%s9 + $0x1358] sm:$0xff]
    %v8213 = vld [vmem:[%s9 + $0x1360] sm:$0xff]
    %v8214 = vld [vmem:[%s9 + $0x1368] sm:$0xff]
    %v8215 = vld [vmem:[%s9 + $0x1370] sm:$0xff]
    %v8216 = vld [vmem:[%s9 + $0x1378] sm:$0xff]
    %v8217 = vld [vmem:[%s9 + $0x1380] sm:$0xff]
    %v8218 = vld [vmem:[%s9 + $0x1388] sm:$0xff]
    %v8219 = vld [vmem:[%s9 + $0x1390] sm:$0xff]
    %v8220 = vld [vmem:[%s9 + $0x1398] sm:$0xff]
    %v8221 = vld [vmem:[%s9 + $0x13a0] sm:$0xff]
    %v8222 = vld [vmem:[%s9 + $0x13a8] sm:$0xff]
    %v8223 = vld [vmem:[%s9 + $0x13b0] sm:$0xff]
    %v8224 = vld [vmem:[%s9 + $0x13b8] sm:$0xff]
    %v8225 = vld [vmem:[%s9 + $0x13c0] sm:$0xff]
    %v8226 = vld [vmem:[%s9 + $0x13c8] sm:$0xff]
    %v8227 = vld [vmem:[%s9 + $0x13d0] sm:$0xff]
    %v8228 = vld [vmem:[%s9 + $0x13d8] sm:$0xff]
    %v8229 = vld [vmem:[%s9 + $0x13e0] sm:$0xff]
    %v8230 = vld [vmem:[%s9 + $0x13e8] sm:$0xff]
    %v8231 = vld [vmem:[%s9 + $0x13f0] sm:$0xff]
    %v8232 = vld [vmem:[%s9 + $0x13f8] sm:$0xff]
    %v8233 = vld [vmem:[%s9 + $0x1400] sm:$0xff]
    %v8234 = vld [vmem:[%s9 + $0x1408] sm:$0xff]
    %v8235 = vld [vmem:[%s9 + $0x1410] sm:$0xff]
    %v8236 = vld [vmem:[%s9 + $0x1418] sm:$0xff]
    %v8237 = vld [vmem:[%s9 + $0x1420] sm:$0xff]
    %v8238 = vld [vmem:[%s9 + $0x1428] sm:$0xff]
    %v8239 = vld [vmem:[%s9 + $0x1430] sm:$0xff]
    %v8240 = vld [vmem:[%s9 + $0x1438] sm:$0xff]
    %v8241 = vld [vmem:[%s9 + $0x1440] sm:$0xff]
    %v8242 = vld [vmem:[%s9 + $0x1448] sm:$0xff]
    %v8243 = vld [vmem:[%s9 + $0x1450] sm:$0xff]
    %v8244 = vld [vmem:[%s9 + $0x1458] sm:$0xff]
    %v8245 = vld [vmem:[%s9 + $0x1460] sm:$0xff]
    %v8246 = vld [vmem:[%s9 + $0x1468] sm:$0xff]
    %v8247 = vld [vmem:[%s9 + $0x1470] sm:$0xff]
    %v8248 = vld [vmem:[%s9 + $0x1478] sm:$0xff]
    %v8249 = vld [vmem:[%s9 + $0x1480] sm:$0xff]
    %v8250 = vld [vmem:[%s9 + $0x1488] sm:$0xff]
    %v8251 = vld [vmem:[%s9 + $0x1490] sm:$0xff]
    %v8252 = vld [vmem:[%s9 + $0x1498] sm:$0xff]
    %v8253 = vld [vmem:[%s9 + $0x14a0] sm:$0xff]
    %v8254 = vld [vmem:[%s9 + $0x14a8] sm:$0xff]
    %v8255 = vld [vmem:[%s9 + $0x14b0] sm:$0xff]
    %v8256 = vld [vmem:[%s9 + $0x14b8] sm:$0xff]
    %v8257 = vld [vmem:[%s9 + $0x14c0] sm:$0xff]
    %v8258 = vld [vmem:[%s9 + $0x14c8] sm:$0xff]
    %v8259 = vld [vmem:[%s9 + $0x14d0] sm:$0xff]
    %v8260 = vld [vmem:[%s9 + $0x14d8] sm:$0xff]
    %v8261 = vld [vmem:[%s9 + $0x14e0] sm:$0xff]
    %v8262 = vld [vmem:[%s9 + $0x14e8] sm:$0xff]
    %v8263 = vld [vmem:[%s9 + $0x14f0] sm:$0xff]
    %v8264 = vld [vmem:[%s9 + $0x14f8] sm:$0xff]
    %v8265 = vld [vmem:[%s9 + $0x1500] sm:$0xff]
    %v8266 = vld [vmem:[%s9 + $0x1508] sm:$0xff]
    %v8267 = vld [vmem:[%s9 + $0x1510] sm:$0xff]
    %v8268 = vld [vmem:[%s9 + $0x1518] sm:$0xff]
    %v8269 = vld [vmem:[%s9 + $0x1520] sm:$0xff]
    %v8270 = vld [vmem:[%s9 + $0x1528] sm:$0xff]
    %v8271 = vld [vmem:[%s9 + $0x1530] sm:$0xff]
    %v8272 = vld [vmem:[%s9 + $0x1538] sm:$0xff]
    %v8273 = vld [vmem:[%s9 + $0x1540] sm:$0xff]
    %v8274 = vld [vmem:[%s9 + $0x1548] sm:$0xff]
    %v8275 = vld [vmem:[%s9 + $0x1550] sm:$0xff]
    %v8276 = vld [vmem:[%s9 + $0x1558] sm:$0xff]
    %v8277 = vld [vmem:[%s9 + $0x1560] sm:$0xff]
    %v8278 = vld [vmem:[%s9 + $0x1568] sm:$0xff]
    %v8279 = vld [vmem:[%s9 + $0x1570] sm:$0xff]
    %v8280 = vld [vmem:[%s9 + $0x1578] sm:$0xff]
    %v8281 = vld [vmem:[%s9 + $0x1580] sm:$0xff]
    %v8282 = vld [vmem:[%s9 + $0x1588] sm:$0xff]
    %v8283 = vld [vmem:[%s9 + $0x1590] sm:$0xff]
    %v8284 = vld [vmem:[%s9 + $0x1598] sm:$0xff]
    %v8285 = vld [vmem:[%s9 + $0x15a0] sm:$0xff]
    %v8286 = vld [vmem:[%s9 + $0x15a8] sm:$0xff]
    %v8287 = vld [vmem:[%s9 + $0x15b0] sm:$0xff]
    %v8288 = vld [vmem:[%s9 + $0x15b8] sm:$0xff]
    %v8289 = vld [vmem:[%s9 + $0x15c0] sm:$0xff]
    %v8290 = vld [vmem:[%s9 + $0x15c8] sm:$0xff]
    %v8291 = vld [vmem:[%s9 + $0x15d0] sm:$0xff]
    %v8292 = vld [vmem:[%s9 + $0x15d8] sm:$0xff]
    %v8293 = vld [vmem:[%s9 + $0x15e0] sm:$0xff]
    %v8294 = vld [vmem:[%s9 + $0x15e8] sm:$0xff]
    %v8295 = vld [vmem:[%s9 + $0x15f0] sm:$0xff]
    %v8296 = vld [vmem:[%s9 + $0x15f8] sm:$0xff]
    %v8297 = vld [vmem:[%s9 + $0x1600] sm:$0xff]
    %v8298 = vld [vmem:[%s9 + $0x1608] sm:$0xff]
    %v8299 = vld [vmem:[%s9 + $0x1610] sm:$0xff]
    %v8300 = vld [vmem:[%s9 + $0x1618] sm:$0xff]
    %v8301 = vld [vmem:[%s9 + $0x1620] sm:$0xff]
    %v8302 = vld [vmem:[%s9 + $0x1628] sm:$0xff]
    %v8303 = vld [vmem:[%s9 + $0x1630] sm:$0xff]
    %v8304 = vld [vmem:[%s9 + $0x1638] sm:$0xff]
    %v8305 = vld [vmem:[%s9 + $0x1640] sm:$0xff]
    %v8306 = vld [vmem:[%s9 + $0x1648] sm:$0xff]
    %v8307 = vld [vmem:[%s9 + $0x1650] sm:$0xff]
    %v8308 = vld [vmem:[%s9 + $0x1658] sm:$0xff]
    %v8309 = vld [vmem:[%s9 + $0x1660] sm:$0xff]
    %v8310 = vld [vmem:[%s9 + $0x1668] sm:$0xff]
    %v8311 = vld [vmem:[%s9 + $0x1670] sm:$0xff]
    %v8312 = vld [vmem:[%s9 + $0x1678] sm:$0xff]
    %v8313 = vld [vmem:[%s9 + $0x1680] sm:$0xff]
    %v8314 = vld [vmem:[%s9 + $0x1688] sm:$0xff]
    %v8315 = vld [vmem:[%s9 + $0x1690] sm:$0xff]
    %v8316 = vld [vmem:[%s9 + $0x1698] sm:$0xff]
    %v8317 = vld [vmem:[%s9 + $0x16a0] sm:$0xff]
    %v8318 = vld [vmem:[%s9 + $0x16a8] sm:$0xff]
    %v8319 = vld [vmem:[%s9 + $0x16b0] sm:$0xff]
    %v8320 = vld [vmem:[%s9 + $0x16b8] sm:$0xff]
    %v8321 = vld [vmem:[%s9 + $0x16c0] sm:$0xff]
    %v8322 = vld [vmem:[%s9 + $0x16c8] sm:$0xff]
    %v8323 = vld [vmem:[%s9 + $0x16d0] sm:$0xff]
    %v8324 = vld [vmem:[%s9 + $0x16d8] sm:$0xff]
    %v8325 = vld [vmem:[%s9 + $0x16e0] sm:$0xff]
    %v8326 = vld [vmem:[%s9 + $0x16e8] sm:$0xff]
    %v8327 = vld [vmem:[%s9 + $0x16f0] sm:$0xff]
    %v8328 = vld [vmem:[%s9 + $0x16f8] sm:$0xff]
    %v8329 = vld [vmem:[%s9 + $0x1700] sm:$0xff]
    %v8330 = vld [vmem:[%s9 + $0x1708] sm:$0xff]
    %v8331 = vld [vmem:[%s9 + $0x1710] sm:$0xff]
    %v8332 = vld [vmem:[%s9 + $0x1718] sm:$0xff]
    %v8333 = vld [vmem:[%s9 + $0x1720] sm:$0xff]
    %v8334 = vld [vmem:[%s9 + $0x1728] sm:$0xff]
    %v8335 = vld [vmem:[%s9 + $0x1730] sm:$0xff]
    %v8336 = vld [vmem:[%s9 + $0x1738] sm:$0xff]
    %v8337 = vld [vmem:[%s9 + $0x1740] sm:$0xff]
    %v8338 = vld [vmem:[%s9 + $0x1748] sm:$0xff]
    %v8339 = vld [vmem:[%s9 + $0x1750] sm:$0xff]
    %v8340 = vld [vmem:[%s9 + $0x1758] sm:$0xff]
    %v8341 = vld [vmem:[%s9 + $0x1760] sm:$0xff]
    %v8342 = vld [vmem:[%s9 + $0x1768] sm:$0xff]
    %v8343 = vld [vmem:[%s9 + $0x1770] sm:$0xff]
    %v8344 = vld [vmem:[%s9 + $0x1778] sm:$0xff]
    %v8345 = vld [vmem:[%s9 + $0x1780] sm:$0xff]
    %v8346 = vld [vmem:[%s9 + $0x1788] sm:$0xff]
    %v8347 = vld [vmem:[%s9 + $0x1790] sm:$0xff]
    %v8348 = vld [vmem:[%s9 + $0x1798] sm:$0xff]
    %v8349 = vld [vmem:[%s9 + $0x17a0] sm:$0xff]
    %v8350 = vld [vmem:[%s9 + $0x17a8] sm:$0xff]
    %v8351 = vld [vmem:[%s9 + $0x17b0] sm:$0xff]
    %v8352 = vld [vmem:[%s9 + $0x17b8] sm:$0xff]
    %v8353 = vld [vmem:[%s9 + $0x17c0] sm:$0xff]
    %v8354 = vld [vmem:[%s9 + $0x17c8] sm:$0xff]
    %v8355 = vld [vmem:[%s9 + $0x17d0] sm:$0xff]
    %v8356 = vld [vmem:[%s9 + $0x17d8] sm:$0xff]
    %v8357 = vld [vmem:[%s9 + $0x17e0] sm:$0xff]
    %v8358 = vld [vmem:[%s9 + $0x17e8] sm:$0xff]
    %v8359 = vld [vmem:[%s9 + $0x17f0] sm:$0xff]
    %v8360 = vld [vmem:[%s9 + $0x17f8] sm:$0xff]
    %v8361 = vld [vmem:[%s9 + $0x1800] sm:$0xff]
    %v8362 = vld [vmem:[%s9 + $0x1808] sm:$0xff]
    %v8363 = vld [vmem:[%s9 + $0x1810] sm:$0xff]
    %v8364 = vld [vmem:[%s9 + $0x1818] sm:$0xff]
    %v8365 = vld [vmem:[%s9 + $0x1820] sm:$0xff]
    %v8366 = vld [vmem:[%s9 + $0x1828] sm:$0xff]
    %v8367 = vld [vmem:[%s9 + $0x1830] sm:$0xff]
    %v8368 = vld [vmem:[%s9 + $0x1838] sm:$0xff]
    %v8369 = vld [vmem:[%s9 + $0x1840] sm:$0xff]
    %v8370 = vld [vmem:[%s9 + $0x1848] sm:$0xff]
    %v8371 = vld [vmem:[%s9 + $0x1850] sm:$0xff]
    %v8372 = vld [vmem:[%s9 + $0x1858] sm:$0xff]
    %v8373 = vld [vmem:[%s9 + $0x1860] sm:$0xff]
    %v8374 = vld [vmem:[%s9 + $0x1868] sm:$0xff]
    %v8375 = vld [vmem:[%s9 + $0x1870] sm:$0xff]
    %v8376 = vld [vmem:[%s9 + $0x1878] sm:$0xff]
    %v8377 = vld [vmem:[%s10] sm:$0xff]
    %v8378 = vld [vmem:[%s10 + $0x8] sm:$0xff]
    %v8379 = vld [vmem:[%s10 + $0x10] sm:$0xff]
    %v8380 = vld [vmem:[%s10 + $0x18] sm:$0xff]
    %v8381 = vld [vmem:[%s10 + $0x20] sm:$0xff]
    %v8382 = vld [vmem:[%s10 + $0x28] sm:$0xff]
    %v8383 = vld [vmem:[%s10 + $0x30] sm:$0xff]
    %v8384 = vld [vmem:[%s10 + $0x38] sm:$0xff]
    %v8385 = vld [vmem:[%s10 + $0x40] sm:$0xff]
    %v8386 = vld [vmem:[%s10 + $0x48] sm:$0xff]
    %v8387 = vld [vmem:[%s10 + $0x50] sm:$0xff]
    %v8388 = vld [vmem:[%s10 + $0x58] sm:$0xff]
    %v8389 = vld [vmem:[%s10 + $0x60] sm:$0xff]
    %v8390 = vld [vmem:[%s10 + $0x68] sm:$0xff]
    %v8391 = vld [vmem:[%s10 + $0x70] sm:$0xff]
    %v8392 = vld [vmem:[%s10 + $0x78] sm:$0xff]
    %v8393 = vld [vmem:[%s10 + $0x80] sm:$0xff]
    %v8394 = vld [vmem:[%s10 + $0x88] sm:$0xff]
    %v8395 = vld [vmem:[%s10 + $0x90] sm:$0xff]
    %v8396 = vld [vmem:[%s10 + $0x98] sm:$0xff]
    %v8397 = vld [vmem:[%s10 + $0xa0] sm:$0xff]
    %v8398 = vld [vmem:[%s10 + $0xa8] sm:$0xff]
    %v8399 = vld [vmem:[%s10 + $0xb0] sm:$0xff]
    %v8400 = vld [vmem:[%s10 + $0xb8] sm:$0xff]
    %v8401 = vld [vmem:[%s10 + $0xc0] sm:$0xff]
    %v8402 = vld [vmem:[%s10 + $0xc8] sm:$0xff]
    %v8403 = vld [vmem:[%s10 + $0xd0] sm:$0xff]
    %v8404 = vld [vmem:[%s10 + $0xd8] sm:$0xff]
    %v8405 = vld [vmem:[%s10 + $0xe0] sm:$0xff]
    %v8406 = vld [vmem:[%s10 + $0xe8] sm:$0xff]
    %v8407 = vld [vmem:[%s10 + $0xf0] sm:$0xff]
    %v8408 = vld [vmem:[%s10 + $0xf8] sm:$0xff]
    %v8409 = vld [vmem:[%s10 + $0x100] sm:$0xff]
    %v8410 = vld [vmem:[%s10 + $0x108] sm:$0xff]
    %v8411 = vld [vmem:[%s10 + $0x110] sm:$0xff]
    %v8412 = vld [vmem:[%s10 + $0x118] sm:$0xff]
    %v8413 = vld [vmem:[%s10 + $0x120] sm:$0xff]
    %v8414 = vld [vmem:[%s10 + $0x128] sm:$0xff]
    %v8415 = vld [vmem:[%s10 + $0x130] sm:$0xff]
    %v8416 = vld [vmem:[%s10 + $0x138] sm:$0xff]
    %v8417 = vld [vmem:[%s10 + $0x140] sm:$0xff]
    %v8418 = vld [vmem:[%s10 + $0x148] sm:$0xff]
    %v8419 = vld [vmem:[%s10 + $0x150] sm:$0xff]
    %v8420 = vld [vmem:[%s10 + $0x158] sm:$0xff]
    %v8421 = vld [vmem:[%s10 + $0x160] sm:$0xff]
    %v8422 = vld [vmem:[%s10 + $0x168] sm:$0xff]
    %v8423 = vld [vmem:[%s10 + $0x170] sm:$0xff]
    %v8424 = vld [vmem:[%s10 + $0x178] sm:$0xff]
    %v8425 = vld [vmem:[%s10 + $0x180] sm:$0xff]
    %v8426 = vld [vmem:[%s10 + $0x188] sm:$0xff]
    %v8427 = vld [vmem:[%s10 + $0x190] sm:$0xff]
    %v8428 = vld [vmem:[%s10 + $0x198] sm:$0xff]
    %v8429 = vld [vmem:[%s10 + $0x1a0] sm:$0xff]
    %v8430 = vld [vmem:[%s10 + $0x1a8] sm:$0xff]
    %v8431 = vld [vmem:[%s10 + $0x1b0] sm:$0xff]
    %v8432 = vld [vmem:[%s10 + $0x1b8] sm:$0xff]
    %v8433 = vld [vmem:[%s10 + $0x1c0] sm:$0xff]
    %v8434 = vld [vmem:[%s10 + $0x1c8] sm:$0xff]
    %v8435 = vld [vmem:[%s10 + $0x1d0] sm:$0xff]
    %v8436 = vld [vmem:[%s10 + $0x1d8] sm:$0xff]
    %v8437 = vld [vmem:[%s10 + $0x1e0] sm:$0xff]
    %v8438 = vld [vmem:[%s10 + $0x1e8] sm:$0xff]
    %v8439 = vld [vmem:[%s10 + $0x1f0] sm:$0xff]
    %v8440 = vld [vmem:[%s10 + $0x1f8] sm:$0xff]
    %v8441 = vld [vmem:[%s10 + $0x200] sm:$0xff]
    %v8442 = vld [vmem:[%s10 + $0x208] sm:$0xff]
    %v8443 = vld [vmem:[%s10 + $0x210] sm:$0xff]
    %v8444 = vld [vmem:[%s10 + $0x218] sm:$0xff]
    %v8445 = vld [vmem:[%s10 + $0x220] sm:$0xff]
    %v8446 = vld [vmem:[%s10 + $0x228] sm:$0xff]
    %v8447 = vld [vmem:[%s10 + $0x230] sm:$0xff]
    %v8448 = vld [vmem:[%s10 + $0x238] sm:$0xff]
    %v8449 = vld [vmem:[%s10 + $0x240] sm:$0xff]
    %v8450 = vld [vmem:[%s10 + $0x248] sm:$0xff]
    %v8451 = vld [vmem:[%s10 + $0x250] sm:$0xff]
    %v8452 = vld [vmem:[%s10 + $0x258] sm:$0xff]
    %v8453 = vld [vmem:[%s10 + $0x260] sm:$0xff]
    %v8454 = vld [vmem:[%s10 + $0x268] sm:$0xff]
    %v8455 = vld [vmem:[%s10 + $0x270] sm:$0xff]
    %v8456 = vld [vmem:[%s10 + $0x278] sm:$0xff]
    %v8457 = vld [vmem:[%s10 + $0x280] sm:$0xff]
    %v8458 = vld [vmem:[%s10 + $0x288] sm:$0xff]
    %v8459 = vld [vmem:[%s10 + $0x290] sm:$0xff]
    %v8460 = vld [vmem:[%s10 + $0x298] sm:$0xff]
    %v8461 = vld [vmem:[%s10 + $0x2a0] sm:$0xff]
    %v8462 = vld [vmem:[%s10 + $0x2a8] sm:$0xff]
    %v8463 = vld [vmem:[%s10 + $0x2b0] sm:$0xff]
    %v8464 = vld [vmem:[%s10 + $0x2b8] sm:$0xff]
    %v8465 = vld [vmem:[%s10 + $0x2c0] sm:$0xff]
    %v8466 = vld [vmem:[%s10 + $0x2c8] sm:$0xff]
    %v8467 = vld [vmem:[%s10 + $0x2d0] sm:$0xff]
    %v8468 = vld [vmem:[%s10 + $0x2d8] sm:$0xff]
    %v8469 = vld [vmem:[%s10 + $0x2e0] sm:$0xff]
    %v8470 = vld [vmem:[%s10 + $0x2e8] sm:$0xff]
    %v8471 = vld [vmem:[%s10 + $0x2f0] sm:$0xff]
    %v8472 = vld [vmem:[%s10 + $0x2f8] sm:$0xff]
    %v8473 = vld [vmem:[%s10 + $0x300] sm:$0xff]
    %v8474 = vld [vmem:[%s10 + $0x308] sm:$0xff]
    %8476 = vset.pattern.permute.xlu0 0
    %8477 = vperm.xlu0 %8476, %v8377
    %v8478 = vpop.permute.xlu0 %8477
    %8481 = vset.pattern.permute.xlu0 0
    %8482 = vperm.xlu0 %8481, %v8378
    %v8483 = vpop.permute.xlu0 %8482
    %8486 = vset.pattern.permute.xlu0 0
    %8487 = vperm.xlu0 %8486, %v8379
    %v8488 = vpop.permute.xlu0 %8487
    %8491 = vset.pattern.permute.xlu0 0
    %8492 = vperm.xlu0 %8491, %v8380
    %v8493 = vpop.permute.xlu0 %8492
    %8496 = vset.pattern.permute.xlu0 0
    %8497 = vperm.xlu0 %8496, %v8381
    %v8498 = vpop.permute.xlu0 %8497
    %8501 = vset.pattern.permute.xlu0 0
    %8502 = vperm.xlu0 %8501, %v8382
    %v8503 = vpop.permute.xlu0 %8502
    %8506 = vset.pattern.permute.xlu0 0
    %8507 = vperm.xlu0 %8506, %v8383
    %v8508 = vpop.permute.xlu0 %8507
    %8511 = vset.pattern.permute.xlu0 0
    %8512 = vperm.xlu0 %8511, %v8384
    %v8513 = vpop.permute.xlu0 %8512
    %8516 = vset.pattern.permute.xlu0 0
    %8517 = vperm.xlu0 %8516, %v8385
    %v8518 = vpop.permute.xlu0 %8517
    %8521 = vset.pattern.permute.xlu0 0
    %8522 = vperm.xlu0 %8521, %v8386
    %v8523 = vpop.permute.xlu0 %8522
    %8526 = vset.pattern.permute.xlu0 0
    %8527 = vperm.xlu0 %8526, %v8387
    %v8528 = vpop.permute.xlu0 %8527
    %8531 = vset.pattern.permute.xlu0 0
    %8532 = vperm.xlu0 %8531, %v8388
    %v8533 = vpop.permute.xlu0 %8532
    %8536 = vset.pattern.permute.xlu0 0
    %8537 = vperm.xlu0 %8536, %v8389
    %v8538 = vpop.permute.xlu0 %8537
    %8541 = vset.pattern.permute.xlu0 0
    %8542 = vperm.xlu0 %8541, %v8390
    %v8543 = vpop.permute.xlu0 %8542
    %8546 = vset.pattern.permute.xlu0 0
    %8547 = vperm.xlu0 %8546, %v8391
    %v8548 = vpop.permute.xlu0 %8547
    %8551 = vset.pattern.permute.xlu0 0
    %8552 = vperm.xlu0 %8551, %v8392
    %v8553 = vpop.permute.xlu0 %8552
    %8556 = vset.pattern.permute.xlu0 0
    %8557 = vperm.xlu0 %8556, %v8393
    %v8558 = vpop.permute.xlu0 %8557
    %8561 = vset.pattern.permute.xlu0 0
    %8562 = vperm.xlu0 %8561, %v8394
    %v8563 = vpop.permute.xlu0 %8562
    %8566 = vset.pattern.permute.xlu0 0
    %8567 = vperm.xlu0 %8566, %v8395
    %v8568 = vpop.permute.xlu0 %8567
    %8571 = vset.pattern.permute.xlu0 0
    %8572 = vperm.xlu0 %8571, %v8396
    %v8573 = vpop.permute.xlu0 %8572
    %8576 = vset.pattern.permute.xlu0 0
    %8577 = vperm.xlu0 %8576, %v8397
    %v8578 = vpop.permute.xlu0 %8577
    %8581 = vset.pattern.permute.xlu0 0
    %8582 = vperm.xlu0 %8581, %v8398
    %v8583 = vpop.permute.xlu0 %8582
    %8586 = vset.pattern.permute.xlu0 0
    %8587 = vperm.xlu0 %8586, %v8399
    %v8588 = vpop.permute.xlu0 %8587
    %8591 = vset.pattern.permute.xlu0 0
    %8592 = vperm.xlu0 %8591, %v8400
    %v8593 = vpop.permute.xlu0 %8592
    %8596 = vset.pattern.permute.xlu0 0
    %8597 = vperm.xlu0 %8596, %v8401
    %v8598 = vpop.permute.xlu0 %8597
    %8601 = vset.pattern.permute.xlu0 0
    %8602 = vperm.xlu0 %8601, %v8402
    %v8603 = vpop.permute.xlu0 %8602
    %8606 = vset.pattern.permute.xlu0 0
    %8607 = vperm.xlu0 %8606, %v8403
    %v8608 = vpop.permute.xlu0 %8607
    %8611 = vset.pattern.permute.xlu0 0
    %8612 = vperm.xlu0 %8611, %v8404
    %v8613 = vpop.permute.xlu0 %8612
    %8616 = vset.pattern.permute.xlu0 0
    %8617 = vperm.xlu0 %8616, %v8405
    %v8618 = vpop.permute.xlu0 %8617
    %8621 = vset.pattern.permute.xlu0 0
    %8622 = vperm.xlu0 %8621, %v8406
    %v8623 = vpop.permute.xlu0 %8622
    %8626 = vset.pattern.permute.xlu0 0
    %8627 = vperm.xlu0 %8626, %v8407
    %v8628 = vpop.permute.xlu0 %8627
    %8631 = vset.pattern.permute.xlu0 0
    %8632 = vperm.xlu0 %8631, %v8408
    %v8633 = vpop.permute.xlu0 %8632
    %8636 = vset.pattern.permute.xlu0 0
    %8637 = vperm.xlu0 %8636, %v8409
    %v8638 = vpop.permute.xlu0 %8637
    %8641 = vset.pattern.permute.xlu0 0
    %8642 = vperm.xlu0 %8641, %v8410
    %v8643 = vpop.permute.xlu0 %8642
    %8646 = vset.pattern.permute.xlu0 0
    %8647 = vperm.xlu0 %8646, %v8411
    %v8648 = vpop.permute.xlu0 %8647
    %8651 = vset.pattern.permute.xlu0 0
    %8652 = vperm.xlu0 %8651, %v8412
    %v8653 = vpop.permute.xlu0 %8652
    %8656 = vset.pattern.permute.xlu0 0
    %8657 = vperm.xlu0 %8656, %v8413
    %v8658 = vpop.permute.xlu0 %8657
    %8661 = vset.pattern.permute.xlu0 0
    %8662 = vperm.xlu0 %8661, %v8414
    %v8663 = vpop.permute.xlu0 %8662
    %8666 = vset.pattern.permute.xlu0 0
    %8667 = vperm.xlu0 %8666, %v8415
    %v8668 = vpop.permute.xlu0 %8667
    %8671 = vset.pattern.permute.xlu0 0
    %8672 = vperm.xlu0 %8671, %v8416
    %v8673 = vpop.permute.xlu0 %8672
    %8676 = vset.pattern.permute.xlu0 0
    %8677 = vperm.xlu0 %8676, %v8417
    %v8678 = vpop.permute.xlu0 %8677
    %8681 = vset.pattern.permute.xlu0 0
    %8682 = vperm.xlu0 %8681, %v8418
    %v8683 = vpop.permute.xlu0 %8682
    %8686 = vset.pattern.permute.xlu0 0
    %8687 = vperm.xlu0 %8686, %v8419
    %v8688 = vpop.permute.xlu0 %8687
    %8691 = vset.pattern.permute.xlu0 0
    %8692 = vperm.xlu0 %8691, %v8420
    %v8693 = vpop.permute.xlu0 %8692
    %8696 = vset.pattern.permute.xlu0 0
    %8697 = vperm.xlu0 %8696, %v8421
    %v8698 = vpop.permute.xlu0 %8697
    %8701 = vset.pattern.permute.xlu0 0
    %8702 = vperm.xlu0 %8701, %v8422
    %v8703 = vpop.permute.xlu0 %8702
    %8706 = vset.pattern.permute.xlu0 0
    %8707 = vperm.xlu0 %8706, %v8423
    %v8708 = vpop.permute.xlu0 %8707
    %8711 = vset.pattern.permute.xlu0 0
    %8712 = vperm.xlu0 %8711, %v8424
    %v8713 = vpop.permute.xlu0 %8712
    %8716 = vset.pattern.permute.xlu0 0
    %8717 = vperm.xlu0 %8716, %v8425
    %v8718 = vpop.permute.xlu0 %8717
    %8721 = vset.pattern.permute.xlu0 0
    %8722 = vperm.xlu0 %8721, %v8426
    %v8723 = vpop.permute.xlu0 %8722
    %8726 = vset.pattern.permute.xlu0 0
    %8727 = vperm.xlu0 %8726, %v8427
    %v8728 = vpop.permute.xlu0 %8727
    %8731 = vset.pattern.permute.xlu0 0
    %8732 = vperm.xlu0 %8731, %v8428
    %v8733 = vpop.permute.xlu0 %8732
    %8736 = vset.pattern.permute.xlu0 0
    %8737 = vperm.xlu0 %8736, %v8429
    %v8738 = vpop.permute.xlu0 %8737
    %8741 = vset.pattern.permute.xlu0 0
    %8742 = vperm.xlu0 %8741, %v8430
    %v8743 = vpop.permute.xlu0 %8742
    %8746 = vset.pattern.permute.xlu0 0
    %8747 = vperm.xlu0 %8746, %v8431
    %v8748 = vpop.permute.xlu0 %8747
    %8751 = vset.pattern.permute.xlu0 0
    %8752 = vperm.xlu0 %8751, %v8432
    %v8753 = vpop.permute.xlu0 %8752
    %8756 = vset.pattern.permute.xlu0 0
    %8757 = vperm.xlu0 %8756, %v8433
    %v8758 = vpop.permute.xlu0 %8757
    %8761 = vset.pattern.permute.xlu0 0
    %8762 = vperm.xlu0 %8761, %v8434
    %v8763 = vpop.permute.xlu0 %8762
    %8766 = vset.pattern.permute.xlu0 0
    %8767 = vperm.xlu0 %8766, %v8435
    %v8768 = vpop.permute.xlu0 %8767
    %8771 = vset.pattern.permute.xlu0 0
    %8772 = vperm.xlu0 %8771, %v8436
    %v8773 = vpop.permute.xlu0 %8772
    %8776 = vset.pattern.permute.xlu0 0
    %8777 = vperm.xlu0 %8776, %v8437
    %v8778 = vpop.permute.xlu0 %8777
    %8781 = vset.pattern.permute.xlu0 0
    %8782 = vperm.xlu0 %8781, %v8438
    %v8783 = vpop.permute.xlu0 %8782
    %8786 = vset.pattern.permute.xlu0 0
    %8787 = vperm.xlu0 %8786, %v8439
    %v8788 = vpop.permute.xlu0 %8787
    %8791 = vset.pattern.permute.xlu0 0
    %8792 = vperm.xlu0 %8791, %v8440
    %v8793 = vpop.permute.xlu0 %8792
    %8796 = vset.pattern.permute.xlu0 0
    %8797 = vperm.xlu0 %8796, %v8441
    %v8798 = vpop.permute.xlu0 %8797
    %8801 = vset.pattern.permute.xlu0 0
    %8802 = vperm.xlu0 %8801, %v8442
    %v8803 = vpop.permute.xlu0 %8802
    %8806 = vset.pattern.permute.xlu0 0
    %8807 = vperm.xlu0 %8806, %v8443
    %v8808 = vpop.permute.xlu0 %8807
    %8811 = vset.pattern.permute.xlu0 0
    %8812 = vperm.xlu0 %8811, %v8444
    %v8813 = vpop.permute.xlu0 %8812
    %8816 = vset.pattern.permute.xlu0 0
    %8817 = vperm.xlu0 %8816, %v8445
    %v8818 = vpop.permute.xlu0 %8817
    %8821 = vset.pattern.permute.xlu0 0
    %8822 = vperm.xlu0 %8821, %v8446
    %v8823 = vpop.permute.xlu0 %8822
    %8826 = vset.pattern.permute.xlu0 0
    %8827 = vperm.xlu0 %8826, %v8447
    %v8828 = vpop.permute.xlu0 %8827
    %8831 = vset.pattern.permute.xlu0 0
    %8832 = vperm.xlu0 %8831, %v8448
    %v8833 = vpop.permute.xlu0 %8832
    %8836 = vset.pattern.permute.xlu0 0
    %8837 = vperm.xlu0 %8836, %v8449
    %v8838 = vpop.permute.xlu0 %8837
    %8841 = vset.pattern.permute.xlu0 0
    %8842 = vperm.xlu0 %8841, %v8450
    %v8843 = vpop.permute.xlu0 %8842
    %8846 = vset.pattern.permute.xlu0 0
    %8847 = vperm.xlu0 %8846, %v8451
    %v8848 = vpop.permute.xlu0 %8847
    %8851 = vset.pattern.permute.xlu0 0
    %8852 = vperm.xlu0 %8851, %v8452
    %v8853 = vpop.permute.xlu0 %8852
    %8856 = vset.pattern.permute.xlu0 0
    %8857 = vperm.xlu0 %8856, %v8453
    %v8858 = vpop.permute.xlu0 %8857
    %8861 = vset.pattern.permute.xlu0 0
    %8862 = vperm.xlu0 %8861, %v8454
    %v8863 = vpop.permute.xlu0 %8862
    %8866 = vset.pattern.permute.xlu0 0
    %8867 = vperm.xlu0 %8866, %v8455
    %v8868 = vpop.permute.xlu0 %8867
    %8871 = vset.pattern.permute.xlu0 0
    %8872 = vperm.xlu0 %8871, %v8456
    %v8873 = vpop.permute.xlu0 %8872
    %8876 = vset.pattern.permute.xlu0 0
    %8877 = vperm.xlu0 %8876, %v8457
    %v8878 = vpop.permute.xlu0 %8877
    %8881 = vset.pattern.permute.xlu0 0
    %8882 = vperm.xlu0 %8881, %v8458
    %v8883 = vpop.permute.xlu0 %8882
    %8886 = vset.pattern.permute.xlu0 0
    %8887 = vperm.xlu0 %8886, %v8459
    %v8888 = vpop.permute.xlu0 %8887
    %8891 = vset.pattern.permute.xlu0 0
    %8892 = vperm.xlu0 %8891, %v8460
    %v8893 = vpop.permute.xlu0 %8892
    %8896 = vset.pattern.permute.xlu0 0
    %8897 = vperm.xlu0 %8896, %v8461
    %v8898 = vpop.permute.xlu0 %8897
    %8901 = vset.pattern.permute.xlu0 0
    %8902 = vperm.xlu0 %8901, %v8462
    %v8903 = vpop.permute.xlu0 %8902
    %8906 = vset.pattern.permute.xlu0 0
    %8907 = vperm.xlu0 %8906, %v8463
    %v8908 = vpop.permute.xlu0 %8907
    %8911 = vset.pattern.permute.xlu0 0
    %8912 = vperm.xlu0 %8911, %v8464
    %v8913 = vpop.permute.xlu0 %8912
    %8916 = vset.pattern.permute.xlu0 0
    %8917 = vperm.xlu0 %8916, %v8465
    %v8918 = vpop.permute.xlu0 %8917
    %8921 = vset.pattern.permute.xlu0 0
    %8922 = vperm.xlu0 %8921, %v8466
    %v8923 = vpop.permute.xlu0 %8922
    %8926 = vset.pattern.permute.xlu0 0
    %8927 = vperm.xlu0 %8926, %v8467
    %v8928 = vpop.permute.xlu0 %8927
    %8931 = vset.pattern.permute.xlu0 0
    %8932 = vperm.xlu0 %8931, %v8468
    %v8933 = vpop.permute.xlu0 %8932
    %8936 = vset.pattern.permute.xlu0 0
    %8937 = vperm.xlu0 %8936, %v8469
    %v8938 = vpop.permute.xlu0 %8937
    %8941 = vset.pattern.permute.xlu0 0
    %8942 = vperm.xlu0 %8941, %v8470
    %v8943 = vpop.permute.xlu0 %8942
    %8946 = vset.pattern.permute.xlu0 0
    %8947 = vperm.xlu0 %8946, %v8471
    %v8948 = vpop.permute.xlu0 %8947
    %8951 = vset.pattern.permute.xlu0 0
    %8952 = vperm.xlu0 %8951, %v8472
    %v8953 = vpop.permute.xlu0 %8952
    %8956 = vset.pattern.permute.xlu0 0
    %8957 = vperm.xlu0 %8956, %v8473
    %v8958 = vpop.permute.xlu0 %8957
    %8961 = vset.pattern.permute.xlu0 0
    %8962 = vperm.xlu0 %8961, %v8474
    %v8963 = vpop.permute.xlu0 %8962
    %vm8965 = vcmask 31744
    %v8967 = vsel %vm8965, %v7600, 0
    %v8970 = vsel %vm8965, %v7608, 0
    %v8973 = vsel %vm8965, %v7616, 0
    %v8976 = vsel %vm8965, %v7624, 0
    %v8979 = vsel %vm8965, %v7632, 0
    %v8982 = vsel %vm8965, %v7640, 0
    %v8985 = vsel %vm8965, %v7648, 0
    %v8988 = vsel %vm8965, %v7656, 0
    %v8991 = vsel %vm8965, %v7664, 0
    %v8994 = vsel %vm8965, %v7672, 0
    %v8997 = vsel %vm8965, %v7680, 0
    %v9000 = vsel %vm8965, %v7688, 0
    %v9003 = vsel %vm8965, %v7696, 0
    %v9006 = vsel %vm8965, %v7704, 0
    %v9009 = vsel %vm8965, %v7712, 0
    %v9012 = vsel %vm8965, %v7720, 0
    %v9015 = vsel %vm8965, %v7728, 0
    %v9018 = vsel %vm8965, %v7736, 0
    %v9021 = vsel %vm8965, %v7744, 0
    %v9024 = vsel %vm8965, %v7752, 0
    %v9027 = vsel %vm8965, %v7760, 0
    %v9030 = vsel %vm8965, %v7768, 0
    %v9033 = vsel %vm8965, %v7776, 0
    %v9036 = vsel %vm8965, %v7784, 0
    %v9039 = vsel %vm8965, %v7792, 0
    %v9042 = vsel %vm8965, %v7800, 0
    %v9045 = vsel %vm8965, %v7808, 0
    %v9048 = vsel %vm8965, %v7816, 0
    %v9051 = vsel %vm8965, %v7824, 0
    %v9054 = vsel %vm8965, %v7832, 0
    %v9057 = vsel %vm8965, %v7840, 0
    %v9060 = vsel %vm8965, %v7848, 0
    %v9063 = vsel %vm8965, %v7856, 0
    %v9066 = vsel %vm8965, %v7864, 0
    %v9069 = vsel %vm8965, %v7872, 0
    %v9072 = vsel %vm8965, %v7880, 0
    %v9075 = vsel %vm8965, %v7888, 0
    %v9078 = vsel %vm8965, %v7896, 0
    %v9081 = vsel %vm8965, %v7904, 0
    %v9084 = vsel %vm8965, %v7912, 0
    %v9087 = vsel %vm8965, %v7920, 0
    %v9090 = vsel %vm8965, %v7928, 0
    %v9093 = vsel %vm8965, %v7936, 0
    %v9096 = vsel %vm8965, %v7944, 0
    %v9099 = vsel %vm8965, %v7952, 0
    %v9102 = vsel %vm8965, %v7960, 0
    %v9105 = vsel %vm8965, %v7968, 0
    %v9108 = vsel %vm8965, %v7976, 0
    %v9111 = vsel %vm8965, %v7984, 0
    %v9114 = vsel %vm8965, %v7992, 0
    %v9117 = vsel %vm8965, %v8000, 0
    %v9120 = vsel %vm8965, %v8008, 0
    %v9123 = vsel %vm8965, %v8016, 0
    %v9126 = vsel %vm8965, %v8024, 0
    %v9129 = vsel %vm8965, %v8032, 0
    %v9132 = vsel %vm8965, %v8040, 0
    %v9135 = vsel %vm8965, %v8048, 0
    %v9138 = vsel %vm8965, %v8056, 0
    %v9141 = vsel %vm8965, %v8064, 0
    %v9144 = vsel %vm8965, %v8072, 0
    %v9147 = vsel %vm8965, %v8080, 0
    %v9150 = vsel %vm8965, %v8088, 0
    %v9153 = vsel %vm8965, %v8096, 0
    %v9156 = vsel %vm8965, %v8104, 0
    %v9159 = vsel %vm8965, %v8112, 0
    %v9162 = vsel %vm8965, %v8120, 0
    %v9165 = vsel %vm8965, %v8128, 0
    %v9168 = vsel %vm8965, %v8136, 0
    %v9171 = vsel %vm8965, %v8144, 0
    %v9174 = vsel %vm8965, %v8152, 0
    %v9177 = vsel %vm8965, %v8160, 0
    %v9180 = vsel %vm8965, %v8168, 0
    %v9183 = vsel %vm8965, %v8176, 0
    %v9186 = vsel %vm8965, %v8184, 0
    %v9189 = vsel %vm8965, %v8192, 0
    %v9192 = vsel %vm8965, %v8200, 0
    %v9195 = vsel %vm8965, %v8208, 0
    %v9198 = vsel %vm8965, %v8216, 0
    %v9201 = vsel %vm8965, %v8224, 0
    %v9204 = vsel %vm8965, %v8232, 0
    %v9207 = vsel %vm8965, %v8240, 0
    %v9210 = vsel %vm8965, %v8248, 0
    %v9213 = vsel %vm8965, %v8256, 0
    %v9216 = vsel %vm8965, %v8264, 0
    %v9219 = vsel %vm8965, %v8272, 0
    %v9222 = vsel %vm8965, %v8280, 0
    %v9225 = vsel %vm8965, %v8288, 0
    %v9228 = vsel %vm8965, %v8296, 0
    %v9231 = vsel %vm8965, %v8304, 0
    %v9234 = vsel %vm8965, %v8312, 0
    %v9237 = vsel %vm8965, %v8320, 0
    %v9240 = vsel %vm8965, %v8328, 0
    %v9243 = vsel %vm8965, %v8336, 0
    %v9246 = vsel %vm8965, %v8344, 0
    %v9249 = vsel %vm8965, %v8352, 0
    %v9252 = vsel %vm8965, %v8360, 0
    %v9255 = vsel %vm8965, %v8368, 0
    %v9258 = vsel %vm8965, %v8376, 0
    %vm9260 = vcmask 1043456
    %v9262 = vsel %vm9260, %v7592, 0
    %9264 = vmatprep.subr.mxu0 0.0
    %9265 = vmatpush1.msra.mxu0 %v7480
    %9266 = vmatprep.subr.mxu0 0.0
    %9267 = vmatpush1.msra.mxu0 %v7481
    %9268 = vmatprep.subr.mxu0 0.0
    %9269 = vmatpush1.msra.mxu0 %v7482
    %9270 = vmatprep.subr.mxu0 0.0
    %9271 = vmatpush1.msra.mxu0 %v7483
    %9272 = vmatprep.subr.mxu0 0.0
    %9273 = vmatpush1.msra.mxu0 %v7484
    %9274 = vmatprep.subr.mxu0 0.0
    %9275 = vmatpush1.msra.mxu0 %v7485
    %9276 = vmatprep.subr.mxu0 0.0
    %9277 = vmatpush1.msra.mxu0 %v7486
    %9278 = vmatprep.subr.mxu0 0.0
    %9279 = vmatpush1.msra.mxu0 %v7487
    %9280 = vmatprep.subr.mxu0 0.0
    %9281 = vmatpush1.msra.mxu0 %v7488
    %9282 = vmatprep.subr.mxu0 0.0
    %9283 = vmatpush1.msra.mxu0 %v7489
    %9284 = vmatprep.subr.mxu0 0.0
    %9285 = vmatpush1.msra.mxu0 %v7490
    %9286 = vmatprep.subr.mxu0 0.0
    %9287 = vmatpush1.msra.mxu0 %v7491
    %9288 = vmatprep.subr.mxu0 0.0
    %9289 = vmatpush1.msra.mxu0 %v7492
    %9290 = vmatprep.subr.mxu0 0.0
    %9291 = vmatpush1.msra.mxu0 %v7493
    %9292 = vmatprep.subr.mxu0 0.0
    %9293 = vmatpush1.msra.mxu0 %v7494
    %9294 = vmatprep.subr.mxu0 0.0
    %9295 = vmatpush1.msra.mxu0 %v7495
    %9296 = vmatprep.subr.mxu0 0.0
    %9297 = vmatpush1.msra.mxu0 %v7496
    %9298 = vmatprep.subr.mxu0 0.0
    %9299 = vmatpush1.msra.mxu0 %v7497
    %9300 = vmatprep.subr.mxu0 0.0
    %9301 = vmatpush1.msra.mxu0 %v7498
    %9302 = vmatprep.subr.mxu0 0.0
    %9303 = vmatpush1.msra.mxu0 %v7499
    %9304 = vmatprep.subr.mxu0 0.0
    %9305 = vmatpush1.msra.mxu0 %v7500
    %9306 = vmatprep.subr.mxu0 0.0
    %9307 = vmatpush1.msra.mxu0 %v7501
    %9308 = vmatprep.subr.mxu0 0.0
    %9309 = vmatpush1.msra.mxu0 %v7502
    %9310 = vmatprep.subr.mxu0 0.0
    %9311 = vmatpush1.msra.mxu0 %v7503
    %9312 = vmatprep.subr.mxu0 0.0
    %9313 = vmatpush1.msra.mxu0 %v7504
    %9314 = vmatprep.subr.mxu0 0.0
    %9315 = vmatpush1.msra.mxu0 %v7505
    %9316 = vmatprep.subr.mxu0 0.0
    %9317 = vmatpush1.msra.mxu0 %v7506
    %9318 = vmatprep.subr.mxu0 0.0
    %9319 = vmatpush1.msra.mxu0 %v7507
    %9320 = vmatprep.subr.mxu0 0.0
    %9321 = vmatpush1.msra.mxu0 %v7508
    %9322 = vmatprep.subr.mxu0 0.0
    %9323 = vmatpush1.msra.mxu0 %v7509
    %9324 = vmatprep.subr.mxu0 0.0
    %9325 = vmatpush1.msra.mxu0 %v7510
    %9326 = vmatprep.subr.mxu0 0.0
    %9327 = vmatpush1.msra.mxu0 %v7511
    %9328 = vmatprep.mubr.f32.mxu0 %v7594
    %9329 = vmatmul.mubr.f32.gmra.mrb[0].mxu0 %v7593
    %v9330 = vpop.f32.mrb[0].mxu0
    %v9331 = vadd.f32 %v8478, %v9330
    %v9332 = vpop.f32.mrb[0].mxu0
    %9333 = vmatprep.mubr.f32.mxu0 %v7602
    %9334 = vmatmul.mubr.f32.gmra.mrb[0].mxu0 %v7601
    %v9335 = vpop.f32.mrb[0].mxu0
    %v9336 = vadd.f32 %v8483, %v9335
    %v9337 = vpop.f32.mrb[0].mxu0
    %9338 = vmatprep.mubr.f32.mxu0 %v7610
    %9339 = vmatmul.mubr.f32.gmra.mrb[0].mxu0 %v7609
    %v9340 = vpop.f32.mrb[0].mxu0
    %v9341 = vadd.f32 %v8488, %v9340
    %v9342 = vpop.f32.mrb[0].mxu0
    %9343 = vmatprep.mubr.f32.mxu0 %v7618
    %9344 = vmatmul.mubr.f32.gmra.mrb[0].mxu0 %v7617
    %v9345 = vpop.f32.mrb[0].mxu0
    %v9346 = vadd.f32 %v8493, %v9345
    %v9347 = vpop.f32.mrb[0].mxu0
    %9348 = vmatprep.mubr.f32.mxu0 %v7626
    %9349 = vmatmul.mubr.f32.gmra.mrb[0].mxu0 %v7625
    %v9350 = vpop.f32.mrb[0].mxu0
    %v9351 = vadd.f32 %v8498, %v9350
    %v9352 = vpop.f32.mrb[0].mxu0
    %9353 = vmatprep.mubr.f32.mxu0 %v7634
    %9354 = vmatmul.mubr.f32.gmra.mrb[0].mxu0 %v7633
    %v9355 = vpop.f32.mrb[0].mxu0
    %v9356 = vadd.f32 %v8503, %v9355
    %v9357 = vpop.f32.mrb[0].mxu0
    %9358 = vmatprep.mubr.f32.mxu0 %v7642
    %9359 = vmatmul.mubr.f32.gmra.mrb[0].mxu0 %v7641
    %v9360 = vpop.f32.mrb[0].mxu0
    %v9361 = vadd.f32 %v8508, %v9360
    %v9362 = vpop.f32.mrb[0].mxu0
    %9363 = vmatprep.mubr.f32.mxu0 %v7650
    %9364 = vmatmul.mubr.f32.gmra.mrb[0].mxu0 %v7649
    %v9365 = vpop.f32.mrb[0].mxu0
    %v9366 = vadd.f32 %v8513, %v9365
    %v9367 = vpop.f32.mrb[0].mxu0
    %9368 = vmatprep.mubr.f32.mxu0 %v7658
    %9369 = vmatmul.mubr.f32.gmra.mrb[0].mxu0 %v7657
    %v9370 = vpop.f32.mrb[0].mxu0
    %v9371 = vadd.f32 %v8518, %v9370
    %v9372 = vpop.f32.mrb[0].mxu0
    %9373 = vmatprep.mubr.f32.mxu0 %v7666
    %9374 = vmatmul.mubr.f32.gmra.mrb[0].mxu0 %v7665
    %v9375 = vpop.f32.mrb[0].mxu0
    %v9376 = vadd.f32 %v8523, %v9375
    %v9377 = vpop.f32.mrb[0].mxu0
    %9378 = vmatprep.mubr.f32.mxu0 %v7674
    %9379 = vmatmul.mubr.f32.gmra.mrb[0].mxu0 %v7673
    %v9380 = vpop.f32.mrb[0].mxu0
    %v9381 = vadd.f32 %v8528, %v9380
    %v9382 = vpop.f32.mrb[0].mxu0
    %9383 = vmatprep.mubr.f32.mxu0 %v7682
    %9384 = vmatmul.mubr.f32.gmra.mrb[0].mxu0 %v7681
    %v9385 = vpop.f32.mrb[0].mxu0
    %v9386 = vadd.f32 %v8533, %v9385
    %v9387 = vpop.f32.mrb[0].mxu0
    %9388 = vmatprep.mubr.f32.mxu0 %v7690
    %9389 = vmatmul.mubr.f32.gmra.mrb[0].mxu0 %v7689
    %v9390 = vpop.f32.mrb[0].mxu0
    %v9391 = vadd.f32 %v8538, %v9390
    %v9392 = vpop.f32.mrb[0].mxu0
    %9393 = vmatprep.mubr.f32.mxu0 %v7698
    %9394 = vmatmul.mubr.f32.gmra.mrb[0].mxu0 %v7697
    %v9395 = vpop.f32.mrb[0].mxu0
    %v9396 = vadd.f32 %v8543, %v9395
    %v9397 = vpop.f32.mrb[0].mxu0
    %9398 = vmatprep.mubr.f32.mxu0 %v7706
    %9399 = vmatmul.mubr.f32.gmra.mrb[0].mxu0 %v7705
    %v9400 = vpop.f32.mrb[0].mxu0
    %v9401 = vadd.f32 %v8548, %v9400
    %v9402 = vpop.f32.mrb[0].mxu0
    %9403 = vmatprep.mubr.f32.mxu0 %v7714
    %9404 = vmatmul.mubr.f32.gmra.mrb[0].mxu0 %v7713
    %v9405 = vpop.f32.mrb[0].mxu0
    %v9406 = vadd.f32 %v8553, %v9405
    %v9407 = vpop.f32.mrb[0].mxu0
    %9408 = vmatprep.mubr.f32.mxu0 %v7722
    %9409 = vmatmul.mubr.f32.gmra.mrb[0].mxu0 %v7721
    %v9410 = vpop.f32.mrb[0].mxu0
    %v9411 = vadd.f32 %v8558, %v9410
    %v9412 = vpop.f32.mrb[0].mxu0
    %9413 = vmatprep.mubr.f32.mxu0 %v7730
    %9414 = vmatmul.mubr.f32.gmra.mrb[0].mxu0 %v7729
    %v9415 = vpop.f32.mrb[0].mxu0
    %v9416 = vadd.f32 %v8563, %v9415
    %v9417 = vpop.f32.mrb[0].mxu0
    %9418 = vmatprep.mubr.f32.mxu0 %v7738
    %9419 = vmatmul.mubr.f32.gmra.mrb[0].mxu0 %v7737
    %v9420 = vpop.f32.mrb[0].mxu0
    %v9421 = vadd.f32 %v8568, %v9420
    %v9422 = vpop.f32.mrb[0].mxu0
    %9423 = vmatprep.mubr.f32.mxu0 %v7746
    %9424 = vmatmul.mubr.f32.gmra.mrb[0].mxu0 %v7745
    %v9425 = vpop.f32.mrb[0].mxu0
    %v9426 = vadd.f32 %v8573, %v9425
    %v9427 = vpop.f32.mrb[0].mxu0
    %9428 = vmatprep.mubr.f32.mxu0 %v7754
    %9429 = vmatmul.mubr.f32.gmra.mrb[0].mxu0 %v7753
    %v9430 = vpop.f32.mrb[0].mxu0
    %v9431 = vadd.f32 %v8578, %v9430
    %v9432 = vpop.f32.mrb[0].mxu0
    %9433 = vmatprep.mubr.f32.mxu0 %v7762
    %9434 = vmatmul.mubr.f32.gmra.mrb[0].mxu0 %v7761
    %v9435 = vpop.f32.mrb[0].mxu0
    %v9436 = vadd.f32 %v8583, %v9435
    %v9437 = vpop.f32.mrb[0].mxu0
    %9438 = vmatprep.mubr.f32.mxu0 %v7770
    %9439 = vmatmul.mubr.f32.gmra.mrb[0].mxu0 %v7769
    %v9440 = vpop.f32.mrb[0].mxu0
    %v9441 = vadd.f32 %v8588, %v9440
    %v9442 = vpop.f32.mrb[0].mxu0
    %9443 = vmatprep.mubr.f32.mxu0 %v7778
    %9444 = vmatmul.mubr.f32.gmra.mrb[0].mxu0 %v7777
    %v9445 = vpop.f32.mrb[0].mxu0
    %v9446 = vadd.f32 %v8593, %v9445
    %v9447 = vpop.f32.mrb[0].mxu0
    %9448 = vmatprep.mubr.f32.mxu0 %v7786
    %9449 = vmatmul.mubr.f32.gmra.mrb[0].mxu0 %v7785
    %v9450 = vpop.f32.mrb[0].mxu0
    %v9451 = vadd.f32 %v8598, %v9450
    %v9452 = vpop.f32.mrb[0].mxu0
    %9453 = vmatprep.mubr.f32.mxu0 %v7794
    %9454 = vmatmul.mubr.f32.gmra.mrb[0].mxu0 %v7793
    %v9455 = vpop.f32.mrb[0].mxu0
    %v9456 = vadd.f32 %v8603, %v9455
    %v9457 = vpop.f32.mrb[0].mxu0
    %9458 = vmatprep.mubr.f32.mxu0 %v7802
    %9459 = vmatmul.mubr.f32.gmra.mrb[0].mxu0 %v7801
    %v9460 = vpop.f32.mrb[0].mxu0
    %v9461 = vadd.f32 %v8608, %v9460
    %v9462 = vpop.f32.mrb[0].mxu0
    %9463 = vmatprep.mubr.f32.mxu0 %v7810
    %9464 = vmatmul.mubr.f32.gmra.mrb[0].mxu0 %v7809
    %v9465 = vpop.f32.mrb[0].mxu0
    %v9466 = vadd.f32 %v8613, %v9465
    %v9467 = vpop.f32.mrb[0].mxu0
    %9468 = vmatprep.mubr.f32.mxu0 %v7818
    %9469 = vmatmul.mubr.f32.gmra.mrb[0].mxu0 %v7817
    %v9470 = vpop.f32.mrb[0].mxu0
    %v9471 = vadd.f32 %v8618, %v9470
    %v9472 = vpop.f32.mrb[0].mxu0
    %9473 = vmatprep.mubr.f32.mxu0 %v7826
    %9474 = vmatmul.mubr.f32.gmra.mrb[0].mxu0 %v7825
    %v9475 = vpop.f32.mrb[0].mxu0
    %v9476 = vadd.f32 %v8623, %v9475
    %v9477 = vpop.f32.mrb[0].mxu0
    %9478 = vmatprep.mubr.f32.mxu0 %v7834
    %9479 = vmatmul.mubr.f32.gmra.mrb[0].mxu0 %v7833
    %v9480 = vpop.f32.mrb[0].mxu0
    %v9481 = vadd.f32 %v8628, %v9480
    %v9482 = vpop.f32.mrb[0].mxu0
    %9483 = vmatprep.mubr.f32.mxu0 %v7842
    %9484 = vmatmul.mubr.f32.gmra.mrb[0].mxu0 %v7841
    %v9485 = vpop.f32.mrb[0].mxu0
    %v9486 = vadd.f32 %v8633, %v9485
    %v9487 = vpop.f32.mrb[0].mxu0
    %9488 = vmatprep.mubr.f32.mxu0 %v7850
    %9489 = vmatmul.mubr.f32.gmra.mrb[0].mxu0 %v7849
    %v9490 = vpop.f32.mrb[0].mxu0
    %v9491 = vadd.f32 %v8638, %v9490
    %v9492 = vpop.f32.mrb[0].mxu0
    %9493 = vmatprep.mubr.f32.mxu0 %v7858
    %9494 = vmatmul.mubr.f32.gmra.mrb[0].mxu0 %v7857
    %v9495 = vpop.f32.mrb[0].mxu0
    %v9496 = vadd.f32 %v8643, %v9495
    %v9497 = vpop.f32.mrb[0].mxu0
    %9498 = vmatprep.mubr.f32.mxu0 %v7866
    %9499 = vmatmul.mubr.f32.gmra.mrb[0].mxu0 %v7865
    %v9500 = vpop.f32.mrb[0].mxu0
    %v9501 = vadd.f32 %v8648, %v9500
    %v9502 = vpop.f32.mrb[0].mxu0
    %9503 = vmatprep.mubr.f32.mxu0 %v7874
    %9504 = vmatmul.mubr.f32.gmra.mrb[0].mxu0 %v7873
    %v9505 = vpop.f32.mrb[0].mxu0
    %v9506 = vadd.f32 %v8653, %v9505
    %v9507 = vpop.f32.mrb[0].mxu0
    %9508 = vmatprep.mubr.f32.mxu0 %v7882
    %9509 = vmatmul.mubr.f32.gmra.mrb[0].mxu0 %v7881
    %v9510 = vpop.f32.mrb[0].mxu0
    %v9511 = vadd.f32 %v8658, %v9510
    %v9512 = vpop.f32.mrb[0].mxu0
    %9513 = vmatprep.mubr.f32.mxu0 %v7890
    %9514 = vmatmul.mubr.f32.gmra.mrb[0].mxu0 %v7889
    %v9515 = vpop.f32.mrb[0].mxu0
    %v9516 = vadd.f32 %v8663, %v9515
    %v9517 = vpop.f32.mrb[0].mxu0
    %9518 = vmatprep.mubr.f32.mxu0 %v7898
    %9519 = vmatmul.mubr.f32.gmra.mrb[0].mxu0 %v7897
    %v9520 = vpop.f32.mrb[0].mxu0
    %v9521 = vadd.f32 %v8668, %v9520
    %v9522 = vpop.f32.mrb[0].mxu0
    %9523 = vmatprep.mubr.f32.mxu0 %v7906
    %9524 = vmatmul.mubr.f32.gmra.mrb[0].mxu0 %v7905
    %v9525 = vpop.f32.mrb[0].mxu0
    %v9526 = vadd.f32 %v8673, %v9525
    %v9527 = vpop.f32.mrb[0].mxu0
    %9528 = vmatprep.mubr.f32.mxu0 %v7914
    %9529 = vmatmul.mubr.f32.gmra.mrb[0].mxu0 %v7913
    %v9530 = vpop.f32.mrb[0].mxu0
    %v9531 = vadd.f32 %v8678, %v9530
    %v9532 = vpop.f32.mrb[0].mxu0
    %9533 = vmatprep.mubr.f32.mxu0 %v7922
    %9534 = vmatmul.mubr.f32.gmra.mrb[0].mxu0 %v7921
    %v9535 = vpop.f32.mrb[0].mxu0
    %v9536 = vadd.f32 %v8683, %v9535
    %v9537 = vpop.f32.mrb[0].mxu0
    %9538 = vmatprep.mubr.f32.mxu0 %v7930
    %9539 = vmatmul.mubr.f32.gmra.mrb[0].mxu0 %v7929
    %v9540 = vpop.f32.mrb[0].mxu0
    %v9541 = vadd.f32 %v8688, %v9540
    %v9542 = vpop.f32.mrb[0].mxu0
    %9543 = vmatprep.mubr.f32.mxu0 %v7938
    %9544 = vmatmul.mubr.f32.gmra.mrb[0].mxu0 %v7937
    %v9545 = vpop.f32.mrb[0].mxu0
    %v9546 = vadd.f32 %v8693, %v9545
    %v9547 = vpop.f32.mrb[0].mxu0
    %9548 = vmatprep.mubr.f32.mxu0 %v7946
    %9549 = vmatmul.mubr.f32.gmra.mrb[0].mxu0 %v7945
    %v9550 = vpop.f32.mrb[0].mxu0
    %v9551 = vadd.f32 %v8698, %v9550
    %v9552 = vpop.f32.mrb[0].mxu0
    %9553 = vmatprep.mubr.f32.mxu0 %v7954
    %9554 = vmatmul.mubr.f32.gmra.mrb[0].mxu0 %v7953
    %v9555 = vpop.f32.mrb[0].mxu0
    %v9556 = vadd.f32 %v8703, %v9555
    %v9557 = vpop.f32.mrb[0].mxu0
    %9558 = vmatprep.mubr.f32.mxu0 %v7962
    %9559 = vmatmul.mubr.f32.gmra.mrb[0].mxu0 %v7961
    %v9560 = vpop.f32.mrb[0].mxu0
    %v9561 = vadd.f32 %v8708, %v9560
    %v9562 = vpop.f32.mrb[0].mxu0
    %9563 = vmatprep.mubr.f32.mxu0 %v7970
    %9564 = vmatmul.mubr.f32.gmra.mrb[0].mxu0 %v7969
    %v9565 = vpop.f32.mrb[0].mxu0
    %v9566 = vadd.f32 %v8713, %v9565
    %v9567 = vpop.f32.mrb[0].mxu0
    %9568 = vmatprep.mubr.f32.mxu0 %v7978
    %9569 = vmatmul.mubr.f32.gmra.mrb[0].mxu0 %v7977
    %v9570 = vpop.f32.mrb[0].mxu0
    %v9571 = vadd.f32 %v8718, %v9570
    %v9572 = vpop.f32.mrb[0].mxu0
    %9573 = vmatprep.mubr.f32.mxu0 %v7986
    %9574 = vmatmul.mubr.f32.gmra.mrb[0].mxu0 %v7985
    %v9575 = vpop.f32.mrb[0].mxu0
    %v9576 = vadd.f32 %v8723, %v9575
    %v9577 = vpop.f32.mrb[0].mxu0
    %9578 = vmatprep.mubr.f32.mxu0 %v7994
    %9579 = vmatmul.mubr.f32.gmra.mrb[0].mxu0 %v7993
    %v9580 = vpop.f32.mrb[0].mxu0
    %v9581 = vadd.f32 %v8728, %v9580
    %v9582 = vpop.f32.mrb[0].mxu0
    %9583 = vmatprep.mubr.f32.mxu0 %v8002
    %9584 = vmatmul.mubr.f32.gmra.mrb[0].mxu0 %v8001
    %v9585 = vpop.f32.mrb[0].mxu0
    %v9586 = vadd.f32 %v8733, %v9585
    %v9587 = vpop.f32.mrb[0].mxu0
    %9588 = vmatprep.mubr.f32.mxu0 %v8010
    %9589 = vmatmul.mubr.f32.gmra.mrb[0].mxu0 %v8009
    %v9590 = vpop.f32.mrb[0].mxu0
    %v9591 = vadd.f32 %v8738, %v9590
    %v9592 = vpop.f32.mrb[0].mxu0
    %9593 = vmatprep.mubr.f32.mxu0 %v8018
    %9594 = vmatmul.mubr.f32.gmra.mrb[0].mxu0 %v8017
    %v9595 = vpop.f32.mrb[0].mxu0
    %v9596 = vadd.f32 %v8743, %v9595
    %v9597 = vpop.f32.mrb[0].mxu0
    %9598 = vmatprep.mubr.f32.mxu0 %v8026
    %9599 = vmatmul.mubr.f32.gmra.mrb[0].mxu0 %v8025
    %v9600 = vpop.f32.mrb[0].mxu0
    %v9601 = vadd.f32 %v8748, %v9600
    %v9602 = vpop.f32.mrb[0].mxu0
    %9603 = vmatprep.mubr.f32.mxu0 %v8034
    %9604 = vmatmul.mubr.f32.gmra.mrb[0].mxu0 %v8033
    %v9605 = vpop.f32.mrb[0].mxu0
    %v9606 = vadd.f32 %v8753, %v9605
    %v9607 = vpop.f32.mrb[0].mxu0
    %9608 = vmatprep.mubr.f32.mxu0 %v8042
    %9609 = vmatmul.mubr.f32.gmra.mrb[0].mxu0 %v8041
    %v9610 = vpop.f32.mrb[0].mxu0
    %v9611 = vadd.f32 %v8758, %v9610
    %v9612 = vpop.f32.mrb[0].mxu0
    %9613 = vmatprep.mubr.f32.mxu0 %v8050
    %9614 = vmatmul.mubr.f32.gmra.mrb[0].mxu0 %v8049
    %v9615 = vpop.f32.mrb[0].mxu0
    %v9616 = vadd.f32 %v8763, %v9615
    %v9617 = vpop.f32.mrb[0].mxu0
    %9618 = vmatprep.mubr.f32.mxu0 %v8058
    %9619 = vmatmul.mubr.f32.gmra.mrb[0].mxu0 %v8057
    %v9620 = vpop.f32.mrb[0].mxu0
    %v9621 = vadd.f32 %v8768, %v9620
    %v9622 = vpop.f32.mrb[0].mxu0
    %9623 = vmatprep.mubr.f32.mxu0 %v8066
    %9624 = vmatmul.mubr.f32.gmra.mrb[0].mxu0 %v8065
    %v9625 = vpop.f32.mrb[0].mxu0
    %v9626 = vadd.f32 %v8773, %v9625
    %v9627 = vpop.f32.mrb[0].mxu0
    %9628 = vmatprep.mubr.f32.mxu0 %v8074
    %9629 = vmatmul.mubr.f32.gmra.mrb[0].mxu0 %v8073
    %v9630 = vpop.f32.mrb[0].mxu0
    %v9631 = vadd.f32 %v8778, %v9630
    %v9632 = vpop.f32.mrb[0].mxu0
    %9633 = vmatprep.mubr.f32.mxu0 %v8082
    %9634 = vmatmul.mubr.f32.gmra.mrb[0].mxu0 %v8081
    %v9635 = vpop.f32.mrb[0].mxu0
    %v9636 = vadd.f32 %v8783, %v9635
    %v9637 = vpop.f32.mrb[0].mxu0
    %9638 = vmatprep.mubr.f32.mxu0 %v8090
    %9639 = vmatmul.mubr.f32.gmra.mrb[0].mxu0 %v8089
    %v9640 = vpop.f32.mrb[0].mxu0
    %v9641 = vadd.f32 %v8788, %v9640
    %v9642 = vpop.f32.mrb[0].mxu0
    %9643 = vmatprep.mubr.f32.mxu0 %v8098
    %9644 = vmatmul.mubr.f32.gmra.mrb[0].mxu0 %v8097
    %v9645 = vpop.f32.mrb[0].mxu0
    %v9646 = vadd.f32 %v8793, %v9645
    %v9647 = vpop.f32.mrb[0].mxu0
    %9648 = vmatprep.mubr.f32.mxu0 %v8106
    %9649 = vmatmul.mubr.f32.gmra.mrb[0].mxu0 %v8105
    %v9650 = vpop.f32.mrb[0].mxu0
    %v9651 = vadd.f32 %v8798, %v9650
    %v9652 = vpop.f32.mrb[0].mxu0
    %9653 = vmatprep.mubr.f32.mxu0 %v8114
    %9654 = vmatmul.mubr.f32.gmra.mrb[0].mxu0 %v8113
    %v9655 = vpop.f32.mrb[0].mxu0
    %v9656 = vadd.f32 %v8803, %v9655
    %v9657 = vpop.f32.mrb[0].mxu0
    %9658 = vmatprep.mubr.f32.mxu0 %v8122
    %9659 = vmatmul.mubr.f32.gmra.mrb[0].mxu0 %v8121
    %v9660 = vpop.f32.mrb[0].mxu0
    %v9661 = vadd.f32 %v8808, %v9660
    %v9662 = vpop.f32.mrb[0].mxu0
    %9663 = vmatprep.mubr.f32.mxu0 %v8130
    %9664 = vmatmul.mubr.f32.gmra.mrb[0].mxu0 %v8129
    %v9665 = vpop.f32.mrb[0].mxu0
    %v9666 = vadd.f32 %v8813, %v9665
    %v9667 = vpop.f32.mrb[0].mxu0
    %9668 = vmatprep.mubr.f32.mxu0 %v8138
    %9669 = vmatmul.mubr.f32.gmra.mrb[0].mxu0 %v8137
    %v9670 = vpop.f32.mrb[0].mxu0
    %v9671 = vadd.f32 %v8818, %v9670
    %v9672 = vpop.f32.mrb[0].mxu0
    %9673 = vmatprep.mubr.f32.mxu0 %v8146
    %9674 = vmatmul.mubr.f32.gmra.mrb[0].mxu0 %v8145
    %v9675 = vpop.f32.mrb[0].mxu0
    %v9676 = vadd.f32 %v8823, %v9675
    %v9677 = vpop.f32.mrb[0].mxu0
    %9678 = vmatprep.mubr.f32.mxu0 %v8154
    %9679 = vmatmul.mubr.f32.gmra.mrb[0].mxu0 %v8153
    %v9680 = vpop.f32.mrb[0].mxu0
    %v9681 = vadd.f32 %v8828, %v9680
    %v9682 = vpop.f32.mrb[0].mxu0
    %9683 = vmatprep.mubr.f32.mxu0 %v8162
    %9684 = vmatmul.mubr.f32.gmra.mrb[0].mxu0 %v8161
    %v9685 = vpop.f32.mrb[0].mxu0
    %v9686 = vadd.f32 %v8833, %v9685
    %v9687 = vpop.f32.mrb[0].mxu0
    %9688 = vmatprep.mubr.f32.mxu0 %v8170
    %9689 = vmatmul.mubr.f32.gmra.mrb[0].mxu0 %v8169
    %v9690 = vpop.f32.mrb[0].mxu0
    %v9691 = vadd.f32 %v8838, %v9690
    %v9692 = vpop.f32.mrb[0].mxu0
    %9693 = vmatprep.mubr.f32.mxu0 %v8178
    %9694 = vmatmul.mubr.f32.gmra.mrb[0].mxu0 %v8177
    %v9695 = vpop.f32.mrb[0].mxu0
    %v9696 = vadd.f32 %v8843, %v9695
    %v9697 = vpop.f32.mrb[0].mxu0
    %9698 = vmatprep.mubr.f32.mxu0 %v8186
    %9699 = vmatmul.mubr.f32.gmra.mrb[0].mxu0 %v8185
    %v9700 = vpop.f32.mrb[0].mxu0
    %v9701 = vadd.f32 %v8848, %v9700
    %v9702 = vpop.f32.mrb[0].mxu0
    %9703 = vmatprep.mubr.f32.mxu0 %v8194
    %9704 = vmatmul.mubr.f32.gmra.mrb[0].mxu0 %v8193
    %v9705 = vpop.f32.mrb[0].mxu0
    %v9706 = vadd.f32 %v8853, %v9705
    %v9707 = vpop.f32.mrb[0].mxu0
    %9708 = vmatprep.mubr.f32.mxu0 %v8202
    %9709 = vmatmul.mubr.f32.gmra.mrb[0].mxu0 %v8201
    %v9710 = vpop.f32.mrb[0].mxu0
    %v9711 = vadd.f32 %v8858, %v9710
    %v9712 = vpop.f32.mrb[0].mxu0
    %9713 = vmatprep.mubr.f32.mxu0 %v8210
    %9714 = vmatmul.mubr.f32.gmra.mrb[0].mxu0 %v8209
    %v9715 = vpop.f32.mrb[0].mxu0
    %v9716 = vadd.f32 %v8863, %v9715
    %v9717 = vpop.f32.mrb[0].mxu0
    %9718 = vmatprep.mubr.f32.mxu0 %v8218
    %9719 = vmatmul.mubr.f32.gmra.mrb[0].mxu0 %v8217
    %v9720 = vpop.f32.mrb[0].mxu0
    %v9721 = vadd.f32 %v8868, %v9720
    %v9722 = vpop.f32.mrb[0].mxu0
    %9723 = vmatprep.mubr.f32.mxu0 %v8226
    %9724 = vmatmul.mubr.f32.gmra.mrb[0].mxu0 %v8225
    %v9725 = vpop.f32.mrb[0].mxu0
    %v9726 = vadd.f32 %v8873, %v9725
    %v9727 = vpop.f32.mrb[0].mxu0
    %9728 = vmatprep.mubr.f32.mxu0 %v8234
    %9729 = vmatmul.mubr.f32.gmra.mrb[0].mxu0 %v8233
    %v9730 = vpop.f32.mrb[0].mxu0
    %v9731 = vadd.f32 %v8878, %v9730
    %v9732 = vpop.f32.mrb[0].mxu0
    %9733 = vmatprep.mubr.f32.mxu0 %v8242
    %9734 = vmatmul.mubr.f32.gmra.mrb[0].mxu0 %v8241
    %v9735 = vpop.f32.mrb[0].mxu0
    %v9736 = vadd.f32 %v8883, %v9735
    %v9737 = vpop.f32.mrb[0].mxu0
    %9738 = vmatprep.mubr.f32.mxu0 %v8250
    %9739 = vmatmul.mubr.f32.gmra.mrb[0].mxu0 %v8249
    %v9740 = vpop.f32.mrb[0].mxu0
    %v9741 = vadd.f32 %v8888, %v9740
    %v9742 = vpop.f32.mrb[0].mxu0
    %9743 = vmatprep.mubr.f32.mxu0 %v8258
    %9744 = vmatmul.mubr.f32.gmra.mrb[0].mxu0 %v8257
    %v9745 = vpop.f32.mrb[0].mxu0
    %v9746 = vadd.f32 %v8893, %v9745
    %v9747 = vpop.f32.mrb[0].mxu0
    %9748 = vmatprep.mubr.f32.mxu0 %v8266
    %9749 = vmatmul.mubr.f32.gmra.mrb[0].mxu0 %v8265
    %v9750 = vpop.f32.mrb[0].mxu0
    %v9751 = vadd.f32 %v8898, %v9750
    %v9752 = vpop.f32.mrb[0].mxu0
    %9753 = vmatprep.mubr.f32.mxu0 %v8274
    %9754 = vmatmul.mubr.f32.gmra.mrb[0].mxu0 %v8273
    %v9755 = vpop.f32.mrb[0].mxu0
    %v9756 = vadd.f32 %v8903, %v9755
    %v9757 = vpop.f32.mrb[0].mxu0
    %9758 = vmatprep.mubr.f32.mxu0 %v8282
    %9759 = vmatmul.mubr.f32.gmra.mrb[0].mxu0 %v8281
    %v9760 = vpop.f32.mrb[0].mxu0
    %v9761 = vadd.f32 %v8908, %v9760
    %v9762 = vpop.f32.mrb[0].mxu0
    %9763 = vmatprep.mubr.f32.mxu0 %v8290
    %9764 = vmatmul.mubr.f32.gmra.mrb[0].mxu0 %v8289
    %v9765 = vpop.f32.mrb[0].mxu0
    %v9766 = vadd.f32 %v8913, %v9765
    %v9767 = vpop.f32.mrb[0].mxu0
    %9768 = vmatprep.mubr.f32.mxu0 %v8298
    %9769 = vmatmul.mubr.f32.gmra.mrb[0].mxu0 %v8297
    %v9770 = vpop.f32.mrb[0].mxu0
    %v9771 = vadd.f32 %v8918, %v9770
    %v9772 = vpop.f32.mrb[0].mxu0
    %9773 = vmatprep.mubr.f32.mxu0 %v8306
    %9774 = vmatmul.mubr.f32.gmra.mrb[0].mxu0 %v8305
    %v9775 = vpop.f32.mrb[0].mxu0
    %v9776 = vadd.f32 %v8923, %v9775
    %v9777 = vpop.f32.mrb[0].mxu0
    %9778 = vmatprep.mubr.f32.mxu0 %v8314
    %9779 = vmatmul.mubr.f32.gmra.mrb[0].mxu0 %v8313
    %v9780 = vpop.f32.mrb[0].mxu0
    %v9781 = vadd.f32 %v8928, %v9780
    %v9782 = vpop.f32.mrb[0].mxu0
    %9783 = vmatprep.mubr.f32.mxu0 %v8322
    %9784 = vmatmul.mubr.f32.gmra.mrb[0].mxu0 %v8321
    %v9785 = vpop.f32.mrb[0].mxu0
    %v9786 = vadd.f32 %v8933, %v9785
    %v9787 = vpop.f32.mrb[0].mxu0
    %9788 = vmatprep.mubr.f32.mxu0 %v8330
    %9789 = vmatmul.mubr.f32.gmra.mrb[0].mxu0 %v8329
    %v9790 = vpop.f32.mrb[0].mxu0
    %v9791 = vadd.f32 %v8938, %v9790
    %v9792 = vpop.f32.mrb[0].mxu0
    %9793 = vmatprep.mubr.f32.mxu0 %v8338
    %9794 = vmatmul.mubr.f32.gmra.mrb[0].mxu0 %v8337
    %v9795 = vpop.f32.mrb[0].mxu0
    %v9796 = vadd.f32 %v8943, %v9795
    %v9797 = vpop.f32.mrb[0].mxu0
    %9798 = vmatprep.mubr.f32.mxu0 %v8346
    %9799 = vmatmul.mubr.f32.gmra.mrb[0].mxu0 %v8345
    %v9800 = vpop.f32.mrb[0].mxu0
    %v9801 = vadd.f32 %v8948, %v9800
    %v9802 = vpop.f32.mrb[0].mxu0
    %9803 = vmatprep.mubr.f32.mxu0 %v8354
    %9804 = vmatmul.mubr.f32.gmra.mrb[0].mxu0 %v8353
    %v9805 = vpop.f32.mrb[0].mxu0
    %v9806 = vadd.f32 %v8953, %v9805
    %v9807 = vpop.f32.mrb[0].mxu0
    %9808 = vmatprep.mubr.f32.mxu0 %v8362
    %9809 = vmatmul.mubr.f32.gmra.mrb[0].mxu0 %v8361
    %v9810 = vpop.f32.mrb[0].mxu0
    %v9811 = vadd.f32 %v8958, %v9810
    %v9812 = vpop.f32.mrb[0].mxu0
    %9813 = vmatprep.mubr.f32.mxu0 %v8370
    %9814 = vmatmul.mubr.f32.gmra.mrb[0].mxu0 %v8369
    %v9815 = vpop.f32.mrb[0].mxu0
    %v9816 = vadd.f32 %v8963, %v9815
    %v9817 = vpop.f32.mrb[0].mxu0
    %9818 = vdwg.mxu0
    %9819 = vmatprep.subr.mxu0 0.0
    %9820 = vmatpush1.msra.mxu0 %v7512
    %9821 = vmatprep.subr.mxu0 0.0
    %9822 = vmatpush1.msra.mxu0 %v7513
    %9823 = vmatprep.subr.mxu0 0.0
    %9824 = vmatpush1.msra.mxu0 %v7514
    %9825 = vmatprep.subr.mxu0 0.0
    %9826 = vmatpush1.msra.mxu0 %v7515
    %9827 = vmatprep.subr.mxu0 0.0
    %9828 = vmatpush1.msra.mxu0 %v7516
    %9829 = vmatprep.subr.mxu0 0.0
    %9830 = vmatpush1.msra.mxu0 %v7517
    %9831 = vmatprep.subr.mxu0 0.0
    %9832 = vmatpush1.msra.mxu0 %v7518
    %9833 = vmatprep.subr.mxu0 0.0
    %9834 = vmatpush1.msra.mxu0 %v7519
    %9835 = vmatprep.subr.mxu0 0.0
    %9836 = vmatpush1.msra.mxu0 %v7520
    %9837 = vmatprep.subr.mxu0 0.0
    %9838 = vmatpush1.msra.mxu0 %v7521
    %9839 = vmatprep.subr.mxu0 0.0
    %9840 = vmatpush1.msra.mxu0 %v7522
    %9841 = vmatprep.subr.mxu0 0.0
    %9842 = vmatpush1.msra.mxu0 %v7523
    %9843 = vmatprep.subr.mxu0 0.0
    %9844 = vmatpush1.msra.mxu0 %v7524
    %9845 = vmatprep.subr.mxu0 0.0
    %9846 = vmatpush1.msra.mxu0 %v7525
    %9847 = vmatprep.subr.mxu0 0.0
    %9848 = vmatpush1.msra.mxu0 %v7526
    %9849 = vmatprep.subr.mxu0 0.0
    %9850 = vmatpush1.msra.mxu0 %v7527
    %9851 = vmatprep.subr.mxu0 0.0
    %9852 = vmatpush1.msra.mxu0 %v7528
    %9853 = vmatprep.subr.mxu0 0.0
    %9854 = vmatpush1.msra.mxu0 %v7529
    %9855 = vmatprep.subr.mxu0 0.0
    %9856 = vmatpush1.msra.mxu0 %v7530
    %9857 = vmatprep.subr.mxu0 0.0
    %9858 = vmatpush1.msra.mxu0 %v7531
    %9859 = vmatprep.subr.mxu0 0.0
    %9860 = vmatpush1.msra.mxu0 %v7532
    %9861 = vmatprep.subr.mxu0 0.0
    %9862 = vmatpush1.msra.mxu0 %v7533
    %9863 = vmatprep.subr.mxu0 0.0
    %9864 = vmatpush1.msra.mxu0 %v7534
    %9865 = vmatprep.subr.mxu0 0.0
    %9866 = vmatpush1.msra.mxu0 %v7535
    %9867 = vmatprep.subr.mxu0 0.0
    %9868 = vmatpush1.msra.mxu0 %v7536
    %9869 = vmatprep.subr.mxu0 0.0
    %9870 = vmatpush1.msra.mxu0 %v7537
    %9871 = vmatprep.subr.mxu0 0.0
    %9872 = vmatpush1.msra.mxu0 %v7538
    %9873 = vmatprep.subr.mxu0 0.0
    %9874 = vmatpush1.msra.mxu0 %v7539
    %9875 = vmatprep.subr.mxu0 0.0
    %9876 = vmatpush1.msra.mxu0 %v7540
    %9877 = vmatprep.subr.mxu0 0.0
    %9878 = vmatpush1.msra.mxu0 %v7541
    %9879 = vmatprep.subr.mxu0 0.0
    %9880 = vmatpush1.msra.mxu0 %v7542
    %9881 = vmatprep.subr.mxu0 0.0
    %9882 = vmatpush1.msra.mxu0 %v7543
    %9883 = vmatprep.mubr.f32.mxu0 %v7596
    %9884 = vmatmul.mubr.f32.gmra.mrb[0].mxu0 %v7595
    %v9885 = vpop.f32.mrb[0].mxu0
    %v9886 = vadd.f32 %v9331, %v9885
    %v9887 = vpop.f32.mrb[0].mxu0
    %9888 = vmatprep.mubr.f32.mxu0 %v7604
    %9889 = vmatmul.mubr.f32.gmra.mrb[0].mxu0 %v7603
    %v9890 = vpop.f32.mrb[0].mxu0
    %v9891 = vadd.f32 %v9336, %v9890
    %v9892 = vpop.f32.mrb[0].mxu0
    %9893 = vmatprep.mubr.f32.mxu0 %v7612
    %9894 = vmatmul.mubr.f32.gmra.mrb[0].mxu0 %v7611
    %v9895 = vpop.f32.mrb[0].mxu0
    %v9896 = vadd.f32 %v9341, %v9895
    %v9897 = vpop.f32.mrb[0].mxu0
    %9898 = vmatprep.mubr.f32.mxu0 %v7620
    %9899 = vmatmul.mubr.f32.gmra.mrb[0].mxu0 %v7619
    %v9900 = vpop.f32.mrb[0].mxu0
    %v9901 = vadd.f32 %v9346, %v9900
    %v9902 = vpop.f32.mrb[0].mxu0
    %9903 = vmatprep.mubr.f32.mxu0 %v7628
    %9904 = vmatmul.mubr.f32.gmra.mrb[0].mxu0 %v7627
    %v9905 = vpop.f32.mrb[0].mxu0
    %v9906 = vadd.f32 %v9351, %v9905
    %v9907 = vpop.f32.mrb[0].mxu0
    %9908 = vmatprep.mubr.f32.mxu0 %v7636
    %9909 = vmatmul.mubr.f32.gmra.mrb[0].mxu0 %v7635
    %v9910 = vpop.f32.mrb[0].mxu0
    %v9911 = vadd.f32 %v9356, %v9910
    %v9912 = vpop.f32.mrb[0].mxu0
    %9913 = vmatprep.mubr.f32.mxu0 %v7644
    %9914 = vmatmul.mubr.f32.gmra.mrb[0].mxu0 %v7643
    %v9915 = vpop.f32.mrb[0].mxu0
    %v9916 = vadd.f32 %v9361, %v9915
    %v9917 = vpop.f32.mrb[0].mxu0
    %9918 = vmatprep.mubr.f32.mxu0 %v7652
    %9919 = vmatmul.mubr.f32.gmra.mrb[0].mxu0 %v7651
    %v9920 = vpop.f32.mrb[0].mxu0
    %v9921 = vadd.f32 %v9366, %v9920
    %v9922 = vpop.f32.mrb[0].mxu0
    %9923 = vmatprep.mubr.f32.mxu0 %v7660
    %9924 = vmatmul.mubr.f32.gmra.mrb[0].mxu0 %v7659
    %v9925 = vpop.f32.mrb[0].mxu0
    %v9926 = vadd.f32 %v9371, %v9925
    %v9927 = vpop.f32.mrb[0].mxu0
    %9928 = vmatprep.mubr.f32.mxu0 %v7668
    %9929 = vmatmul.mubr.f32.gmra.mrb[0].mxu0 %v7667
    %v9930 = vpop.f32.mrb[0].mxu0
    %v9931 = vadd.f32 %v9376, %v9930
    %v9932 = vpop.f32.mrb[0].mxu0
    %9933 = vmatprep.mubr.f32.mxu0 %v7676
    %9934 = vmatmul.mubr.f32.gmra.mrb[0].mxu0 %v7675
    %v9935 = vpop.f32.mrb[0].mxu0
    %v9936 = vadd.f32 %v9381, %v9935
    %v9937 = vpop.f32.mrb[0].mxu0
    %9938 = vmatprep.mubr.f32.mxu0 %v7684
    %9939 = vmatmul.mubr.f32.gmra.mrb[0].mxu0 %v7683
    %v9940 = vpop.f32.mrb[0].mxu0
    %v9941 = vadd.f32 %v9386, %v9940
    %v9942 = vpop.f32.mrb[0].mxu0
    %9943 = vmatprep.mubr.f32.mxu0 %v7692
    %9944 = vmatmul.mubr.f32.gmra.mrb[0].mxu0 %v7691
    %v9945 = vpop.f32.mrb[0].mxu0
    %v9946 = vadd.f32 %v9391, %v9945
    %v9947 = vpop.f32.mrb[0].mxu0
    %9948 = vmatprep.mubr.f32.mxu0 %v7700
    %9949 = vmatmul.mubr.f32.gmra.mrb[0].mxu0 %v7699
    %v9950 = vpop.f32.mrb[0].mxu0
    %v9951 = vadd.f32 %v9396, %v9950
    %v9952 = vpop.f32.mrb[0].mxu0
    %9953 = vmatprep.mubr.f32.mxu0 %v7708
    %9954 = vmatmul.mubr.f32.gmra.mrb[0].mxu0 %v7707
    %v9955 = vpop.f32.mrb[0].mxu0
    %v9956 = vadd.f32 %v9401, %v9955
    %v9957 = vpop.f32.mrb[0].mxu0
    %9958 = vmatprep.mubr.f32.mxu0 %v7716
    %9959 = vmatmul.mubr.f32.gmra.mrb[0].mxu0 %v7715
    %v9960 = vpop.f32.mrb[0].mxu0
    %v9961 = vadd.f32 %v9406, %v9960
    %v9962 = vpop.f32.mrb[0].mxu0
    %9963 = vmatprep.mubr.f32.mxu0 %v7724
    %9964 = vmatmul.mubr.f32.gmra.mrb[0].mxu0 %v7723
    %v9965 = vpop.f32.mrb[0].mxu0
    %v9966 = vadd.f32 %v9411, %v9965
    %v9967 = vpop.f32.mrb[0].mxu0
    %9968 = vmatprep.mubr.f32.mxu0 %v7732
    %9969 = vmatmul.mubr.f32.gmra.mrb[0].mxu0 %v7731
    %v9970 = vpop.f32.mrb[0].mxu0
    %v9971 = vadd.f32 %v9416, %v9970
    %v9972 = vpop.f32.mrb[0].mxu0
    %9973 = vmatprep.mubr.f32.mxu0 %v7740
    %9974 = vmatmul.mubr.f32.gmra.mrb[0].mxu0 %v7739
    %v9975 = vpop.f32.mrb[0].mxu0
    %v9976 = vadd.f32 %v9421, %v9975
    %v9977 = vpop.f32.mrb[0].mxu0
    %9978 = vmatprep.mubr.f32.mxu0 %v7748
    %9979 = vmatmul.mubr.f32.gmra.mrb[0].mxu0 %v7747
    %v9980 = vpop.f32.mrb[0].mxu0
    %v9981 = vadd.f32 %v9426, %v9980
    %v9982 = vpop.f32.mrb[0].mxu0
    %9983 = vmatprep.mubr.f32.mxu0 %v7756
    %9984 = vmatmul.mubr.f32.gmra.mrb[0].mxu0 %v7755
    %v9985 = vpop.f32.mrb[0].mxu0
    %v9986 = vadd.f32 %v9431, %v9985
    %v9987 = vpop.f32.mrb[0].mxu0
    %9988 = vmatprep.mubr.f32.mxu0 %v7764
    %9989 = vmatmul.mubr.f32.gmra.mrb[0].mxu0 %v7763
    %v9990 = vpop.f32.mrb[0].mxu0
    %v9991 = vadd.f32 %v9436, %v9990
    %v9992 = vpop.f32.mrb[0].mxu0
    %9993 = vmatprep.mubr.f32.mxu0 %v7772
    %9994 = vmatmul.mubr.f32.gmra.mrb[0].mxu0 %v7771
    %v9995 = vpop.f32.mrb[0].mxu0
    %v9996 = vadd.f32 %v9441, %v9995
    %v9997 = vpop.f32.mrb[0].mxu0
    %9998 = vmatprep.mubr.f32.mxu0 %v7780
    %9999 = vmatmul.mubr.f32.gmra.mrb[0].mxu0 %v7779
    %v10000 = vpop.f32.mrb[0].mxu0
    %v10001 = vadd.f32 %v9446, %v10000
    %v10002 = vpop.f32.mrb[0].mxu0
    %10003 = vmatprep.mubr.f32.mxu0 %v7788
    %10004 = vmatmul.mubr.f32.gmra.mrb[0].mxu0 %v7787
    %v10005 = vpop.f32.mrb[0].mxu0
    %v10006 = vadd.f32 %v9451, %v10005
    %v10007 = vpop.f32.mrb[0].mxu0
    %10008 = vmatprep.mubr.f32.mxu0 %v7796
    %10009 = vmatmul.mubr.f32.gmra.mrb[0].mxu0 %v7795
    %v10010 = vpop.f32.mrb[0].mxu0
    %v10011 = vadd.f32 %v9456, %v10010
    %v10012 = vpop.f32.mrb[0].mxu0
    %10013 = vmatprep.mubr.f32.mxu0 %v7804
    %10014 = vmatmul.mubr.f32.gmra.mrb[0].mxu0 %v7803
    %v10015 = vpop.f32.mrb[0].mxu0
    %v10016 = vadd.f32 %v9461, %v10015
    %v10017 = vpop.f32.mrb[0].mxu0
    %10018 = vmatprep.mubr.f32.mxu0 %v7812
    %10019 = vmatmul.mubr.f32.gmra.mrb[0].mxu0 %v7811
    %v10020 = vpop.f32.mrb[0].mxu0
    %v10021 = vadd.f32 %v9466, %v10020
    %v10022 = vpop.f32.mrb[0].mxu0
    %10023 = vmatprep.mubr.f32.mxu0 %v7820
    %10024 = vmatmul.mubr.f32.gmra.mrb[0].mxu0 %v7819
    %v10025 = vpop.f32.mrb[0].mxu0
    %v10026 = vadd.f32 %v9471, %v10025
    %v10027 = vpop.f32.mrb[0].mxu0
    %10028 = vmatprep.mubr.f32.mxu0 %v7828
    %10029 = vmatmul.mubr.f32.gmra.mrb[0].mxu0 %v7827
    %v10030 = vpop.f32.mrb[0].mxu0
    %v10031 = vadd.f32 %v9476, %v10030
    %v10032 = vpop.f32.mrb[0].mxu0
    %10033 = vmatprep.mubr.f32.mxu0 %v7836
    %10034 = vmatmul.mubr.f32.gmra.mrb[0].mxu0 %v7835
    %v10035 = vpop.f32.mrb[0].mxu0
    %v10036 = vadd.f32 %v9481, %v10035
    %v10037 = vpop.f32.mrb[0].mxu0
    %10038 = vmatprep.mubr.f32.mxu0 %v7844
    %10039 = vmatmul.mubr.f32.gmra.mrb[0].mxu0 %v7843
    %v10040 = vpop.f32.mrb[0].mxu0
    %v10041 = vadd.f32 %v9486, %v10040
    %v10042 = vpop.f32.mrb[0].mxu0
    %10043 = vmatprep.mubr.f32.mxu0 %v7852
    %10044 = vmatmul.mubr.f32.gmra.mrb[0].mxu0 %v7851
    %v10045 = vpop.f32.mrb[0].mxu0
    %v10046 = vadd.f32 %v9491, %v10045
    %v10047 = vpop.f32.mrb[0].mxu0
    %10048 = vmatprep.mubr.f32.mxu0 %v7860
    %10049 = vmatmul.mubr.f32.gmra.mrb[0].mxu0 %v7859
    %v10050 = vpop.f32.mrb[0].mxu0
    %v10051 = vadd.f32 %v9496, %v10050
    %v10052 = vpop.f32.mrb[0].mxu0
    %10053 = vmatprep.mubr.f32.mxu0 %v7868
    %10054 = vmatmul.mubr.f32.gmra.mrb[0].mxu0 %v7867
    %v10055 = vpop.f32.mrb[0].mxu0
    %v10056 = vadd.f32 %v9501, %v10055
    %v10057 = vpop.f32.mrb[0].mxu0
    %10058 = vmatprep.mubr.f32.mxu0 %v7876
    %10059 = vmatmul.mubr.f32.gmra.mrb[0].mxu0 %v7875
    %v10060 = vpop.f32.mrb[0].mxu0
    %v10061 = vadd.f32 %v9506, %v10060
    %v10062 = vpop.f32.mrb[0].mxu0
    %10063 = vmatprep.mubr.f32.mxu0 %v7884
    %10064 = vmatmul.mubr.f32.gmra.mrb[0].mxu0 %v7883
    %v10065 = vpop.f32.mrb[0].mxu0
    %v10066 = vadd.f32 %v9511, %v10065
    %v10067 = vpop.f32.mrb[0].mxu0
    %10068 = vmatprep.mubr.f32.mxu0 %v7892
    %10069 = vmatmul.mubr.f32.gmra.mrb[0].mxu0 %v7891
    %v10070 = vpop.f32.mrb[0].mxu0
    %v10071 = vadd.f32 %v9516, %v10070
    %v10072 = vpop.f32.mrb[0].mxu0
    %10073 = vmatprep.mubr.f32.mxu0 %v7900
    %10074 = vmatmul.mubr.f32.gmra.mrb[0].mxu0 %v7899
    %v10075 = vpop.f32.mrb[0].mxu0
    %v10076 = vadd.f32 %v9521, %v10075
    %v10077 = vpop.f32.mrb[0].mxu0
    %10078 = vmatprep.mubr.f32.mxu0 %v7908
    %10079 = vmatmul.mubr.f32.gmra.mrb[0].mxu0 %v7907
    %v10080 = vpop.f32.mrb[0].mxu0
    %v10081 = vadd.f32 %v9526, %v10080
    %v10082 = vpop.f32.mrb[0].mxu0
    %10083 = vmatprep.mubr.f32.mxu0 %v7916
    %10084 = vmatmul.mubr.f32.gmra.mrb[0].mxu0 %v7915
    %v10085 = vpop.f32.mrb[0].mxu0
    %v10086 = vadd.f32 %v9531, %v10085
    %v10087 = vpop.f32.mrb[0].mxu0
    %10088 = vmatprep.mubr.f32.mxu0 %v7924
    %10089 = vmatmul.mubr.f32.gmra.mrb[0].mxu0 %v7923
    %v10090 = vpop.f32.mrb[0].mxu0
    %v10091 = vadd.f32 %v9536, %v10090
    %v10092 = vpop.f32.mrb[0].mxu0
    %10093 = vmatprep.mubr.f32.mxu0 %v7932
    %10094 = vmatmul.mubr.f32.gmra.mrb[0].mxu0 %v7931
    %v10095 = vpop.f32.mrb[0].mxu0
    %v10096 = vadd.f32 %v9541, %v10095
    %v10097 = vpop.f32.mrb[0].mxu0
    %10098 = vmatprep.mubr.f32.mxu0 %v7940
    %10099 = vmatmul.mubr.f32.gmra.mrb[0].mxu0 %v7939
    %v10100 = vpop.f32.mrb[0].mxu0
    %v10101 = vadd.f32 %v9546, %v10100
    %v10102 = vpop.f32.mrb[0].mxu0
    %10103 = vmatprep.mubr.f32.mxu0 %v7948
    %10104 = vmatmul.mubr.f32.gmra.mrb[0].mxu0 %v7947
    %v10105 = vpop.f32.mrb[0].mxu0
    %v10106 = vadd.f32 %v9551, %v10105
    %v10107 = vpop.f32.mrb[0].mxu0
    %10108 = vmatprep.mubr.f32.mxu0 %v7956
    %10109 = vmatmul.mubr.f32.gmra.mrb[0].mxu0 %v7955
    %v10110 = vpop.f32.mrb[0].mxu0
    %v10111 = vadd.f32 %v9556, %v10110
    %v10112 = vpop.f32.mrb[0].mxu0
    %10113 = vmatprep.mubr.f32.mxu0 %v7964
    %10114 = vmatmul.mubr.f32.gmra.mrb[0].mxu0 %v7963
    %v10115 = vpop.f32.mrb[0].mxu0
    %v10116 = vadd.f32 %v9561, %v10115
    %v10117 = vpop.f32.mrb[0].mxu0
    %10118 = vmatprep.mubr.f32.mxu0 %v7972
    %10119 = vmatmul.mubr.f32.gmra.mrb[0].mxu0 %v7971
    %v10120 = vpop.f32.mrb[0].mxu0
    %v10121 = vadd.f32 %v9566, %v10120
    %v10122 = vpop.f32.mrb[0].mxu0
    %10123 = vmatprep.mubr.f32.mxu0 %v7980
    %10124 = vmatmul.mubr.f32.gmra.mrb[0].mxu0 %v7979
    %v10125 = vpop.f32.mrb[0].mxu0
    %v10126 = vadd.f32 %v9571, %v10125
    %v10127 = vpop.f32.mrb[0].mxu0
    %10128 = vmatprep.mubr.f32.mxu0 %v7988
    %10129 = vmatmul.mubr.f32.gmra.mrb[0].mxu0 %v7987
    %v10130 = vpop.f32.mrb[0].mxu0
    %v10131 = vadd.f32 %v9576, %v10130
    %v10132 = vpop.f32.mrb[0].mxu0
    %10133 = vmatprep.mubr.f32.mxu0 %v7996
    %10134 = vmatmul.mubr.f32.gmra.mrb[0].mxu0 %v7995
    %v10135 = vpop.f32.mrb[0].mxu0
    %v10136 = vadd.f32 %v9581, %v10135
    %v10137 = vpop.f32.mrb[0].mxu0
    %10138 = vmatprep.mubr.f32.mxu0 %v8004
    %10139 = vmatmul.mubr.f32.gmra.mrb[0].mxu0 %v8003
    %v10140 = vpop.f32.mrb[0].mxu0
    %v10141 = vadd.f32 %v9586, %v10140
    %v10142 = vpop.f32.mrb[0].mxu0
    %10143 = vmatprep.mubr.f32.mxu0 %v8012
    %10144 = vmatmul.mubr.f32.gmra.mrb[0].mxu0 %v8011
    %v10145 = vpop.f32.mrb[0].mxu0
    %v10146 = vadd.f32 %v9591, %v10145
    %v10147 = vpop.f32.mrb[0].mxu0
    %10148 = vmatprep.mubr.f32.mxu0 %v8020
    %10149 = vmatmul.mubr.f32.gmra.mrb[0].mxu0 %v8019
    %v10150 = vpop.f32.mrb[0].mxu0
    %v10151 = vadd.f32 %v9596, %v10150
    %v10152 = vpop.f32.mrb[0].mxu0
    %10153 = vmatprep.mubr.f32.mxu0 %v8028
    %10154 = vmatmul.mubr.f32.gmra.mrb[0].mxu0 %v8027
    %v10155 = vpop.f32.mrb[0].mxu0
    %v10156 = vadd.f32 %v9601, %v10155
    %v10157 = vpop.f32.mrb[0].mxu0
    %10158 = vmatprep.mubr.f32.mxu0 %v8036
    %10159 = vmatmul.mubr.f32.gmra.mrb[0].mxu0 %v8035
    %v10160 = vpop.f32.mrb[0].mxu0
    %v10161 = vadd.f32 %v9606, %v10160
    %v10162 = vpop.f32.mrb[0].mxu0
    %10163 = vmatprep.mubr.f32.mxu0 %v8044
    %10164 = vmatmul.mubr.f32.gmra.mrb[0].mxu0 %v8043
    %v10165 = vpop.f32.mrb[0].mxu0
    %v10166 = vadd.f32 %v9611, %v10165
    %v10167 = vpop.f32.mrb[0].mxu0
    %10168 = vmatprep.mubr.f32.mxu0 %v8052
    %10169 = vmatmul.mubr.f32.gmra.mrb[0].mxu0 %v8051
    %v10170 = vpop.f32.mrb[0].mxu0
    %v10171 = vadd.f32 %v9616, %v10170
    %v10172 = vpop.f32.mrb[0].mxu0
    %10173 = vmatprep.mubr.f32.mxu0 %v8060
    %10174 = vmatmul.mubr.f32.gmra.mrb[0].mxu0 %v8059
    %v10175 = vpop.f32.mrb[0].mxu0
    %v10176 = vadd.f32 %v9621, %v10175
    %v10177 = vpop.f32.mrb[0].mxu0
    %10178 = vmatprep.mubr.f32.mxu0 %v8068
    %10179 = vmatmul.mubr.f32.gmra.mrb[0].mxu0 %v8067
    %v10180 = vpop.f32.mrb[0].mxu0
    %v10181 = vadd.f32 %v9626, %v10180
    %v10182 = vpop.f32.mrb[0].mxu0
    %10183 = vmatprep.mubr.f32.mxu0 %v8076
    %10184 = vmatmul.mubr.f32.gmra.mrb[0].mxu0 %v8075
    %v10185 = vpop.f32.mrb[0].mxu0
    %v10186 = vadd.f32 %v9631, %v10185
    %v10187 = vpop.f32.mrb[0].mxu0
    %10188 = vmatprep.mubr.f32.mxu0 %v8084
    %10189 = vmatmul.mubr.f32.gmra.mrb[0].mxu0 %v8083
    %v10190 = vpop.f32.mrb[0].mxu0
    %v10191 = vadd.f32 %v9636, %v10190
    %v10192 = vpop.f32.mrb[0].mxu0
    %10193 = vmatprep.mubr.f32.mxu0 %v8092
    %10194 = vmatmul.mubr.f32.gmra.mrb[0].mxu0 %v8091
    %v10195 = vpop.f32.mrb[0].mxu0
    %v10196 = vadd.f32 %v9641, %v10195
    %v10197 = vpop.f32.mrb[0].mxu0
    %10198 = vmatprep.mubr.f32.mxu0 %v8100
    %10199 = vmatmul.mubr.f32.gmra.mrb[0].mxu0 %v8099
    %v10200 = vpop.f32.mrb[0].mxu0
    %v10201 = vadd.f32 %v9646, %v10200
    %v10202 = vpop.f32.mrb[0].mxu0
    %10203 = vmatprep.mubr.f32.mxu0 %v8108
    %10204 = vmatmul.mubr.f32.gmra.mrb[0].mxu0 %v8107
    %v10205 = vpop.f32.mrb[0].mxu0
    %v10206 = vadd.f32 %v9651, %v10205
    %v10207 = vpop.f32.mrb[0].mxu0
    %10208 = vmatprep.mubr.f32.mxu0 %v8116
    %10209 = vmatmul.mubr.f32.gmra.mrb[0].mxu0 %v8115
    %v10210 = vpop.f32.mrb[0].mxu0
    %v10211 = vadd.f32 %v9656, %v10210
    %v10212 = vpop.f32.mrb[0].mxu0
    %10213 = vmatprep.mubr.f32.mxu0 %v8124
    %10214 = vmatmul.mubr.f32.gmra.mrb[0].mxu0 %v8123
    %v10215 = vpop.f32.mrb[0].mxu0
    %v10216 = vadd.f32 %v9661, %v10215
    %v10217 = vpop.f32.mrb[0].mxu0
    %10218 = vmatprep.mubr.f32.mxu0 %v8132
    %10219 = vmatmul.mubr.f32.gmra.mrb[0].mxu0 %v8131
    %v10220 = vpop.f32.mrb[0].mxu0
    %v10221 = vadd.f32 %v9666, %v10220
    %v10222 = vpop.f32.mrb[0].mxu0
    %10223 = vmatprep.mubr.f32.mxu0 %v8140
    %10224 = vmatmul.mubr.f32.gmra.mrb[0].mxu0 %v8139
    %v10225 = vpop.f32.mrb[0].mxu0
    %v10226 = vadd.f32 %v9671, %v10225
    %v10227 = vpop.f32.mrb[0].mxu0
    %10228 = vmatprep.mubr.f32.mxu0 %v8148
    %10229 = vmatmul.mubr.f32.gmra.mrb[0].mxu0 %v8147
    %v10230 = vpop.f32.mrb[0].mxu0
    %v10231 = vadd.f32 %v9676, %v10230
    %v10232 = vpop.f32.mrb[0].mxu0
    %10233 = vmatprep.mubr.f32.mxu0 %v8156
    %10234 = vmatmul.mubr.f32.gmra.mrb[0].mxu0 %v8155
    %v10235 = vpop.f32.mrb[0].mxu0
    %v10236 = vadd.f32 %v9681, %v10235
    %v10237 = vpop.f32.mrb[0].mxu0
    %10238 = vmatprep.mubr.f32.mxu0 %v8164
    %10239 = vmatmul.mubr.f32.gmra.mrb[0].mxu0 %v8163
    %v10240 = vpop.f32.mrb[0].mxu0
    %v10241 = vadd.f32 %v9686, %v10240
    %v10242 = vpop.f32.mrb[0].mxu0
    %10243 = vmatprep.mubr.f32.mxu0 %v8172
    %10244 = vmatmul.mubr.f32.gmra.mrb[0].mxu0 %v8171
    %v10245 = vpop.f32.mrb[0].mxu0
    %v10246 = vadd.f32 %v9691, %v10245
    %v10247 = vpop.f32.mrb[0].mxu0
    %10248 = vmatprep.mubr.f32.mxu0 %v8180
    %10249 = vmatmul.mubr.f32.gmra.mrb[0].mxu0 %v8179
    %v10250 = vpop.f32.mrb[0].mxu0
    %v10251 = vadd.f32 %v9696, %v10250
    %v10252 = vpop.f32.mrb[0].mxu0
    %10253 = vmatprep.mubr.f32.mxu0 %v8188
    %10254 = vmatmul.mubr.f32.gmra.mrb[0].mxu0 %v8187
    %v10255 = vpop.f32.mrb[0].mxu0
    %v10256 = vadd.f32 %v9701, %v10255
    %v10257 = vpop.f32.mrb[0].mxu0
    %10258 = vmatprep.mubr.f32.mxu0 %v8196
    %10259 = vmatmul.mubr.f32.gmra.mrb[0].mxu0 %v8195
    %v10260 = vpop.f32.mrb[0].mxu0
    %v10261 = vadd.f32 %v9706, %v10260
    %v10262 = vpop.f32.mrb[0].mxu0
    %10263 = vmatprep.mubr.f32.mxu0 %v8204
    %10264 = vmatmul.mubr.f32.gmra.mrb[0].mxu0 %v8203
    %v10265 = vpop.f32.mrb[0].mxu0
    %v10266 = vadd.f32 %v9711, %v10265
    %v10267 = vpop.f32.mrb[0].mxu0
    %10268 = vmatprep.mubr.f32.mxu0 %v8212
    %10269 = vmatmul.mubr.f32.gmra.mrb[0].mxu0 %v8211
    %v10270 = vpop.f32.mrb[0].mxu0
    %v10271 = vadd.f32 %v9716, %v10270
    %v10272 = vpop.f32.mrb[0].mxu0
    %10273 = vmatprep.mubr.f32.mxu0 %v8220
    %10274 = vmatmul.mubr.f32.gmra.mrb[0].mxu0 %v8219
    %v10275 = vpop.f32.mrb[0].mxu0
    %v10276 = vadd.f32 %v9721, %v10275
    %v10277 = vpop.f32.mrb[0].mxu0
    %10278 = vmatprep.mubr.f32.mxu0 %v8228
    %10279 = vmatmul.mubr.f32.gmra.mrb[0].mxu0 %v8227
    %v10280 = vpop.f32.mrb[0].mxu0
    %v10281 = vadd.f32 %v9726, %v10280
    %v10282 = vpop.f32.mrb[0].mxu0
    %10283 = vmatprep.mubr.f32.mxu0 %v8236
    %10284 = vmatmul.mubr.f32.gmra.mrb[0].mxu0 %v8235
    %v10285 = vpop.f32.mrb[0].mxu0
    %v10286 = vadd.f32 %v9731, %v10285
    %v10287 = vpop.f32.mrb[0].mxu0
    %10288 = vmatprep.mubr.f32.mxu0 %v8244
    %10289 = vmatmul.mubr.f32.gmra.mrb[0].mxu0 %v8243
    %v10290 = vpop.f32.mrb[0].mxu0
    %v10291 = vadd.f32 %v9736, %v10290
    %v10292 = vpop.f32.mrb[0].mxu0
    %10293 = vmatprep.mubr.f32.mxu0 %v8252
    %10294 = vmatmul.mubr.f32.gmra.mrb[0].mxu0 %v8251
    %v10295 = vpop.f32.mrb[0].mxu0
    %v10296 = vadd.f32 %v9741, %v10295
    %v10297 = vpop.f32.mrb[0].mxu0
    %10298 = vmatprep.mubr.f32.mxu0 %v8260
    %10299 = vmatmul.mubr.f32.gmra.mrb[0].mxu0 %v8259
    %v10300 = vpop.f32.mrb[0].mxu0
    %v10301 = vadd.f32 %v9746, %v10300
    %v10302 = vpop.f32.mrb[0].mxu0
    %10303 = vmatprep.mubr.f32.mxu0 %v8268
    %10304 = vmatmul.mubr.f32.gmra.mrb[0].mxu0 %v8267
    %v10305 = vpop.f32.mrb[0].mxu0
    %v10306 = vadd.f32 %v9751, %v10305
    %v10307 = vpop.f32.mrb[0].mxu0
    %10308 = vmatprep.mubr.f32.mxu0 %v8276
    %10309 = vmatmul.mubr.f32.gmra.mrb[0].mxu0 %v8275
    %v10310 = vpop.f32.mrb[0].mxu0
    %v10311 = vadd.f32 %v9756, %v10310
    %v10312 = vpop.f32.mrb[0].mxu0
    %10313 = vmatprep.mubr.f32.mxu0 %v8284
    %10314 = vmatmul.mubr.f32.gmra.mrb[0].mxu0 %v8283
    %v10315 = vpop.f32.mrb[0].mxu0
    %v10316 = vadd.f32 %v9761, %v10315
    %v10317 = vpop.f32.mrb[0].mxu0
    %10318 = vmatprep.mubr.f32.mxu0 %v8292
    %10319 = vmatmul.mubr.f32.gmra.mrb[0].mxu0 %v8291
    %v10320 = vpop.f32.mrb[0].mxu0
    %v10321 = vadd.f32 %v9766, %v10320
    %v10322 = vpop.f32.mrb[0].mxu0
    %10323 = vmatprep.mubr.f32.mxu0 %v8300
    %10324 = vmatmul.mubr.f32.gmra.mrb[0].mxu0 %v8299
    %v10325 = vpop.f32.mrb[0].mxu0
    %v10326 = vadd.f32 %v9771, %v10325
    %v10327 = vpop.f32.mrb[0].mxu0
    %10328 = vmatprep.mubr.f32.mxu0 %v8308
    %10329 = vmatmul.mubr.f32.gmra.mrb[0].mxu0 %v8307
    %v10330 = vpop.f32.mrb[0].mxu0
    %v10331 = vadd.f32 %v9776, %v10330
    %v10332 = vpop.f32.mrb[0].mxu0
    %10333 = vmatprep.mubr.f32.mxu0 %v8316
    %10334 = vmatmul.mubr.f32.gmra.mrb[0].mxu0 %v8315
    %v10335 = vpop.f32.mrb[0].mxu0
    %v10336 = vadd.f32 %v9781, %v10335
    %v10337 = vpop.f32.mrb[0].mxu0
    %10338 = vmatprep.mubr.f32.mxu0 %v8324
    %10339 = vmatmul.mubr.f32.gmra.mrb[0].mxu0 %v8323
    %v10340 = vpop.f32.mrb[0].mxu0
    %v10341 = vadd.f32 %v9786, %v10340
    %v10342 = vpop.f32.mrb[0].mxu0
    %10343 = vmatprep.mubr.f32.mxu0 %v8332
    %10344 = vmatmul.mubr.f32.gmra.mrb[0].mxu0 %v8331
    %v10345 = vpop.f32.mrb[0].mxu0
    %v10346 = vadd.f32 %v9791, %v10345
    %v10347 = vpop.f32.mrb[0].mxu0
    %10348 = vmatprep.mubr.f32.mxu0 %v8340
    %10349 = vmatmul.mubr.f32.gmra.mrb[0].mxu0 %v8339
    %v10350 = vpop.f32.mrb[0].mxu0
    %v10351 = vadd.f32 %v9796, %v10350
    %v10352 = vpop.f32.mrb[0].mxu0
    %10353 = vmatprep.mubr.f32.mxu0 %v8348
    %10354 = vmatmul.mubr.f32.gmra.mrb[0].mxu0 %v8347
    %v10355 = vpop.f32.mrb[0].mxu0
    %v10356 = vadd.f32 %v9801, %v10355
    %v10357 = vpop.f32.mrb[0].mxu0
    %10358 = vmatprep.mubr.f32.mxu0 %v8356
    %10359 = vmatmul.mubr.f32.gmra.mrb[0].mxu0 %v8355
    %v10360 = vpop.f32.mrb[0].mxu0
    %v10361 = vadd.f32 %v9806, %v10360
    %v10362 = vpop.f32.mrb[0].mxu0
    %10363 = vmatprep.mubr.f32.mxu0 %v8364
    %10364 = vmatmul.mubr.f32.gmra.mrb[0].mxu0 %v8363
    %v10365 = vpop.f32.mrb[0].mxu0
    %v10366 = vadd.f32 %v9811, %v10365
    %v10367 = vpop.f32.mrb[0].mxu0
    %10368 = vmatprep.mubr.f32.mxu0 %v8372
    %10369 = vmatmul.mubr.f32.gmra.mrb[0].mxu0 %v8371
    %v10370 = vpop.f32.mrb[0].mxu0
    %v10371 = vadd.f32 %v9816, %v10370
    %v10372 = vpop.f32.mrb[0].mxu0
    %10373 = vdwg.mxu0
    %10374 = vmatprep.subr.mxu0 0.0
    %10375 = vmatpush1.msra.mxu0 %v7544
    %10376 = vmatprep.subr.mxu0 0.0
    %10377 = vmatpush1.msra.mxu0 %v7545
    %10378 = vmatprep.subr.mxu0 0.0
    %10379 = vmatpush1.msra.mxu0 %v7546
    %10380 = vmatprep.subr.mxu0 0.0
    %10381 = vmatpush1.msra.mxu0 %v7547
    %10382 = vmatprep.subr.mxu0 0.0
    %10383 = vmatpush1.msra.mxu0 %v7548
    %10384 = vmatprep.subr.mxu0 0.0
    %10385 = vmatpush1.msra.mxu0 %v7549
    %10386 = vmatprep.subr.mxu0 0.0
    %10387 = vmatpush1.msra.mxu0 %v7550
    %10388 = vmatprep.subr.mxu0 0.0
    %10389 = vmatpush1.msra.mxu0 %v7551
    %10390 = vmatprep.subr.mxu0 0.0
    %10391 = vmatpush1.msra.mxu0 %v7552
    %10392 = vmatprep.subr.mxu0 0.0
    %10393 = vmatpush1.msra.mxu0 %v7553
    %10394 = vmatprep.subr.mxu0 0.0
    %10395 = vmatpush1.msra.mxu0 %v7554
    %10396 = vmatprep.subr.mxu0 0.0
    %10397 = vmatpush1.msra.mxu0 %v7555
    %10398 = vmatprep.subr.mxu0 0.0
    %10399 = vmatpush1.msra.mxu0 %v7556
    %10400 = vmatprep.subr.mxu0 0.0
    %10401 = vmatpush1.msra.mxu0 %v7557
    %10402 = vmatprep.subr.mxu0 0.0
    %10403 = vmatpush1.msra.mxu0 %v7558
    %10404 = vmatprep.subr.mxu0 0.0
    %10405 = vmatpush1.msra.mxu0 %v7559
    %10406 = vmatprep.subr.mxu0 0.0
    %10407 = vmatpush1.msra.mxu0 %v7560
    %10408 = vmatprep.subr.mxu0 0.0
    %10409 = vmatpush1.msra.mxu0 %v7561
    %10410 = vmatprep.subr.mxu0 0.0
    %10411 = vmatpush1.msra.mxu0 %v7562
    %10412 = vmatprep.subr.mxu0 0.0
    %10413 = vmatpush1.msra.mxu0 %v7563
    %10414 = vmatprep.subr.mxu0 0.0
    %10415 = vmatpush1.msra.mxu0 %v7564
    %10416 = vmatprep.subr.mxu0 0.0
    %10417 = vmatpush1.msra.mxu0 %v7565
    %10418 = vmatprep.subr.mxu0 0.0
    %10419 = vmatpush1.msra.mxu0 %v7566
    %10420 = vmatprep.subr.mxu0 0.0
    %10421 = vmatpush1.msra.mxu0 %v7567
    %10422 = vmatprep.subr.mxu0 0.0
    %10423 = vmatpush1.msra.mxu0 %v7568
    %10424 = vmatprep.subr.mxu0 0.0
    %10425 = vmatpush1.msra.mxu0 %v7569
    %10426 = vmatprep.subr.mxu0 0.0
    %10427 = vmatpush1.msra.mxu0 %v7570
    %10428 = vmatprep.subr.mxu0 0.0
    %10429 = vmatpush1.msra.mxu0 %v7571
    %10430 = vmatprep.subr.mxu0 0.0
    %10431 = vmatpush1.msra.mxu0 %v7572
    %10432 = vmatprep.subr.mxu0 0.0
    %10433 = vmatpush1.msra.mxu0 %v7573
    %10434 = vmatprep.subr.mxu0 0.0
    %10435 = vmatpush1.msra.mxu0 %v7574
    %10436 = vmatprep.subr.mxu0 0.0
    %10437 = vmatpush1.msra.mxu0 %v7575
    %10438 = vmatprep.mubr.f32.mxu0 %v7598
    %10439 = vmatmul.mubr.f32.gmra.mrb[0].mxu0 %v7597
    %v10440 = vpop.f32.mrb[0].mxu0
    %v10441 = vadd.f32 %v9886, %v10440
    %v10442 = vpop.f32.mrb[0].mxu0
    %10443 = vmatprep.mubr.f32.mxu0 %v7606
    %10444 = vmatmul.mubr.f32.gmra.mrb[0].mxu0 %v7605
    %v10445 = vpop.f32.mrb[0].mxu0
    %v10446 = vadd.f32 %v9891, %v10445
    %v10447 = vpop.f32.mrb[0].mxu0
    %10448 = vmatprep.mubr.f32.mxu0 %v7614
    %10449 = vmatmul.mubr.f32.gmra.mrb[0].mxu0 %v7613
    %v10450 = vpop.f32.mrb[0].mxu0
    %v10451 = vadd.f32 %v9896, %v10450
    %v10452 = vpop.f32.mrb[0].mxu0
    %10453 = vmatprep.mubr.f32.mxu0 %v7622
    %10454 = vmatmul.mubr.f32.gmra.mrb[0].mxu0 %v7621
    %v10455 = vpop.f32.mrb[0].mxu0
    %v10456 = vadd.f32 %v9901, %v10455
    %v10457 = vpop.f32.mrb[0].mxu0
    %10458 = vmatprep.mubr.f32.mxu0 %v7630
    %10459 = vmatmul.mubr.f32.gmra.mrb[0].mxu0 %v7629
    %v10460 = vpop.f32.mrb[0].mxu0
    %v10461 = vadd.f32 %v9906, %v10460
    %v10462 = vpop.f32.mrb[0].mxu0
    %10463 = vmatprep.mubr.f32.mxu0 %v7638
    %10464 = vmatmul.mubr.f32.gmra.mrb[0].mxu0 %v7637
    %v10465 = vpop.f32.mrb[0].mxu0
    %v10466 = vadd.f32 %v9911, %v10465
    %v10467 = vpop.f32.mrb[0].mxu0
    %10468 = vmatprep.mubr.f32.mxu0 %v7646
    %10469 = vmatmul.mubr.f32.gmra.mrb[0].mxu0 %v7645
    %v10470 = vpop.f32.mrb[0].mxu0
    %v10471 = vadd.f32 %v9916, %v10470
    %v10472 = vpop.f32.mrb[0].mxu0
    %10473 = vmatprep.mubr.f32.mxu0 %v7654
    %10474 = vmatmul.mubr.f32.gmra.mrb[0].mxu0 %v7653
    %v10475 = vpop.f32.mrb[0].mxu0
    %v10476 = vadd.f32 %v9921, %v10475
    %v10477 = vpop.f32.mrb[0].mxu0
    %10478 = vmatprep.mubr.f32.mxu0 %v7662
    %10479 = vmatmul.mubr.f32.gmra.mrb[0].mxu0 %v7661
    %v10480 = vpop.f32.mrb[0].mxu0
    %v10481 = vadd.f32 %v9926, %v10480
    %v10482 = vpop.f32.mrb[0].mxu0
    %10483 = vmatprep.mubr.f32.mxu0 %v7670
    %10484 = vmatmul.mubr.f32.gmra.mrb[0].mxu0 %v7669
    %v10485 = vpop.f32.mrb[0].mxu0
    %v10486 = vadd.f32 %v9931, %v10485
    %v10487 = vpop.f32.mrb[0].mxu0
    %10488 = vmatprep.mubr.f32.mxu0 %v7678
    %10489 = vmatmul.mubr.f32.gmra.mrb[0].mxu0 %v7677
    %v10490 = vpop.f32.mrb[0].mxu0
    %v10491 = vadd.f32 %v9936, %v10490
    %v10492 = vpop.f32.mrb[0].mxu0
    %10493 = vmatprep.mubr.f32.mxu0 %v7686
    %10494 = vmatmul.mubr.f32.gmra.mrb[0].mxu0 %v7685
    %v10495 = vpop.f32.mrb[0].mxu0
    %v10496 = vadd.f32 %v9941, %v10495
    %v10497 = vpop.f32.mrb[0].mxu0
    %10498 = vmatprep.mubr.f32.mxu0 %v7694
    %10499 = vmatmul.mubr.f32.gmra.mrb[0].mxu0 %v7693
    %v10500 = vpop.f32.mrb[0].mxu0
    %v10501 = vadd.f32 %v9946, %v10500
    %v10502 = vpop.f32.mrb[0].mxu0
    %10503 = vmatprep.mubr.f32.mxu0 %v7702
    %10504 = vmatmul.mubr.f32.gmra.mrb[0].mxu0 %v7701
    %v10505 = vpop.f32.mrb[0].mxu0
    %v10506 = vadd.f32 %v9951, %v10505
    %v10507 = vpop.f32.mrb[0].mxu0
    %10508 = vmatprep.mubr.f32.mxu0 %v7710
    %10509 = vmatmul.mubr.f32.gmra.mrb[0].mxu0 %v7709
    %v10510 = vpop.f32.mrb[0].mxu0
    %v10511 = vadd.f32 %v9956, %v10510
    %v10512 = vpop.f32.mrb[0].mxu0
    %10513 = vmatprep.mubr.f32.mxu0 %v7718
    %10514 = vmatmul.mubr.f32.gmra.mrb[0].mxu0 %v7717
    %v10515 = vpop.f32.mrb[0].mxu0
    %v10516 = vadd.f32 %v9961, %v10515
    %v10517 = vpop.f32.mrb[0].mxu0
    %10518 = vmatprep.mubr.f32.mxu0 %v7726
    %10519 = vmatmul.mubr.f32.gmra.mrb[0].mxu0 %v7725
    %v10520 = vpop.f32.mrb[0].mxu0
    %v10521 = vadd.f32 %v9966, %v10520
    %v10522 = vpop.f32.mrb[0].mxu0
    %10523 = vmatprep.mubr.f32.mxu0 %v7734
    %10524 = vmatmul.mubr.f32.gmra.mrb[0].mxu0 %v7733
    %v10525 = vpop.f32.mrb[0].mxu0
    %v10526 = vadd.f32 %v9971, %v10525
    %v10527 = vpop.f32.mrb[0].mxu0
    %10528 = vmatprep.mubr.f32.mxu0 %v7742
    %10529 = vmatmul.mubr.f32.gmra.mrb[0].mxu0 %v7741
    %v10530 = vpop.f32.mrb[0].mxu0
    %v10531 = vadd.f32 %v9976, %v10530
    %v10532 = vpop.f32.mrb[0].mxu0
    %10533 = vmatprep.mubr.f32.mxu0 %v7750
    %10534 = vmatmul.mubr.f32.gmra.mrb[0].mxu0 %v7749
    %v10535 = vpop.f32.mrb[0].mxu0
    %v10536 = vadd.f32 %v9981, %v10535
    %v10537 = vpop.f32.mrb[0].mxu0
    %10538 = vmatprep.mubr.f32.mxu0 %v7758
    %10539 = vmatmul.mubr.f32.gmra.mrb[0].mxu0 %v7757
    %v10540 = vpop.f32.mrb[0].mxu0
    %v10541 = vadd.f32 %v9986, %v10540
    %v10542 = vpop.f32.mrb[0].mxu0
    %10543 = vmatprep.mubr.f32.mxu0 %v7766
    %10544 = vmatmul.mubr.f32.gmra.mrb[0].mxu0 %v7765
    %v10545 = vpop.f32.mrb[0].mxu0
    %v10546 = vadd.f32 %v9991, %v10545
    %v10547 = vpop.f32.mrb[0].mxu0
    %10548 = vmatprep.mubr.f32.mxu0 %v7774
    %10549 = vmatmul.mubr.f32.gmra.mrb[0].mxu0 %v7773
    %v10550 = vpop.f32.mrb[0].mxu0
    %v10551 = vadd.f32 %v9996, %v10550
    %v10552 = vpop.f32.mrb[0].mxu0
    %10553 = vmatprep.mubr.f32.mxu0 %v7782
    %10554 = vmatmul.mubr.f32.gmra.mrb[0].mxu0 %v7781
    %v10555 = vpop.f32.mrb[0].mxu0
    %v10556 = vadd.f32 %v10001, %v10555
    %v10557 = vpop.f32.mrb[0].mxu0
    %10558 = vmatprep.mubr.f32.mxu0 %v7790
    %10559 = vmatmul.mubr.f32.gmra.mrb[0].mxu0 %v7789
    %v10560 = vpop.f32.mrb[0].mxu0
    %v10561 = vadd.f32 %v10006, %v10560
    %v10562 = vpop.f32.mrb[0].mxu0
    %10563 = vmatprep.mubr.f32.mxu0 %v7798
    %10564 = vmatmul.mubr.f32.gmra.mrb[0].mxu0 %v7797
    %v10565 = vpop.f32.mrb[0].mxu0
    %v10566 = vadd.f32 %v10011, %v10565
    %v10567 = vpop.f32.mrb[0].mxu0
    %10568 = vmatprep.mubr.f32.mxu0 %v7806
    %10569 = vmatmul.mubr.f32.gmra.mrb[0].mxu0 %v7805
    %v10570 = vpop.f32.mrb[0].mxu0
    %v10571 = vadd.f32 %v10016, %v10570
    %v10572 = vpop.f32.mrb[0].mxu0
    %10573 = vmatprep.mubr.f32.mxu0 %v7814
    %10574 = vmatmul.mubr.f32.gmra.mrb[0].mxu0 %v7813
    %v10575 = vpop.f32.mrb[0].mxu0
    %v10576 = vadd.f32 %v10021, %v10575
    %v10577 = vpop.f32.mrb[0].mxu0
    %10578 = vmatprep.mubr.f32.mxu0 %v7822
    %10579 = vmatmul.mubr.f32.gmra.mrb[0].mxu0 %v7821
    %v10580 = vpop.f32.mrb[0].mxu0
    %v10581 = vadd.f32 %v10026, %v10580
    %v10582 = vpop.f32.mrb[0].mxu0
    %10583 = vmatprep.mubr.f32.mxu0 %v7830
    %10584 = vmatmul.mubr.f32.gmra.mrb[0].mxu0 %v7829
    %v10585 = vpop.f32.mrb[0].mxu0
    %v10586 = vadd.f32 %v10031, %v10585
    %v10587 = vpop.f32.mrb[0].mxu0
    %10588 = vmatprep.mubr.f32.mxu0 %v7838
    %10589 = vmatmul.mubr.f32.gmra.mrb[0].mxu0 %v7837
    %v10590 = vpop.f32.mrb[0].mxu0
    %v10591 = vadd.f32 %v10036, %v10590
    %v10592 = vpop.f32.mrb[0].mxu0
    %10593 = vmatprep.mubr.f32.mxu0 %v7846
    %10594 = vmatmul.mubr.f32.gmra.mrb[0].mxu0 %v7845
    %v10595 = vpop.f32.mrb[0].mxu0
    %v10596 = vadd.f32 %v10041, %v10595
    %v10597 = vpop.f32.mrb[0].mxu0
    %10598 = vmatprep.mubr.f32.mxu0 %v7854
    %10599 = vmatmul.mubr.f32.gmra.mrb[0].mxu0 %v7853
    %v10600 = vpop.f32.mrb[0].mxu0
    %v10601 = vadd.f32 %v10046, %v10600
    %v10602 = vpop.f32.mrb[0].mxu0
    %10603 = vmatprep.mubr.f32.mxu0 %v7862
    %10604 = vmatmul.mubr.f32.gmra.mrb[0].mxu0 %v7861
    %v10605 = vpop.f32.mrb[0].mxu0
    %v10606 = vadd.f32 %v10051, %v10605
    %v10607 = vpop.f32.mrb[0].mxu0
    %10608 = vmatprep.mubr.f32.mxu0 %v7870
    %10609 = vmatmul.mubr.f32.gmra.mrb[0].mxu0 %v7869
    %v10610 = vpop.f32.mrb[0].mxu0
    %v10611 = vadd.f32 %v10056, %v10610
    %v10612 = vpop.f32.mrb[0].mxu0
    %10613 = vmatprep.mubr.f32.mxu0 %v7878
    %10614 = vmatmul.mubr.f32.gmra.mrb[0].mxu0 %v7877
    %v10615 = vpop.f32.mrb[0].mxu0
    %v10616 = vadd.f32 %v10061, %v10615
    %v10617 = vpop.f32.mrb[0].mxu0
    %10618 = vmatprep.mubr.f32.mxu0 %v7886
    %10619 = vmatmul.mubr.f32.gmra.mrb[0].mxu0 %v7885
    %v10620 = vpop.f32.mrb[0].mxu0
    %v10621 = vadd.f32 %v10066, %v10620
    %v10622 = vpop.f32.mrb[0].mxu0
    %10623 = vmatprep.mubr.f32.mxu0 %v7894
    %10624 = vmatmul.mubr.f32.gmra.mrb[0].mxu0 %v7893
    %v10625 = vpop.f32.mrb[0].mxu0
    %v10626 = vadd.f32 %v10071, %v10625
    %v10627 = vpop.f32.mrb[0].mxu0
    %10628 = vmatprep.mubr.f32.mxu0 %v7902
    %10629 = vmatmul.mubr.f32.gmra.mrb[0].mxu0 %v7901
    %v10630 = vpop.f32.mrb[0].mxu0
    %v10631 = vadd.f32 %v10076, %v10630
    %v10632 = vpop.f32.mrb[0].mxu0
    %10633 = vmatprep.mubr.f32.mxu0 %v7910
    %10634 = vmatmul.mubr.f32.gmra.mrb[0].mxu0 %v7909
    %v10635 = vpop.f32.mrb[0].mxu0
    %v10636 = vadd.f32 %v10081, %v10635
    %v10637 = vpop.f32.mrb[0].mxu0
    %10638 = vmatprep.mubr.f32.mxu0 %v7918
    %10639 = vmatmul.mubr.f32.gmra.mrb[0].mxu0 %v7917
    %v10640 = vpop.f32.mrb[0].mxu0
    %v10641 = vadd.f32 %v10086, %v10640
    %v10642 = vpop.f32.mrb[0].mxu0
    %10643 = vmatprep.mubr.f32.mxu0 %v7926
    %10644 = vmatmul.mubr.f32.gmra.mrb[0].mxu0 %v7925
    %v10645 = vpop.f32.mrb[0].mxu0
    %v10646 = vadd.f32 %v10091, %v10645
    %v10647 = vpop.f32.mrb[0].mxu0
    %10648 = vmatprep.mubr.f32.mxu0 %v7934
    %10649 = vmatmul.mubr.f32.gmra.mrb[0].mxu0 %v7933
    %v10650 = vpop.f32.mrb[0].mxu0
    %v10651 = vadd.f32 %v10096, %v10650
    %v10652 = vpop.f32.mrb[0].mxu0
    %10653 = vmatprep.mubr.f32.mxu0 %v7942
    %10654 = vmatmul.mubr.f32.gmra.mrb[0].mxu0 %v7941
    %v10655 = vpop.f32.mrb[0].mxu0
    %v10656 = vadd.f32 %v10101, %v10655
    %v10657 = vpop.f32.mrb[0].mxu0
    %10658 = vmatprep.mubr.f32.mxu0 %v7950
    %10659 = vmatmul.mubr.f32.gmra.mrb[0].mxu0 %v7949
    %v10660 = vpop.f32.mrb[0].mxu0
    %v10661 = vadd.f32 %v10106, %v10660
    %v10662 = vpop.f32.mrb[0].mxu0
    %10663 = vmatprep.mubr.f32.mxu0 %v7958
    %10664 = vmatmul.mubr.f32.gmra.mrb[0].mxu0 %v7957
    %v10665 = vpop.f32.mrb[0].mxu0
    %v10666 = vadd.f32 %v10111, %v10665
    %v10667 = vpop.f32.mrb[0].mxu0
    %10668 = vmatprep.mubr.f32.mxu0 %v7966
    %10669 = vmatmul.mubr.f32.gmra.mrb[0].mxu0 %v7965
    %v10670 = vpop.f32.mrb[0].mxu0
    %v10671 = vadd.f32 %v10116, %v10670
    %v10672 = vpop.f32.mrb[0].mxu0
    %10673 = vmatprep.mubr.f32.mxu0 %v7974
    %10674 = vmatmul.mubr.f32.gmra.mrb[0].mxu0 %v7973
    %v10675 = vpop.f32.mrb[0].mxu0
    %v10676 = vadd.f32 %v10121, %v10675
    %v10677 = vpop.f32.mrb[0].mxu0
    %10678 = vmatprep.mubr.f32.mxu0 %v7982
    %10679 = vmatmul.mubr.f32.gmra.mrb[0].mxu0 %v7981
    %v10680 = vpop.f32.mrb[0].mxu0
    %v10681 = vadd.f32 %v10126, %v10680
    %v10682 = vpop.f32.mrb[0].mxu0
    %10683 = vmatprep.mubr.f32.mxu0 %v7990
    %10684 = vmatmul.mubr.f32.gmra.mrb[0].mxu0 %v7989
    %v10685 = vpop.f32.mrb[0].mxu0
    %v10686 = vadd.f32 %v10131, %v10685
    %v10687 = vpop.f32.mrb[0].mxu0
    %10688 = vmatprep.mubr.f32.mxu0 %v7998
    %10689 = vmatmul.mubr.f32.gmra.mrb[0].mxu0 %v7997
    %v10690 = vpop.f32.mrb[0].mxu0
    %v10691 = vadd.f32 %v10136, %v10690
    %v10692 = vpop.f32.mrb[0].mxu0
    %10693 = vmatprep.mubr.f32.mxu0 %v8006
    %10694 = vmatmul.mubr.f32.gmra.mrb[0].mxu0 %v8005
    %v10695 = vpop.f32.mrb[0].mxu0
    %v10696 = vadd.f32 %v10141, %v10695
    %v10697 = vpop.f32.mrb[0].mxu0
    %10698 = vmatprep.mubr.f32.mxu0 %v8014
    %10699 = vmatmul.mubr.f32.gmra.mrb[0].mxu0 %v8013
    %v10700 = vpop.f32.mrb[0].mxu0
    %v10701 = vadd.f32 %v10146, %v10700
    %v10702 = vpop.f32.mrb[0].mxu0
    %10703 = vmatprep.mubr.f32.mxu0 %v8022
    %10704 = vmatmul.mubr.f32.gmra.mrb[0].mxu0 %v8021
    %v10705 = vpop.f32.mrb[0].mxu0
    %v10706 = vadd.f32 %v10151, %v10705
    %v10707 = vpop.f32.mrb[0].mxu0
    %10708 = vmatprep.mubr.f32.mxu0 %v8030
    %10709 = vmatmul.mubr.f32.gmra.mrb[0].mxu0 %v8029
    %v10710 = vpop.f32.mrb[0].mxu0
    %v10711 = vadd.f32 %v10156, %v10710
    %v10712 = vpop.f32.mrb[0].mxu0
    %10713 = vmatprep.mubr.f32.mxu0 %v8038
    %10714 = vmatmul.mubr.f32.gmra.mrb[0].mxu0 %v8037
    %v10715 = vpop.f32.mrb[0].mxu0
    %v10716 = vadd.f32 %v10161, %v10715
    %v10717 = vpop.f32.mrb[0].mxu0
    %10718 = vmatprep.mubr.f32.mxu0 %v8046
    %10719 = vmatmul.mubr.f32.gmra.mrb[0].mxu0 %v8045
    %v10720 = vpop.f32.mrb[0].mxu0
    %v10721 = vadd.f32 %v10166, %v10720
    %v10722 = vpop.f32.mrb[0].mxu0
    %10723 = vmatprep.mubr.f32.mxu0 %v8054
    %10724 = vmatmul.mubr.f32.gmra.mrb[0].mxu0 %v8053
    %v10725 = vpop.f32.mrb[0].mxu0
    %v10726 = vadd.f32 %v10171, %v10725
    %v10727 = vpop.f32.mrb[0].mxu0
    %10728 = vmatprep.mubr.f32.mxu0 %v8062
    %10729 = vmatmul.mubr.f32.gmra.mrb[0].mxu0 %v8061
    %v10730 = vpop.f32.mrb[0].mxu0
    %v10731 = vadd.f32 %v10176, %v10730
    %v10732 = vpop.f32.mrb[0].mxu0
    %10733 = vmatprep.mubr.f32.mxu0 %v8070
    %10734 = vmatmul.mubr.f32.gmra.mrb[0].mxu0 %v8069
    %v10735 = vpop.f32.mrb[0].mxu0
    %v10736 = vadd.f32 %v10181, %v10735
    %v10737 = vpop.f32.mrb[0].mxu0
    %10738 = vmatprep.mubr.f32.mxu0 %v8078
    %10739 = vmatmul.mubr.f32.gmra.mrb[0].mxu0 %v8077
    %v10740 = vpop.f32.mrb[0].mxu0
    %v10741 = vadd.f32 %v10186, %v10740
    %v10742 = vpop.f32.mrb[0].mxu0
    %10743 = vmatprep.mubr.f32.mxu0 %v8086
    %10744 = vmatmul.mubr.f32.gmra.mrb[0].mxu0 %v8085
    %v10745 = vpop.f32.mrb[0].mxu0
    %v10746 = vadd.f32 %v10191, %v10745
    %v10747 = vpop.f32.mrb[0].mxu0
    %10748 = vmatprep.mubr.f32.mxu0 %v8094
    %10749 = vmatmul.mubr.f32.gmra.mrb[0].mxu0 %v8093
    %v10750 = vpop.f32.mrb[0].mxu0
    %v10751 = vadd.f32 %v10196, %v10750
    %v10752 = vpop.f32.mrb[0].mxu0
    %10753 = vmatprep.mubr.f32.mxu0 %v8102
    %10754 = vmatmul.mubr.f32.gmra.mrb[0].mxu0 %v8101
    %v10755 = vpop.f32.mrb[0].mxu0
    %v10756 = vadd.f32 %v10201, %v10755
    %v10757 = vpop.f32.mrb[0].mxu0
    %10758 = vmatprep.mubr.f32.mxu0 %v8110
    %10759 = vmatmul.mubr.f32.gmra.mrb[0].mxu0 %v8109
    %v10760 = vpop.f32.mrb[0].mxu0
    %v10761 = vadd.f32 %v10206, %v10760
    %v10762 = vpop.f32.mrb[0].mxu0
    %10763 = vmatprep.mubr.f32.mxu0 %v8118
    %10764 = vmatmul.mubr.f32.gmra.mrb[0].mxu0 %v8117
    %v10765 = vpop.f32.mrb[0].mxu0
    %v10766 = vadd.f32 %v10211, %v10765
    %v10767 = vpop.f32.mrb[0].mxu0
    %10768 = vmatprep.mubr.f32.mxu0 %v8126
    %10769 = vmatmul.mubr.f32.gmra.mrb[0].mxu0 %v8125
    %v10770 = vpop.f32.mrb[0].mxu0
    %v10771 = vadd.f32 %v10216, %v10770
    %v10772 = vpop.f32.mrb[0].mxu0
    %10773 = vmatprep.mubr.f32.mxu0 %v8134
    %10774 = vmatmul.mubr.f32.gmra.mrb[0].mxu0 %v8133
    %v10775 = vpop.f32.mrb[0].mxu0
    %v10776 = vadd.f32 %v10221, %v10775
    %v10777 = vpop.f32.mrb[0].mxu0
    %10778 = vmatprep.mubr.f32.mxu0 %v8142
    %10779 = vmatmul.mubr.f32.gmra.mrb[0].mxu0 %v8141
    %v10780 = vpop.f32.mrb[0].mxu0
    %v10781 = vadd.f32 %v10226, %v10780
    %v10782 = vpop.f32.mrb[0].mxu0
    %10783 = vmatprep.mubr.f32.mxu0 %v8150
    %10784 = vmatmul.mubr.f32.gmra.mrb[0].mxu0 %v8149
    %v10785 = vpop.f32.mrb[0].mxu0
    %v10786 = vadd.f32 %v10231, %v10785
    %v10787 = vpop.f32.mrb[0].mxu0
    %10788 = vmatprep.mubr.f32.mxu0 %v8158
    %10789 = vmatmul.mubr.f32.gmra.mrb[0].mxu0 %v8157
    %v10790 = vpop.f32.mrb[0].mxu0
    %v10791 = vadd.f32 %v10236, %v10790
    %v10792 = vpop.f32.mrb[0].mxu0
    %10793 = vmatprep.mubr.f32.mxu0 %v8166
    %10794 = vmatmul.mubr.f32.gmra.mrb[0].mxu0 %v8165
    %v10795 = vpop.f32.mrb[0].mxu0
    %v10796 = vadd.f32 %v10241, %v10795
    %v10797 = vpop.f32.mrb[0].mxu0
    %10798 = vmatprep.mubr.f32.mxu0 %v8174
    %10799 = vmatmul.mubr.f32.gmra.mrb[0].mxu0 %v8173
    %v10800 = vpop.f32.mrb[0].mxu0
    %v10801 = vadd.f32 %v10246, %v10800
    %v10802 = vpop.f32.mrb[0].mxu0
    %10803 = vmatprep.mubr.f32.mxu0 %v8182
    %10804 = vmatmul.mubr.f32.gmra.mrb[0].mxu0 %v8181
    %v10805 = vpop.f32.mrb[0].mxu0
    %v10806 = vadd.f32 %v10251, %v10805
    %v10807 = vpop.f32.mrb[0].mxu0
    %10808 = vmatprep.mubr.f32.mxu0 %v8190
    %10809 = vmatmul.mubr.f32.gmra.mrb[0].mxu0 %v8189
    %v10810 = vpop.f32.mrb[0].mxu0
    %v10811 = vadd.f32 %v10256, %v10810
    %v10812 = vpop.f32.mrb[0].mxu0
    %10813 = vmatprep.mubr.f32.mxu0 %v8198
    %10814 = vmatmul.mubr.f32.gmra.mrb[0].mxu0 %v8197
    %v10815 = vpop.f32.mrb[0].mxu0
    %v10816 = vadd.f32 %v10261, %v10815
    %v10817 = vpop.f32.mrb[0].mxu0
    %10818 = vmatprep.mubr.f32.mxu0 %v8206
    %10819 = vmatmul.mubr.f32.gmra.mrb[0].mxu0 %v8205
    %v10820 = vpop.f32.mrb[0].mxu0
    %v10821 = vadd.f32 %v10266, %v10820
    %v10822 = vpop.f32.mrb[0].mxu0
    %10823 = vmatprep.mubr.f32.mxu0 %v8214
    %10824 = vmatmul.mubr.f32.gmra.mrb[0].mxu0 %v8213
    %v10825 = vpop.f32.mrb[0].mxu0
    %v10826 = vadd.f32 %v10271, %v10825
    %v10827 = vpop.f32.mrb[0].mxu0
    %10828 = vmatprep.mubr.f32.mxu0 %v8222
    %10829 = vmatmul.mubr.f32.gmra.mrb[0].mxu0 %v8221
    %v10830 = vpop.f32.mrb[0].mxu0
    %v10831 = vadd.f32 %v10276, %v10830
    %v10832 = vpop.f32.mrb[0].mxu0
    %10833 = vmatprep.mubr.f32.mxu0 %v8230
    %10834 = vmatmul.mubr.f32.gmra.mrb[0].mxu0 %v8229
    %v10835 = vpop.f32.mrb[0].mxu0
    %v10836 = vadd.f32 %v10281, %v10835
    %v10837 = vpop.f32.mrb[0].mxu0
    %10838 = vmatprep.mubr.f32.mxu0 %v8238
    %10839 = vmatmul.mubr.f32.gmra.mrb[0].mxu0 %v8237
    %v10840 = vpop.f32.mrb[0].mxu0
    %v10841 = vadd.f32 %v10286, %v10840
    %v10842 = vpop.f32.mrb[0].mxu0
    %10843 = vmatprep.mubr.f32.mxu0 %v8246
    %10844 = vmatmul.mubr.f32.gmra.mrb[0].mxu0 %v8245
    %v10845 = vpop.f32.mrb[0].mxu0
    %v10846 = vadd.f32 %v10291, %v10845
    %v10847 = vpop.f32.mrb[0].mxu0
    %10848 = vmatprep.mubr.f32.mxu0 %v8254
    %10849 = vmatmul.mubr.f32.gmra.mrb[0].mxu0 %v8253
    %v10850 = vpop.f32.mrb[0].mxu0
    %v10851 = vadd.f32 %v10296, %v10850
    %v10852 = vpop.f32.mrb[0].mxu0
    %10853 = vmatprep.mubr.f32.mxu0 %v8262
    %10854 = vmatmul.mubr.f32.gmra.mrb[0].mxu0 %v8261
    %v10855 = vpop.f32.mrb[0].mxu0
    %v10856 = vadd.f32 %v10301, %v10855
    %v10857 = vpop.f32.mrb[0].mxu0
    %10858 = vmatprep.mubr.f32.mxu0 %v8270
    %10859 = vmatmul.mubr.f32.gmra.mrb[0].mxu0 %v8269
    %v10860 = vpop.f32.mrb[0].mxu0
    %v10861 = vadd.f32 %v10306, %v10860
    %v10862 = vpop.f32.mrb[0].mxu0
    %10863 = vmatprep.mubr.f32.mxu0 %v8278
    %10864 = vmatmul.mubr.f32.gmra.mrb[0].mxu0 %v8277
    %v10865 = vpop.f32.mrb[0].mxu0
    %v10866 = vadd.f32 %v10311, %v10865
    %v10867 = vpop.f32.mrb[0].mxu0
    %10868 = vmatprep.mubr.f32.mxu0 %v8286
    %10869 = vmatmul.mubr.f32.gmra.mrb[0].mxu0 %v8285
    %v10870 = vpop.f32.mrb[0].mxu0
    %v10871 = vadd.f32 %v10316, %v10870
    %v10872 = vpop.f32.mrb[0].mxu0
    %10873 = vmatprep.mubr.f32.mxu0 %v8294
    %10874 = vmatmul.mubr.f32.gmra.mrb[0].mxu0 %v8293
    %v10875 = vpop.f32.mrb[0].mxu0
    %v10876 = vadd.f32 %v10321, %v10875
    %v10877 = vpop.f32.mrb[0].mxu0
    %10878 = vmatprep.mubr.f32.mxu0 %v8302
    %10879 = vmatmul.mubr.f32.gmra.mrb[0].mxu0 %v8301
    %v10880 = vpop.f32.mrb[0].mxu0
    %v10881 = vadd.f32 %v10326, %v10880
    %v10882 = vpop.f32.mrb[0].mxu0
    %10883 = vmatprep.mubr.f32.mxu0 %v8310
    %10884 = vmatmul.mubr.f32.gmra.mrb[0].mxu0 %v8309
    %v10885 = vpop.f32.mrb[0].mxu0
    %v10886 = vadd.f32 %v10331, %v10885
    %v10887 = vpop.f32.mrb[0].mxu0
    %10888 = vmatprep.mubr.f32.mxu0 %v8318
    %10889 = vmatmul.mubr.f32.gmra.mrb[0].mxu0 %v8317
    %v10890 = vpop.f32.mrb[0].mxu0
    %v10891 = vadd.f32 %v10336, %v10890
    %v10892 = vpop.f32.mrb[0].mxu0
    %10893 = vmatprep.mubr.f32.mxu0 %v8326
    %10894 = vmatmul.mubr.f32.gmra.mrb[0].mxu0 %v8325
    %v10895 = vpop.f32.mrb[0].mxu0
    %v10896 = vadd.f32 %v10341, %v10895
    %v10897 = vpop.f32.mrb[0].mxu0
    %10898 = vmatprep.mubr.f32.mxu0 %v8334
    %10899 = vmatmul.mubr.f32.gmra.mrb[0].mxu0 %v8333
    %v10900 = vpop.f32.mrb[0].mxu0
    %v10901 = vadd.f32 %v10346, %v10900
    %v10902 = vpop.f32.mrb[0].mxu0
    %10903 = vmatprep.mubr.f32.mxu0 %v8342
    %10904 = vmatmul.mubr.f32.gmra.mrb[0].mxu0 %v8341
    %v10905 = vpop.f32.mrb[0].mxu0
    %v10906 = vadd.f32 %v10351, %v10905
    %v10907 = vpop.f32.mrb[0].mxu0
    %10908 = vmatprep.mubr.f32.mxu0 %v8350
    %10909 = vmatmul.mubr.f32.gmra.mrb[0].mxu0 %v8349
    %v10910 = vpop.f32.mrb[0].mxu0
    %v10911 = vadd.f32 %v10356, %v10910
    %v10912 = vpop.f32.mrb[0].mxu0
    %10913 = vmatprep.mubr.f32.mxu0 %v8358
    %10914 = vmatmul.mubr.f32.gmra.mrb[0].mxu0 %v8357
    %v10915 = vpop.f32.mrb[0].mxu0
    %v10916 = vadd.f32 %v10361, %v10915
    %v10917 = vpop.f32.mrb[0].mxu0
    %10918 = vmatprep.mubr.f32.mxu0 %v8366
    %10919 = vmatmul.mubr.f32.gmra.mrb[0].mxu0 %v8365
    %v10920 = vpop.f32.mrb[0].mxu0
    %v10921 = vadd.f32 %v10366, %v10920
    %v10922 = vpop.f32.mrb[0].mxu0
    %10923 = vmatprep.mubr.f32.mxu0 %v8374
    %10924 = vmatmul.mubr.f32.gmra.mrb[0].mxu0 %v8373
    %v10925 = vpop.f32.mrb[0].mxu0
    %v10926 = vadd.f32 %v10371, %v10925
    %v10927 = vpop.f32.mrb[0].mxu0
    %10928 = vdwg.mxu0
    %10929 = vmatprep.subr.mxu0 0.0
    %10930 = vmatpush1.msra.mxu0 %v7576
    %10931 = vmatprep.subr.mxu0 0.0
    %10932 = vmatpush1.msra.mxu0 %v7577
    %10933 = vmatprep.subr.mxu0 0.0
    %10934 = vmatpush1.msra.mxu0 %v7578
    %10935 = vmatprep.subr.mxu0 0.0
    %10936 = vmatpush1.msra.mxu0 %v7579
    %10937 = vmatprep.subr.mxu0 0.0
    %10938 = vmatpush1.msra.mxu0 %v7580
    %10939 = vmatprep.subr.mxu0 0.0
    %10940 = vmatpush1.msra.mxu0 %v7581
    %10941 = vmatprep.subr.mxu0 0.0
    %10942 = vmatpush1.msra.mxu0 %v7582
    %10943 = vmatprep.subr.mxu0 0.0
    %10944 = vmatpush1.msra.mxu0 %v7583
    %10945 = vmatprep.subr.mxu0 0.0
    %10946 = vmatpush1.msra.mxu0 %v7584
    %10947 = vmatprep.subr.mxu0 0.0
    %10948 = vmatpush1.msra.mxu0 %v7585
    %10949 = vmatprep.subr.mxu0 0.0
    %10950 = vmatpush1.msra.mxu0 %v7586
    %10951 = vmatprep.subr.mxu0 0.0
    %10952 = vmatpush1.msra.mxu0 %v7587
    %10953 = vmatprep.subr.mxu0 0.0
    %10954 = vmatpush1.msra.mxu0 %v7588
    %10955 = vmatprep.subr.mxu0 0.0
    %10956 = vmatpush1.msra.mxu0 %v7589
    %10957 = vmatprep.subr.mxu0 0.0
    %10958 = vmatpush1.msra.mxu0 %v7590
    %10959 = vmatprep.subr.mxu0 0.0
    %10960 = vmatpush1.msra.mxu0 %v7591
    %10961 = vmatprep.subr.mxu0 0.0
    %10962 = vmatpush1.msra.mxu0 %v9262
    %10963 = vmatprep.subr.mxu0 0.0
    %10964 = vmatpush1.msra.mxu0 0.0
    %10965 = vmatprep.subr.mxu0 0.0
    %10966 = vmatpush1.msra.mxu0 0.0
    %10967 = vmatprep.subr.mxu0 0.0
    %10968 = vmatpush1.msra.mxu0 0.0
    %10969 = vmatprep.subr.mxu0 0.0
    %10970 = vmatpush1.msra.mxu0 0.0
    %10971 = vmatprep.subr.mxu0 0.0
    %10972 = vmatpush1.msra.mxu0 0.0
    %10973 = vmatprep.subr.mxu0 0.0
    %10974 = vmatpush1.msra.mxu0 0.0
    %10975 = vmatprep.subr.mxu0 0.0
    %10976 = vmatpush1.msra.mxu0 0.0
    %10977 = vmatprep.subr.mxu0 0.0
    %10978 = vmatpush1.msra.mxu0 0.0
    %10979 = vmatprep.subr.mxu0 0.0
    %10980 = vmatpush1.msra.mxu0 0.0
    %10981 = vmatprep.subr.mxu0 0.0
    %10982 = vmatpush1.msra.mxu0 0.0
    %10983 = vmatprep.subr.mxu0 0.0
    %10984 = vmatpush1.msra.mxu0 0.0
    %10985 = vmatprep.subr.mxu0 0.0
    %10986 = vmatpush1.msra.mxu0 0.0
    %10987 = vmatprep.subr.mxu0 0.0
    %10988 = vmatpush1.msra.mxu0 0.0
    %10989 = vmatprep.subr.mxu0 0.0
    %10990 = vmatpush1.msra.mxu0 0.0
    %10991 = vmatprep.subr.mxu0 0.0
    %10992 = vmatpush1.msra.mxu0 0.0
    %10993 = vmatprep.mubr.f32.mxu0 %v8967
    %10994 = vmatmul.mubr.f32.gmra.mrb[0].mxu0 %v7599
    %v10995 = vpop.f32.mrb[0].mxu0
    %v10996 = vadd.f32 %v10441, %v10995
    %v10997 = vpop.f32.mrb[0].mxu0
    %10998 = vmatprep.mubr.f32.mxu0 %v8970
    %10999 = vmatmul.mubr.f32.gmra.mrb[0].mxu0 %v7607
    %v11000 = vpop.f32.mrb[0].mxu0
    %v11001 = vadd.f32 %v10446, %v11000
    %v11002 = vpop.f32.mrb[0].mxu0
    %11003 = vmatprep.mubr.f32.mxu0 %v8973
    %11004 = vmatmul.mubr.f32.gmra.mrb[0].mxu0 %v7615
    %v11005 = vpop.f32.mrb[0].mxu0
    %v11006 = vadd.f32 %v10451, %v11005
    %v11007 = vpop.f32.mrb[0].mxu0
    %11008 = vmatprep.mubr.f32.mxu0 %v8976
    %11009 = vmatmul.mubr.f32.gmra.mrb[0].mxu0 %v7623
    %v11010 = vpop.f32.mrb[0].mxu0
    %v11011 = vadd.f32 %v10456, %v11010
    %v11012 = vpop.f32.mrb[0].mxu0
    %11013 = vmatprep.mubr.f32.mxu0 %v8979
    %11014 = vmatmul.mubr.f32.gmra.mrb[0].mxu0 %v7631
    %v11015 = vpop.f32.mrb[0].mxu0
    %v11016 = vadd.f32 %v10461, %v11015
    %v11017 = vpop.f32.mrb[0].mxu0
    %11018 = vmatprep.mubr.f32.mxu0 %v8982
    %11019 = vmatmul.mubr.f32.gmra.mrb[0].mxu0 %v7639
    %v11020 = vpop.f32.mrb[0].mxu0
    %v11021 = vadd.f32 %v10466, %v11020
    %v11022 = vpop.f32.mrb[0].mxu0
    %11023 = vmatprep.mubr.f32.mxu0 %v8985
    %11024 = vmatmul.mubr.f32.gmra.mrb[0].mxu0 %v7647
    %v11025 = vpop.f32.mrb[0].mxu0
    %v11026 = vadd.f32 %v10471, %v11025
    %v11027 = vpop.f32.mrb[0].mxu0
    %11028 = vmatprep.mubr.f32.mxu0 %v8988
    %11029 = vmatmul.mubr.f32.gmra.mrb[0].mxu0 %v7655
    %v11030 = vpop.f32.mrb[0].mxu0
    %v11031 = vadd.f32 %v10476, %v11030
    %v11032 = vpop.f32.mrb[0].mxu0
    %11033 = vmatprep.mubr.f32.mxu0 %v8991
    %11034 = vmatmul.mubr.f32.gmra.mrb[0].mxu0 %v7663
    %v11035 = vpop.f32.mrb[0].mxu0
    %v11036 = vadd.f32 %v10481, %v11035
    %v11037 = vpop.f32.mrb[0].mxu0
    %11038 = vmatprep.mubr.f32.mxu0 %v8994
    %11039 = vmatmul.mubr.f32.gmra.mrb[0].mxu0 %v7671
    %v11040 = vpop.f32.mrb[0].mxu0
    %v11041 = vadd.f32 %v10486, %v11040
    %v11042 = vpop.f32.mrb[0].mxu0
    %11043 = vmatprep.mubr.f32.mxu0 %v8997
    %11044 = vmatmul.mubr.f32.gmra.mrb[0].mxu0 %v7679
    %v11045 = vpop.f32.mrb[0].mxu0
    %v11046 = vadd.f32 %v10491, %v11045
    %v11047 = vpop.f32.mrb[0].mxu0
    %11048 = vmatprep.mubr.f32.mxu0 %v9000
    %11049 = vmatmul.mubr.f32.gmra.mrb[0].mxu0 %v7687
    %v11050 = vpop.f32.mrb[0].mxu0
    %v11051 = vadd.f32 %v10496, %v11050
    %v11052 = vpop.f32.mrb[0].mxu0
    %11053 = vmatprep.mubr.f32.mxu0 %v9003
    %11054 = vmatmul.mubr.f32.gmra.mrb[0].mxu0 %v7695
    %v11055 = vpop.f32.mrb[0].mxu0
    %v11056 = vadd.f32 %v10501, %v11055
    %v11057 = vpop.f32.mrb[0].mxu0
    %11058 = vmatprep.mubr.f32.mxu0 %v9006
    %11059 = vmatmul.mubr.f32.gmra.mrb[0].mxu0 %v7703
    %v11060 = vpop.f32.mrb[0].mxu0
    %v11061 = vadd.f32 %v10506, %v11060
    %v11062 = vpop.f32.mrb[0].mxu0
    %11063 = vmatprep.mubr.f32.mxu0 %v9009
    %11064 = vmatmul.mubr.f32.gmra.mrb[0].mxu0 %v7711
    %v11065 = vpop.f32.mrb[0].mxu0
    %v11066 = vadd.f32 %v10511, %v11065
    %v11067 = vpop.f32.mrb[0].mxu0
    %11068 = vmatprep.mubr.f32.mxu0 %v9012
    %11069 = vmatmul.mubr.f32.gmra.mrb[0].mxu0 %v7719
    %v11070 = vpop.f32.mrb[0].mxu0
    %v11071 = vadd.f32 %v10516, %v11070
    %v11072 = vpop.f32.mrb[0].mxu0
    %11073 = vmatprep.mubr.f32.mxu0 %v9015
    %11074 = vmatmul.mubr.f32.gmra.mrb[0].mxu0 %v7727
    %v11075 = vpop.f32.mrb[0].mxu0
    %v11076 = vadd.f32 %v10521, %v11075
    %v11077 = vpop.f32.mrb[0].mxu0
    %11078 = vmatprep.mubr.f32.mxu0 %v9018
    %11079 = vmatmul.mubr.f32.gmra.mrb[0].mxu0 %v7735
    %v11080 = vpop.f32.mrb[0].mxu0
    %v11081 = vadd.f32 %v10526, %v11080
    %v11082 = vpop.f32.mrb[0].mxu0
    %11083 = vmatprep.mubr.f32.mxu0 %v9021
    %11084 = vmatmul.mubr.f32.gmra.mrb[0].mxu0 %v7743
    %v11085 = vpop.f32.mrb[0].mxu0
    %v11086 = vadd.f32 %v10531, %v11085
    %v11087 = vpop.f32.mrb[0].mxu0
    %11088 = vmatprep.mubr.f32.mxu0 %v9024
    %11089 = vmatmul.mubr.f32.gmra.mrb[0].mxu0 %v7751
    %v11090 = vpop.f32.mrb[0].mxu0
    %v11091 = vadd.f32 %v10536, %v11090
    %v11092 = vpop.f32.mrb[0].mxu0
    %11093 = vmatprep.mubr.f32.mxu0 %v9027
    %11094 = vmatmul.mubr.f32.gmra.mrb[0].mxu0 %v7759
    %v11095 = vpop.f32.mrb[0].mxu0
    %v11096 = vadd.f32 %v10541, %v11095
    %v11097 = vpop.f32.mrb[0].mxu0
    %11098 = vmatprep.mubr.f32.mxu0 %v9030
    %11099 = vmatmul.mubr.f32.gmra.mrb[0].mxu0 %v7767
    %v11100 = vpop.f32.mrb[0].mxu0
    %v11101 = vadd.f32 %v10546, %v11100
    %v11102 = vpop.f32.mrb[0].mxu0
    %11103 = vmatprep.mubr.f32.mxu0 %v9033
    %11104 = vmatmul.mubr.f32.gmra.mrb[0].mxu0 %v7775
    %v11105 = vpop.f32.mrb[0].mxu0
    %v11106 = vadd.f32 %v10551, %v11105
    %v11107 = vpop.f32.mrb[0].mxu0
    %11108 = vmatprep.mubr.f32.mxu0 %v9036
    %11109 = vmatmul.mubr.f32.gmra.mrb[0].mxu0 %v7783
    %v11110 = vpop.f32.mrb[0].mxu0
    %v11111 = vadd.f32 %v10556, %v11110
    %v11112 = vpop.f32.mrb[0].mxu0
    %11113 = vmatprep.mubr.f32.mxu0 %v9039
    %11114 = vmatmul.mubr.f32.gmra.mrb[0].mxu0 %v7791
    %v11115 = vpop.f32.mrb[0].mxu0
    %v11116 = vadd.f32 %v10561, %v11115
    %v11117 = vpop.f32.mrb[0].mxu0
    %11118 = vmatprep.mubr.f32.mxu0 %v9042
    %11119 = vmatmul.mubr.f32.gmra.mrb[0].mxu0 %v7799
    %v11120 = vpop.f32.mrb[0].mxu0
    %v11121 = vadd.f32 %v10566, %v11120
    %v11122 = vpop.f32.mrb[0].mxu0
    %11123 = vmatprep.mubr.f32.mxu0 %v9045
    %11124 = vmatmul.mubr.f32.gmra.mrb[0].mxu0 %v7807
    %v11125 = vpop.f32.mrb[0].mxu0
    %v11126 = vadd.f32 %v10571, %v11125
    %v11127 = vpop.f32.mrb[0].mxu0
    %11128 = vmatprep.mubr.f32.mxu0 %v9048
    %11129 = vmatmul.mubr.f32.gmra.mrb[0].mxu0 %v7815
    %v11130 = vpop.f32.mrb[0].mxu0
    %v11131 = vadd.f32 %v10576, %v11130
    %v11132 = vpop.f32.mrb[0].mxu0
    %11133 = vmatprep.mubr.f32.mxu0 %v9051
    %11134 = vmatmul.mubr.f32.gmra.mrb[0].mxu0 %v7823
    %v11135 = vpop.f32.mrb[0].mxu0
    %v11136 = vadd.f32 %v10581, %v11135
    %v11137 = vpop.f32.mrb[0].mxu0
    %11138 = vmatprep.mubr.f32.mxu0 %v9054
    %11139 = vmatmul.mubr.f32.gmra.mrb[0].mxu0 %v7831
    %v11140 = vpop.f32.mrb[0].mxu0
    %v11141 = vadd.f32 %v10586, %v11140
    %v11142 = vpop.f32.mrb[0].mxu0
    %11143 = vmatprep.mubr.f32.mxu0 %v9057
    %11144 = vmatmul.mubr.f32.gmra.mrb[0].mxu0 %v7839
    %v11145 = vpop.f32.mrb[0].mxu0
    %v11146 = vadd.f32 %v10591, %v11145
    %v11147 = vpop.f32.mrb[0].mxu0
    %11148 = vmatprep.mubr.f32.mxu0 %v9060
    %11149 = vmatmul.mubr.f32.gmra.mrb[0].mxu0 %v7847
    %v11150 = vpop.f32.mrb[0].mxu0
    %v11151 = vadd.f32 %v10596, %v11150
    %v11152 = vpop.f32.mrb[0].mxu0
    %11153 = vmatprep.mubr.f32.mxu0 %v9063
    %11154 = vmatmul.mubr.f32.gmra.mrb[0].mxu0 %v7855
    %v11155 = vpop.f32.mrb[0].mxu0
    %v11156 = vadd.f32 %v10601, %v11155
    %v11157 = vpop.f32.mrb[0].mxu0
    %11158 = vmatprep.mubr.f32.mxu0 %v9066
    %11159 = vmatmul.mubr.f32.gmra.mrb[0].mxu0 %v7863
    %v11160 = vpop.f32.mrb[0].mxu0
    %v11161 = vadd.f32 %v10606, %v11160
    %v11162 = vpop.f32.mrb[0].mxu0
    %11163 = vmatprep.mubr.f32.mxu0 %v9069
    %11164 = vmatmul.mubr.f32.gmra.mrb[0].mxu0 %v7871
    %v11165 = vpop.f32.mrb[0].mxu0
    %v11166 = vadd.f32 %v10611, %v11165
    %v11167 = vpop.f32.mrb[0].mxu0
    %11168 = vmatprep.mubr.f32.mxu0 %v9072
    %11169 = vmatmul.mubr.f32.gmra.mrb[0].mxu0 %v7879
    %v11170 = vpop.f32.mrb[0].mxu0
    %v11171 = vadd.f32 %v10616, %v11170
    %v11172 = vpop.f32.mrb[0].mxu0
    %11173 = vmatprep.mubr.f32.mxu0 %v9075
    %11174 = vmatmul.mubr.f32.gmra.mrb[0].mxu0 %v7887
    %v11175 = vpop.f32.mrb[0].mxu0
    %v11176 = vadd.f32 %v10621, %v11175
    %v11177 = vpop.f32.mrb[0].mxu0
    %11178 = vmatprep.mubr.f32.mxu0 %v9078
    %11179 = vmatmul.mubr.f32.gmra.mrb[0].mxu0 %v7895
    %v11180 = vpop.f32.mrb[0].mxu0
    %v11181 = vadd.f32 %v10626, %v11180
    %v11182 = vpop.f32.mrb[0].mxu0
    %11183 = vmatprep.mubr.f32.mxu0 %v9081
    %11184 = vmatmul.mubr.f32.gmra.mrb[0].mxu0 %v7903
    %v11185 = vpop.f32.mrb[0].mxu0
    %v11186 = vadd.f32 %v10631, %v11185
    %v11187 = vpop.f32.mrb[0].mxu0
    %11188 = vmatprep.mubr.f32.mxu0 %v9084
    %11189 = vmatmul.mubr.f32.gmra.mrb[0].mxu0 %v7911
    %v11190 = vpop.f32.mrb[0].mxu0
    %v11191 = vadd.f32 %v10636, %v11190
    %v11192 = vpop.f32.mrb[0].mxu0
    %11193 = vmatprep.mubr.f32.mxu0 %v9087
    %11194 = vmatmul.mubr.f32.gmra.mrb[0].mxu0 %v7919
    %v11195 = vpop.f32.mrb[0].mxu0
    %v11196 = vadd.f32 %v10641, %v11195
    %v11197 = vpop.f32.mrb[0].mxu0
    %11198 = vmatprep.mubr.f32.mxu0 %v9090
    %11199 = vmatmul.mubr.f32.gmra.mrb[0].mxu0 %v7927
    %v11200 = vpop.f32.mrb[0].mxu0
    %v11201 = vadd.f32 %v10646, %v11200
    %v11202 = vpop.f32.mrb[0].mxu0
    %11203 = vmatprep.mubr.f32.mxu0 %v9093
    %11204 = vmatmul.mubr.f32.gmra.mrb[0].mxu0 %v7935
    %v11205 = vpop.f32.mrb[0].mxu0
    %v11206 = vadd.f32 %v10651, %v11205
    %v11207 = vpop.f32.mrb[0].mxu0
    %11208 = vmatprep.mubr.f32.mxu0 %v9096
    %11209 = vmatmul.mubr.f32.gmra.mrb[0].mxu0 %v7943
    %v11210 = vpop.f32.mrb[0].mxu0
    %v11211 = vadd.f32 %v10656, %v11210
    %v11212 = vpop.f32.mrb[0].mxu0
    %11213 = vmatprep.mubr.f32.mxu0 %v9099
    %11214 = vmatmul.mubr.f32.gmra.mrb[0].mxu0 %v7951
    %v11215 = vpop.f32.mrb[0].mxu0
    %v11216 = vadd.f32 %v10661, %v11215
    %v11217 = vpop.f32.mrb[0].mxu0
    %11218 = vmatprep.mubr.f32.mxu0 %v9102
    %11219 = vmatmul.mubr.f32.gmra.mrb[0].mxu0 %v7959
    %v11220 = vpop.f32.mrb[0].mxu0
    %v11221 = vadd.f32 %v10666, %v11220
    %v11222 = vpop.f32.mrb[0].mxu0
    %11223 = vmatprep.mubr.f32.mxu0 %v9105
    %11224 = vmatmul.mubr.f32.gmra.mrb[0].mxu0 %v7967
    %v11225 = vpop.f32.mrb[0].mxu0
    %v11226 = vadd.f32 %v10671, %v11225
    %v11227 = vpop.f32.mrb[0].mxu0
    %11228 = vmatprep.mubr.f32.mxu0 %v9108
    %11229 = vmatmul.mubr.f32.gmra.mrb[0].mxu0 %v7975
    %v11230 = vpop.f32.mrb[0].mxu0
    %v11231 = vadd.f32 %v10676, %v11230
    %v11232 = vpop.f32.mrb[0].mxu0
    %11233 = vmatprep.mubr.f32.mxu0 %v9111
    %11234 = vmatmul.mubr.f32.gmra.mrb[0].mxu0 %v7983
    %v11235 = vpop.f32.mrb[0].mxu0
    %v11236 = vadd.f32 %v10681, %v11235
    %v11237 = vpop.f32.mrb[0].mxu0
    %11238 = vmatprep.mubr.f32.mxu0 %v9114
    %11239 = vmatmul.mubr.f32.gmra.mrb[0].mxu0 %v7991
    %v11240 = vpop.f32.mrb[0].mxu0
    %v11241 = vadd.f32 %v10686, %v11240
    %v11242 = vpop.f32.mrb[0].mxu0
    %11243 = vmatprep.mubr.f32.mxu0 %v9117
    %11244 = vmatmul.mubr.f32.gmra.mrb[0].mxu0 %v7999
    %v11245 = vpop.f32.mrb[0].mxu0
    %v11246 = vadd.f32 %v10691, %v11245
    %v11247 = vpop.f32.mrb[0].mxu0
    %11248 = vmatprep.mubr.f32.mxu0 %v9120
    %11249 = vmatmul.mubr.f32.gmra.mrb[0].mxu0 %v8007
    %v11250 = vpop.f32.mrb[0].mxu0
    %v11251 = vadd.f32 %v10696, %v11250
    %v11252 = vpop.f32.mrb[0].mxu0
    %11253 = vmatprep.mubr.f32.mxu0 %v9123
    %11254 = vmatmul.mubr.f32.gmra.mrb[0].mxu0 %v8015
    %v11255 = vpop.f32.mrb[0].mxu0
    %v11256 = vadd.f32 %v10701, %v11255
    %v11257 = vpop.f32.mrb[0].mxu0
    %11258 = vmatprep.mubr.f32.mxu0 %v9126
    %11259 = vmatmul.mubr.f32.gmra.mrb[0].mxu0 %v8023
    %v11260 = vpop.f32.mrb[0].mxu0
    %v11261 = vadd.f32 %v10706, %v11260
    %v11262 = vpop.f32.mrb[0].mxu0
    %11263 = vmatprep.mubr.f32.mxu0 %v9129
    %11264 = vmatmul.mubr.f32.gmra.mrb[0].mxu0 %v8031
    %v11265 = vpop.f32.mrb[0].mxu0
    %v11266 = vadd.f32 %v10711, %v11265
    %v11267 = vpop.f32.mrb[0].mxu0
    %11268 = vmatprep.mubr.f32.mxu0 %v9132
    %11269 = vmatmul.mubr.f32.gmra.mrb[0].mxu0 %v8039
    %v11270 = vpop.f32.mrb[0].mxu0
    %v11271 = vadd.f32 %v10716, %v11270
    %v11272 = vpop.f32.mrb[0].mxu0
    %11273 = vmatprep.mubr.f32.mxu0 %v9135
    %11274 = vmatmul.mubr.f32.gmra.mrb[0].mxu0 %v8047
    %v11275 = vpop.f32.mrb[0].mxu0
    %v11276 = vadd.f32 %v10721, %v11275
    %v11277 = vpop.f32.mrb[0].mxu0
    %11278 = vmatprep.mubr.f32.mxu0 %v9138
    %11279 = vmatmul.mubr.f32.gmra.mrb[0].mxu0 %v8055
    %v11280 = vpop.f32.mrb[0].mxu0
    %v11281 = vadd.f32 %v10726, %v11280
    %v11282 = vpop.f32.mrb[0].mxu0
    %11283 = vmatprep.mubr.f32.mxu0 %v9141
    %11284 = vmatmul.mubr.f32.gmra.mrb[0].mxu0 %v8063
    %v11285 = vpop.f32.mrb[0].mxu0
    %v11286 = vadd.f32 %v10731, %v11285
    %v11287 = vpop.f32.mrb[0].mxu0
    %11288 = vmatprep.mubr.f32.mxu0 %v9144
    %11289 = vmatmul.mubr.f32.gmra.mrb[0].mxu0 %v8071
    %v11290 = vpop.f32.mrb[0].mxu0
    %v11291 = vadd.f32 %v10736, %v11290
    %v11292 = vpop.f32.mrb[0].mxu0
    %11293 = vmatprep.mubr.f32.mxu0 %v9147
    %11294 = vmatmul.mubr.f32.gmra.mrb[0].mxu0 %v8079
    %v11295 = vpop.f32.mrb[0].mxu0
    %v11296 = vadd.f32 %v10741, %v11295
    %v11297 = vpop.f32.mrb[0].mxu0
    %11298 = vmatprep.mubr.f32.mxu0 %v9150
    %11299 = vmatmul.mubr.f32.gmra.mrb[0].mxu0 %v8087
    %v11300 = vpop.f32.mrb[0].mxu0
    %v11301 = vadd.f32 %v10746, %v11300
    %v11302 = vpop.f32.mrb[0].mxu0
    %11303 = vmatprep.mubr.f32.mxu0 %v9153
    %11304 = vmatmul.mubr.f32.gmra.mrb[0].mxu0 %v8095
    %v11305 = vpop.f32.mrb[0].mxu0
    %v11306 = vadd.f32 %v10751, %v11305
    %v11307 = vpop.f32.mrb[0].mxu0
    %11308 = vmatprep.mubr.f32.mxu0 %v9156
    %11309 = vmatmul.mubr.f32.gmra.mrb[0].mxu0 %v8103
    %v11310 = vpop.f32.mrb[0].mxu0
    %v11311 = vadd.f32 %v10756, %v11310
    %v11312 = vpop.f32.mrb[0].mxu0
    %11313 = vmatprep.mubr.f32.mxu0 %v9159
    %11314 = vmatmul.mubr.f32.gmra.mrb[0].mxu0 %v8111
    %v11315 = vpop.f32.mrb[0].mxu0
    %v11316 = vadd.f32 %v10761, %v11315
    %v11317 = vpop.f32.mrb[0].mxu0
    %11318 = vmatprep.mubr.f32.mxu0 %v9162
    %11319 = vmatmul.mubr.f32.gmra.mrb[0].mxu0 %v8119
    %v11320 = vpop.f32.mrb[0].mxu0
    %v11321 = vadd.f32 %v10766, %v11320
    %v11322 = vpop.f32.mrb[0].mxu0
    %11323 = vmatprep.mubr.f32.mxu0 %v9165
    %11324 = vmatmul.mubr.f32.gmra.mrb[0].mxu0 %v8127
    %v11325 = vpop.f32.mrb[0].mxu0
    %v11326 = vadd.f32 %v10771, %v11325
    %v11327 = vpop.f32.mrb[0].mxu0
    %11328 = vmatprep.mubr.f32.mxu0 %v9168
    %11329 = vmatmul.mubr.f32.gmra.mrb[0].mxu0 %v8135
    %v11330 = vpop.f32.mrb[0].mxu0
    %v11331 = vadd.f32 %v10776, %v11330
    %v11332 = vpop.f32.mrb[0].mxu0
    %11333 = vmatprep.mubr.f32.mxu0 %v9171
    %11334 = vmatmul.mubr.f32.gmra.mrb[0].mxu0 %v8143
    %v11335 = vpop.f32.mrb[0].mxu0
    %v11336 = vadd.f32 %v10781, %v11335
    %v11337 = vpop.f32.mrb[0].mxu0
    %11338 = vmatprep.mubr.f32.mxu0 %v9174
    %11339 = vmatmul.mubr.f32.gmra.mrb[0].mxu0 %v8151
    %v11340 = vpop.f32.mrb[0].mxu0
    %v11341 = vadd.f32 %v10786, %v11340
    %v11342 = vpop.f32.mrb[0].mxu0
    %11343 = vmatprep.mubr.f32.mxu0 %v9177
    %11344 = vmatmul.mubr.f32.gmra.mrb[0].mxu0 %v8159
    %v11345 = vpop.f32.mrb[0].mxu0
    %v11346 = vadd.f32 %v10791, %v11345
    %v11347 = vpop.f32.mrb[0].mxu0
    %11348 = vmatprep.mubr.f32.mxu0 %v9180
    %11349 = vmatmul.mubr.f32.gmra.mrb[0].mxu0 %v8167
    %v11350 = vpop.f32.mrb[0].mxu0
    %v11351 = vadd.f32 %v10796, %v11350
    %v11352 = vpop.f32.mrb[0].mxu0
    %11353 = vmatprep.mubr.f32.mxu0 %v9183
    %11354 = vmatmul.mubr.f32.gmra.mrb[0].mxu0 %v8175
    %v11355 = vpop.f32.mrb[0].mxu0
    %v11356 = vadd.f32 %v10801, %v11355
    %v11357 = vpop.f32.mrb[0].mxu0
    %11358 = vmatprep.mubr.f32.mxu0 %v9186
    %11359 = vmatmul.mubr.f32.gmra.mrb[0].mxu0 %v8183
    %v11360 = vpop.f32.mrb[0].mxu0
    %v11361 = vadd.f32 %v10806, %v11360
    %v11362 = vpop.f32.mrb[0].mxu0
    %11363 = vmatprep.mubr.f32.mxu0 %v9189
    %11364 = vmatmul.mubr.f32.gmra.mrb[0].mxu0 %v8191
    %v11365 = vpop.f32.mrb[0].mxu0
    %v11366 = vadd.f32 %v10811, %v11365
    %v11367 = vpop.f32.mrb[0].mxu0
    %11368 = vmatprep.mubr.f32.mxu0 %v9192
    %11369 = vmatmul.mubr.f32.gmra.mrb[0].mxu0 %v8199
    %v11370 = vpop.f32.mrb[0].mxu0
    %v11371 = vadd.f32 %v10816, %v11370
    %v11372 = vpop.f32.mrb[0].mxu0
    %11373 = vmatprep.mubr.f32.mxu0 %v9195
    %11374 = vmatmul.mubr.f32.gmra.mrb[0].mxu0 %v8207
    %v11375 = vpop.f32.mrb[0].mxu0
    %v11376 = vadd.f32 %v10821, %v11375
    %v11377 = vpop.f32.mrb[0].mxu0
    %11378 = vmatprep.mubr.f32.mxu0 %v9198
    %11379 = vmatmul.mubr.f32.gmra.mrb[0].mxu0 %v8215
    %v11380 = vpop.f32.mrb[0].mxu0
    %v11381 = vadd.f32 %v10826, %v11380
    %v11382 = vpop.f32.mrb[0].mxu0
    %11383 = vmatprep.mubr.f32.mxu0 %v9201
    %11384 = vmatmul.mubr.f32.gmra.mrb[0].mxu0 %v8223
    %v11385 = vpop.f32.mrb[0].mxu0
    %v11386 = vadd.f32 %v10831, %v11385
    %v11387 = vpop.f32.mrb[0].mxu0
    %11388 = vmatprep.mubr.f32.mxu0 %v9204
    %11389 = vmatmul.mubr.f32.gmra.mrb[0].mxu0 %v8231
    %v11390 = vpop.f32.mrb[0].mxu0
    %v11391 = vadd.f32 %v10836, %v11390
    %v11392 = vpop.f32.mrb[0].mxu0
    %11393 = vmatprep.mubr.f32.mxu0 %v9207
    %11394 = vmatmul.mubr.f32.gmra.mrb[0].mxu0 %v8239
    %v11395 = vpop.f32.mrb[0].mxu0
    %v11396 = vadd.f32 %v10841, %v11395
    %v11397 = vpop.f32.mrb[0].mxu0
    %11398 = vmatprep.mubr.f32.mxu0 %v9210
    %11399 = vmatmul.mubr.f32.gmra.mrb[0].mxu0 %v8247
    %v11400 = vpop.f32.mrb[0].mxu0
    %v11401 = vadd.f32 %v10846, %v11400
    %v11402 = vpop.f32.mrb[0].mxu0
    %11403 = vmatprep.mubr.f32.mxu0 %v9213
    %11404 = vmatmul.mubr.f32.gmra.mrb[0].mxu0 %v8255
    %v11405 = vpop.f32.mrb[0].mxu0
    %v11406 = vadd.f32 %v10851, %v11405
    %v11407 = vpop.f32.mrb[0].mxu0
    %11408 = vmatprep.mubr.f32.mxu0 %v9216
    %11409 = vmatmul.mubr.f32.gmra.mrb[0].mxu0 %v8263
    %v11410 = vpop.f32.mrb[0].mxu0
    %v11411 = vadd.f32 %v10856, %v11410
    %v11412 = vpop.f32.mrb[0].mxu0
    %11413 = vmatprep.mubr.f32.mxu0 %v9219
    %11414 = vmatmul.mubr.f32.gmra.mrb[0].mxu0 %v8271
    %v11415 = vpop.f32.mrb[0].mxu0
    %v11416 = vadd.f32 %v10861, %v11415
    %v11417 = vpop.f32.mrb[0].mxu0
    %11418 = vmatprep.mubr.f32.mxu0 %v9222
    %11419 = vmatmul.mubr.f32.gmra.mrb[0].mxu0 %v8279
    %v11420 = vpop.f32.mrb[0].mxu0
    %v11421 = vadd.f32 %v10866, %v11420
    %v11422 = vpop.f32.mrb[0].mxu0
    %11423 = vmatprep.mubr.f32.mxu0 %v9225
    %11424 = vmatmul.mubr.f32.gmra.mrb[0].mxu0 %v8287
    %v11425 = vpop.f32.mrb[0].mxu0
    %v11426 = vadd.f32 %v10871, %v11425
    %v11427 = vpop.f32.mrb[0].mxu0
    %11428 = vmatprep.mubr.f32.mxu0 %v9228
    %11429 = vmatmul.mubr.f32.gmra.mrb[0].mxu0 %v8295
    %v11430 = vpop.f32.mrb[0].mxu0
    %v11431 = vadd.f32 %v10876, %v11430
    %v11432 = vpop.f32.mrb[0].mxu0
    %11433 = vmatprep.mubr.f32.mxu0 %v9231
    %11434 = vmatmul.mubr.f32.gmra.mrb[0].mxu0 %v8303
    %v11435 = vpop.f32.mrb[0].mxu0
    %v11436 = vadd.f32 %v10881, %v11435
    %v11437 = vpop.f32.mrb[0].mxu0
    %11438 = vmatprep.mubr.f32.mxu0 %v9234
    %11439 = vmatmul.mubr.f32.gmra.mrb[0].mxu0 %v8311
    %v11440 = vpop.f32.mrb[0].mxu0
    %v11441 = vadd.f32 %v10886, %v11440
    %v11442 = vpop.f32.mrb[0].mxu0
    %11443 = vmatprep.mubr.f32.mxu0 %v9237
    %11444 = vmatmul.mubr.f32.gmra.mrb[0].mxu0 %v8319
    %v11445 = vpop.f32.mrb[0].mxu0
    %v11446 = vadd.f32 %v10891, %v11445
    %v11447 = vpop.f32.mrb[0].mxu0
    %11448 = vmatprep.mubr.f32.mxu0 %v9240
    %11449 = vmatmul.mubr.f32.gmra.mrb[0].mxu0 %v8327
    %v11450 = vpop.f32.mrb[0].mxu0
    %v11451 = vadd.f32 %v10896, %v11450
    %v11452 = vpop.f32.mrb[0].mxu0
    %11453 = vmatprep.mubr.f32.mxu0 %v9243
    %11454 = vmatmul.mubr.f32.gmra.mrb[0].mxu0 %v8335
    %v11455 = vpop.f32.mrb[0].mxu0
    %v11456 = vadd.f32 %v10901, %v11455
    %v11457 = vpop.f32.mrb[0].mxu0
    %11458 = vmatprep.mubr.f32.mxu0 %v9246
    %11459 = vmatmul.mubr.f32.gmra.mrb[0].mxu0 %v8343
    %v11460 = vpop.f32.mrb[0].mxu0
    %v11461 = vadd.f32 %v10906, %v11460
    %v11462 = vpop.f32.mrb[0].mxu0
    %11463 = vmatprep.mubr.f32.mxu0 %v9249
    %11464 = vmatmul.mubr.f32.gmra.mrb[0].mxu0 %v8351
    %v11465 = vpop.f32.mrb[0].mxu0
    %v11466 = vadd.f32 %v10911, %v11465
    %v11467 = vpop.f32.mrb[0].mxu0
    %11468 = vmatprep.mubr.f32.mxu0 %v9252
    %11469 = vmatmul.mubr.f32.gmra.mrb[0].mxu0 %v8359
    %v11470 = vpop.f32.mrb[0].mxu0
    %v11471 = vadd.f32 %v10916, %v11470
    %v11472 = vpop.f32.mrb[0].mxu0
    %11473 = vmatprep.mubr.f32.mxu0 %v9255
    %11474 = vmatmul.mubr.f32.gmra.mrb[0].mxu0 %v8367
    %v11475 = vpop.f32.mrb[0].mxu0
    %v11476 = vadd.f32 %v10921, %v11475
    %v11477 = vpop.f32.mrb[0].mxu0
    %11478 = vmatprep.mubr.f32.mxu0 %v9258
    %11479 = vmatmul.mubr.f32.gmra.mrb[0].mxu0 %v8375
    %v11480 = vpop.f32.mrb[0].mxu0
    %v11481 = vadd.f32 %v10926, %v11480
    %v11482 = vpop.f32.mrb[0].mxu0
    %11483 = vdwg.mxu0
    %v11484 = vtanh.pop %v10996
    %v11485 = vtanh.pop %v11001
    %v11486 = vtanh.pop %v11006
    %v11487 = vtanh.pop %v11011
    %v11488 = vtanh.pop %v11016
    %v11489 = vtanh.pop %v11021
    %v11490 = vtanh.pop %v11026
    %v11491 = vtanh.pop %v11031
    %v11492 = vtanh.pop %v11036
    %v11493 = vtanh.pop %v11041
    %v11494 = vtanh.pop %v11046
    %v11495 = vtanh.pop %v11051
    %v11496 = vtanh.pop %v11056
    %v11497 = vtanh.pop %v11061
    %v11498 = vtanh.pop %v11066
    %v11499 = vtanh.pop %v11071
    %v11500 = vtanh.pop %v11076
    %v11501 = vtanh.pop %v11081
    %v11502 = vtanh.pop %v11086
    %v11503 = vtanh.pop %v11091
    %v11504 = vtanh.pop %v11096
    %v11505 = vtanh.pop %v11101
    %v11506 = vtanh.pop %v11106
    %v11507 = vtanh.pop %v11111
    %v11508 = vtanh.pop %v11116
    %v11509 = vtanh.pop %v11121
    %v11510 = vtanh.pop %v11126
    %v11511 = vtanh.pop %v11131
    %v11512 = vtanh.pop %v11136
    %v11513 = vtanh.pop %v11141
    %v11514 = vtanh.pop %v11146
    %v11515 = vtanh.pop %v11151
    %v11516 = vtanh.pop %v11156
    %v11517 = vtanh.pop %v11161
    %v11518 = vtanh.pop %v11166
    %v11519 = vtanh.pop %v11171
    %v11520 = vtanh.pop %v11176
    %v11521 = vtanh.pop %v11181
    %v11522 = vtanh.pop %v11186
    %v11523 = vtanh.pop %v11191
    %v11524 = vtanh.pop %v11196
    %v11525 = vtanh.pop %v11201
    %v11526 = vtanh.pop %v11206
    %v11527 = vtanh.pop %v11211
    %v11528 = vtanh.pop %v11216
    %v11529 = vtanh.pop %v11221
    %v11530 = vtanh.pop %v11226
    %v11531 = vtanh.pop %v11231
    %v11532 = vtanh.pop %v11236
    %v11533 = vtanh.pop %v11241
    %v11534 = vtanh.pop %v11246
    %v11535 = vtanh.pop %v11251
    %v11536 = vtanh.pop %v11256
    %v11537 = vtanh.pop %v11261
    %v11538 = vtanh.pop %v11266
    %v11539 = vtanh.pop %v11271
    %v11540 = vtanh.pop %v11276
    %v11541 = vtanh.pop %v11281
    %v11542 = vtanh.pop %v11286
    %v11543 = vtanh.pop %v11291
    %v11544 = vtanh.pop %v11296
    %v11545 = vtanh.pop %v11301
    %v11546 = vtanh.pop %v11306
    %v11547 = vtanh.pop %v11311
    %v11548 = vtanh.pop %v11316
    %v11549 = vtanh.pop %v11321
    %v11550 = vtanh.pop %v11326
    %v11551 = vtanh.pop %v11331
    %v11552 = vtanh.pop %v11336
    %v11553 = vtanh.pop %v11341
    %v11554 = vtanh.pop %v11346
    %v11555 = vtanh.pop %v11351
    %v11556 = vtanh.pop %v11356
    %v11557 = vtanh.pop %v11361
    %v11558 = vtanh.pop %v11366
    %v11559 = vtanh.pop %v11371
    %v11560 = vtanh.pop %v11376
    %v11561 = vtanh.pop %v11381
    %v11562 = vtanh.pop %v11386
    %v11563 = vtanh.pop %v11391
    %v11564 = vtanh.pop %v11396
    %v11565 = vtanh.pop %v11401
    %v11566 = vtanh.pop %v11406
    %v11567 = vtanh.pop %v11411
    %v11568 = vtanh.pop %v11416
    %v11569 = vtanh.pop %v11421
    %v11570 = vtanh.pop %v11426
    %v11571 = vtanh.pop %v11431
    %v11572 = vtanh.pop %v11436
    %v11573 = vtanh.pop %v11441
    %v11574 = vtanh.pop %v11446
    %v11575 = vtanh.pop %v11451
    %v11576 = vtanh.pop %v11456
    %v11577 = vtanh.pop %v11461
    %v11578 = vtanh.pop %v11466
    %v11579 = vtanh.pop %v11471
    %v11580 = vtanh.pop %v11476
    %v11581 = vtanh.pop %v11481
    %11582 = vst [vmem:[%s11] sm:$0xff] %v11484
    %11583 = vst [vmem:[%s11 + $0x8] sm:$0xff] %v11485
    %11584 = vst [vmem:[%s11 + $0x10] sm:$0xff] %v11486
    %11585 = vst [vmem:[%s11 + $0x18] sm:$0xff] %v11487
    %11586 = vst [vmem:[%s11 + $0x20] sm:$0xff] %v11488
    %11587 = vst [vmem:[%s11 + $0x28] sm:$0xff] %v11489
    %11588 = vst [vmem:[%s11 + $0x30] sm:$0xff] %v11490
    %11589 = vst [vmem:[%s11 + $0x38] sm:$0xff] %v11491
    %11590 = vst [vmem:[%s11 + $0x40] sm:$0xff] %v11492
    %11591 = vst [vmem:[%s11 + $0x48] sm:$0xff] %v11493
    %11592 = vst [vmem:[%s11 + $0x50] sm:$0xff] %v11494
    %11593 = vst [vmem:[%s11 + $0x58] sm:$0xff] %v11495
    %11594 = vst [vmem:[%s11 + $0x60] sm:$0xff] %v11496
    %11595 = vst [vmem:[%s11 + $0x68] sm:$0xff] %v11497
    %11596 = vst [vmem:[%s11 + $0x70] sm:$0xff] %v11498
    %11597 = vst [vmem:[%s11 + $0x78] sm:$0xff] %v11499
    %11598 = vst [vmem:[%s11 + $0x80] sm:$0xff] %v11500
    %11599 = vst [vmem:[%s11 + $0x88] sm:$0xff] %v11501
    %11600 = vst [vmem:[%s11 + $0x90] sm:$0xff] %v11502
    %11601 = vst [vmem:[%s11 + $0x98] sm:$0xff] %v11503
    %11602 = vst [vmem:[%s11 + $0xa0] sm:$0xff] %v11504
    %11603 = vst [vmem:[%s11 + $0xa8] sm:$0xff] %v11505
    %11604 = vst [vmem:[%s11 + $0xb0] sm:$0xff] %v11506
    %11605 = vst [vmem:[%s11 + $0xb8] sm:$0xff] %v11507
    %11606 = vst [vmem:[%s11 + $0xc0] sm:$0xff] %v11508
    %11607 = vst [vmem:[%s11 + $0xc8] sm:$0xff] %v11509
    %11608 = vst [vmem:[%s11 + $0xd0] sm:$0xff] %v11510
    %11609 = vst [vmem:[%s11 + $0xd8] sm:$0xff] %v11511
    %11610 = vst [vmem:[%s11 + $0xe0] sm:$0xff] %v11512
    %11611 = vst [vmem:[%s11 + $0xe8] sm:$0xff] %v11513
    %11612 = vst [vmem:[%s11 + $0xf0] sm:$0xff] %v11514
    %11613 = vst [vmem:[%s11 + $0xf8] sm:$0xff] %v11515
    %11614 = vst [vmem:[%s11 + $0x100] sm:$0xff] %v11516
    %11615 = vst [vmem:[%s11 + $0x108] sm:$0xff] %v11517
    %11616 = vst [vmem:[%s11 + $0x110] sm:$0xff] %v11518
    %11617 = vst [vmem:[%s11 + $0x118] sm:$0xff] %v11519
    %11618 = vst [vmem:[%s11 + $0x120] sm:$0xff] %v11520
    %11619 = vst [vmem:[%s11 + $0x128] sm:$0xff] %v11521
    %11620 = vst [vmem:[%s11 + $0x130] sm:$0xff] %v11522
    %11621 = vst [vmem:[%s11 + $0x138] sm:$0xff] %v11523
    %11622 = vst [vmem:[%s11 + $0x140] sm:$0xff] %v11524
    %11623 = vst [vmem:[%s11 + $0x148] sm:$0xff] %v11525
    %11624 = vst [vmem:[%s11 + $0x150] sm:$0xff] %v11526
    %11625 = vst [vmem:[%s11 + $0x158] sm:$0xff] %v11527
    %11626 = vst [vmem:[%s11 + $0x160] sm:$0xff] %v11528
    %11627 = vst [vmem:[%s11 + $0x168] sm:$0xff] %v11529
    %11628 = vst [vmem:[%s11 + $0x170] sm:$0xff] %v11530
    %11629 = vst [vmem:[%s11 + $0x178] sm:$0xff] %v11531
    %11630 = vst [vmem:[%s11 + $0x180] sm:$0xff] %v11532
    %11631 = vst [vmem:[%s11 + $0x188] sm:$0xff] %v11533
    %11632 = vst [vmem:[%s11 + $0x190] sm:$0xff] %v11534
    %11633 = vst [vmem:[%s11 + $0x198] sm:$0xff] %v11535
    %11634 = vst [vmem:[%s11 + $0x1a0] sm:$0xff] %v11536
    %11635 = vst [vmem:[%s11 + $0x1a8] sm:$0xff] %v11537
    %11636 = vst [vmem:[%s11 + $0x1b0] sm:$0xff] %v11538
    %11637 = vst [vmem:[%s11 + $0x1b8] sm:$0xff] %v11539
    %11638 = vst [vmem:[%s11 + $0x1c0] sm:$0xff] %v11540
    %11639 = vst [vmem:[%s11 + $0x1c8] sm:$0xff] %v11541
    %11640 = vst [vmem:[%s11 + $0x1d0] sm:$0xff] %v11542
    %11641 = vst [vmem:[%s11 + $0x1d8] sm:$0xff] %v11543
    %11642 = vst [vmem:[%s11 + $0x1e0] sm:$0xff] %v11544
    %11643 = vst [vmem:[%s11 + $0x1e8] sm:$0xff] %v11545
    %11644 = vst [vmem:[%s11 + $0x1f0] sm:$0xff] %v11546
    %11645 = vst [vmem:[%s11 + $0x1f8] sm:$0xff] %v11547
    %11646 = vst [vmem:[%s11 + $0x200] sm:$0xff] %v11548
    %11647 = vst [vmem:[%s11 + $0x208] sm:$0xff] %v11549
    %11648 = vst [vmem:[%s11 + $0x210] sm:$0xff] %v11550
    %11649 = vst [vmem:[%s11 + $0x218] sm:$0xff] %v11551
    %11650 = vst [vmem:[%s11 + $0x220] sm:$0xff] %v11552
    %11651 = vst [vmem:[%s11 + $0x228] sm:$0xff] %v11553
    %11652 = vst [vmem:[%s11 + $0x230] sm:$0xff] %v11554
    %11653 = vst [vmem:[%s11 + $0x238] sm:$0xff] %v11555
    %11654 = vst [vmem:[%s11 + $0x240] sm:$0xff] %v11556
    %11655 = vst [vmem:[%s11 + $0x248] sm:$0xff] %v11557
    %11656 = vst [vmem:[%s11 + $0x250] sm:$0xff] %v11558
    %11657 = vst [vmem:[%s11 + $0x258] sm:$0xff] %v11559
    %11658 = vst [vmem:[%s11 + $0x260] sm:$0xff] %v11560
    %11659 = vst [vmem:[%s11 + $0x268] sm:$0xff] %v11561
    %11660 = vst [vmem:[%s11 + $0x270] sm:$0xff] %v11562
    %11661 = vst [vmem:[%s11 + $0x278] sm:$0xff] %v11563
    %11662 = vst [vmem:[%s11 + $0x280] sm:$0xff] %v11564
    %11663 = vst [vmem:[%s11 + $0x288] sm:$0xff] %v11565
    %11664 = vst [vmem:[%s11 + $0x290] sm:$0xff] %v11566
    %11665 = vst [vmem:[%s11 + $0x298] sm:$0xff] %v11567
    %11666 = vst [vmem:[%s11 + $0x2a0] sm:$0xff] %v11568
    %11667 = vst [vmem:[%s11 + $0x2a8] sm:$0xff] %v11569
    %11668 = vst [vmem:[%s11 + $0x2b0] sm:$0xff] %v11570
    %11669 = vst [vmem:[%s11 + $0x2b8] sm:$0xff] %v11571
    %11670 = vst [vmem:[%s11 + $0x2c0] sm:$0xff] %v11572
    %11671 = vst [vmem:[%s11 + $0x2c8] sm:$0xff] %v11573
    %11672 = vst [vmem:[%s11 + $0x2d0] sm:$0xff] %v11574
    %11673 = vst [vmem:[%s11 + $0x2d8] sm:$0xff] %v11575
    %11674 = vst [vmem:[%s11 + $0x2e0] sm:$0xff] %v11576
    %11675 = vst [vmem:[%s11 + $0x2e8] sm:$0xff] %v11577
    %11676 = vst [vmem:[%s11 + $0x2f0] sm:$0xff] %v11578
    %11677 = vst [vmem:[%s11 + $0x2f8] sm:$0xff] %v11579
    %11678 = vst [vmem:[%s11 + $0x300] sm:$0xff] %v11580
    %11679 = vst [vmem:[%s11 + $0x308] sm:$0xff] %v11581
    // Predicated region
    $region50: #{autoencoder_forward.1} parent=1 // pred_check
      _
    $region51: #{autoencoder_forward.1} parent=1 // pred_check_branch
      %11681 = sbr.rel (0) target = $region53
    $region52: #{autoencoder_forward.1} parent=1 // pred_region
      _
    $region53: #{autoencoder_forward.1} parent=1 // pred_fallthru
      _
    // Predicated region
    $region54: #{autoencoder_forward.1} parent=1 // pred_check
      _
    $region55: #{autoencoder_forward.1} parent=1 // pred_check_branch
      %11683 = sbr.rel (0) target = $region57
    $region56: #{autoencoder_forward.1} parent=1 // pred_region
      _
    $region57: #{autoencoder_forward.1} parent=1 // pred_fallthru
      _
    %11684 = vsyncpa [#allocation3], 1

</llo_original>
